<compile_context>
chip_gen: v7x
topology: tpu7x:2x2x1
jax: 0.10.0
libtpu: 0.0.40
codegen_flags: <defaults>
</compile_context>

<pallas_src>
import numpy as np
import jax
import jax.numpy as jnp
from jax import lax
from jax.experimental import pallas as pl
from jax.experimental.pallas import tpu as pltpu

# ---- model hyper-parameters --------------------------------------------------
C = 16            # channels
S = 8             # static_dim
L = 12            # sequence_length (short bottleneck sequence)
LP = 16           # L padded to a sublane-tile multiple
N_S4 = 3          # num_s4_layers
EPS = 1e-5        # LayerNorm / GroupNorm eps (PyTorch default)

P = 8             # samples packed along the lane axis
PC = P * C        # 128 lanes
P2C = P * 2 * C   # 256 lanes (expanded channel stage)
GT_MAX = 16       # packed groups per grid step (rows per step = GT_MAX*LP = 256)

# ---- bf16 weight slab (width 128) row offsets ---------------------------------
OFF_WOUT = 0                       # S4 output projections        [N_S4*PC, PC]
OFF_W2 = OFF_WOUT + N_S4 * PC      # conv2 taps                   [3*P2C, PC]
OFF_GC1 = OFF_W2 + 3 * P2C         # global-context 1x1 #1 (pad)  [PC, PC]
OFF_GC2 = OFF_GC1 + PC             # global-context 1x1 #2 (pad)  [PC, PC]
WBF128_ROWS = OFF_GC2 + PC         # = 1408

# ---- f32 vector slab (width 128) rows ------------------------------------------
V_LN_IN_W, V_LN_IN_B = 0, 1
V_S4_D = 2                         # 3 rows
V_S4_BOUT = V_S4_D + N_S4          # 3 rows
V_B2 = V_S4_BOUT + N_S4
V_GN2_W, V_GN2_B = V_B2 + 1, V_B2 + 2
V_GC_B1, V_GC_B2 = V_B2 + 3, V_B2 + 4
V_LN_OUT_W, V_LN_OUT_B = V_B2 + 5, V_B2 + 6
VEC128_ROWS = V_LN_OUT_B + 1       # = 15

# ---- f32 vector slab (width 256) rows: 0=b1, 1=gn1_w, 2=gn1_b -------------------
VEC256_ROWS = 3


# ---------------------------- in-kernel helpers -------------------------------
def _gelu(x):
    # TODO(synk): nn.GELU() default is exact erf; tanh approximation used (<1e-3 diff).
    return 0.5 * x * (1.0 + jnp.tanh(0.7978845608028654 * (x + 0.044715 * x * x * x)))


def _sigmoid(x):
    return pl.reciprocal(1.0 + jnp.exp(-x), approx=True)


# ------------------------------- the kernel -----------------------------------
def bottleneck_kernel(x_ref, film_ref, segd_ref, segu_ref, mprev_ref, mnext_ref,
                      kp_ref, w128_ref, w256_ref, pmC_ref, pm2C_ref,
                      v128_ref, v256_ref, o_ref):
    R = x_ref.shape[0]          # Gt * LP rows per step
    Gt = segd_ref.shape[0]
    f32, bf16 = jnp.float32, jnp.bfloat16

    x = x_ref[...].astype(f32)                  # [R, PC]
    residual = x

    seg_down = segd_ref[...]                    # [Gt, R]  (valid-time rows only)
    seg_up = segu_ref[...]                      # [R, Gt]
    m_prev = mprev_ref[...]                     # [R, 1] boundary mask for the t-1 tap
    m_next = mnext_ref[...]                     # [R, 1] boundary mask for the t+1 tap
    pmC = pmC_ref[...]                          # [PC, PC]  per-sample channel-mean projector
    pm2C = pm2C_ref[...]                        # [P2C, P2C]

    def v128(r):
        return v128_ref[r:r + 1, :]

    def v256(r):
        return v256_ref[r:r + 1, :]

    def wdot(lhs, w):                           # bf16 MXU matmul, f32 accumulation
        return jnp.dot(lhs.astype(bf16), w, preferred_element_type=f32)

    def fdot(a, b):                             # f32 matmul (statistics / broadcasts)
        return jnp.dot(a, b, preferred_element_type=f32)

    def layernorm(h, w, b):                     # per row, per sample (block-diag projector)
        m = fdot(h, pmC)
        hc = h - m
        v = fdot(hc * hc, pmC)
        return hc * lax.rsqrt(v + EPS) * w + b

    def groupnorm(h, proj, w, b):               # GroupNorm(1): per sample over (time, chans)
        s1 = fdot(seg_down, h)                  # sum over valid time rows    [Gt, W]
        m = fdot(seg_up, fdot(s1, proj) * (1.0 / L))                        # [R, W]
        hc = h - m
        s2 = fdot(seg_down, hc * hc)
        v = fdot(seg_up, fdot(s2, proj) * (1.0 / L))
        return hc * lax.rsqrt(v + EPS) * w + b

    def shift_prev(h):                          # row r <- h[r-1], zeroed across edges
        z = jnp.zeros((1, h.shape[1]), f32)
        return jnp.concatenate([z, h[:-1, :]], axis=0) * m_prev

    def shift_next(h):                          # row r <- h[r+1], zeroed across edges
        z = jnp.zeros((1, h.shape[1]), f32)
        return jnp.concatenate([h[1:, :], z], axis=0) * m_next

    # ---- input LayerNorm ----
    x = layernorm(x, v128(V_LN_IN_W), v128(V_LN_IN_B))

    # ---- S4 stack with residuals ----
    # TODO(synk): EnhancedS4Layer source unavailable; modeled as bidirectional depthwise
    # long conv (Toeplitz operator, zero outside the valid LxL block) + D*u, GELU, out proj.
    for i in range(N_S4):
        x3 = x.reshape(Gt, LP, PC)              # tile-aligned split (LP = 16)
        conv3 = jnp.zeros((Gt, LP, PC), f32)
        for s in range(L):
            k_s = kp_ref[i * L + s].astype(f32)                  # [LP(t), PC]
            conv3 = conv3 + k_s[None, :, :] * x3[:, s, :][:, None, :]
        conv = conv3.reshape(R, PC)
        z = _gelu(conv + x * v128(V_S4_D + i))
        wout = w128_ref[OFF_WOUT + i * PC:OFF_WOUT + (i + 1) * PC, :]
        x = x + wdot(z, wout) + v128(V_S4_BOUT + i)

    # ---- bottleneck: Conv1d(C->2C, k=3) -> GELU -> GroupNorm(1) ----
    xp_, xn_ = shift_prev(x), shift_next(x)
    h = (wdot(xp_, w256_ref[0:PC, :])
         + wdot(x, w256_ref[PC:2 * PC, :])
         + wdot(xn_, w256_ref[2 * PC:3 * PC, :])
         + v256(0))
    h = _gelu(h)
    h = groupnorm(h, pm2C, v256(1), v256(2))

    # ----             Conv1d(2C->C, k=3) -> GELU -> GroupNorm(1) ----
    hp_, hn_ = shift_prev(h), shift_next(h)
    h = (wdot(hp_, w128_ref[OFF_W2:OFF_W2 + P2C, :])
         + wdot(h, w128_ref[OFF_W2 + P2C:OFF_W2 + 2 * P2C, :])
         + wdot(hn_, w128_ref[OFF_W2 + 2 * P2C:OFF_W2 + 3 * P2C, :])
         + v128(V_B2))
    h = _gelu(h)
    h = groupnorm(h, pmC, v128(V_GN2_W), v128(V_GN2_B))

    # ---- global_context: avg-pool -> 1x1 -> GELU -> 1x1 -> sigmoid; gate h ----
    g = fdot(seg_down, h) * (1.0 / L)                             # [Gt, PC] per-sample mean
    g = _gelu(wdot(g, w128_ref[OFF_GC1:OFF_GC1 + PC, :]) + v128(V_GC_B1))
    g = _sigmoid(wdot(g, w128_ref[OFF_GC2:OFF_GC2 + PC, :]) + v128(V_GC_B2))
    h = h * fdot(seg_up, g)

    # ---- FiLM (gamma/beta precomputed in the wrapper from static_params) ----
    film = film_ref[...]                                          # [Gt, 2, PC]
    h = h * fdot(seg_up, film[:, 0, :]) + fdot(seg_up, film[:, 1, :])

    # ---- output LayerNorm + outer residual ----
    h = layernorm(h, v128(V_LN_OUT_W), v128(V_LN_OUT_B))
    o_ref[...] = (h + residual).astype(o_ref.dtype)


# ------------------------------- parameter init --------------------------------
def init_params(key):
    ks = jax.random.split(key, 16)

    def nrm(k, shape, scale):
        return (scale * jax.random.normal(k, shape)).astype(jnp.float32)

    return [
        jnp.ones((1, C), jnp.float32),                 # ln_in_w
        jnp.zeros((1, C), jnp.float32),                # ln_in_b
        nrm(ks[0], (N_S4, L, C), 0.10),                # s4_kf
        nrm(ks[1], (N_S4, L, C), 0.10),                # s4_kb
        nrm(ks[2], (N_S4, 1, C), 0.50),                # s4_d
        nrm(ks[3], (N_S4, C, C), 0.20),                # s4_wout
        jnp.zeros((N_S4, 1, C), jnp.float32),          # s4_bout
        nrm(ks[4], (3, C, 2 * C), 0.20),               # w1  (conv1: [k, Cin, Cout])
        nrm(ks[5], (1, 2 * C), 0.05),                  # b1
        jnp.ones((1, 2 * C), jnp.float32),             # gn1_w
        jnp.zeros((1, 2 * C), jnp.float32),            # gn1_b
        nrm(ks[6], (3, 2 * C, C), 0.20),               # w2  (conv2)
        nrm(ks[7], (1, C), 0.05),                      # b2
        jnp.ones((1, C), jnp.float32),                 # gn2_w
        jnp.zeros((1, C), jnp.float32),                # gn2_b
        nrm(ks[8], (C, C // 2), 0.30),                 # gc_w1 (1x1 conv)
        jnp.zeros((1, C // 2), jnp.float32),           # gc_b1
        nrm(ks[9], (C // 2, C), 0.30),                 # gc_w2 (1x1 conv)
        jnp.zeros((1, C), jnp.float32),                # gc_b2
        nrm(ks[10], (2 * S, C), 0.20),                 # film_wg
        jnp.zeros((1, C), jnp.float32),                # film_bg
        nrm(ks[11], (2 * S, C), 0.20),                 # film_wb
        jnp.zeros((1, C), jnp.float32),                # film_bb
        jnp.ones((1, C), jnp.float32),                 # ln_out_w
        jnp.zeros((1, C), jnp.float32),                # ln_out_b
    ]


# --------------------- one-time (out-of-jit) parameter packing ------------------
def pack_params(params):
    (ln_in_w, ln_in_b, s4_kf, s4_kb, s4_d, s4_wout, s4_bout,
     w1, b1, gn1_w, gn1_b, w2, b2, gn2_w, gn2_b,
     gc_w1, gc_b1, gc_w2, gc_b2,
     film_wg, film_bg, film_wb, film_bb,
     ln_out_w, ln_out_b) = params

    eyeP = jnp.eye(P, dtype=jnp.float32)

    def bd(w):                                   # [a,b] -> block-diagonal [P*a, P*b]
        return jnp.kron(eyeP, w.astype(jnp.float32))

    def packv(v, width):                         # replicate a per-channel vector per sample
        return jnp.tile(jnp.reshape(v.astype(jnp.float32), (1, width)), (1, P))

    # Toeplitz operators for the bidirectional depthwise long conv (s-major storage).
    # TODO(synk): center tap counted from both directions (kf[0]+kb[0]); same modeling as
    # the previous kernel for the unavailable EnhancedS4Layer.
    t_idx = jnp.arange(LP)[:, None]
    s_idx = jnp.arange(LP)[None, :]
    d = t_idx - s_idx
    valid = (t_idx < L) & (s_idx < L)
    kp_rows = []
    for i in range(N_S4):
        kf, kb = s4_kf[i], s4_kb[i]                                       # [L, C]
        Kf = jnp.where(((d >= 0) & valid)[..., None], kf[jnp.clip(d, 0, L - 1)], 0.0)
        Kb = jnp.where(((d <= 0) & valid)[..., None], kb[jnp.clip(-d, 0, L - 1)], 0.0)
        Ki = jnp.tile(Kf + Kb, (1, 1, P))                                 # [LP, LP, PC]
        kp_rows.append(jnp.transpose(Ki, (1, 0, 2))[:L])                  # [L(s), LP(t), PC]
    kp = jnp.concatenate(kp_rows, axis=0).astype(jnp.bfloat16)            # [N_S4*L, LP, PC]

    # per-sample channel-averaging projectors (block diagonal) kept in f32 for statistics
    pmC = jnp.kron(eyeP, jnp.ones((C, C), jnp.float32) / C)
    pm2C = jnp.kron(eyeP, jnp.ones((2 * C, 2 * C), jnp.float32) / (2 * C))

    # bf16 MXU weight slabs
    wout_bd = jnp.concatenate([bd(s4_wout[i]) for i in range(N_S4)], axis=0)
    w2_bd = jnp.concatenate([bd(w2[k]) for k in range(3)], axis=0)
    gc1_bd = jnp.pad(bd(gc_w1), ((0, 0), (0, PC - P * (C // 2))))
    gc2_bd = jnp.pad(bd(gc_w2), ((0, PC - P * (C // 2)), (0, 0)))
    wbf128 = jnp.concatenate([wout_bd, w2_bd, gc1_bd, gc2_bd],
                             axis=0).astype(jnp.bfloat16)                 # [1408, 128]
    wbf256 = jnp.concatenate([bd(w1[k]) for k in range(3)],
                             axis=0).astype(jnp.bfloat16)                 # [384, 256]

    gc_b1_p = jnp.pad(packv(gc_b1, C // 2), ((0, 0), (0, PC - P * (C // 2))))
    vec128 = jnp.concatenate(
        [packv(ln_in_w, C), packv(ln_in_b, C)]
        + [packv(s4_d[i], C) for i in range(N_S4)]
        + [packv(s4_bout[i], C) for i in range(N_S4)]
        + [packv(b2, C), packv(gn2_w, C), packv(gn2_b, C),
           gc_b1_p, packv(gc_b2, C),
           packv(ln_out_w, C), packv(ln_out_b, C)], axis=0)               # [15, 128]
    vec256 = jnp.concatenate(
        [packv(b1, 2 * C), packv(gn1_w, 2 * C), packv(gn1_b, 2 * C)], axis=0)  # [3, 256]

    # FiLM weights with the cond = concat(s, s) duplication folded (used in the wrapper)
    film_wg_f = (film_wg[:S] + film_wg[S:]).astype(jnp.float32)
    film_wb_f = (film_wb[:S] + film_wb[S:]).astype(jnp.float32)

    return dict(kp=kp, wbf128=wbf128, wbf256=wbf256, pmC=pmC, pm2C=pm2C,
                vec128=vec128, vec256=vec256,
                film_wg=film_wg_f, film_bg=film_bg.astype(jnp.float32),
                film_wb=film_wb_f, film_bb=film_bb.astype(jnp.float32))


# ----------------- static per-step operators (segment sums / masks) -------------
def _build_seg_operators(Gt):
    R = Gt * LP
    r = np.arange(R)
    grp, tt = r // LP, r % LP
    valid = (tt < L).astype(np.float32)
    seg_down = (grp[None, :] == np.arange(Gt)[:, None]).astype(np.float32) * valid[None, :]
    seg_up = (grp[:, None] == np.arange(Gt)[None, :]).astype(np.float32)
    m_prev = (((tt >= 1) & (tt <= L - 1)).astype(np.float32))[:, None]
    m_next = ((tt <= L - 2).astype(np.float32))[:, None]
    return (jnp.asarray(seg_down), jnp.asarray(seg_up),
            jnp.asarray(m_prev), jnp.asarray(m_next))


# ------------------------------- wrapper ---------------------------------------
def optimized_bottleneck_processor(x_ncl, static_params, packed, single_buffer=True,
                                   cfg_guidance_scale=1.0, force_uncond=False):
    """x_ncl: [B, C, L] (PyTorch layout); static_params: [B, S] -> [B, C, L]."""
    del cfg_guidance_scale, force_uncond  # eval-mode defaults (see TODOs at top)
    B = x_ncl.shape[0]
    G = -(-B // P)                                  # lane-packed groups of P samples
    if G <= 1:
        Gt, n_steps = max(G, 1), 1
    else:
        Gt = min(GT_MAX, -(-G // 2))                # keep >=2 grid steps (v7x megacore)
        n_steps = -(-G // Gt)
    G_pad = Gt * n_steps
    B_pad = G_pad * P
    R = Gt * LP

    # pack activations: [B, C, L] -> [G_pad*LP, P*C]   (row = group*LP + t, lane = p*C + c)
    x = jnp.transpose(x_ncl, (0, 2, 1)).astype(jnp.float32)               # [B, L, C]
    x = jnp.pad(x, ((0, B_pad - B), (0, LP - L), (0, 0)))
    xp = x.reshape(G_pad, P, LP, C).transpose(0, 2, 1, 3).reshape(G_pad * LP, PC)

    # FiLM gamma/beta hoisted out of the kernel (depend only on static_params)
    sp = static_params.astype(jnp.float32)
    gamma = sp @ packed["film_wg"] + packed["film_bg"]                     # [B, C]
    beta = sp @ packed["film_wb"] + packed["film_bb"]
    film = jnp.stack([1.0 + gamma, beta], axis=1)                          # [B, 2, C]
    film = jnp.pad(film, ((0, B_pad - B), (0, 0), (0, 0)))
    film = film.reshape(G_pad, P, 2, C).transpose(0, 2, 1, 3).reshape(G_pad, 2, PC)

    seg_down, seg_up, m_prev, m_next = _build_seg_operators(Gt)

    inv_kw = {"pipeline_mode": pl.Buffered(1)} if single_buffer else {}

    def inv_spec(shape):            # grid-invariant input (copied once, single-buffered)
        return pl.BlockSpec(shape, lambda *_: (0,) * len(shape), **inv_kw)

    out = pl.pallas_call(
        bottleneck_kernel,
        out_shape=jax.ShapeDtypeStruct((G_pad * LP, PC), jnp.float32),
        grid=(n_steps,),
        in_specs=[
            pl.BlockSpec((R, PC), lambda g: (g, 0)),                       # activations
            pl.BlockSpec((Gt, 2, PC), lambda g: (g, 0, 0)),                # FiLM (1+gamma, beta)
            inv_spec((Gt, R)),                                             # seg_down
            inv_spec((R, Gt)),                                             # seg_up
            inv_spec((R, 1)),                                              # mask prev-tap
            inv_spec((R, 1)),                                              # mask next-tap
            inv_spec((N_S4 * L, LP, PC)),                                  # Toeplitz stack (bf16)
            inv_spec((WBF128_ROWS, PC)),                                   # bf16 weights, w=128
            inv_spec((3 * PC, P2C)),                                       # bf16 weights, w=256
            inv_spec((PC, PC)),                                            # f32 projector C
            inv_spec((P2C, P2C)),                                          # f32 projector 2C
            inv_spec((VEC128_ROWS, PC)),                                   # f32 vectors, w=128
            inv_spec((VEC256_ROWS, P2C)),                                  # f32 vectors, w=256
        ],
        out_specs=pl.BlockSpec((R, PC), lambda g: (g, 0)),
        compiler_params=pltpu.CompilerParams(dimension_semantics=("parallel",)),
    )(xp, film, seg_down, seg_up, m_prev, m_next,
      packed["kp"], packed["wbf128"], packed["wbf256"], packed["pmC"], packed["pm2C"],
      packed["vec128"], packed["vec256"])

    # unpack: [G_pad*LP, P*C] -> [B, C, L]
    y = out.reshape(G_pad, LP, P, C).transpose(0, 2, 1, 3).reshape(B_pad, LP, C)[:B, :L]
    return jnp.transpose(y, (0, 2, 1))


if __name__ == "__main__":
    key = jax.random.PRNGKey(0)
    kx, ks, kp_ = jax.random.split(key, 3)

    batch = 2
    x = jax.random.normal(kx, (batch, C, L), jnp.float32)            # [B, channels, seq]
    static_params = jax.random.normal(ks, (batch, S), jnp.float32)   # [B, static_dim]
    params = init_params(kp_)
    packed = pack_params(params)          # packed once, outside the per-call jit

    fwd = jax.jit(optimized_bottleneck_processor, static_argnames=("single_buffer",))
    try:
        out = jax.block_until_ready(fwd(x, static_params, packed, single_buffer=True))
    except Exception:
        # fallback if this JAX build rejects pipeline_mode=pl.Buffered(1)
        out = jax.block_until_ready(fwd(x, static_params, packed, single_buffer=False))

    assert out.shape == (batch, C, L)
    assert bool(jnp.all(jnp.isfinite(out)))
    print("KERNEL_OK")
</pallas_src>

<mosaic_0001>
module attributes {stable_mosaic.version = 11 : i64} {
  func.func @bottleneck_kernel(%arg0: i32, %arg1: memref<16x128xf32, #tpu.memory_space<vmem>>, %arg2: memref<1x2x128xf32, #tpu.memory_space<vmem>>, %arg3: memref<1x16xf32, #tpu.memory_space<vmem>>, %arg4: memref<16x1xf32, #tpu.memory_space<vmem>>, %arg5: memref<16x1xf32, #tpu.memory_space<vmem>>, %arg6: memref<16x1xf32, #tpu.memory_space<vmem>>, %arg7: memref<36x16x128xbf16, #tpu.memory_space<vmem>>, %arg8: memref<1408x128xbf16, #tpu.memory_space<vmem>>, %arg9: memref<384x256xbf16, #tpu.memory_space<vmem>>, %arg10: memref<128x128xf32, #tpu.memory_space<vmem>>, %arg11: memref<256x256xf32, #tpu.memory_space<vmem>>, %arg12: memref<15x128xf32, #tpu.memory_space<vmem>>, %arg13: memref<3x256xf32, #tpu.memory_space<vmem>>, %arg14: memref<16x128xf32, #tpu.memory_space<vmem>>) attributes {dimension_semantics = [#tpu.dimension_semantics<parallel>], iteration_bounds = array<i64: 1>, scalar_prefetch = 0 : i64, scratch_operands = 0 : i64, tpu.core_type = #tpu.core_type<tc>, window_params = [{transform_indices = @transform_0, window_bounds = array<i64: 16, 128>}, {transform_indices = @transform_1, window_bounds = array<i64: 1, 2, 128>}, {pipeline_mode = #tpu.pipeline_mode<synchronous>, transform_indices = @transform_2, window_bounds = array<i64: 1, 16>}, {pipeline_mode = #tpu.pipeline_mode<synchronous>, transform_indices = @transform_3, window_bounds = array<i64: 16, 1>}, {pipeline_mode = #tpu.pipeline_mode<synchronous>, transform_indices = @transform_4, window_bounds = array<i64: 16, 1>}, {pipeline_mode = #tpu.pipeline_mode<synchronous>, transform_indices = @transform_5, window_bounds = array<i64: 16, 1>}, {pipeline_mode = #tpu.pipeline_mode<synchronous>, transform_indices = @transform_6, window_bounds = array<i64: 36, 16, 128>}, {pipeline_mode = #tpu.pipeline_mode<synchronous>, transform_indices = @transform_7, window_bounds = array<i64: 1408, 128>}, {pipeline_mode = #tpu.pipeline_mode<synchronous>, transform_indices = @transform_8, window_bounds = array<i64: 384, 256>}, {pipeline_mode = #tpu.pipeline_mode<synchronous>, transform_indices = @transform_9, window_bounds = array<i64: 128, 128>}, {pipeline_mode = #tpu.pipeline_mode<synchronous>, transform_indices = @transform_10, window_bounds = array<i64: 256, 256>}, {pipeline_mode = #tpu.pipeline_mode<synchronous>, transform_indices = @transform_11, window_bounds = array<i64: 15, 128>}, {pipeline_mode = #tpu.pipeline_mode<synchronous>, transform_indices = @transform_12, window_bounds = array<i64: 3, 256>}, {transform_indices = @transform_13, window_bounds = array<i64: 16, 128>}]} {
    %c0 = arith.constant 0 : index
    %c0_0 = arith.constant 0 : index
    %0 = vector.load %arg1[%c0, %c0_0] : memref<16x128xf32, #tpu.memory_space<vmem>>, vector<16x128xf32>
    %c0_1 = arith.constant 0 : index
    %c0_2 = arith.constant 0 : index
    %1 = vector.load %arg3[%c0_1, %c0_2] : memref<1x16xf32, #tpu.memory_space<vmem>>, vector<1x16xf32>
    %c0_3 = arith.constant 0 : index
    %c0_4 = arith.constant 0 : index
    %2 = vector.load %arg4[%c0_3, %c0_4] : memref<16x1xf32, #tpu.memory_space<vmem>>, vector<16x1xf32>
    %c0_5 = arith.constant 0 : index
    %c0_6 = arith.constant 0 : index
    %3 = vector.load %arg5[%c0_5, %c0_6] : memref<16x1xf32, #tpu.memory_space<vmem>>, vector<16x1xf32>
    %c0_7 = arith.constant 0 : index
    %c0_8 = arith.constant 0 : index
    %4 = vector.load %arg6[%c0_7, %c0_8] : memref<16x1xf32, #tpu.memory_space<vmem>>, vector<16x1xf32>
    %c0_9 = arith.constant 0 : index
    %c0_10 = arith.constant 0 : index
    %5 = vector.load %arg10[%c0_9, %c0_10] : memref<128x128xf32, #tpu.memory_space<vmem>>, vector<128x128xf32>
    %c0_11 = arith.constant 0 : index
    %c0_12 = arith.constant 0 : index
    %6 = vector.load %arg11[%c0_11, %c0_12] : memref<256x256xf32, #tpu.memory_space<vmem>>, vector<256x256xf32>
    %c0_13 = arith.constant 0 : index
    %c0_14 = arith.constant 0 : index
    %7 = vector.load %arg12[%c0_13, %c0_14] : memref<15x128xf32, #tpu.memory_space<vmem>>, vector<1x128xf32>
    %c1 = arith.constant 1 : index
    %c0_15 = arith.constant 0 : index
    %8 = vector.load %arg12[%c1, %c0_15] : memref<15x128xf32, #tpu.memory_space<vmem>>, vector<1x128xf32>
    %cst = arith.constant dense<0.000000e+00> : vector<16x128xf32>
    %9 = tpu.matmul %0, %5, %cst {dimension_numbers = #tpu.dot_dimension_numbers<[1], [0], [0], [1], [0, 0, 1, 1], [], []>} : vector<16x128xf32>, vector<128x128xf32>, vector<16x128xf32> -> vector<16x128xf32>
    %10 = arith.subf %0, %9 : vector<16x128xf32>
    %11 = arith.mulf %10, %10 : vector<16x128xf32>
    %cst_16 = arith.constant dense<0.000000e+00> : vector<16x128xf32>
    %12 = tpu.matmul %11, %5, %cst_16 {dimension_numbers = #tpu.dot_dimension_numbers<[1], [0], [0], [1], [0, 0, 1, 1], [], []>} : vector<16x128xf32>, vector<128x128xf32>, vector<16x128xf32> -> vector<16x128xf32>
    %cst_17 = arith.constant 9.99999974E-6 : f32
    %13 = vector.broadcast %cst_17 : f32 to vector<16x128xf32>
    %14 = arith.addf %12, %13 : vector<16x128xf32>
    %15 = math.rsqrt %14 : vector<16x128xf32>
    %16 = arith.mulf %10, %15 : vector<16x128xf32>
    %17 = vector.broadcast %7 : vector<1x128xf32> to vector<16x128xf32>
    %18 = arith.mulf %16, %17 : vector<16x128xf32>
    %19 = vector.broadcast %8 : vector<1x128xf32> to vector<16x128xf32>
    %20 = arith.addf %18, %19 : vector<16x128xf32>
    %21 = vector.shape_cast %20 : vector<16x128xf32> to vector<1x16x128xf32>
    %cst_18 = arith.constant 0.000000e+00 : f32
    %22 = vector.broadcast %cst_18 : f32 to vector<1x16x128xf32>
    %c0_19 = arith.constant 0 : index
    %c0_20 = arith.constant 0 : index
    %c0_21 = arith.constant 0 : index
    %23 = vector.load %arg7[%c0_19, %c0_20, %c0_21] : memref<36x16x128xbf16, #tpu.memory_space<vmem>>, vector<1x16x128xbf16>
    %24 = vector.shape_cast %23 : vector<1x16x128xbf16> to vector<16x128xbf16>
    %25 = arith.extf %24 : vector<16x128xbf16> to vector<16x128xf32>
    %26 = vector.shape_cast %25 : vector<16x128xf32> to vector<1x16x128xf32>
    %27 = vector.extract_strided_slice %21 {offsets = [0, 0, 0], sizes = [1, 1, 128], strides = [1, 1, 1]} : vector<1x16x128xf32> to vector<1x1x128xf32>
    %28 = vector.shape_cast %27 : vector<1x1x128xf32> to vector<1x128xf32>
    %29 = vector.shape_cast %28 : vector<1x128xf32> to vector<1x1x128xf32>
    %30 = vector.broadcast %29 : vector<1x1x128xf32> to vector<1x16x128xf32>
    %31 = arith.mulf %26, %30 : vector<1x16x128xf32>
    %32 = arith.addf %22, %31 : vector<1x16x128xf32>
    %c1_22 = arith.constant 1 : index
    %c0_23 = arith.constant 0 : index
    %c0_24 = arith.constant 0 : index
    %33 = vector.load %arg7[%c1_22, %c0_23, %c0_24] : memref<36x16x128xbf16, #tpu.memory_space<vmem>>, vector<1x16x128xbf16>
    %34 = vector.shape_cast %33 : vector<1x16x128xbf16> to vector<16x128xbf16>
    %35 = arith.extf %34 : vector<16x128xbf16> to vector<16x128xf32>
    %36 = vector.shape_cast %35 : vector<16x128xf32> to vector<1x16x128xf32>
    %37 = vector.extract_strided_slice %21 {offsets = [0, 1, 0], sizes = [1, 1, 128], strides = [1, 1, 1]} : vector<1x16x128xf32> to vector<1x1x128xf32>
    %38 = vector.shape_cast %37 : vector<1x1x128xf32> to vector<1x128xf32>
    %39 = vector.shape_cast %38 : vector<1x128xf32> to vector<1x1x128xf32>
    %40 = vector.broadcast %39 : vector<1x1x128xf32> to vector<1x16x128xf32>
    %41 = arith.mulf %36, %40 : vector<1x16x128xf32>
    %42 = arith.addf %32, %41 : vector<1x16x128xf32>
    %c2 = arith.constant 2 : index
    %c0_25 = arith.constant 0 : index
    %c0_26 = arith.constant 0 : index
    %43 = vector.load %arg7[%c2, %c0_25, %c0_26] : memref<36x16x128xbf16, #tpu.memory_space<vmem>>, vector<1x16x128xbf16>
    %44 = vector.shape_cast %43 : vector<1x16x128xbf16> to vector<16x128xbf16>
    %45 = arith.extf %44 : vector<16x128xbf16> to vector<16x128xf32>
    %46 = vector.shape_cast %45 : vector<16x128xf32> to vector<1x16x128xf32>
    %47 = vector.extract_strided_slice %21 {offsets = [0, 2, 0], sizes = [1, 1, 128], strides = [1, 1, 1]} : vector<1x16x128xf32> to vector<1x1x128xf32>
    %48 = vector.shape_cast %47 : vector<1x1x128xf32> to vector<1x128xf32>
    %49 = vector.shape_cast %48 : vector<1x128xf32> to vector<1x1x128xf32>
    %50 = vector.broadcast %49 : vector<1x1x128xf32> to vector<1x16x128xf32>
    %51 = arith.mulf %46, %50 : vector<1x16x128xf32>
    %52 = arith.addf %42, %51 : vector<1x16x128xf32>
    %c3 = arith.constant 3 : index
    %c0_27 = arith.constant 0 : index
    %c0_28 = arith.constant 0 : index
    %53 = vector.load %arg7[%c3, %c0_27, %c0_28] : memref<36x16x128xbf16, #tpu.memory_space<vmem>>, vector<1x16x128xbf16>
    %54 = vector.shape_cast %53 : vector<1x16x128xbf16> to vector<16x128xbf16>
    %55 = arith.extf %54 : vector<16x128xbf16> to vector<16x128xf32>
    %56 = vector.shape_cast %55 : vector<16x128xf32> to vector<1x16x128xf32>
    %57 = vector.extract_strided_slice %21 {offsets = [0, 3, 0], sizes = [1, 1, 128], strides = [1, 1, 1]} : vector<1x16x128xf32> to vector<1x1x128xf32>
    %58 = vector.shape_cast %57 : vector<1x1x128xf32> to vector<1x128xf32>
    %59 = vector.shape_cast %58 : vector<1x128xf32> to vector<1x1x128xf32>
    %60 = vector.broadcast %59 : vector<1x1x128xf32> to vector<1x16x128xf32>
    %61 = arith.mulf %56, %60 : vector<1x16x128xf32>
    %62 = arith.addf %52, %61 : vector<1x16x128xf32>
    %c4 = arith.constant 4 : index
    %c0_29 = arith.constant 0 : index
    %c0_30 = arith.constant 0 : index
    %63 = vector.load %arg7[%c4, %c0_29, %c0_30] : memref<36x16x128xbf16, #tpu.memory_space<vmem>>, vector<1x16x128xbf16>
    %64 = vector.shape_cast %63 : vector<1x16x128xbf16> to vector<16x128xbf16>
    %65 = arith.extf %64 : vector<16x128xbf16> to vector<16x128xf32>
    %66 = vector.shape_cast %65 : vector<16x128xf32> to vector<1x16x128xf32>
    %67 = vector.extract_strided_slice %21 {offsets = [0, 4, 0], sizes = [1, 1, 128], strides = [1, 1, 1]} : vector<1x16x128xf32> to vector<1x1x128xf32>
    %68 = vector.shape_cast %67 : vector<1x1x128xf32> to vector<1x128xf32>
    %69 = vector.shape_cast %68 : vector<1x128xf32> to vector<1x1x128xf32>
    %70 = vector.broadcast %69 : vector<1x1x128xf32> to vector<1x16x128xf32>
    %71 = arith.mulf %66, %70 : vector<1x16x128xf32>
    %72 = arith.addf %62, %71 : vector<1x16x128xf32>
    %c5 = arith.constant 5 : index
    %c0_31 = arith.constant 0 : index
    %c0_32 = arith.constant 0 : index
    %73 = vector.load %arg7[%c5, %c0_31, %c0_32] : memref<36x16x128xbf16, #tpu.memory_space<vmem>>, vector<1x16x128xbf16>
    %74 = vector.shape_cast %73 : vector<1x16x128xbf16> to vector<16x128xbf16>
    %75 = arith.extf %74 : vector<16x128xbf16> to vector<16x128xf32>
    %76 = vector.shape_cast %75 : vector<16x128xf32> to vector<1x16x128xf32>
    %77 = vector.extract_strided_slice %21 {offsets = [0, 5, 0], sizes = [1, 1, 128], strides = [1, 1, 1]} : vector<1x16x128xf32> to vector<1x1x128xf32>
    %78 = vector.shape_cast %77 : vector<1x1x128xf32> to vector<1x128xf32>
    %79 = vector.shape_cast %78 : vector<1x128xf32> to vector<1x1x128xf32>
    %80 = vector.broadcast %79 : vector<1x1x128xf32> to vector<1x16x128xf32>
    %81 = arith.mulf %76, %80 : vector<1x16x128xf32>
    %82 = arith.addf %72, %81 : vector<1x16x128xf32>
    %c6 = arith.constant 6 : index
    %c0_33 = arith.constant 0 : index
    %c0_34 = arith.constant 0 : index
    %83 = vector.load %arg7[%c6, %c0_33, %c0_34] : memref<36x16x128xbf16, #tpu.memory_space<vmem>>, vector<1x16x128xbf16>
    %84 = vector.shape_cast %83 : vector<1x16x128xbf16> to vector<16x128xbf16>
    %85 = arith.extf %84 : vector<16x128xbf16> to vector<16x128xf32>
    %86 = vector.shape_cast %85 : vector<16x128xf32> to vector<1x16x128xf32>
    %87 = vector.extract_strided_slice %21 {offsets = [0, 6, 0], sizes = [1, 1, 128], strides = [1, 1, 1]} : vector<1x16x128xf32> to vector<1x1x128xf32>
    %88 = vector.shape_cast %87 : vector<1x1x128xf32> to vector<1x128xf32>
    %89 = vector.shape_cast %88 : vector<1x128xf32> to vector<1x1x128xf32>
    %90 = vector.broadcast %89 : vector<1x1x128xf32> to vector<1x16x128xf32>
    %91 = arith.mulf %86, %90 : vector<1x16x128xf32>
    %92 = arith.addf %82, %91 : vector<1x16x128xf32>
    %c7 = arith.constant 7 : index
    %c0_35 = arith.constant 0 : index
    %c0_36 = arith.constant 0 : index
    %93 = vector.load %arg7[%c7, %c0_35, %c0_36] : memref<36x16x128xbf16, #tpu.memory_space<vmem>>, vector<1x16x128xbf16>
    %94 = vector.shape_cast %93 : vector<1x16x128xbf16> to vector<16x128xbf16>
    %95 = arith.extf %94 : vector<16x128xbf16> to vector<16x128xf32>
    %96 = vector.shape_cast %95 : vector<16x128xf32> to vector<1x16x128xf32>
    %97 = vector.extract_strided_slice %21 {offsets = [0, 7, 0], sizes = [1, 1, 128], strides = [1, 1, 1]} : vector<1x16x128xf32> to vector<1x1x128xf32>
    %98 = vector.shape_cast %97 : vector<1x1x128xf32> to vector<1x128xf32>
    %99 = vector.shape_cast %98 : vector<1x128xf32> to vector<1x1x128xf32>
    %100 = vector.broadcast %99 : vector<1x1x128xf32> to vector<1x16x128xf32>
    %101 = arith.mulf %96, %100 : vector<1x16x128xf32>
    %102 = arith.addf %92, %101 : vector<1x16x128xf32>
    %c8 = arith.constant 8 : index
    %c0_37 = arith.constant 0 : index
    %c0_38 = arith.constant 0 : index
    %103 = vector.load %arg7[%c8, %c0_37, %c0_38] : memref<36x16x128xbf16, #tpu.memory_space<vmem>>, vector<1x16x128xbf16>
    %104 = vector.shape_cast %103 : vector<1x16x128xbf16> to vector<16x128xbf16>
    %105 = arith.extf %104 : vector<16x128xbf16> to vector<16x128xf32>
    %106 = vector.shape_cast %105 : vector<16x128xf32> to vector<1x16x128xf32>
    %107 = vector.extract_strided_slice %21 {offsets = [0, 8, 0], sizes = [1, 1, 128], strides = [1, 1, 1]} : vector<1x16x128xf32> to vector<1x1x128xf32>
    %108 = vector.shape_cast %107 : vector<1x1x128xf32> to vector<1x128xf32>
    %109 = vector.shape_cast %108 : vector<1x128xf32> to vector<1x1x128xf32>
    %110 = vector.broadcast %109 : vector<1x1x128xf32> to vector<1x16x128xf32>
    %111 = arith.mulf %106, %110 : vector<1x16x128xf32>
    %112 = arith.addf %102, %111 : vector<1x16x128xf32>
    %c9 = arith.constant 9 : index
    %c0_39 = arith.constant 0 : index
    %c0_40 = arith.constant 0 : index
    %113 = vector.load %arg7[%c9, %c0_39, %c0_40] : memref<36x16x128xbf16, #tpu.memory_space<vmem>>, vector<1x16x128xbf16>
    %114 = vector.shape_cast %113 : vector<1x16x128xbf16> to vector<16x128xbf16>
    %115 = arith.extf %114 : vector<16x128xbf16> to vector<16x128xf32>
    %116 = vector.shape_cast %115 : vector<16x128xf32> to vector<1x16x128xf32>
    %117 = vector.extract_strided_slice %21 {offsets = [0, 9, 0], sizes = [1, 1, 128], strides = [1, 1, 1]} : vector<1x16x128xf32> to vector<1x1x128xf32>
    %118 = vector.shape_cast %117 : vector<1x1x128xf32> to vector<1x128xf32>
    %119 = vector.shape_cast %118 : vector<1x128xf32> to vector<1x1x128xf32>
    %120 = vector.broadcast %119 : vector<1x1x128xf32> to vector<1x16x128xf32>
    %121 = arith.mulf %116, %120 : vector<1x16x128xf32>
    %122 = arith.addf %112, %121 : vector<1x16x128xf32>
    %c10 = arith.constant 10 : index
    %c0_41 = arith.constant 0 : index
    %c0_42 = arith.constant 0 : index
    %123 = vector.load %arg7[%c10, %c0_41, %c0_42] : memref<36x16x128xbf16, #tpu.memory_space<vmem>>, vector<1x16x128xbf16>
    %124 = vector.shape_cast %123 : vector<1x16x128xbf16> to vector<16x128xbf16>
    %125 = arith.extf %124 : vector<16x128xbf16> to vector<16x128xf32>
    %126 = vector.shape_cast %125 : vector<16x128xf32> to vector<1x16x128xf32>
    %127 = vector.extract_strided_slice %21 {offsets = [0, 10, 0], sizes = [1, 1, 128], strides = [1, 1, 1]} : vector<1x16x128xf32> to vector<1x1x128xf32>
    %128 = vector.shape_cast %127 : vector<1x1x128xf32> to vector<1x128xf32>
    %129 = vector.shape_cast %128 : vector<1x128xf32> to vector<1x1x128xf32>
    %130 = vector.broadcast %129 : vector<1x1x128xf32> to vector<1x16x128xf32>
    %131 = arith.mulf %126, %130 : vector<1x16x128xf32>
    %132 = arith.addf %122, %131 : vector<1x16x128xf32>
    %c11 = arith.constant 11 : index
    %c0_43 = arith.constant 0 : index
    %c0_44 = arith.constant 0 : index
    %133 = vector.load %arg7[%c11, %c0_43, %c0_44] : memref<36x16x128xbf16, #tpu.memory_space<vmem>>, vector<1x16x128xbf16>
    %134 = vector.shape_cast %133 : vector<1x16x128xbf16> to vector<16x128xbf16>
    %135 = arith.extf %134 : vector<16x128xbf16> to vector<16x128xf32>
    %136 = vector.shape_cast %135 : vector<16x128xf32> to vector<1x16x128xf32>
    %137 = vector.extract_strided_slice %21 {offsets = [0, 11, 0], sizes = [1, 1, 128], strides = [1, 1, 1]} : vector<1x16x128xf32> to vector<1x1x128xf32>
    %138 = vector.shape_cast %137 : vector<1x1x128xf32> to vector<1x128xf32>
    %139 = vector.shape_cast %138 : vector<1x128xf32> to vector<1x1x128xf32>
    %140 = vector.broadcast %139 : vector<1x1x128xf32> to vector<1x16x128xf32>
    %141 = arith.mulf %136, %140 : vector<1x16x128xf32>
    %142 = arith.addf %132, %141 : vector<1x16x128xf32>
    %143 = vector.shape_cast %142 : vector<1x16x128xf32> to vector<16x128xf32>
    %c2_45 = arith.constant 2 : index
    %c0_46 = arith.constant 0 : index
    %144 = vector.load %arg12[%c2_45, %c0_46] : memref<15x128xf32, #tpu.memory_space<vmem>>, vector<1x128xf32>
    %145 = vector.broadcast %144 : vector<1x128xf32> to vector<16x128xf32>
    %146 = arith.mulf %20, %145 : vector<16x128xf32>
    %147 = arith.addf %143, %146 : vector<16x128xf32>
    %cst_47 = arith.constant 5.000000e-01 : f32
    %148 = vector.broadcast %cst_47 : f32 to vector<16x128xf32>
    %149 = arith.mulf %148, %147 : vector<16x128xf32>
    %cst_48 = arith.constant 4.471500e-02 : f32
    %150 = vector.broadcast %cst_48 : f32 to vector<16x128xf32>
    %151 = arith.mulf %150, %147 : vector<16x128xf32>
    %152 = arith.mulf %151, %147 : vector<16x128xf32>
    %153 = arith.mulf %152, %147 : vector<16x128xf32>
    %154 = arith.addf %147, %153 : vector<16x128xf32>
    %cst_49 = arith.constant 0.797884583 : f32
    %155 = vector.broadcast %cst_49 : f32 to vector<16x128xf32>
    %156 = arith.mulf %155, %154 : vector<16x128xf32>
    %157 = math.tanh %156 : vector<16x128xf32>
    %cst_50 = arith.constant 1.000000e+00 : f32
    %158 = vector.broadcast %cst_50 : f32 to vector<16x128xf32>
    %159 = arith.addf %158, %157 : vector<16x128xf32>
    %160 = arith.mulf %149, %159 : vector<16x128xf32>
    %c0_51 = arith.constant 0 : index
    %c0_52 = arith.constant 0 : index
    %161 = vector.load %arg8[%c0_51, %c0_52] : memref<1408x128xbf16, #tpu.memory_space<vmem>>, vector<128x128xbf16>
    %162 = arith.truncf %160 : vector<16x128xf32> to vector<16x128xbf16>
    %cst_53 = arith.constant dense<0.000000e+00> : vector<16x128xf32>
    %163 = tpu.matmul %162, %161, %cst_53 {dimension_numbers = #tpu.dot_dimension_numbers<[1], [0], [0], [1], [0, 0, 1, 1], [], []>} : vector<16x128xbf16>, vector<128x128xbf16>, vector<16x128xf32> -> vector<16x128xf32>
    %164 = arith.addf %20, %163 : vector<16x128xf32>
    %c5_54 = arith.constant 5 : index
    %c0_55 = arith.constant 0 : index
    %165 = vector.load %arg12[%c5_54, %c0_55] : memref<15x128xf32, #tpu.memory_space<vmem>>, vector<1x128xf32>
    %166 = vector.broadcast %165 : vector<1x128xf32> to vector<16x128xf32>
    %167 = arith.addf %164, %166 : vector<16x128xf32>
    %168 = vector.shape_cast %167 : vector<16x128xf32> to vector<1x16x128xf32>
    %cst_56 = arith.constant 0.000000e+00 : f32
    %169 = vector.broadcast %cst_56 : f32 to vector<1x16x128xf32>
    %c12 = arith.constant 12 : index
    %c0_57 = arith.constant 0 : index
    %c0_58 = arith.constant 0 : index
    %170 = vector.load %arg7[%c12, %c0_57, %c0_58] : memref<36x16x128xbf16, #tpu.memory_space<vmem>>, vector<1x16x128xbf16>
    %171 = vector.shape_cast %170 : vector<1x16x128xbf16> to vector<16x128xbf16>
    %172 = arith.extf %171 : vector<16x128xbf16> to vector<16x128xf32>
    %173 = vector.shape_cast %172 : vector<16x128xf32> to vector<1x16x128xf32>
    %174 = vector.extract_strided_slice %168 {offsets = [0, 0, 0], sizes = [1, 1, 128], strides = [1, 1, 1]} : vector<1x16x128xf32> to vector<1x1x128xf32>
    %175 = vector.shape_cast %174 : vector<1x1x128xf32> to vector<1x128xf32>
    %176 = vector.shape_cast %175 : vector<1x128xf32> to vector<1x1x128xf32>
    %177 = vector.broadcast %176 : vector<1x1x128xf32> to vector<1x16x128xf32>
    %178 = arith.mulf %173, %177 : vector<1x16x128xf32>
    %179 = arith.addf %169, %178 : vector<1x16x128xf32>
    %c13 = arith.constant 13 : index
    %c0_59 = arith.constant 0 : index
    %c0_60 = arith.constant 0 : index
    %180 = vector.load %arg7[%c13, %c0_59, %c0_60] : memref<36x16x128xbf16, #tpu.memory_space<vmem>>, vector<1x16x128xbf16>
    %181 = vector.shape_cast %180 : vector<1x16x128xbf16> to vector<16x128xbf16>
    %182 = arith.extf %181 : vector<16x128xbf16> to vector<16x128xf32>
    %183 = vector.shape_cast %182 : vector<16x128xf32> to vector<1x16x128xf32>
    %184 = vector.extract_strided_slice %168 {offsets = [0, 1, 0], sizes = [1, 1, 128], strides = [1, 1, 1]} : vector<1x16x128xf32> to vector<1x1x128xf32>
    %185 = vector.shape_cast %184 : vector<1x1x128xf32> to vector<1x128xf32>
    %186 = vector.shape_cast %185 : vector<1x128xf32> to vector<1x1x128xf32>
    %187 = vector.broadcast %186 : vector<1x1x128xf32> to vector<1x16x128xf32>
    %188 = arith.mulf %183, %187 : vector<1x16x128xf32>
    %189 = arith.addf %179, %188 : vector<1x16x128xf32>
    %c14 = arith.constant 14 : index
    %c0_61 = arith.constant 0 : index
    %c0_62 = arith.constant 0 : index
    %190 = vector.load %arg7[%c14, %c0_61, %c0_62] : memref<36x16x128xbf16, #tpu.memory_space<vmem>>, vector<1x16x128xbf16>
    %191 = vector.shape_cast %190 : vector<1x16x128xbf16> to vector<16x128xbf16>
    %192 = arith.extf %191 : vector<16x128xbf16> to vector<16x128xf32>
    %193 = vector.shape_cast %192 : vector<16x128xf32> to vector<1x16x128xf32>
    %194 = vector.extract_strided_slice %168 {offsets = [0, 2, 0], sizes = [1, 1, 128], strides = [1, 1, 1]} : vector<1x16x128xf32> to vector<1x1x128xf32>
    %195 = vector.shape_cast %194 : vector<1x1x128xf32> to vector<1x128xf32>
    %196 = vector.shape_cast %195 : vector<1x128xf32> to vector<1x1x128xf32>
    %197 = vector.broadcast %196 : vector<1x1x128xf32> to vector<1x16x128xf32>
    %198 = arith.mulf %193, %197 : vector<1x16x128xf32>
    %199 = arith.addf %189, %198 : vector<1x16x128xf32>
    %c15 = arith.constant 15 : index
    %c0_63 = arith.constant 0 : index
    %c0_64 = arith.constant 0 : index
    %200 = vector.load %arg7[%c15, %c0_63, %c0_64] : memref<36x16x128xbf16, #tpu.memory_space<vmem>>, vector<1x16x128xbf16>
    %201 = vector.shape_cast %200 : vector<1x16x128xbf16> to vector<16x128xbf16>
    %202 = arith.extf %201 : vector<16x128xbf16> to vector<16x128xf32>
    %203 = vector.shape_cast %202 : vector<16x128xf32> to vector<1x16x128xf32>
    %204 = vector.extract_strided_slice %168 {offsets = [0, 3, 0], sizes = [1, 1, 128], strides = [1, 1, 1]} : vector<1x16x128xf32> to vector<1x1x128xf32>
    %205 = vector.shape_cast %204 : vector<1x1x128xf32> to vector<1x128xf32>
    %206 = vector.shape_cast %205 : vector<1x128xf32> to vector<1x1x128xf32>
    %207 = vector.broadcast %206 : vector<1x1x128xf32> to vector<1x16x128xf32>
    %208 = arith.mulf %203, %207 : vector<1x16x128xf32>
    %209 = arith.addf %199, %208 : vector<1x16x128xf32>
    %c16 = arith.constant 16 : index
    %c0_65 = arith.constant 0 : index
    %c0_66 = arith.constant 0 : index
    %210 = vector.load %arg7[%c16, %c0_65, %c0_66] : memref<36x16x128xbf16, #tpu.memory_space<vmem>>, vector<1x16x128xbf16>
    %211 = vector.shape_cast %210 : vector<1x16x128xbf16> to vector<16x128xbf16>
    %212 = arith.extf %211 : vector<16x128xbf16> to vector<16x128xf32>
    %213 = vector.shape_cast %212 : vector<16x128xf32> to vector<1x16x128xf32>
    %214 = vector.extract_strided_slice %168 {offsets = [0, 4, 0], sizes = [1, 1, 128], strides = [1, 1, 1]} : vector<1x16x128xf32> to vector<1x1x128xf32>
    %215 = vector.shape_cast %214 : vector<1x1x128xf32> to vector<1x128xf32>
    %216 = vector.shape_cast %215 : vector<1x128xf32> to vector<1x1x128xf32>
    %217 = vector.broadcast %216 : vector<1x1x128xf32> to vector<1x16x128xf32>
    %218 = arith.mulf %213, %217 : vector<1x16x128xf32>
    %219 = arith.addf %209, %218 : vector<1x16x128xf32>
    %c17 = arith.constant 17 : index
    %c0_67 = arith.constant 0 : index
    %c0_68 = arith.constant 0 : index
    %220 = vector.load %arg7[%c17, %c0_67, %c0_68] : memref<36x16x128xbf16, #tpu.memory_space<vmem>>, vector<1x16x128xbf16>
    %221 = vector.shape_cast %220 : vector<1x16x128xbf16> to vector<16x128xbf16>
    %222 = arith.extf %221 : vector<16x128xbf16> to vector<16x128xf32>
    %223 = vector.shape_cast %222 : vector<16x128xf32> to vector<1x16x128xf32>
    %224 = vector.extract_strided_slice %168 {offsets = [0, 5, 0], sizes = [1, 1, 128], strides = [1, 1, 1]} : vector<1x16x128xf32> to vector<1x1x128xf32>
    %225 = vector.shape_cast %224 : vector<1x1x128xf32> to vector<1x128xf32>
    %226 = vector.shape_cast %225 : vector<1x128xf32> to vector<1x1x128xf32>
    %227 = vector.broadcast %226 : vector<1x1x128xf32> to vector<1x16x128xf32>
    %228 = arith.mulf %223, %227 : vector<1x16x128xf32>
    %229 = arith.addf %219, %228 : vector<1x16x128xf32>
    %c18 = arith.constant 18 : index
    %c0_69 = arith.constant 0 : index
    %c0_70 = arith.constant 0 : index
    %230 = vector.load %arg7[%c18, %c0_69, %c0_70] : memref<36x16x128xbf16, #tpu.memory_space<vmem>>, vector<1x16x128xbf16>
    %231 = vector.shape_cast %230 : vector<1x16x128xbf16> to vector<16x128xbf16>
    %232 = arith.extf %231 : vector<16x128xbf16> to vector<16x128xf32>
    %233 = vector.shape_cast %232 : vector<16x128xf32> to vector<1x16x128xf32>
    %234 = vector.extract_strided_slice %168 {offsets = [0, 6, 0], sizes = [1, 1, 128], strides = [1, 1, 1]} : vector<1x16x128xf32> to vector<1x1x128xf32>
    %235 = vector.shape_cast %234 : vector<1x1x128xf32> to vector<1x128xf32>
    %236 = vector.shape_cast %235 : vector<1x128xf32> to vector<1x1x128xf32>
    %237 = vector.broadcast %236 : vector<1x1x128xf32> to vector<1x16x128xf32>
    %238 = arith.mulf %233, %237 : vector<1x16x128xf32>
    %239 = arith.addf %229, %238 : vector<1x16x128xf32>
    %c19 = arith.constant 19 : index
    %c0_71 = arith.constant 0 : index
    %c0_72 = arith.constant 0 : index
    %240 = vector.load %arg7[%c19, %c0_71, %c0_72] : memref<36x16x128xbf16, #tpu.memory_space<vmem>>, vector<1x16x128xbf16>
    %241 = vector.shape_cast %240 : vector<1x16x128xbf16> to vector<16x128xbf16>
    %242 = arith.extf %241 : vector<16x128xbf16> to vector<16x128xf32>
    %243 = vector.shape_cast %242 : vector<16x128xf32> to vector<1x16x128xf32>
    %244 = vector.extract_strided_slice %168 {offsets = [0, 7, 0], sizes = [1, 1, 128], strides = [1, 1, 1]} : vector<1x16x128xf32> to vector<1x1x128xf32>
    %245 = vector.shape_cast %244 : vector<1x1x128xf32> to vector<1x128xf32>
    %246 = vector.shape_cast %245 : vector<1x128xf32> to vector<1x1x128xf32>
    %247 = vector.broadcast %246 : vector<1x1x128xf32> to vector<1x16x128xf32>
    %248 = arith.mulf %243, %247 : vector<1x16x128xf32>
    %249 = arith.addf %239, %248 : vector<1x16x128xf32>
    %c20 = arith.constant 20 : index
    %c0_73 = arith.constant 0 : index
    %c0_74 = arith.constant 0 : index
    %250 = vector.load %arg7[%c20, %c0_73, %c0_74] : memref<36x16x128xbf16, #tpu.memory_space<vmem>>, vector<1x16x128xbf16>
    %251 = vector.shape_cast %250 : vector<1x16x128xbf16> to vector<16x128xbf16>
    %252 = arith.extf %251 : vector<16x128xbf16> to vector<16x128xf32>
    %253 = vector.shape_cast %252 : vector<16x128xf32> to vector<1x16x128xf32>
    %254 = vector.extract_strided_slice %168 {offsets = [0, 8, 0], sizes = [1, 1, 128], strides = [1, 1, 1]} : vector<1x16x128xf32> to vector<1x1x128xf32>
    %255 = vector.shape_cast %254 : vector<1x1x128xf32> to vector<1x128xf32>
    %256 = vector.shape_cast %255 : vector<1x128xf32> to vector<1x1x128xf32>
    %257 = vector.broadcast %256 : vector<1x1x128xf32> to vector<1x16x128xf32>
    %258 = arith.mulf %253, %257 : vector<1x16x128xf32>
    %259 = arith.addf %249, %258 : vector<1x16x128xf32>
    %c21 = arith.constant 21 : index
    %c0_75 = arith.constant 0 : index
    %c0_76 = arith.constant 0 : index
    %260 = vector.load %arg7[%c21, %c0_75, %c0_76] : memref<36x16x128xbf16, #tpu.memory_space<vmem>>, vector<1x16x128xbf16>
    %261 = vector.shape_cast %260 : vector<1x16x128xbf16> to vector<16x128xbf16>
    %262 = arith.extf %261 : vector<16x128xbf16> to vector<16x128xf32>
    %263 = vector.shape_cast %262 : vector<16x128xf32> to vector<1x16x128xf32>
    %264 = vector.extract_strided_slice %168 {offsets = [0, 9, 0], sizes = [1, 1, 128], strides = [1, 1, 1]} : vector<1x16x128xf32> to vector<1x1x128xf32>
    %265 = vector.shape_cast %264 : vector<1x1x128xf32> to vector<1x128xf32>
    %266 = vector.shape_cast %265 : vector<1x128xf32> to vector<1x1x128xf32>
    %267 = vector.broadcast %266 : vector<1x1x128xf32> to vector<1x16x128xf32>
    %268 = arith.mulf %263, %267 : vector<1x16x128xf32>
    %269 = arith.addf %259, %268 : vector<1x16x128xf32>
    %c22 = arith.constant 22 : index
    %c0_77 = arith.constant 0 : index
    %c0_78 = arith.constant 0 : index
    %270 = vector.load %arg7[%c22, %c0_77, %c0_78] : memref<36x16x128xbf16, #tpu.memory_space<vmem>>, vector<1x16x128xbf16>
    %271 = vector.shape_cast %270 : vector<1x16x128xbf16> to vector<16x128xbf16>
    %272 = arith.extf %271 : vector<16x128xbf16> to vector<16x128xf32>
    %273 = vector.shape_cast %272 : vector<16x128xf32> to vector<1x16x128xf32>
    %274 = vector.extract_strided_slice %168 {offsets = [0, 10, 0], sizes = [1, 1, 128], strides = [1, 1, 1]} : vector<1x16x128xf32> to vector<1x1x128xf32>
    %275 = vector.shape_cast %274 : vector<1x1x128xf32> to vector<1x128xf32>
    %276 = vector.shape_cast %275 : vector<1x128xf32> to vector<1x1x128xf32>
    %277 = vector.broadcast %276 : vector<1x1x128xf32> to vector<1x16x128xf32>
    %278 = arith.mulf %273, %277 : vector<1x16x128xf32>
    %279 = arith.addf %269, %278 : vector<1x16x128xf32>
    %c23 = arith.constant 23 : index
    %c0_79 = arith.constant 0 : index
    %c0_80 = arith.constant 0 : index
    %280 = vector.load %arg7[%c23, %c0_79, %c0_80] : memref<36x16x128xbf16, #tpu.memory_space<vmem>>, vector<1x16x128xbf16>
    %281 = vector.shape_cast %280 : vector<1x16x128xbf16> to vector<16x128xbf16>
    %282 = arith.extf %281 : vector<16x128xbf16> to vector<16x128xf32>
    %283 = vector.shape_cast %282 : vector<16x128xf32> to vector<1x16x128xf32>
    %284 = vector.extract_strided_slice %168 {offsets = [0, 11, 0], sizes = [1, 1, 128], strides = [1, 1, 1]} : vector<1x16x128xf32> to vector<1x1x128xf32>
    %285 = vector.shape_cast %284 : vector<1x1x128xf32> to vector<1x128xf32>
    %286 = vector.shape_cast %285 : vector<1x128xf32> to vector<1x1x128xf32>
    %287 = vector.broadcast %286 : vector<1x1x128xf32> to vector<1x16x128xf32>
    %288 = arith.mulf %283, %287 : vector<1x16x128xf32>
    %289 = arith.addf %279, %288 : vector<1x16x128xf32>
    %290 = vector.shape_cast %289 : vector<1x16x128xf32> to vector<16x128xf32>
    %c3_81 = arith.constant 3 : index
    %c0_82 = arith.constant 0 : index
    %291 = vector.load %arg12[%c3_81, %c0_82] : memref<15x128xf32, #tpu.memory_space<vmem>>, vector<1x128xf32>
    %292 = vector.broadcast %291 : vector<1x128xf32> to vector<16x128xf32>
    %293 = arith.mulf %167, %292 : vector<16x128xf32>
    %294 = arith.addf %290, %293 : vector<16x128xf32>
    %cst_83 = arith.constant 5.000000e-01 : f32
    %295 = vector.broadcast %cst_83 : f32 to vector<16x128xf32>
    %296 = arith.mulf %295, %294 : vector<16x128xf32>
    %cst_84 = arith.constant 4.471500e-02 : f32
    %297 = vector.broadcast %cst_84 : f32 to vector<16x128xf32>
    %298 = arith.mulf %297, %294 : vector<16x128xf32>
    %299 = arith.mulf %298, %294 : vector<16x128xf32>
    %300 = arith.mulf %299, %294 : vector<16x128xf32>
    %301 = arith.addf %294, %300 : vector<16x128xf32>
    %cst_85 = arith.constant 0.797884583 : f32
    %302 = vector.broadcast %cst_85 : f32 to vector<16x128xf32>
    %303 = arith.mulf %302, %301 : vector<16x128xf32>
    %304 = math.tanh %303 : vector<16x128xf32>
    %cst_86 = arith.constant 1.000000e+00 : f32
    %305 = vector.broadcast %cst_86 : f32 to vector<16x128xf32>
    %306 = arith.addf %305, %304 : vector<16x128xf32>
    %307 = arith.mulf %296, %306 : vector<16x128xf32>
    %c128 = arith.constant 128 : index
    %c0_87 = arith.constant 0 : index
    %308 = vector.load %arg8[%c128, %c0_87] : memref<1408x128xbf16, #tpu.memory_space<vmem>>, vector<128x128xbf16>
    %309 = arith.truncf %307 : vector<16x128xf32> to vector<16x128xbf16>
    %cst_88 = arith.constant dense<0.000000e+00> : vector<16x128xf32>
    %310 = tpu.matmul %309, %308, %cst_88 {dimension_numbers = #tpu.dot_dimension_numbers<[1], [0], [0], [1], [0, 0, 1, 1], [], []>} : vector<16x128xbf16>, vector<128x128xbf16>, vector<16x128xf32> -> vector<16x128xf32>
    %311 = arith.addf %167, %310 : vector<16x128xf32>
    %c6_89 = arith.constant 6 : index
    %c0_90 = arith.constant 0 : index
    %312 = vector.load %arg12[%c6_89, %c0_90] : memref<15x128xf32, #tpu.memory_space<vmem>>, vector<1x128xf32>
    %313 = vector.broadcast %312 : vector<1x128xf32> to vector<16x128xf32>
    %314 = arith.addf %311, %313 : vector<16x128xf32>
    %315 = vector.shape_cast %314 : vector<16x128xf32> to vector<1x16x128xf32>
    %cst_91 = arith.constant 0.000000e+00 : f32
    %316 = vector.broadcast %cst_91 : f32 to vector<1x16x128xf32>
    %c24 = arith.constant 24 : index
    %c0_92 = arith.constant 0 : index
    %c0_93 = arith.constant 0 : index
    %317 = vector.load %arg7[%c24, %c0_92, %c0_93] : memref<36x16x128xbf16, #tpu.memory_space<vmem>>, vector<1x16x128xbf16>
    %318 = vector.shape_cast %317 : vector<1x16x128xbf16> to vector<16x128xbf16>
    %319 = arith.extf %318 : vector<16x128xbf16> to vector<16x128xf32>
    %320 = vector.shape_cast %319 : vector<16x128xf32> to vector<1x16x128xf32>
    %321 = vector.extract_strided_slice %315 {offsets = [0, 0, 0], sizes = [1, 1, 128], strides = [1, 1, 1]} : vector<1x16x128xf32> to vector<1x1x128xf32>
    %322 = vector.shape_cast %321 : vector<1x1x128xf32> to vector<1x128xf32>
    %323 = vector.shape_cast %322 : vector<1x128xf32> to vector<1x1x128xf32>
    %324 = vector.broadcast %323 : vector<1x1x128xf32> to vector<1x16x128xf32>
    %325 = arith.mulf %320, %324 : vector<1x16x128xf32>
    %326 = arith.addf %316, %325 : vector<1x16x128xf32>
    %c25 = arith.constant 25 : index
    %c0_94 = arith.constant 0 : index
    %c0_95 = arith.constant 0 : index
    %327 = vector.load %arg7[%c25, %c0_94, %c0_95] : memref<36x16x128xbf16, #tpu.memory_space<vmem>>, vector<1x16x128xbf16>
    %328 = vector.shape_cast %327 : vector<1x16x128xbf16> to vector<16x128xbf16>
    %329 = arith.extf %328 : vector<16x128xbf16> to vector<16x128xf32>
    %330 = vector.shape_cast %329 : vector<16x128xf32> to vector<1x16x128xf32>
    %331 = vector.extract_strided_slice %315 {offsets = [0, 1, 0], sizes = [1, 1, 128], strides = [1, 1, 1]} : vector<1x16x128xf32> to vector<1x1x128xf32>
    %332 = vector.shape_cast %331 : vector<1x1x128xf32> to vector<1x128xf32>
    %333 = vector.shape_cast %332 : vector<1x128xf32> to vector<1x1x128xf32>
    %334 = vector.broadcast %333 : vector<1x1x128xf32> to vector<1x16x128xf32>
    %335 = arith.mulf %330, %334 : vector<1x16x128xf32>
    %336 = arith.addf %326, %335 : vector<1x16x128xf32>
    %c26 = arith.constant 26 : index
    %c0_96 = arith.constant 0 : index
    %c0_97 = arith.constant 0 : index
    %337 = vector.load %arg7[%c26, %c0_96, %c0_97] : memref<36x16x128xbf16, #tpu.memory_space<vmem>>, vector<1x16x128xbf16>
    %338 = vector.shape_cast %337 : vector<1x16x128xbf16> to vector<16x128xbf16>
    %339 = arith.extf %338 : vector<16x128xbf16> to vector<16x128xf32>
    %340 = vector.shape_cast %339 : vector<16x128xf32> to vector<1x16x128xf32>
    %341 = vector.extract_strided_slice %315 {offsets = [0, 2, 0], sizes = [1, 1, 128], strides = [1, 1, 1]} : vector<1x16x128xf32> to vector<1x1x128xf32>
    %342 = vector.shape_cast %341 : vector<1x1x128xf32> to vector<1x128xf32>
    %343 = vector.shape_cast %342 : vector<1x128xf32> to vector<1x1x128xf32>
    %344 = vector.broadcast %343 : vector<1x1x128xf32> to vector<1x16x128xf32>
    %345 = arith.mulf %340, %344 : vector<1x16x128xf32>
    %346 = arith.addf %336, %345 : vector<1x16x128xf32>
    %c27 = arith.constant 27 : index
    %c0_98 = arith.constant 0 : index
    %c0_99 = arith.constant 0 : index
    %347 = vector.load %arg7[%c27, %c0_98, %c0_99] : memref<36x16x128xbf16, #tpu.memory_space<vmem>>, vector<1x16x128xbf16>
    %348 = vector.shape_cast %347 : vector<1x16x128xbf16> to vector<16x128xbf16>
    %349 = arith.extf %348 : vector<16x128xbf16> to vector<16x128xf32>
    %350 = vector.shape_cast %349 : vector<16x128xf32> to vector<1x16x128xf32>
    %351 = vector.extract_strided_slice %315 {offsets = [0, 3, 0], sizes = [1, 1, 128], strides = [1, 1, 1]} : vector<1x16x128xf32> to vector<1x1x128xf32>
    %352 = vector.shape_cast %351 : vector<1x1x128xf32> to vector<1x128xf32>
    %353 = vector.shape_cast %352 : vector<1x128xf32> to vector<1x1x128xf32>
    %354 = vector.broadcast %353 : vector<1x1x128xf32> to vector<1x16x128xf32>
    %355 = arith.mulf %350, %354 : vector<1x16x128xf32>
    %356 = arith.addf %346, %355 : vector<1x16x128xf32>
    %c28 = arith.constant 28 : index
    %c0_100 = arith.constant 0 : index
    %c0_101 = arith.constant 0 : index
    %357 = vector.load %arg7[%c28, %c0_100, %c0_101] : memref<36x16x128xbf16, #tpu.memory_space<vmem>>, vector<1x16x128xbf16>
    %358 = vector.shape_cast %357 : vector<1x16x128xbf16> to vector<16x128xbf16>
    %359 = arith.extf %358 : vector<16x128xbf16> to vector<16x128xf32>
    %360 = vector.shape_cast %359 : vector<16x128xf32> to vector<1x16x128xf32>
    %361 = vector.extract_strided_slice %315 {offsets = [0, 4, 0], sizes = [1, 1, 128], strides = [1, 1, 1]} : vector<1x16x128xf32> to vector<1x1x128xf32>
    %362 = vector.shape_cast %361 : vector<1x1x128xf32> to vector<1x128xf32>
    %363 = vector.shape_cast %362 : vector<1x128xf32> to vector<1x1x128xf32>
    %364 = vector.broadcast %363 : vector<1x1x128xf32> to vector<1x16x128xf32>
    %365 = arith.mulf %360, %364 : vector<1x16x128xf32>
    %366 = arith.addf %356, %365 : vector<1x16x128xf32>
    %c29 = arith.constant 29 : index
    %c0_102 = arith.constant 0 : index
    %c0_103 = arith.constant 0 : index
    %367 = vector.load %arg7[%c29, %c0_102, %c0_103] : memref<36x16x128xbf16, #tpu.memory_space<vmem>>, vector<1x16x128xbf16>
    %368 = vector.shape_cast %367 : vector<1x16x128xbf16> to vector<16x128xbf16>
    %369 = arith.extf %368 : vector<16x128xbf16> to vector<16x128xf32>
    %370 = vector.shape_cast %369 : vector<16x128xf32> to vector<1x16x128xf32>
    %371 = vector.extract_strided_slice %315 {offsets = [0, 5, 0], sizes = [1, 1, 128], strides = [1, 1, 1]} : vector<1x16x128xf32> to vector<1x1x128xf32>
    %372 = vector.shape_cast %371 : vector<1x1x128xf32> to vector<1x128xf32>
    %373 = vector.shape_cast %372 : vector<1x128xf32> to vector<1x1x128xf32>
    %374 = vector.broadcast %373 : vector<1x1x128xf32> to vector<1x16x128xf32>
    %375 = arith.mulf %370, %374 : vector<1x16x128xf32>
    %376 = arith.addf %366, %375 : vector<1x16x128xf32>
    %c30 = arith.constant 30 : index
    %c0_104 = arith.constant 0 : index
    %c0_105 = arith.constant 0 : index
    %377 = vector.load %arg7[%c30, %c0_104, %c0_105] : memref<36x16x128xbf16, #tpu.memory_space<vmem>>, vector<1x16x128xbf16>
    %378 = vector.shape_cast %377 : vector<1x16x128xbf16> to vector<16x128xbf16>
    %379 = arith.extf %378 : vector<16x128xbf16> to vector<16x128xf32>
    %380 = vector.shape_cast %379 : vector<16x128xf32> to vector<1x16x128xf32>
    %381 = vector.extract_strided_slice %315 {offsets = [0, 6, 0], sizes = [1, 1, 128], strides = [1, 1, 1]} : vector<1x16x128xf32> to vector<1x1x128xf32>
    %382 = vector.shape_cast %381 : vector<1x1x128xf32> to vector<1x128xf32>
    %383 = vector.shape_cast %382 : vector<1x128xf32> to vector<1x1x128xf32>
    %384 = vector.broadcast %383 : vector<1x1x128xf32> to vector<1x16x128xf32>
    %385 = arith.mulf %380, %384 : vector<1x16x128xf32>
    %386 = arith.addf %376, %385 : vector<1x16x128xf32>
    %c31 = arith.constant 31 : index
    %c0_106 = arith.constant 0 : index
    %c0_107 = arith.constant 0 : index
    %387 = vector.load %arg7[%c31, %c0_106, %c0_107] : memref<36x16x128xbf16, #tpu.memory_space<vmem>>, vector<1x16x128xbf16>
    %388 = vector.shape_cast %387 : vector<1x16x128xbf16> to vector<16x128xbf16>
    %389 = arith.extf %388 : vector<16x128xbf16> to vector<16x128xf32>
    %390 = vector.shape_cast %389 : vector<16x128xf32> to vector<1x16x128xf32>
    %391 = vector.extract_strided_slice %315 {offsets = [0, 7, 0], sizes = [1, 1, 128], strides = [1, 1, 1]} : vector<1x16x128xf32> to vector<1x1x128xf32>
    %392 = vector.shape_cast %391 : vector<1x1x128xf32> to vector<1x128xf32>
    %393 = vector.shape_cast %392 : vector<1x128xf32> to vector<1x1x128xf32>
    %394 = vector.broadcast %393 : vector<1x1x128xf32> to vector<1x16x128xf32>
    %395 = arith.mulf %390, %394 : vector<1x16x128xf32>
    %396 = arith.addf %386, %395 : vector<1x16x128xf32>
    %c32 = arith.constant 32 : index
    %c0_108 = arith.constant 0 : index
    %c0_109 = arith.constant 0 : index
    %397 = vector.load %arg7[%c32, %c0_108, %c0_109] : memref<36x16x128xbf16, #tpu.memory_space<vmem>>, vector<1x16x128xbf16>
    %398 = vector.shape_cast %397 : vector<1x16x128xbf16> to vector<16x128xbf16>
    %399 = arith.extf %398 : vector<16x128xbf16> to vector<16x128xf32>
    %400 = vector.shape_cast %399 : vector<16x128xf32> to vector<1x16x128xf32>
    %401 = vector.extract_strided_slice %315 {offsets = [0, 8, 0], sizes = [1, 1, 128], strides = [1, 1, 1]} : vector<1x16x128xf32> to vector<1x1x128xf32>
    %402 = vector.shape_cast %401 : vector<1x1x128xf32> to vector<1x128xf32>
    %403 = vector.shape_cast %402 : vector<1x128xf32> to vector<1x1x128xf32>
    %404 = vector.broadcast %403 : vector<1x1x128xf32> to vector<1x16x128xf32>
    %405 = arith.mulf %400, %404 : vector<1x16x128xf32>
    %406 = arith.addf %396, %405 : vector<1x16x128xf32>
    %c33 = arith.constant 33 : index
    %c0_110 = arith.constant 0 : index
    %c0_111 = arith.constant 0 : index
    %407 = vector.load %arg7[%c33, %c0_110, %c0_111] : memref<36x16x128xbf16, #tpu.memory_space<vmem>>, vector<1x16x128xbf16>
    %408 = vector.shape_cast %407 : vector<1x16x128xbf16> to vector<16x128xbf16>
    %409 = arith.extf %408 : vector<16x128xbf16> to vector<16x128xf32>
    %410 = vector.shape_cast %409 : vector<16x128xf32> to vector<1x16x128xf32>
    %411 = vector.extract_strided_slice %315 {offsets = [0, 9, 0], sizes = [1, 1, 128], strides = [1, 1, 1]} : vector<1x16x128xf32> to vector<1x1x128xf32>
    %412 = vector.shape_cast %411 : vector<1x1x128xf32> to vector<1x128xf32>
    %413 = vector.shape_cast %412 : vector<1x128xf32> to vector<1x1x128xf32>
    %414 = vector.broadcast %413 : vector<1x1x128xf32> to vector<1x16x128xf32>
    %415 = arith.mulf %410, %414 : vector<1x16x128xf32>
    %416 = arith.addf %406, %415 : vector<1x16x128xf32>
    %c34 = arith.constant 34 : index
    %c0_112 = arith.constant 0 : index
    %c0_113 = arith.constant 0 : index
    %417 = vector.load %arg7[%c34, %c0_112, %c0_113] : memref<36x16x128xbf16, #tpu.memory_space<vmem>>, vector<1x16x128xbf16>
    %418 = vector.shape_cast %417 : vector<1x16x128xbf16> to vector<16x128xbf16>
    %419 = arith.extf %418 : vector<16x128xbf16> to vector<16x128xf32>
    %420 = vector.shape_cast %419 : vector<16x128xf32> to vector<1x16x128xf32>
    %421 = vector.extract_strided_slice %315 {offsets = [0, 10, 0], sizes = [1, 1, 128], strides = [1, 1, 1]} : vector<1x16x128xf32> to vector<1x1x128xf32>
    %422 = vector.shape_cast %421 : vector<1x1x128xf32> to vector<1x128xf32>
    %423 = vector.shape_cast %422 : vector<1x128xf32> to vector<1x1x128xf32>
    %424 = vector.broadcast %423 : vector<1x1x128xf32> to vector<1x16x128xf32>
    %425 = arith.mulf %420, %424 : vector<1x16x128xf32>
    %426 = arith.addf %416, %425 : vector<1x16x128xf32>
    %c35 = arith.constant 35 : index
    %c0_114 = arith.constant 0 : index
    %c0_115 = arith.constant 0 : index
    %427 = vector.load %arg7[%c35, %c0_114, %c0_115] : memref<36x16x128xbf16, #tpu.memory_space<vmem>>, vector<1x16x128xbf16>
    %428 = vector.shape_cast %427 : vector<1x16x128xbf16> to vector<16x128xbf16>
    %429 = arith.extf %428 : vector<16x128xbf16> to vector<16x128xf32>
    %430 = vector.shape_cast %429 : vector<16x128xf32> to vector<1x16x128xf32>
    %431 = vector.extract_strided_slice %315 {offsets = [0, 11, 0], sizes = [1, 1, 128], strides = [1, 1, 1]} : vector<1x16x128xf32> to vector<1x1x128xf32>
    %432 = vector.shape_cast %431 : vector<1x1x128xf32> to vector<1x128xf32>
    %433 = vector.shape_cast %432 : vector<1x128xf32> to vector<1x1x128xf32>
    %434 = vector.broadcast %433 : vector<1x1x128xf32> to vector<1x16x128xf32>
    %435 = arith.mulf %430, %434 : vector<1x16x128xf32>
    %436 = arith.addf %426, %435 : vector<1x16x128xf32>
    %437 = vector.shape_cast %436 : vector<1x16x128xf32> to vector<16x128xf32>
    %c4_116 = arith.constant 4 : index
    %c0_117 = arith.constant 0 : index
    %438 = vector.load %arg12[%c4_116, %c0_117] : memref<15x128xf32, #tpu.memory_space<vmem>>, vector<1x128xf32>
    %439 = vector.broadcast %438 : vector<1x128xf32> to vector<16x128xf32>
    %440 = arith.mulf %314, %439 : vector<16x128xf32>
    %441 = arith.addf %437, %440 : vector<16x128xf32>
    %cst_118 = arith.constant 5.000000e-01 : f32
    %442 = vector.broadcast %cst_118 : f32 to vector<16x128xf32>
    %443 = arith.mulf %442, %441 : vector<16x128xf32>
    %cst_119 = arith.constant 4.471500e-02 : f32
    %444 = vector.broadcast %cst_119 : f32 to vector<16x128xf32>
    %445 = arith.mulf %444, %441 : vector<16x128xf32>
    %446 = arith.mulf %445, %441 : vector<16x128xf32>
    %447 = arith.mulf %446, %441 : vector<16x128xf32>
    %448 = arith.addf %441, %447 : vector<16x128xf32>
    %cst_120 = arith.constant 0.797884583 : f32
    %449 = vector.broadcast %cst_120 : f32 to vector<16x128xf32>
    %450 = arith.mulf %449, %448 : vector<16x128xf32>
    %451 = math.tanh %450 : vector<16x128xf32>
    %cst_121 = arith.constant 1.000000e+00 : f32
    %452 = vector.broadcast %cst_121 : f32 to vector<16x128xf32>
    %453 = arith.addf %452, %451 : vector<16x128xf32>
    %454 = arith.mulf %443, %453 : vector<16x128xf32>
    %c256 = arith.constant 256 : index
    %c0_122 = arith.constant 0 : index
    %455 = vector.load %arg8[%c256, %c0_122] : memref<1408x128xbf16, #tpu.memory_space<vmem>>, vector<128x128xbf16>
    %456 = arith.truncf %454 : vector<16x128xf32> to vector<16x128xbf16>
    %cst_123 = arith.constant dense<0.000000e+00> : vector<16x128xf32>
    %457 = tpu.matmul %456, %455, %cst_123 {dimension_numbers = #tpu.dot_dimension_numbers<[1], [0], [0], [1], [0, 0, 1, 1], [], []>} : vector<16x128xbf16>, vector<128x128xbf16>, vector<16x128xf32> -> vector<16x128xf32>
    %458 = arith.addf %314, %457 : vector<16x128xf32>
    %c7_124 = arith.constant 7 : index
    %c0_125 = arith.constant 0 : index
    %459 = vector.load %arg12[%c7_124, %c0_125] : memref<15x128xf32, #tpu.memory_space<vmem>>, vector<1x128xf32>
    %460 = vector.broadcast %459 : vector<1x128xf32> to vector<16x128xf32>
    %461 = arith.addf %458, %460 : vector<16x128xf32>
    %cst_126 = arith.constant 0.000000e+00 : f32
    %462 = vector.broadcast %cst_126 : f32 to vector<1x128xf32>
    %463 = vector.extract_strided_slice %461 {offsets = [0, 0], sizes = [15, 128], strides = [1, 1]} : vector<16x128xf32> to vector<15x128xf32>
    %464 = tpu.concatenate %462, %463 in 0 : vector<1x128xf32>, vector<15x128xf32> -> vector<16x128xf32>
    %465 = vector.broadcast %3 : vector<16x1xf32> to vector<16x128xf32>
    %466 = arith.mulf %464, %465 : vector<16x128xf32>
    %cst_127 = arith.constant 0.000000e+00 : f32
    %467 = vector.broadcast %cst_127 : f32 to vector<1x128xf32>
    %468 = vector.extract_strided_slice %461 {offsets = [1, 0], sizes = [15, 128], strides = [1, 1]} : vector<16x128xf32> to vector<15x128xf32>
    %469 = tpu.concatenate %468, %467 in 0 : vector<15x128xf32>, vector<1x128xf32> -> vector<16x128xf32>
    %470 = vector.broadcast %4 : vector<16x1xf32> to vector<16x128xf32>
    %471 = arith.mulf %469, %470 : vector<16x128xf32>
    %c0_128 = arith.constant 0 : index
    %c0_129 = arith.constant 0 : index
    %472 = vector.load %arg9[%c0_128, %c0_129] : memref<384x256xbf16, #tpu.memory_space<vmem>>, vector<128x256xbf16>
    %473 = arith.truncf %466 : vector<16x128xf32> to vector<16x128xbf16>
    %cst_130 = arith.constant dense<0.000000e+00> : vector<16x256xf32>
    %474 = tpu.matmul %473, %472, %cst_130 {dimension_numbers = #tpu.dot_dimension_numbers<[1], [0], [0], [1], [0, 0, 1, 1], [], []>} : vector<16x128xbf16>, vector<128x256xbf16>, vector<16x256xf32> -> vector<16x256xf32>
    %c128_131 = arith.constant 128 : index
    %c0_132 = arith.constant 0 : index
    %475 = vector.load %arg9[%c128_131, %c0_132] : memref<384x256xbf16, #tpu.memory_space<vmem>>, vector<128x256xbf16>
    %476 = arith.truncf %461 : vector<16x128xf32> to vector<16x128xbf16>
    %cst_133 = arith.constant dense<0.000000e+00> : vector<16x256xf32>
    %477 = tpu.matmul %476, %475, %cst_133 {dimension_numbers = #tpu.dot_dimension_numbers<[1], [0], [0], [1], [0, 0, 1, 1], [], []>} : vector<16x128xbf16>, vector<128x256xbf16>, vector<16x256xf32> -> vector<16x256xf32>
    %478 = arith.addf %474, %477 : vector<16x256xf32>
    %c256_134 = arith.constant 256 : index
    %c0_135 = arith.constant 0 : index
    %479 = vector.load %arg9[%c256_134, %c0_135] : memref<384x256xbf16, #tpu.memory_space<vmem>>, vector<128x256xbf16>
    %480 = arith.truncf %471 : vector<16x128xf32> to vector<16x128xbf16>
    %cst_136 = arith.constant dense<0.000000e+00> : vector<16x256xf32>
    %481 = tpu.matmul %480, %479, %cst_136 {dimension_numbers = #tpu.dot_dimension_numbers<[1], [0], [0], [1], [0, 0, 1, 1], [], []>} : vector<16x128xbf16>, vector<128x256xbf16>, vector<16x256xf32> -> vector<16x256xf32>
    %482 = arith.addf %478, %481 : vector<16x256xf32>
    %c0_137 = arith.constant 0 : index
    %c0_138 = arith.constant 0 : index
    %483 = vector.load %arg13[%c0_137, %c0_138] : memref<3x256xf32, #tpu.memory_space<vmem>>, vector<1x256xf32>
    %484 = vector.broadcast %483 : vector<1x256xf32> to vector<16x256xf32>
    %485 = arith.addf %482, %484 : vector<16x256xf32>
    %cst_139 = arith.constant 5.000000e-01 : f32
    %486 = vector.broadcast %cst_139 : f32 to vector<16x256xf32>
    %487 = arith.mulf %486, %485 : vector<16x256xf32>
    %cst_140 = arith.constant 4.471500e-02 : f32
    %488 = vector.broadcast %cst_140 : f32 to vector<16x256xf32>
    %489 = arith.mulf %488, %485 : vector<16x256xf32>
    %490 = arith.mulf %489, %485 : vector<16x256xf32>
    %491 = arith.mulf %490, %485 : vector<16x256xf32>
    %492 = arith.addf %485, %491 : vector<16x256xf32>
    %cst_141 = arith.constant 0.797884583 : f32
    %493 = vector.broadcast %cst_141 : f32 to vector<16x256xf32>
    %494 = arith.mulf %493, %492 : vector<16x256xf32>
    %495 = math.tanh %494 : vector<16x256xf32>
    %cst_142 = arith.constant 1.000000e+00 : f32
    %496 = vector.broadcast %cst_142 : f32 to vector<16x256xf32>
    %497 = arith.addf %496, %495 : vector<16x256xf32>
    %498 = arith.mulf %487, %497 : vector<16x256xf32>
    %c1_143 = arith.constant 1 : index
    %c0_144 = arith.constant 0 : index
    %499 = vector.load %arg13[%c1_143, %c0_144] : memref<3x256xf32, #tpu.memory_space<vmem>>, vector<1x256xf32>
    %c2_145 = arith.constant 2 : index
    %c0_146 = arith.constant 0 : index
    %500 = vector.load %arg13[%c2_145, %c0_146] : memref<3x256xf32, #tpu.memory_space<vmem>>, vector<1x256xf32>
    %cst_147 = arith.constant dense<0.000000e+00> : vector<1x256xf32>
    %501 = tpu.matmul %1, %498, %cst_147 {dimension_numbers = #tpu.dot_dimension_numbers<[1], [0], [0], [1], [0, 0, 1, 1], [], []>} : vector<1x16xf32>, vector<16x256xf32>, vector<1x256xf32> -> vector<1x256xf32>
    %cst_148 = arith.constant dense<0.000000e+00> : vector<1x256xf32>
    %502 = tpu.matmul %501, %6, %cst_148 {dimension_numbers = #tpu.dot_dimension_numbers<[1], [0], [0], [1], [0, 0, 1, 1], [], []>} : vector<1x256xf32>, vector<256x256xf32>, vector<1x256xf32> -> vector<1x256xf32>
    %cst_149 = arith.constant 0.0833333358 : f32
    %503 = vector.broadcast %cst_149 : f32 to vector<1x256xf32>
    %504 = arith.mulf %502, %503 : vector<1x256xf32>
    %cst_150 = arith.constant dense<0.000000e+00> : vector<16x256xf32>
    %505 = tpu.matmul %2, %504, %cst_150 {dimension_numbers = #tpu.dot_dimension_numbers<[1], [0], [0], [1], [0, 0, 1, 1], [], []>} : vector<16x1xf32>, vector<1x256xf32>, vector<16x256xf32> -> vector<16x256xf32>
    %506 = arith.subf %498, %505 : vector<16x256xf32>
    %507 = arith.mulf %506, %506 : vector<16x256xf32>
    %cst_151 = arith.constant dense<0.000000e+00> : vector<1x256xf32>
    %508 = tpu.matmul %1, %507, %cst_151 {dimension_numbers = #tpu.dot_dimension_numbers<[1], [0], [0], [1], [0, 0, 1, 1], [], []>} : vector<1x16xf32>, vector<16x256xf32>, vector<1x256xf32> -> vector<1x256xf32>
    %cst_152 = arith.constant dense<0.000000e+00> : vector<1x256xf32>
    %509 = tpu.matmul %508, %6, %cst_152 {dimension_numbers = #tpu.dot_dimension_numbers<[1], [0], [0], [1], [0, 0, 1, 1], [], []>} : vector<1x256xf32>, vector<256x256xf32>, vector<1x256xf32> -> vector<1x256xf32>
    %cst_153 = arith.constant 0.0833333358 : f32
    %510 = vector.broadcast %cst_153 : f32 to vector<1x256xf32>
    %511 = arith.mulf %509, %510 : vector<1x256xf32>
    %cst_154 = arith.constant dense<0.000000e+00> : vector<16x256xf32>
    %512 = tpu.matmul %2, %511, %cst_154 {dimension_numbers = #tpu.dot_dimension_numbers<[1], [0], [0], [1], [0, 0, 1, 1], [], []>} : vector<16x1xf32>, vector<1x256xf32>, vector<16x256xf32> -> vector<16x256xf32>
    %cst_155 = arith.constant 9.99999974E-6 : f32
    %513 = vector.broadcast %cst_155 : f32 to vector<16x256xf32>
    %514 = arith.addf %512, %513 : vector<16x256xf32>
    %515 = math.rsqrt %514 : vector<16x256xf32>
    %516 = arith.mulf %506, %515 : vector<16x256xf32>
    %517 = vector.broadcast %499 : vector<1x256xf32> to vector<16x256xf32>
    %518 = arith.mulf %516, %517 : vector<16x256xf32>
    %519 = vector.broadcast %500 : vector<1x256xf32> to vector<16x256xf32>
    %520 = arith.addf %518, %519 : vector<16x256xf32>
    %cst_156 = arith.constant 0.000000e+00 : f32
    %521 = vector.broadcast %cst_156 : f32 to vector<1x256xf32>
    %522 = vector.extract_strided_slice %520 {offsets = [0, 0], sizes = [15, 256], strides = [1, 1]} : vector<16x256xf32> to vector<15x256xf32>
    %523 = tpu.concatenate %521, %522 in 0 : vector<1x256xf32>, vector<15x256xf32> -> vector<16x256xf32>
    %524 = vector.broadcast %3 : vector<16x1xf32> to vector<16x256xf32>
    %525 = arith.mulf %523, %524 : vector<16x256xf32>
    %cst_157 = arith.constant 0.000000e+00 : f32
    %526 = vector.broadcast %cst_157 : f32 to vector<1x256xf32>
    %527 = vector.extract_strided_slice %520 {offsets = [1, 0], sizes = [15, 256], strides = [1, 1]} : vector<16x256xf32> to vector<15x256xf32>
    %528 = tpu.concatenate %527, %526 in 0 : vector<15x256xf32>, vector<1x256xf32> -> vector<16x256xf32>
    %529 = vector.broadcast %4 : vector<16x1xf32> to vector<16x256xf32>
    %530 = arith.mulf %528, %529 : vector<16x256xf32>
    %c384 = arith.constant 384 : index
    %c0_158 = arith.constant 0 : index
    %531 = vector.load %arg8[%c384, %c0_158] : memref<1408x128xbf16, #tpu.memory_space<vmem>>, vector<256x128xbf16>
    %532 = arith.truncf %525 : vector<16x256xf32> to vector<16x256xbf16>
    %cst_159 = arith.constant dense<0.000000e+00> : vector<16x128xf32>
    %533 = tpu.matmul %532, %531, %cst_159 {dimension_numbers = #tpu.dot_dimension_numbers<[1], [0], [0], [1], [0, 0, 1, 1], [], []>} : vector<16x256xbf16>, vector<256x128xbf16>, vector<16x128xf32> -> vector<16x128xf32>
    %c640 = arith.constant 640 : index
    %c0_160 = arith.constant 0 : index
    %534 = vector.load %arg8[%c640, %c0_160] : memref<1408x128xbf16, #tpu.memory_space<vmem>>, vector<256x128xbf16>
    %535 = arith.truncf %520 : vector<16x256xf32> to vector<16x256xbf16>
    %cst_161 = arith.constant dense<0.000000e+00> : vector<16x128xf32>
    %536 = tpu.matmul %535, %534, %cst_161 {dimension_numbers = #tpu.dot_dimension_numbers<[1], [0], [0], [1], [0, 0, 1, 1], [], []>} : vector<16x256xbf16>, vector<256x128xbf16>, vector<16x128xf32> -> vector<16x128xf32>
    %537 = arith.addf %533, %536 : vector<16x128xf32>
    %c896 = arith.constant 896 : index
    %c0_162 = arith.constant 0 : index
    %538 = vector.load %arg8[%c896, %c0_162] : memref<1408x128xbf16, #tpu.memory_space<vmem>>, vector<256x128xbf16>
    %539 = arith.truncf %530 : vector<16x256xf32> to vector<16x256xbf16>
    %cst_163 = arith.constant dense<0.000000e+00> : vector<16x128xf32>
    %540 = tpu.matmul %539, %538, %cst_163 {dimension_numbers = #tpu.dot_dimension_numbers<[1], [0], [0], [1], [0, 0, 1, 1], [], []>} : vector<16x256xbf16>, vector<256x128xbf16>, vector<16x128xf32> -> vector<16x128xf32>
    %541 = arith.addf %537, %540 : vector<16x128xf32>
    %c8_164 = arith.constant 8 : index
    %c0_165 = arith.constant 0 : index
    %542 = vector.load %arg12[%c8_164, %c0_165] : memref<15x128xf32, #tpu.memory_space<vmem>>, vector<1x128xf32>
    %543 = vector.broadcast %542 : vector<1x128xf32> to vector<16x128xf32>
    %544 = arith.addf %541, %543 : vector<16x128xf32>
    %cst_166 = arith.constant 5.000000e-01 : f32
    %545 = vector.broadcast %cst_166 : f32 to vector<16x128xf32>
    %546 = arith.mulf %545, %544 : vector<16x128xf32>
    %cst_167 = arith.constant 4.471500e-02 : f32
    %547 = vector.broadcast %cst_167 : f32 to vector<16x128xf32>
    %548 = arith.mulf %547, %544 : vector<16x128xf32>
    %549 = arith.mulf %548, %544 : vector<16x128xf32>
    %550 = arith.mulf %549, %544 : vector<16x128xf32>
    %551 = arith.addf %544, %550 : vector<16x128xf32>
    %cst_168 = arith.constant 0.797884583 : f32
    %552 = vector.broadcast %cst_168 : f32 to vector<16x128xf32>
    %553 = arith.mulf %552, %551 : vector<16x128xf32>
    %554 = math.tanh %553 : vector<16x128xf32>
    %cst_169 = arith.constant 1.000000e+00 : f32
    %555 = vector.broadcast %cst_169 : f32 to vector<16x128xf32>
    %556 = arith.addf %555, %554 : vector<16x128xf32>
    %557 = arith.mulf %546, %556 : vector<16x128xf32>
    %c9_170 = arith.constant 9 : index
    %c0_171 = arith.constant 0 : index
    %558 = vector.load %arg12[%c9_170, %c0_171] : memref<15x128xf32, #tpu.memory_space<vmem>>, vector<1x128xf32>
    %c10_172 = arith.constant 10 : index
    %c0_173 = arith.constant 0 : index
    %559 = vector.load %arg12[%c10_172, %c0_173] : memref<15x128xf32, #tpu.memory_space<vmem>>, vector<1x128xf32>
    %cst_174 = arith.constant dense<0.000000e+00> : vector<1x128xf32>
    %560 = tpu.matmul %1, %557, %cst_174 {dimension_numbers = #tpu.dot_dimension_numbers<[1], [0], [0], [1], [0, 0, 1, 1], [], []>} : vector<1x16xf32>, vector<16x128xf32>, vector<1x128xf32> -> vector<1x128xf32>
    %cst_175 = arith.constant dense<0.000000e+00> : vector<1x128xf32>
    %561 = tpu.matmul %560, %5, %cst_175 {dimension_numbers = #tpu.dot_dimension_numbers<[1], [0], [0], [1], [0, 0, 1, 1], [], []>} : vector<1x128xf32>, vector<128x128xf32>, vector<1x128xf32> -> vector<1x128xf32>
    %cst_176 = arith.constant 0.0833333358 : f32
    %562 = vector.broadcast %cst_176 : f32 to vector<1x128xf32>
    %563 = arith.mulf %561, %562 : vector<1x128xf32>
    %cst_177 = arith.constant dense<0.000000e+00> : vector<16x128xf32>
    %564 = tpu.matmul %2, %563, %cst_177 {dimension_numbers = #tpu.dot_dimension_numbers<[1], [0], [0], [1], [0, 0, 1, 1], [], []>} : vector<16x1xf32>, vector<1x128xf32>, vector<16x128xf32> -> vector<16x128xf32>
    %565 = arith.subf %557, %564 : vector<16x128xf32>
    %566 = arith.mulf %565, %565 : vector<16x128xf32>
    %cst_178 = arith.constant dense<0.000000e+00> : vector<1x128xf32>
    %567 = tpu.matmul %1, %566, %cst_178 {dimension_numbers = #tpu.dot_dimension_numbers<[1], [0], [0], [1], [0, 0, 1, 1], [], []>} : vector<1x16xf32>, vector<16x128xf32>, vector<1x128xf32> -> vector<1x128xf32>
    %cst_179 = arith.constant dense<0.000000e+00> : vector<1x128xf32>
    %568 = tpu.matmul %567, %5, %cst_179 {dimension_numbers = #tpu.dot_dimension_numbers<[1], [0], [0], [1], [0, 0, 1, 1], [], []>} : vector<1x128xf32>, vector<128x128xf32>, vector<1x128xf32> -> vector<1x128xf32>
    %cst_180 = arith.constant 0.0833333358 : f32
    %569 = vector.broadcast %cst_180 : f32 to vector<1x128xf32>
    %570 = arith.mulf %568, %569 : vector<1x128xf32>
    %cst_181 = arith.constant dense<0.000000e+00> : vector<16x128xf32>
    %571 = tpu.matmul %2, %570, %cst_181 {dimension_numbers = #tpu.dot_dimension_numbers<[1], [0], [0], [1], [0, 0, 1, 1], [], []>} : vector<16x1xf32>, vector<1x128xf32>, vector<16x128xf32> -> vector<16x128xf32>
    %cst_182 = arith.constant 9.99999974E-6 : f32
    %572 = vector.broadcast %cst_182 : f32 to vector<16x128xf32>
    %573 = arith.addf %571, %572 : vector<16x128xf32>
    %574 = math.rsqrt %573 : vector<16x128xf32>
    %575 = arith.mulf %565, %574 : vector<16x128xf32>
    %576 = vector.broadcast %558 : vector<1x128xf32> to vector<16x128xf32>
    %577 = arith.mulf %575, %576 : vector<16x128xf32>
    %578 = vector.broadcast %559 : vector<1x128xf32> to vector<16x128xf32>
    %579 = arith.addf %577, %578 : vector<16x128xf32>
    %cst_183 = arith.constant dense<0.000000e+00> : vector<1x128xf32>
    %580 = tpu.matmul %1, %579, %cst_183 {dimension_numbers = #tpu.dot_dimension_numbers<[1], [0], [0], [1], [0, 0, 1, 1], [], []>} : vector<1x16xf32>, vector<16x128xf32>, vector<1x128xf32> -> vector<1x128xf32>
    %cst_184 = arith.constant 0.0833333358 : f32
    %581 = vector.broadcast %cst_184 : f32 to vector<1x128xf32>
    %582 = arith.mulf %580, %581 : vector<1x128xf32>
    %c1152 = arith.constant 1152 : index
    %c0_185 = arith.constant 0 : index
    %583 = vector.load %arg8[%c1152, %c0_185] : memref<1408x128xbf16, #tpu.memory_space<vmem>>, vector<128x128xbf16>
    %584 = arith.truncf %582 : vector<1x128xf32> to vector<1x128xbf16>
    %cst_186 = arith.constant dense<0.000000e+00> : vector<1x128xf32>
    %585 = tpu.matmul %584, %583, %cst_186 {dimension_numbers = #tpu.dot_dimension_numbers<[1], [0], [0], [1], [0, 0, 1, 1], [], []>} : vector<1x128xbf16>, vector<128x128xbf16>, vector<1x128xf32> -> vector<1x128xf32>
    %c11_187 = arith.constant 11 : index
    %c0_188 = arith.constant 0 : index
    %586 = vector.load %arg12[%c11_187, %c0_188] : memref<15x128xf32, #tpu.memory_space<vmem>>, vector<1x128xf32>
    %587 = arith.addf %585, %586 : vector<1x128xf32>
    %cst_189 = arith.constant 5.000000e-01 : f32
    %588 = vector.broadcast %cst_189 : f32 to vector<1x128xf32>
    %589 = arith.mulf %588, %587 : vector<1x128xf32>
    %cst_190 = arith.constant 4.471500e-02 : f32
    %590 = vector.broadcast %cst_190 : f32 to vector<1x128xf32>
    %591 = arith.mulf %590, %587 : vector<1x128xf32>
    %592 = arith.mulf %591, %587 : vector<1x128xf32>
    %593 = arith.mulf %592, %587 : vector<1x128xf32>
    %594 = arith.addf %587, %593 : vector<1x128xf32>
    %cst_191 = arith.constant 0.797884583 : f32
    %595 = vector.broadcast %cst_191 : f32 to vector<1x128xf32>
    %596 = arith.mulf %595, %594 : vector<1x128xf32>
    %597 = math.tanh %596 : vector<1x128xf32>
    %cst_192 = arith.constant 1.000000e+00 : f32
    %598 = vector.broadcast %cst_192 : f32 to vector<1x128xf32>
    %599 = arith.addf %598, %597 : vector<1x128xf32>
    %600 = arith.mulf %589, %599 : vector<1x128xf32>
    %c1280 = arith.constant 1280 : index
    %c0_193 = arith.constant 0 : index
    %601 = vector.load %arg8[%c1280, %c0_193] : memref<1408x128xbf16, #tpu.memory_space<vmem>>, vector<128x128xbf16>
    %602 = arith.truncf %600 : vector<1x128xf32> to vector<1x128xbf16>
    %cst_194 = arith.constant dense<0.000000e+00> : vector<1x128xf32>
    %603 = tpu.matmul %602, %601, %cst_194 {dimension_numbers = #tpu.dot_dimension_numbers<[1], [0], [0], [1], [0, 0, 1, 1], [], []>} : vector<1x128xbf16>, vector<128x128xbf16>, vector<1x128xf32> -> vector<1x128xf32>
    %c12_195 = arith.constant 12 : index
    %c0_196 = arith.constant 0 : index
    %604 = vector.load %arg12[%c12_195, %c0_196] : memref<15x128xf32, #tpu.memory_space<vmem>>, vector<1x128xf32>
    %605 = arith.addf %603, %604 : vector<1x128xf32>
    %cst_197 = arith.constant 0.000000e+00 : f32
    %606 = vector.broadcast %cst_197 : f32 to vector<1x128xf32>
    %607 = arith.subf %606, %605 : vector<1x128xf32>
    %608 = math.exp %607 : vector<1x128xf32>
    %cst_198 = arith.constant 1.000000e+00 : f32
    %609 = vector.broadcast %cst_198 : f32 to vector<1x128xf32>
    %610 = arith.addf %609, %608 : vector<1x128xf32>
    %611 = tpu.reciprocal %610 {approx = true} : vector<1x128xf32> -> vector<1x128xf32>
    %cst_199 = arith.constant dense<0.000000e+00> : vector<16x128xf32>
    %612 = tpu.matmul %2, %611, %cst_199 {dimension_numbers = #tpu.dot_dimension_numbers<[1], [0], [0], [1], [0, 0, 1, 1], [], []>} : vector<16x1xf32>, vector<1x128xf32>, vector<16x128xf32> -> vector<16x128xf32>
    %613 = arith.mulf %579, %612 : vector<16x128xf32>
    %c0_200 = arith.constant 0 : index
    %c0_201 = arith.constant 0 : index
    %c0_202 = arith.constant 0 : index
    %614 = vector.load %arg2[%c0_200, %c0_201, %c0_202] : memref<1x2x128xf32, #tpu.memory_space<vmem>>, vector<1x2x128xf32>
    %615 = vector.extract_strided_slice %614 {offsets = [0, 0, 0], sizes = [1, 1, 128], strides = [1, 1, 1]} : vector<1x2x128xf32> to vector<1x1x128xf32>
    %616 = vector.shape_cast %615 : vector<1x1x128xf32> to vector<1x128xf32>
    %cst_203 = arith.constant dense<0.000000e+00> : vector<16x128xf32>
    %617 = tpu.matmul %2, %616, %cst_203 {dimension_numbers = #tpu.dot_dimension_numbers<[1], [0], [0], [1], [0, 0, 1, 1], [], []>} : vector<16x1xf32>, vector<1x128xf32>, vector<16x128xf32> -> vector<16x128xf32>
    %618 = arith.mulf %613, %617 : vector<16x128xf32>
    %619 = vector.extract_strided_slice %614 {offsets = [0, 1, 0], sizes = [1, 1, 128], strides = [1, 1, 1]} : vector<1x2x128xf32> to vector<1x1x128xf32>
    %620 = vector.shape_cast %619 : vector<1x1x128xf32> to vector<1x128xf32>
    %cst_204 = arith.constant dense<0.000000e+00> : vector<16x128xf32>
    %621 = tpu.matmul %2, %620, %cst_204 {dimension_numbers = #tpu.dot_dimension_numbers<[1], [0], [0], [1], [0, 0, 1, 1], [], []>} : vector<16x1xf32>, vector<1x128xf32>, vector<16x128xf32> -> vector<16x128xf32>
    %622 = arith.addf %618, %621 : vector<16x128xf32>
    %c13_205 = arith.constant 13 : index
    %c0_206 = arith.constant 0 : index
    %623 = vector.load %arg12[%c13_205, %c0_206] : memref<15x128xf32, #tpu.memory_space<vmem>>, vector<1x128xf32>
    %c14_207 = arith.constant 14 : index
    %c0_208 = arith.constant 0 : index
    %624 = vector.load %arg12[%c14_207, %c0_208] : memref<15x128xf32, #tpu.memory_space<vmem>>, vector<1x128xf32>
    %cst_209 = arith.constant dense<0.000000e+00> : vector<16x128xf32>
    %625 = tpu.matmul %622, %5, %cst_209 {dimension_numbers = #tpu.dot_dimension_numbers<[1], [0], [0], [1], [0, 0, 1, 1], [], []>} : vector<16x128xf32>, vector<128x128xf32>, vector<16x128xf32> -> vector<16x128xf32>
    %626 = arith.subf %622, %625 : vector<16x128xf32>
    %627 = arith.mulf %626, %626 : vector<16x128xf32>
    %cst_210 = arith.constant dense<0.000000e+00> : vector<16x128xf32>
    %628 = tpu.matmul %627, %5, %cst_210 {dimension_numbers = #tpu.dot_dimension_numbers<[1], [0], [0], [1], [0, 0, 1, 1], [], []>} : vector<16x128xf32>, vector<128x128xf32>, vector<16x128xf32> -> vector<16x128xf32>
    %cst_211 = arith.constant 9.99999974E-6 : f32
    %629 = vector.broadcast %cst_211 : f32 to vector<16x128xf32>
    %630 = arith.addf %628, %629 : vector<16x128xf32>
    %631 = math.rsqrt %630 : vector<16x128xf32>
    %632 = arith.mulf %626, %631 : vector<16x128xf32>
    %633 = vector.broadcast %623 : vector<1x128xf32> to vector<16x128xf32>
    %634 = arith.mulf %632, %633 : vector<16x128xf32>
    %635 = vector.broadcast %624 : vector<1x128xf32> to vector<16x128xf32>
    %636 = arith.addf %634, %635 : vector<16x128xf32>
    %637 = arith.addf %636, %0 : vector<16x128xf32>
    %c0_212 = arith.constant 0 : index
    %c0_213 = arith.constant 0 : index
    %638 = vector.load %arg14[%c0_212, %c0_213] : memref<16x128xf32, #tpu.memory_space<vmem>>, vector<16x128xf32>
    tpu.vector_store %arg14[%c0_212, %c0_213], %637 {strides = array<i32>} : memref<16x128xf32, #tpu.memory_space<vmem>>, vector<16x128xf32>,
    return
  }
  func.func @transform_0(%arg0: i32) -> (i32, i32) {
    %c0_i32 = arith.constant 0 : i32
    %c0_i32_0 = arith.constant 0 : i32
    return %arg0, %c0_i32 : i32, i32
  }
  func.func @transform_1(%arg0: i32) -> (i32, i32, i32) {
    %c0_i32 = arith.constant 0 : i32
    %c0_i32_0 = arith.constant 0 : i32
    %c0_i32_1 = arith.constant 0 : i32
    return %arg0, %c0_i32, %c0_i32_0 : i32, i32, i32
  }
  func.func @transform_2(%arg0: i32) -> (i32, i32) {
    %c0_i32 = arith.constant 0 : i32
    %c0_i32_0 = arith.constant 0 : i32
    %c0_i32_1 = arith.constant 0 : i32
    return %c0_i32, %c0_i32_0 : i32, i32
  }
  func.func @transform_3(%arg0: i32) -> (i32, i32) {
    %c0_i32 = arith.constant 0 : i32
    %c0_i32_0 = arith.constant 0 : i32
    %c0_i32_1 = arith.constant 0 : i32
    return %c0_i32, %c0_i32_0 : i32, i32
  }
  func.func @transform_4(%arg0: i32) -> (i32, i32) {
    %c0_i32 = arith.constant 0 : i32
    %c0_i32_0 = arith.constant 0 : i32
    %c0_i32_1 = arith.constant 0 : i32
    return %c0_i32, %c0_i32_0 : i32, i32
  }
  func.func @transform_5(%arg0: i32) -> (i32, i32) {
    %c0_i32 = arith.constant 0 : i32
    %c0_i32_0 = arith.constant 0 : i32
    %c0_i32_1 = arith.constant 0 : i32
    return %c0_i32, %c0_i32_0 : i32, i32
  }
  func.func @transform_6(%arg0: i32) -> (i32, i32, i32) {
    %c0_i32 = arith.constant 0 : i32
    %c0_i32_0 = arith.constant 0 : i32
    %c0_i32_1 = arith.constant 0 : i32
    %c0_i32_2 = arith.constant 0 : i32
    return %c0_i32, %c0_i32_0, %c0_i32_1 : i32, i32, i32
  }
  func.func @transform_7(%arg0: i32) -> (i32, i32) {
    %c0_i32 = arith.constant 0 : i32
    %c0_i32_0 = arith.constant 0 : i32
    %c0_i32_1 = arith.constant 0 : i32
    return %c0_i32, %c0_i32_0 : i32, i32
  }
  func.func @transform_8(%arg0: i32) -> (i32, i32) {
    %c0_i32 = arith.constant 0 : i32
    %c0_i32_0 = arith.constant 0 : i32
    %c0_i32_1 = arith.constant 0 : i32
    return %c0_i32, %c0_i32_0 : i32, i32
  }
  func.func @transform_9(%arg0: i32) -> (i32, i32) {
    %c0_i32 = arith.constant 0 : i32
    %c0_i32_0 = arith.constant 0 : i32
    %c0_i32_1 = arith.constant 0 : i32
    return %c0_i32, %c0_i32_0 : i32, i32
  }
  func.func @transform_10(%arg0: i32) -> (i32, i32) {
    %c0_i32 = arith.constant 0 : i32
    %c0_i32_0 = arith.constant 0 : i32
    %c0_i32_1 = arith.constant 0 : i32
    return %c0_i32, %c0_i32_0 : i32, i32
  }
  func.func @transform_11(%arg0: i32) -> (i32, i32) {
    %c0_i32 = arith.constant 0 : i32
    %c0_i32_0 = arith.constant 0 : i32
    %c0_i32_1 = arith.constant 0 : i32
    return %c0_i32, %c0_i32_0 : i32, i32
  }
  func.func @transform_12(%arg0: i32) -> (i32, i32) {
    %c0_i32 = arith.constant 0 : i32
    %c0_i32_0 = arith.constant 0 : i32
    %c0_i32_1 = arith.constant 0 : i32
    return %c0_i32, %c0_i32_0 : i32, i32
  }
  func.func @transform_13(%arg0: i32) -> (i32, i32) {
    %c0_i32 = arith.constant 0 : i32
    %c0_i32_0 = arith.constant 0 : i32
    return %arg0, %c0_i32 : i32, i32
  }
}

module attributes {stable_mosaic.version = 11 : i64} {
  func.func @bottleneck_kernel(%arg0: i32, %arg1: memref<16x128xf32, #tpu.memory_space<vmem>>, %arg2: memref<1x2x128xf32, #tpu.memory_space<vmem>>, %arg3: memref<1x16xf32, #tpu.memory_space<vmem>>, %arg4: memref<16x1xf32, #tpu.memory_space<vmem>>, %arg5: memref<16x1xf32, #tpu.memory_space<vmem>>, %arg6: memref<16x1xf32, #tpu.memory_space<vmem>>, %arg7: memref<36x16x128xbf16, #tpu.memory_space<vmem>>, %arg8: memref<1408x128xbf16, #tpu.memory_space<vmem>>, %arg9: memref<384x256xbf16, #tpu.memory_space<vmem>>, %arg10: memref<128x128xf32, #tpu.memory_space<vmem>>, %arg11: memref<256x256xf32, #tpu.memory_space<vmem>>, %arg12: memref<15x128xf32, #tpu.memory_space<vmem>>, %arg13: memref<3x256xf32, #tpu.memory_space<vmem>>, %arg14: memref<16x128xf32, #tpu.memory_space<vmem>>) attributes {dimension_semantics = [#tpu.dimension_semantics<parallel>], iteration_bounds = array<i64: 1>, scalar_prefetch = 0 : i64, scratch_operands = 0 : i64, tpu.core_type = #tpu.core_type<tc>, window_params = [{transform_indices = @transform_0, window_bounds = array<i64: 16, 128>}, {transform_indices = @transform_1, window_bounds = array<i64: 1, 2, 128>}, {pipeline_mode = #tpu.pipeline_mode<synchronous>, transform_indices = @transform_2, window_bounds = array<i64: 1, 16>}, {pipeline_mode = #tpu.pipeline_mode<synchronous>, transform_indices = @transform_3, window_bounds = array<i64: 16, 1>}, {pipeline_mode = #tpu.pipeline_mode<synchronous>, transform_indices = @transform_4, window_bounds = array<i64: 16, 1>}, {pipeline_mode = #tpu.pipeline_mode<synchronous>, transform_indices = @transform_5, window_bounds = array<i64: 16, 1>}, {pipeline_mode = #tpu.pipeline_mode<synchronous>, transform_indices = @transform_6, window_bounds = array<i64: 36, 16, 128>}, {pipeline_mode = #tpu.pipeline_mode<synchronous>, transform_indices = @transform_7, window_bounds = array<i64: 1408, 128>}, {pipeline_mode = #tpu.pipeline_mode<synchronous>, transform_indices = @transform_8, window_bounds = array<i64: 384, 256>}, {pipeline_mode = #tpu.pipeline_mode<synchronous>, transform_indices = @transform_9, window_bounds = array<i64: 128, 128>}, {pipeline_mode = #tpu.pipeline_mode<synchronous>, transform_indices = @transform_10, window_bounds = array<i64: 256, 256>}, {pipeline_mode = #tpu.pipeline_mode<synchronous>, transform_indices = @transform_11, window_bounds = array<i64: 15, 128>}, {pipeline_mode = #tpu.pipeline_mode<synchronous>, transform_indices = @transform_12, window_bounds = array<i64: 3, 256>}, {transform_indices = @transform_13, window_bounds = array<i64: 16, 128>}]} {
    %c0 = arith.constant 0 : index
    %c0_0 = arith.constant 0 : index
    %0 = vector.load %arg1[%c0, %c0_0] : memref<16x128xf32, #tpu.memory_space<vmem>>, vector<16x128xf32>
    %c0_1 = arith.constant 0 : index
    %c0_2 = arith.constant 0 : index
    %1 = vector.load %arg3[%c0_1, %c0_2] : memref<1x16xf32, #tpu.memory_space<vmem>>, vector<1x16xf32>
    %c0_3 = arith.constant 0 : index
    %c0_4 = arith.constant 0 : index
    %2 = vector.load %arg4[%c0_3, %c0_4] : memref<16x1xf32, #tpu.memory_space<vmem>>, vector<16x1xf32>
    %c0_5 = arith.constant 0 : index
    %c0_6 = arith.constant 0 : index
    %3 = vector.load %arg5[%c0_5, %c0_6] : memref<16x1xf32, #tpu.memory_space<vmem>>, vector<16x1xf32>
    %c0_7 = arith.constant 0 : index
    %c0_8 = arith.constant 0 : index
    %4 = vector.load %arg6[%c0_7, %c0_8] : memref<16x1xf32, #tpu.memory_space<vmem>>, vector<16x1xf32>
    %c0_9 = arith.constant 0 : index
    %c0_10 = arith.constant 0 : index
    %5 = vector.load %arg10[%c0_9, %c0_10] : memref<128x128xf32, #tpu.memory_space<vmem>>, vector<128x128xf32>
    %c0_11 = arith.constant 0 : index
    %c0_12 = arith.constant 0 : index
    %6 = vector.load %arg11[%c0_11, %c0_12] : memref<256x256xf32, #tpu.memory_space<vmem>>, vector<256x256xf32>
    %c0_13 = arith.constant 0 : index
    %c0_14 = arith.constant 0 : index
    %7 = vector.load %arg12[%c0_13, %c0_14] : memref<15x128xf32, #tpu.memory_space<vmem>>, vector<1x128xf32>
    %c1 = arith.constant 1 : index
    %c0_15 = arith.constant 0 : index
    %8 = vector.load %arg12[%c1, %c0_15] : memref<15x128xf32, #tpu.memory_space<vmem>>, vector<1x128xf32>
    %cst = arith.constant dense<0.000000e+00> : vector<16x128xf32>
    %9 = tpu.matmul %0, %5, %cst {dimension_numbers = #tpu.dot_dimension_numbers<[1], [0], [0], [1], [0, 0, 1, 1], [], []>} : vector<16x128xf32>, vector<128x128xf32>, vector<16x128xf32> -> vector<16x128xf32>
    %10 = arith.subf %0, %9 : vector<16x128xf32>
    %11 = arith.mulf %10, %10 : vector<16x128xf32>
    %cst_16 = arith.constant dense<0.000000e+00> : vector<16x128xf32>
    %12 = tpu.matmul %11, %5, %cst_16 {dimension_numbers = #tpu.dot_dimension_numbers<[1], [0], [0], [1], [0, 0, 1, 1], [], []>} : vector<16x128xf32>, vector<128x128xf32>, vector<16x128xf32> -> vector<16x128xf32>
    %cst_17 = arith.constant 9.99999974E-6 : f32
    %13 = vector.broadcast %cst_17 : f32 to vector<16x128xf32>
    %14 = arith.addf %12, %13 : vector<16x128xf32>
    %15 = math.rsqrt %14 : vector<16x128xf32>
    %16 = arith.mulf %10, %15 : vector<16x128xf32>
    %17 = vector.broadcast %7 : vector<1x128xf32> to vector<16x128xf32>
    %18 = arith.mulf %16, %17 : vector<16x128xf32>
    %19 = vector.broadcast %8 : vector<1x128xf32> to vector<16x128xf32>
    %20 = arith.addf %18, %19 : vector<16x128xf32>
    %21 = vector.shape_cast %20 : vector<16x128xf32> to vector<1x16x128xf32>
    %cst_18 = arith.constant 0.000000e+00 : f32
    %22 = vector.broadcast %cst_18 : f32 to vector<1x16x128xf32>
    %c0_19 = arith.constant 0 : index
    %c0_20 = arith.constant 0 : index
    %c0_21 = arith.constant 0 : index
    %23 = vector.load %arg7[%c0_19, %c0_20, %c0_21] : memref<36x16x128xbf16, #tpu.memory_space<vmem>>, vector<1x16x128xbf16>
    %24 = vector.shape_cast %23 : vector<1x16x128xbf16> to vector<16x128xbf16>
    %25 = arith.extf %24 : vector<16x128xbf16> to vector<16x128xf32>
    %26 = vector.shape_cast %25 : vector<16x128xf32> to vector<1x16x128xf32>
    %27 = vector.extract_strided_slice %21 {offsets = [0, 0, 0], sizes = [1, 1, 128], strides = [1, 1, 1]} : vector<1x16x128xf32> to vector<1x1x128xf32>
    %28 = vector.shape_cast %27 : vector<1x1x128xf32> to vector<1x128xf32>
    %29 = vector.shape_cast %28 : vector<1x128xf32> to vector<1x1x128xf32>
    %30 = vector.broadcast %29 : vector<1x1x128xf32> to vector<1x16x128xf32>
    %31 = arith.mulf %26, %30 : vector<1x16x128xf32>
    %32 = arith.addf %22, %31 : vector<1x16x128xf32>
    %c1_22 = arith.constant 1 : index
    %c0_23 = arith.constant 0 : index
    %c0_24 = arith.constant 0 : index
    %33 = vector.load %arg7[%c1_22, %c0_23, %c0_24] : memref<36x16x128xbf16, #tpu.memory_space<vmem>>, vector<1x16x128xbf16>
    %34 = vector.shape_cast %33 : vector<1x16x128xbf16> to vector<16x128xbf16>
    %35 = arith.extf %34 : vector<16x128xbf16> to vector<16x128xf32>
    %36 = vector.shape_cast %35 : vector<16x128xf32> to vector<1x16x128xf32>
    %37 = vector.extract_strided_slice %21 {offsets = [0, 1, 0], sizes = [1, 1, 128], strides = [1, 1, 1]} : vector<1x16x128xf32> to vector<1x1x128xf32>
    %38 = vector.shape_cast %37 : vector<1x1x128xf32> to vector<1x128xf32>
    %39 = vector.shape_cast %38 : vector<1x128xf32> to vector<1x1x128xf32>
    %40 = vector.broadcast %39 : vector<1x1x128xf32> to vector<1x16x128xf32>
    %41 = arith.mulf %36, %40 : vector<1x16x128xf32>
    %42 = arith.addf %32, %41 : vector<1x16x128xf32>
    %c2 = arith.constant 2 : index
    %c0_25 = arith.constant 0 : index
    %c0_26 = arith.constant 0 : index
    %43 = vector.load %arg7[%c2, %c0_25, %c0_26] : memref<36x16x128xbf16, #tpu.memory_space<vmem>>, vector<1x16x128xbf16>
    %44 = vector.shape_cast %43 : vector<1x16x128xbf16> to vector<16x128xbf16>
    %45 = arith.extf %44 : vector<16x128xbf16> to vector<16x128xf32>
    %46 = vector.shape_cast %45 : vector<16x128xf32> to vector<1x16x128xf32>
    %47 = vector.extract_strided_slice %21 {offsets = [0, 2, 0], sizes = [1, 1, 128], strides = [1, 1, 1]} : vector<1x16x128xf32> to vector<1x1x128xf32>
    %48 = vector.shape_cast %47 : vector<1x1x128xf32> to vector<1x128xf32>
    %49 = vector.shape_cast %48 : vector<1x128xf32> to vector<1x1x128xf32>
    %50 = vector.broadcast %49 : vector<1x1x128xf32> to vector<1x16x128xf32>
    %51 = arith.mulf %46, %50 : vector<1x16x128xf32>
    %52 = arith.addf %42, %51 : vector<1x16x128xf32>
    %c3 = arith.constant 3 : index
    %c0_27 = arith.constant 0 : index
    %c0_28 = arith.constant 0 : index
    %53 = vector.load %arg7[%c3, %c0_27, %c0_28] : memref<36x16x128xbf16, #tpu.memory_space<vmem>>, vector<1x16x128xbf16>
    %54 = vector.shape_cast %53 : vector<1x16x128xbf16> to vector<16x128xbf16>
    %55 = arith.extf %54 : vector<16x128xbf16> to vector<16x128xf32>
    %56 = vector.shape_cast %55 : vector<16x128xf32> to vector<1x16x128xf32>
    %57 = vector.extract_strided_slice %21 {offsets = [0, 3, 0], sizes = [1, 1, 128], strides = [1, 1, 1]} : vector<1x16x128xf32> to vector<1x1x128xf32>
    %58 = vector.shape_cast %57 : vector<1x1x128xf32> to vector<1x128xf32>
    %59 = vector.shape_cast %58 : vector<1x128xf32> to vector<1x1x128xf32>
    %60 = vector.broadcast %59 : vector<1x1x128xf32> to vector<1x16x128xf32>
    %61 = arith.mulf %56, %60 : vector<1x16x128xf32>
    %62 = arith.addf %52, %61 : vector<1x16x128xf32>
    %c4 = arith.constant 4 : index
    %c0_29 = arith.constant 0 : index
    %c0_30 = arith.constant 0 : index
    %63 = vector.load %arg7[%c4, %c0_29, %c0_30] : memref<36x16x128xbf16, #tpu.memory_space<vmem>>, vector<1x16x128xbf16>
    %64 = vector.shape_cast %63 : vector<1x16x128xbf16> to vector<16x128xbf16>
    %65 = arith.extf %64 : vector<16x128xbf16> to vector<16x128xf32>
    %66 = vector.shape_cast %65 : vector<16x128xf32> to vector<1x16x128xf32>
    %67 = vector.extract_strided_slice %21 {offsets = [0, 4, 0], sizes = [1, 1, 128], strides = [1, 1, 1]} : vector<1x16x128xf32> to vector<1x1x128xf32>
    %68 = vector.shape_cast %67 : vector<1x1x128xf32> to vector<1x128xf32>
    %69 = vector.shape_cast %68 : vector<1x128xf32> to vector<1x1x128xf32>
    %70 = vector.broadcast %69 : vector<1x1x128xf32> to vector<1x16x128xf32>
    %71 = arith.mulf %66, %70 : vector<1x16x128xf32>
    %72 = arith.addf %62, %71 : vector<1x16x128xf32>
    %c5 = arith.constant 5 : index
    %c0_31 = arith.constant 0 : index
    %c0_32 = arith.constant 0 : index
    %73 = vector.load %arg7[%c5, %c0_31, %c0_32] : memref<36x16x128xbf16, #tpu.memory_space<vmem>>, vector<1x16x128xbf16>
    %74 = vector.shape_cast %73 : vector<1x16x128xbf16> to vector<16x128xbf16>
    %75 = arith.extf %74 : vector<16x128xbf16> to vector<16x128xf32>
    %76 = vector.shape_cast %75 : vector<16x128xf32> to vector<1x16x128xf32>
    %77 = vector.extract_strided_slice %21 {offsets = [0, 5, 0], sizes = [1, 1, 128], strides = [1, 1, 1]} : vector<1x16x128xf32> to vector<1x1x128xf32>
    %78 = vector.shape_cast %77 : vector<1x1x128xf32> to vector<1x128xf32>
    %79 = vector.shape_cast %78 : vector<1x128xf32> to vector<1x1x128xf32>
    %80 = vector.broadcast %79 : vector<1x1x128xf32> to vector<1x16x128xf32>
    %81 = arith.mulf %76, %80 : vector<1x16x128xf32>
    %82 = arith.addf %72, %81 : vector<1x16x128xf32>
    %c6 = arith.constant 6 : index
    %c0_33 = arith.constant 0 : index
    %c0_34 = arith.constant 0 : index
    %83 = vector.load %arg7[%c6, %c0_33, %c0_34] : memref<36x16x128xbf16, #tpu.memory_space<vmem>>, vector<1x16x128xbf16>
    %84 = vector.shape_cast %83 : vector<1x16x128xbf16> to vector<16x128xbf16>
    %85 = arith.extf %84 : vector<16x128xbf16> to vector<16x128xf32>
    %86 = vector.shape_cast %85 : vector<16x128xf32> to vector<1x16x128xf32>
    %87 = vector.extract_strided_slice %21 {offsets = [0, 6, 0], sizes = [1, 1, 128], strides = [1, 1, 1]} : vector<1x16x128xf32> to vector<1x1x128xf32>
    %88 = vector.shape_cast %87 : vector<1x1x128xf32> to vector<1x128xf32>
    %89 = vector.shape_cast %88 : vector<1x128xf32> to vector<1x1x128xf32>
    %90 = vector.broadcast %89 : vector<1x1x128xf32> to vector<1x16x128xf32>
    %91 = arith.mulf %86, %90 : vector<1x16x128xf32>
    %92 = arith.addf %82, %91 : vector<1x16x128xf32>
    %c7 = arith.constant 7 : index
    %c0_35 = arith.constant 0 : index
    %c0_36 = arith.constant 0 : index
    %93 = vector.load %arg7[%c7, %c0_35, %c0_36] : memref<36x16x128xbf16, #tpu.memory_space<vmem>>, vector<1x16x128xbf16>
    %94 = vector.shape_cast %93 : vector<1x16x128xbf16> to vector<16x128xbf16>
    %95 = arith.extf %94 : vector<16x128xbf16> to vector<16x128xf32>
    %96 = vector.shape_cast %95 : vector<16x128xf32> to vector<1x16x128xf32>
    %97 = vector.extract_strided_slice %21 {offsets = [0, 7, 0], sizes = [1, 1, 128], strides = [1, 1, 1]} : vector<1x16x128xf32> to vector<1x1x128xf32>
    %98 = vector.shape_cast %97 : vector<1x1x128xf32> to vector<1x128xf32>
    %99 = vector.shape_cast %98 : vector<1x128xf32> to vector<1x1x128xf32>
    %100 = vector.broadcast %99 : vector<1x1x128xf32> to vector<1x16x128xf32>
    %101 = arith.mulf %96, %100 : vector<1x16x128xf32>
    %102 = arith.addf %92, %101 : vector<1x16x128xf32>
    %c8 = arith.constant 8 : index
    %c0_37 = arith.constant 0 : index
    %c0_38 = arith.constant 0 : index
    %103 = vector.load %arg7[%c8, %c0_37, %c0_38] : memref<36x16x128xbf16, #tpu.memory_space<vmem>>, vector<1x16x128xbf16>
    %104 = vector.shape_cast %103 : vector<1x16x128xbf16> to vector<16x128xbf16>
    %105 = arith.extf %104 : vector<16x128xbf16> to vector<16x128xf32>
    %106 = vector.shape_cast %105 : vector<16x128xf32> to vector<1x16x128xf32>
    %107 = vector.extract_strided_slice %21 {offsets = [0, 8, 0], sizes = [1, 1, 128], strides = [1, 1, 1]} : vector<1x16x128xf32> to vector<1x1x128xf32>
    %108 = vector.shape_cast %107 : vector<1x1x128xf32> to vector<1x128xf32>
    %109 = vector.shape_cast %108 : vector<1x128xf32> to vector<1x1x128xf32>
    %110 = vector.broadcast %109 : vector<1x1x128xf32> to vector<1x16x128xf32>
    %111 = arith.mulf %106, %110 : vector<1x16x128xf32>
    %112 = arith.addf %102, %111 : vector<1x16x128xf32>
    %c9 = arith.constant 9 : index
    %c0_39 = arith.constant 0 : index
    %c0_40 = arith.constant 0 : index
    %113 = vector.load %arg7[%c9, %c0_39, %c0_40] : memref<36x16x128xbf16, #tpu.memory_space<vmem>>, vector<1x16x128xbf16>
    %114 = vector.shape_cast %113 : vector<1x16x128xbf16> to vector<16x128xbf16>
    %115 = arith.extf %114 : vector<16x128xbf16> to vector<16x128xf32>
    %116 = vector.shape_cast %115 : vector<16x128xf32> to vector<1x16x128xf32>
    %117 = vector.extract_strided_slice %21 {offsets = [0, 9, 0], sizes = [1, 1, 128], strides = [1, 1, 1]} : vector<1x16x128xf32> to vector<1x1x128xf32>
    %118 = vector.shape_cast %117 : vector<1x1x128xf32> to vector<1x128xf32>
    %119 = vector.shape_cast %118 : vector<1x128xf32> to vector<1x1x128xf32>
    %120 = vector.broadcast %119 : vector<1x1x128xf32> to vector<1x16x128xf32>
    %121 = arith.mulf %116, %120 : vector<1x16x128xf32>
    %122 = arith.addf %112, %121 : vector<1x16x128xf32>
    %c10 = arith.constant 10 : index
    %c0_41 = arith.constant 0 : index
    %c0_42 = arith.constant 0 : index
    %123 = vector.load %arg7[%c10, %c0_41, %c0_42] : memref<36x16x128xbf16, #tpu.memory_space<vmem>>, vector<1x16x128xbf16>
    %124 = vector.shape_cast %123 : vector<1x16x128xbf16> to vector<16x128xbf16>
    %125 = arith.extf %124 : vector<16x128xbf16> to vector<16x128xf32>
    %126 = vector.shape_cast %125 : vector<16x128xf32> to vector<1x16x128xf32>
    %127 = vector.extract_strided_slice %21 {offsets = [0, 10, 0], sizes = [1, 1, 128], strides = [1, 1, 1]} : vector<1x16x128xf32> to vector<1x1x128xf32>
    %128 = vector.shape_cast %127 : vector<1x1x128xf32> to vector<1x128xf32>
    %129 = vector.shape_cast %128 : vector<1x128xf32> to vector<1x1x128xf32>
    %130 = vector.broadcast %129 : vector<1x1x128xf32> to vector<1x16x128xf32>
    %131 = arith.mulf %126, %130 : vector<1x16x128xf32>
    %132 = arith.addf %122, %131 : vector<1x16x128xf32>
    %c11 = arith.constant 11 : index
    %c0_43 = arith.constant 0 : index
    %c0_44 = arith.constant 0 : index
    %133 = vector.load %arg7[%c11, %c0_43, %c0_44] : memref<36x16x128xbf16, #tpu.memory_space<vmem>>, vector<1x16x128xbf16>
    %134 = vector.shape_cast %133 : vector<1x16x128xbf16> to vector<16x128xbf16>
    %135 = arith.extf %134 : vector<16x128xbf16> to vector<16x128xf32>
    %136 = vector.shape_cast %135 : vector<16x128xf32> to vector<1x16x128xf32>
    %137 = vector.extract_strided_slice %21 {offsets = [0, 11, 0], sizes = [1, 1, 128], strides = [1, 1, 1]} : vector<1x16x128xf32> to vector<1x1x128xf32>
    %138 = vector.shape_cast %137 : vector<1x1x128xf32> to vector<1x128xf32>
    %139 = vector.shape_cast %138 : vector<1x128xf32> to vector<1x1x128xf32>
    %140 = vector.broadcast %139 : vector<1x1x128xf32> to vector<1x16x128xf32>
    %141 = arith.mulf %136, %140 : vector<1x16x128xf32>
    %142 = arith.addf %132, %141 : vector<1x16x128xf32>
    %143 = vector.shape_cast %142 : vector<1x16x128xf32> to vector<16x128xf32>
    %c2_45 = arith.constant 2 : index
    %c0_46 = arith.constant 0 : index
    %144 = vector.load %arg12[%c2_45, %c0_46] : memref<15x128xf32, #tpu.memory_space<vmem>>, vector<1x128xf32>
    %145 = vector.broadcast %144 : vector<1x128xf32> to vector<16x128xf32>
    %146 = arith.mulf %20, %145 : vector<16x128xf32>
    %147 = arith.addf %143, %146 : vector<16x128xf32>
    %cst_47 = arith.constant 5.000000e-01 : f32
    %148 = vector.broadcast %cst_47 : f32 to vector<16x128xf32>
    %149 = arith.mulf %148, %147 : vector<16x128xf32>
    %cst_48 = arith.constant 4.471500e-02 : f32
    %150 = vector.broadcast %cst_48 : f32 to vector<16x128xf32>
    %151 = arith.mulf %150, %147 : vector<16x128xf32>
    %152 = arith.mulf %151, %147 : vector<16x128xf32>
    %153 = arith.mulf %152, %147 : vector<16x128xf32>
    %154 = arith.addf %147, %153 : vector<16x128xf32>
    %cst_49 = arith.constant 0.797884583 : f32
    %155 = vector.broadcast %cst_49 : f32 to vector<16x128xf32>
    %156 = arith.mulf %155, %154 : vector<16x128xf32>
    %157 = math.tanh %156 : vector<16x128xf32>
    %cst_50 = arith.constant 1.000000e+00 : f32
    %158 = vector.broadcast %cst_50 : f32 to vector<16x128xf32>
    %159 = arith.addf %158, %157 : vector<16x128xf32>
    %160 = arith.mulf %149, %159 : vector<16x128xf32>
    %c0_51 = arith.constant 0 : index
    %c0_52 = arith.constant 0 : index
    %161 = vector.load %arg8[%c0_51, %c0_52] : memref<1408x128xbf16, #tpu.memory_space<vmem>>, vector<128x128xbf16>
    %162 = arith.truncf %160 : vector<16x128xf32> to vector<16x128xbf16>
    %cst_53 = arith.constant dense<0.000000e+00> : vector<16x128xf32>
    %163 = tpu.matmul %162, %161, %cst_53 {dimension_numbers = #tpu.dot_dimension_numbers<[1], [0], [0], [1], [0, 0, 1, 1], [], []>} : vector<16x128xbf16>, vector<128x128xbf16>, vector<16x128xf32> -> vector<16x128xf32>
    %164 = arith.addf %20, %163 : vector<16x128xf32>
    %c5_54 = arith.constant 5 : index
    %c0_55 = arith.constant 0 : index
    %165 = vector.load %arg12[%c5_54, %c0_55] : memref<15x128xf32, #tpu.memory_space<vmem>>, vector<1x128xf32>
    %166 = vector.broadcast %165 : vector<1x128xf32> to vector<16x128xf32>
    %167 = arith.addf %164, %166 : vector<16x128xf32>
    %168 = vector.shape_cast %167 : vector<16x128xf32> to vector<1x16x128xf32>
    %cst_56 = arith.constant 0.000000e+00 : f32
    %169 = vector.broadcast %cst_56 : f32 to vector<1x16x128xf32>
    %c12 = arith.constant 12 : index
    %c0_57 = arith.constant 0 : index
    %c0_58 = arith.constant 0 : index
    %170 = vector.load %arg7[%c12, %c0_57, %c0_58] : memref<36x16x128xbf16, #tpu.memory_space<vmem>>, vector<1x16x128xbf16>
    %171 = vector.shape_cast %170 : vector<1x16x128xbf16> to vector<16x128xbf16>
    %172 = arith.extf %171 : vector<16x128xbf16> to vector<16x128xf32>
    %173 = vector.shape_cast %172 : vector<16x128xf32> to vector<1x16x128xf32>
    %174 = vector.extract_strided_slice %168 {offsets = [0, 0, 0], sizes = [1, 1, 128], strides = [1, 1, 1]} : vector<1x16x128xf32> to vector<1x1x128xf32>
    %175 = vector.shape_cast %174 : vector<1x1x128xf32> to vector<1x128xf32>
    %176 = vector.shape_cast %175 : vector<1x128xf32> to vector<1x1x128xf32>
    %177 = vector.broadcast %176 : vector<1x1x128xf32> to vector<1x16x128xf32>
    %178 = arith.mulf %173, %177 : vector<1x16x128xf32>
    %179 = arith.addf %169, %178 : vector<1x16x128xf32>
    %c13 = arith.constant 13 : index
    %c0_59 = arith.constant 0 : index
    %c0_60 = arith.constant 0 : index
    %180 = vector.load %arg7[%c13, %c0_59, %c0_60] : memref<36x16x128xbf16, #tpu.memory_space<vmem>>, vector<1x16x128xbf16>
    %181 = vector.shape_cast %180 : vector<1x16x128xbf16> to vector<16x128xbf16>
    %182 = arith.extf %181 : vector<16x128xbf16> to vector<16x128xf32>
    %183 = vector.shape_cast %182 : vector<16x128xf32> to vector<1x16x128xf32>
    %184 = vector.extract_strided_slice %168 {offsets = [0, 1, 0], sizes = [1, 1, 128], strides = [1, 1, 1]} : vector<1x16x128xf32> to vector<1x1x128xf32>
    %185 = vector.shape_cast %184 : vector<1x1x128xf32> to vector<1x128xf32>
    %186 = vector.shape_cast %185 : vector<1x128xf32> to vector<1x1x128xf32>
    %187 = vector.broadcast %186 : vector<1x1x128xf32> to vector<1x16x128xf32>
    %188 = arith.mulf %183, %187 : vector<1x16x128xf32>
    %189 = arith.addf %179, %188 : vector<1x16x128xf32>
    %c14 = arith.constant 14 : index
    %c0_61 = arith.constant 0 : index
    %c0_62 = arith.constant 0 : index
    %190 = vector.load %arg7[%c14, %c0_61, %c0_62] : memref<36x16x128xbf16, #tpu.memory_space<vmem>>, vector<1x16x128xbf16>
    %191 = vector.shape_cast %190 : vector<1x16x128xbf16> to vector<16x128xbf16>
    %192 = arith.extf %191 : vector<16x128xbf16> to vector<16x128xf32>
    %193 = vector.shape_cast %192 : vector<16x128xf32> to vector<1x16x128xf32>
    %194 = vector.extract_strided_slice %168 {offsets = [0, 2, 0], sizes = [1, 1, 128], strides = [1, 1, 1]} : vector<1x16x128xf32> to vector<1x1x128xf32>
    %195 = vector.shape_cast %194 : vector<1x1x128xf32> to vector<1x128xf32>
    %196 = vector.shape_cast %195 : vector<1x128xf32> to vector<1x1x128xf32>
    %197 = vector.broadcast %196 : vector<1x1x128xf32> to vector<1x16x128xf32>
    %198 = arith.mulf %193, %197 : vector<1x16x128xf32>
    %199 = arith.addf %189, %198 : vector<1x16x128xf32>
    %c15 = arith.constant 15 : index
    %c0_63 = arith.constant 0 : index
    %c0_64 = arith.constant 0 : index
    %200 = vector.load %arg7[%c15, %c0_63, %c0_64] : memref<36x16x128xbf16, #tpu.memory_space<vmem>>, vector<1x16x128xbf16>
    %201 = vector.shape_cast %200 : vector<1x16x128xbf16> to vector<16x128xbf16>
    %202 = arith.extf %201 : vector<16x128xbf16> to vector<16x128xf32>
    %203 = vector.shape_cast %202 : vector<16x128xf32> to vector<1x16x128xf32>
    %204 = vector.extract_strided_slice %168 {offsets = [0, 3, 0], sizes = [1, 1, 128], strides = [1, 1, 1]} : vector<1x16x128xf32> to vector<1x1x128xf32>
    %205 = vector.shape_cast %204 : vector<1x1x128xf32> to vector<1x128xf32>
    %206 = vector.shape_cast %205 : vector<1x128xf32> to vector<1x1x128xf32>
    %207 = vector.broadcast %206 : vector<1x1x128xf32> to vector<1x16x128xf32>
    %208 = arith.mulf %203, %207 : vector<1x16x128xf32>
    %209 = arith.addf %199, %208 : vector<1x16x128xf32>
    %c16 = arith.constant 16 : index
    %c0_65 = arith.constant 0 : index
    %c0_66 = arith.constant 0 : index
    %210 = vector.load %arg7[%c16, %c0_65, %c0_66] : memref<36x16x128xbf16, #tpu.memory_space<vmem>>, vector<1x16x128xbf16>
    %211 = vector.shape_cast %210 : vector<1x16x128xbf16> to vector<16x128xbf16>
    %212 = arith.extf %211 : vector<16x128xbf16> to vector<16x128xf32>
    %213 = vector.shape_cast %212 : vector<16x128xf32> to vector<1x16x128xf32>
    %214 = vector.extract_strided_slice %168 {offsets = [0, 4, 0], sizes = [1, 1, 128], strides = [1, 1, 1]} : vector<1x16x128xf32> to vector<1x1x128xf32>
    %215 = vector.shape_cast %214 : vector<1x1x128xf32> to vector<1x128xf32>
    %216 = vector.shape_cast %215 : vector<1x128xf32> to vector<1x1x128xf32>
    %217 = vector.broadcast %216 : vector<1x1x128xf32> to vector<1x16x128xf32>
    %218 = arith.mulf %213, %217 : vector<1x16x128xf32>
    %219 = arith.addf %209, %218 : vector<1x16x128xf32>
    %c17 = arith.constant 17 : index
    %c0_67 = arith.constant 0 : index
    %c0_68 = arith.constant 0 : index
    %220 = vector.load %arg7[%c17, %c0_67, %c0_68] : memref<36x16x128xbf16, #tpu.memory_space<vmem>>, vector<1x16x128xbf16>
    %221 = vector.shape_cast %220 : vector<1x16x128xbf16> to vector<16x128xbf16>
    %222 = arith.extf %221 : vector<16x128xbf16> to vector<16x128xf32>
    %223 = vector.shape_cast %222 : vector<16x128xf32> to vector<1x16x128xf32>
    %224 = vector.extract_strided_slice %168 {offsets = [0, 5, 0], sizes = [1, 1, 128], strides = [1, 1, 1]} : vector<1x16x128xf32> to vector<1x1x128xf32>
    %225 = vector.shape_cast %224 : vector<1x1x128xf32> to vector<1x128xf32>
    %226 = vector.shape_cast %225 : vector<1x128xf32> to vector<1x1x128xf32>
    %227 = vector.broadcast %226 : vector<1x1x128xf32> to vector<1x16x128xf32>
    %228 = arith.mulf %223, %227 : vector<1x16x128xf32>
    %229 = arith.addf %219, %228 : vector<1x16x128xf32>
    %c18 = arith.constant 18 : index
    %c0_69 = arith.constant 0 : index
    %c0_70 = arith.constant 0 : index
    %230 = vector.load %arg7[%c18, %c0_69, %c0_70] : memref<36x16x128xbf16, #tpu.memory_space<vmem>>, vector<1x16x128xbf16>
    %231 = vector.shape_cast %230 : vector<1x16x128xbf16> to vector<16x128xbf16>
    %232 = arith.extf %231 : vector<16x128xbf16> to vector<16x128xf32>
    %233 = vector.shape_cast %232 : vector<16x128xf32> to vector<1x16x128xf32>
    %234 = vector.extract_strided_slice %168 {offsets = [0, 6, 0], sizes = [1, 1, 128], strides = [1, 1, 1]} : vector<1x16x128xf32> to vector<1x1x128xf32>
    %235 = vector.shape_cast %234 : vector<1x1x128xf32> to vector<1x128xf32>
    %236 = vector.shape_cast %235 : vector<1x128xf32> to vector<1x1x128xf32>
    %237 = vector.broadcast %236 : vector<1x1x128xf32> to vector<1x16x128xf32>
    %238 = arith.mulf %233, %237 : vector<1x16x128xf32>
    %239 = arith.addf %229, %238 : vector<1x16x128xf32>
    %c19 = arith.constant 19 : index
    %c0_71 = arith.constant 0 : index
    %c0_72 = arith.constant 0 : index
    %240 = vector.load %arg7[%c19, %c0_71, %c0_72] : memref<36x16x128xbf16, #tpu.memory_space<vmem>>, vector<1x16x128xbf16>
    %241 = vector.shape_cast %240 : vector<1x16x128xbf16> to vector<16x128xbf16>
    %242 = arith.extf %241 : vector<16x128xbf16> to vector<16x128xf32>
    %243 = vector.shape_cast %242 : vector<16x128xf32> to vector<1x16x128xf32>
    %244 = vector.extract_strided_slice %168 {offsets = [0, 7, 0], sizes = [1, 1, 128], strides = [1, 1, 1]} : vector<1x16x128xf32> to vector<1x1x128xf32>
    %245 = vector.shape_cast %244 : vector<1x1x128xf32> to vector<1x128xf32>
    %246 = vector.shape_cast %245 : vector<1x128xf32> to vector<1x1x128xf32>
    %247 = vector.broadcast %246 : vector<1x1x128xf32> to vector<1x16x128xf32>
    %248 = arith.mulf %243, %247 : vector<1x16x128xf32>
    %249 = arith.addf %239, %248 : vector<1x16x128xf32>
    %c20 = arith.constant 20 : index
    %c0_73 = arith.constant 0 : index
    %c0_74 = arith.constant 0 : index
    %250 = vector.load %arg7[%c20, %c0_73, %c0_74] : memref<36x16x128xbf16, #tpu.memory_space<vmem>>, vector<1x16x128xbf16>
    %251 = vector.shape_cast %250 : vector<1x16x128xbf16> to vector<16x128xbf16>
    %252 = arith.extf %251 : vector<16x128xbf16> to vector<16x128xf32>
    %253 = vector.shape_cast %252 : vector<16x128xf32> to vector<1x16x128xf32>
    %254 = vector.extract_strided_slice %168 {offsets = [0, 8, 0], sizes = [1, 1, 128], strides = [1, 1, 1]} : vector<1x16x128xf32> to vector<1x1x128xf32>
    %255 = vector.shape_cast %254 : vector<1x1x128xf32> to vector<1x128xf32>
    %256 = vector.shape_cast %255 : vector<1x128xf32> to vector<1x1x128xf32>
    %257 = vector.broadcast %256 : vector<1x1x128xf32> to vector<1x16x128xf32>
    %258 = arith.mulf %253, %257 : vector<1x16x128xf32>
    %259 = arith.addf %249, %258 : vector<1x16x128xf32>
    %c21 = arith.constant 21 : index
    %c0_75 = arith.constant 0 : index
    %c0_76 = arith.constant 0 : index
    %260 = vector.load %arg7[%c21, %c0_75, %c0_76] : memref<36x16x128xbf16, #tpu.memory_space<vmem>>, vector<1x16x128xbf16>
    %261 = vector.shape_cast %260 : vector<1x16x128xbf16> to vector<16x128xbf16>
    %262 = arith.extf %261 : vector<16x128xbf16> to vector<16x128xf32>
    %263 = vector.shape_cast %262 : vector<16x128xf32> to vector<1x16x128xf32>
    %264 = vector.extract_strided_slice %168 {offsets = [0, 9, 0], sizes = [1, 1, 128], strides = [1, 1, 1]} : vector<1x16x128xf32> to vector<1x1x128xf32>
    %265 = vector.shape_cast %264 : vector<1x1x128xf32> to vector<1x128xf32>
    %266 = vector.shape_cast %265 : vector<1x128xf32> to vector<1x1x128xf32>
    %267 = vector.broadcast %266 : vector<1x1x128xf32> to vector<1x16x128xf32>
    %268 = arith.mulf %263, %267 : vector<1x16x128xf32>
    %269 = arith.addf %259, %268 : vector<1x16x128xf32>
    %c22 = arith.constant 22 : index
    %c0_77 = arith.constant 0 : index
    %c0_78 = arith.constant 0 : index
    %270 = vector.load %arg7[%c22, %c0_77, %c0_78] : memref<36x16x128xbf16, #tpu.memory_space<vmem>>, vector<1x16x128xbf16>
    %271 = vector.shape_cast %270 : vector<1x16x128xbf16> to vector<16x128xbf16>
    %272 = arith.extf %271 : vector<16x128xbf16> to vector<16x128xf32>
    %273 = vector.shape_cast %272 : vector<16x128xf32> to vector<1x16x128xf32>
    %274 = vector.extract_strided_slice %168 {offsets = [0, 10, 0], sizes = [1, 1, 128], strides = [1, 1, 1]} : vector<1x16x128xf32> to vector<1x1x128xf32>
    %275 = vector.shape_cast %274 : vector<1x1x128xf32> to vector<1x128xf32>
    %276 = vector.shape_cast %275 : vector<1x128xf32> to vector<1x1x128xf32>
    %277 = vector.broadcast %276 : vector<1x1x128xf32> to vector<1x16x128xf32>
    %278 = arith.mulf %273, %277 : vector<1x16x128xf32>
    %279 = arith.addf %269, %278 : vector<1x16x128xf32>
    %c23 = arith.constant 23 : index
    %c0_79 = arith.constant 0 : index
    %c0_80 = arith.constant 0 : index
    %280 = vector.load %arg7[%c23, %c0_79, %c0_80] : memref<36x16x128xbf16, #tpu.memory_space<vmem>>, vector<1x16x128xbf16>
    %281 = vector.shape_cast %280 : vector<1x16x128xbf16> to vector<16x128xbf16>
    %282 = arith.extf %281 : vector<16x128xbf16> to vector<16x128xf32>
    %283 = vector.shape_cast %282 : vector<16x128xf32> to vector<1x16x128xf32>
    %284 = vector.extract_strided_slice %168 {offsets = [0, 11, 0], sizes = [1, 1, 128], strides = [1, 1, 1]} : vector<1x16x128xf32> to vector<1x1x128xf32>
    %285 = vector.shape_cast %284 : vector<1x1x128xf32> to vector<1x128xf32>
    %286 = vector.shape_cast %285 : vector<1x128xf32> to vector<1x1x128xf32>
    %287 = vector.broadcast %286 : vector<1x1x128xf32> to vector<1x16x128xf32>
    %288 = arith.mulf %283, %287 : vector<1x16x128xf32>
    %289 = arith.addf %279, %288 : vector<1x16x128xf32>
    %290 = vector.shape_cast %289 : vector<1x16x128xf32> to vector<16x128xf32>
    %c3_81 = arith.constant 3 : index
    %c0_82 = arith.constant 0 : index
    %291 = vector.load %arg12[%c3_81, %c0_82] : memref<15x128xf32, #tpu.memory_space<vmem>>, vector<1x128xf32>
    %292 = vector.broadcast %291 : vector<1x128xf32> to vector<16x128xf32>
    %293 = arith.mulf %167, %292 : vector<16x128xf32>
    %294 = arith.addf %290, %293 : vector<16x128xf32>
    %cst_83 = arith.constant 5.000000e-01 : f32
    %295 = vector.broadcast %cst_83 : f32 to vector<16x128xf32>
    %296 = arith.mulf %295, %294 : vector<16x128xf32>
    %cst_84 = arith.constant 4.471500e-02 : f32
    %297 = vector.broadcast %cst_84 : f32 to vector<16x128xf32>
    %298 = arith.mulf %297, %294 : vector<16x128xf32>
    %299 = arith.mulf %298, %294 : vector<16x128xf32>
    %300 = arith.mulf %299, %294 : vector<16x128xf32>
    %301 = arith.addf %294, %300 : vector<16x128xf32>
    %cst_85 = arith.constant 0.797884583 : f32
    %302 = vector.broadcast %cst_85 : f32 to vector<16x128xf32>
    %303 = arith.mulf %302, %301 : vector<16x128xf32>
    %304 = math.tanh %303 : vector<16x128xf32>
    %cst_86 = arith.constant 1.000000e+00 : f32
    %305 = vector.broadcast %cst_86 : f32 to vector<16x128xf32>
    %306 = arith.addf %305, %304 : vector<16x128xf32>
    %307 = arith.mulf %296, %306 : vector<16x128xf32>
    %c128 = arith.constant 128 : index
    %c0_87 = arith.constant 0 : index
    %308 = vector.load %arg8[%c128, %c0_87] : memref<1408x128xbf16, #tpu.memory_space<vmem>>, vector<128x128xbf16>
    %309 = arith.truncf %307 : vector<16x128xf32> to vector<16x128xbf16>
    %cst_88 = arith.constant dense<0.000000e+00> : vector<16x128xf32>
    %310 = tpu.matmul %309, %308, %cst_88 {dimension_numbers = #tpu.dot_dimension_numbers<[1], [0], [0], [1], [0, 0, 1, 1], [], []>} : vector<16x128xbf16>, vector<128x128xbf16>, vector<16x128xf32> -> vector<16x128xf32>
    %311 = arith.addf %167, %310 : vector<16x128xf32>
    %c6_89 = arith.constant 6 : index
    %c0_90 = arith.constant 0 : index
    %312 = vector.load %arg12[%c6_89, %c0_90] : memref<15x128xf32, #tpu.memory_space<vmem>>, vector<1x128xf32>
    %313 = vector.broadcast %312 : vector<1x128xf32> to vector<16x128xf32>
    %314 = arith.addf %311, %313 : vector<16x128xf32>
    %315 = vector.shape_cast %314 : vector<16x128xf32> to vector<1x16x128xf32>
    %cst_91 = arith.constant 0.000000e+00 : f32
    %316 = vector.broadcast %cst_91 : f32 to vector<1x16x128xf32>
    %c24 = arith.constant 24 : index
    %c0_92 = arith.constant 0 : index
    %c0_93 = arith.constant 0 : index
    %317 = vector.load %arg7[%c24, %c0_92, %c0_93] : memref<36x16x128xbf16, #tpu.memory_space<vmem>>, vector<1x16x128xbf16>
    %318 = vector.shape_cast %317 : vector<1x16x128xbf16> to vector<16x128xbf16>
    %319 = arith.extf %318 : vector<16x128xbf16> to vector<16x128xf32>
    %320 = vector.shape_cast %319 : vector<16x128xf32> to vector<1x16x128xf32>
    %321 = vector.extract_strided_slice %315 {offsets = [0, 0, 0], sizes = [1, 1, 128], strides = [1, 1, 1]} : vector<1x16x128xf32> to vector<1x1x128xf32>
    %322 = vector.shape_cast %321 : vector<1x1x128xf32> to vector<1x128xf32>
    %323 = vector.shape_cast %322 : vector<1x128xf32> to vector<1x1x128xf32>
    %324 = vector.broadcast %323 : vector<1x1x128xf32> to vector<1x16x128xf32>
    %325 = arith.mulf %320, %324 : vector<1x16x128xf32>
    %326 = arith.addf %316, %325 : vector<1x16x128xf32>
    %c25 = arith.constant 25 : index
    %c0_94 = arith.constant 0 : index
    %c0_95 = arith.constant 0 : index
    %327 = vector.load %arg7[%c25, %c0_94, %c0_95] : memref<36x16x128xbf16, #tpu.memory_space<vmem>>, vector<1x16x128xbf16>
    %328 = vector.shape_cast %327 : vector<1x16x128xbf16> to vector<16x128xbf16>
    %329 = arith.extf %328 : vector<16x128xbf16> to vector<16x128xf32>
    %330 = vector.shape_cast %329 : vector<16x128xf32> to vector<1x16x128xf32>
    %331 = vector.extract_strided_slice %315 {offsets = [0, 1, 0], sizes = [1, 1, 128], strides = [1, 1, 1]} : vector<1x16x128xf32> to vector<1x1x128xf32>
    %332 = vector.shape_cast %331 : vector<1x1x128xf32> to vector<1x128xf32>
    %333 = vector.shape_cast %332 : vector<1x128xf32> to vector<1x1x128xf32>
    %334 = vector.broadcast %333 : vector<1x1x128xf32> to vector<1x16x128xf32>
    %335 = arith.mulf %330, %334 : vector<1x16x128xf32>
    %336 = arith.addf %326, %335 : vector<1x16x128xf32>
    %c26 = arith.constant 26 : index
    %c0_96 = arith.constant 0 : index
    %c0_97 = arith.constant 0 : index
    %337 = vector.load %arg7[%c26, %c0_96, %c0_97] : memref<36x16x128xbf16, #tpu.memory_space<vmem>>, vector<1x16x128xbf16>
    %338 = vector.shape_cast %337 : vector<1x16x128xbf16> to vector<16x128xbf16>
    %339 = arith.extf %338 : vector<16x128xbf16> to vector<16x128xf32>
    %340 = vector.shape_cast %339 : vector<16x128xf32> to vector<1x16x128xf32>
    %341 = vector.extract_strided_slice %315 {offsets = [0, 2, 0], sizes = [1, 1, 128], strides = [1, 1, 1]} : vector<1x16x128xf32> to vector<1x1x128xf32>
    %342 = vector.shape_cast %341 : vector<1x1x128xf32> to vector<1x128xf32>
    %343 = vector.shape_cast %342 : vector<1x128xf32> to vector<1x1x128xf32>
    %344 = vector.broadcast %343 : vector<1x1x128xf32> to vector<1x16x128xf32>
    %345 = arith.mulf %340, %344 : vector<1x16x128xf32>
    %346 = arith.addf %336, %345 : vector<1x16x128xf32>
    %c27 = arith.constant 27 : index
    %c0_98 = arith.constant 0 : index
    %c0_99 = arith.constant 0 : index
    %347 = vector.load %arg7[%c27, %c0_98, %c0_99] : memref<36x16x128xbf16, #tpu.memory_space<vmem>>, vector<1x16x128xbf16>
    %348 = vector.shape_cast %347 : vector<1x16x128xbf16> to vector<16x128xbf16>
    %349 = arith.extf %348 : vector<16x128xbf16> to vector<16x128xf32>
    %350 = vector.shape_cast %349 : vector<16x128xf32> to vector<1x16x128xf32>
    %351 = vector.extract_strided_slice %315 {offsets = [0, 3, 0], sizes = [1, 1, 128], strides = [1, 1, 1]} : vector<1x16x128xf32> to vector<1x1x128xf32>
    %352 = vector.shape_cast %351 : vector<1x1x128xf32> to vector<1x128xf32>
    %353 = vector.shape_cast %352 : vector<1x128xf32> to vector<1x1x128xf32>
    %354 = vector.broadcast %353 : vector<1x1x128xf32> to vector<1x16x128xf32>
    %355 = arith.mulf %350, %354 : vector<1x16x128xf32>
    %356 = arith.addf %346, %355 : vector<1x16x128xf32>
    %c28 = arith.constant 28 : index
    %c0_100 = arith.constant 0 : index
    %c0_101 = arith.constant 0 : index
    %357 = vector.load %arg7[%c28, %c0_100, %c0_101] : memref<36x16x128xbf16, #tpu.memory_space<vmem>>, vector<1x16x128xbf16>
    %358 = vector.shape_cast %357 : vector<1x16x128xbf16> to vector<16x128xbf16>
    %359 = arith.extf %358 : vector<16x128xbf16> to vector<16x128xf32>
    %360 = vector.shape_cast %359 : vector<16x128xf32> to vector<1x16x128xf32>
    %361 = vector.extract_strided_slice %315 {offsets = [0, 4, 0], sizes = [1, 1, 128], strides = [1, 1, 1]} : vector<1x16x128xf32> to vector<1x1x128xf32>
    %362 = vector.shape_cast %361 : vector<1x1x128xf32> to vector<1x128xf32>
    %363 = vector.shape_cast %362 : vector<1x128xf32> to vector<1x1x128xf32>
    %364 = vector.broadcast %363 : vector<1x1x128xf32> to vector<1x16x128xf32>
    %365 = arith.mulf %360, %364 : vector<1x16x128xf32>
    %366 = arith.addf %356, %365 : vector<1x16x128xf32>
    %c29 = arith.constant 29 : index
    %c0_102 = arith.constant 0 : index
    %c0_103 = arith.constant 0 : index
    %367 = vector.load %arg7[%c29, %c0_102, %c0_103] : memref<36x16x128xbf16, #tpu.memory_space<vmem>>, vector<1x16x128xbf16>
    %368 = vector.shape_cast %367 : vector<1x16x128xbf16> to vector<16x128xbf16>
    %369 = arith.extf %368 : vector<16x128xbf16> to vector<16x128xf32>
    %370 = vector.shape_cast %369 : vector<16x128xf32> to vector<1x16x128xf32>
    %371 = vector.extract_strided_slice %315 {offsets = [0, 5, 0], sizes = [1, 1, 128], strides = [1, 1, 1]} : vector<1x16x128xf32> to vector<1x1x128xf32>
    %372 = vector.shape_cast %371 : vector<1x1x128xf32> to vector<1x128xf32>
    %373 = vector.shape_cast %372 : vector<1x128xf32> to vector<1x1x128xf32>
    %374 = vector.broadcast %373 : vector<1x1x128xf32> to vector<1x16x128xf32>
    %375 = arith.mulf %370, %374 : vector<1x16x128xf32>
    %376 = arith.addf %366, %375 : vector<1x16x128xf32>
    %c30 = arith.constant 30 : index
    %c0_104 = arith.constant 0 : index
    %c0_105 = arith.constant 0 : index
    %377 = vector.load %arg7[%c30, %c0_104, %c0_105] : memref<36x16x128xbf16, #tpu.memory_space<vmem>>, vector<1x16x128xbf16>
    %378 = vector.shape_cast %377 : vector<1x16x128xbf16> to vector<16x128xbf16>
    %379 = arith.extf %378 : vector<16x128xbf16> to vector<16x128xf32>
    %380 = vector.shape_cast %379 : vector<16x128xf32> to vector<1x16x128xf32>
    %381 = vector.extract_strided_slice %315 {offsets = [0, 6, 0], sizes = [1, 1, 128], strides = [1, 1, 1]} : vector<1x16x128xf32> to vector<1x1x128xf32>
    %382 = vector.shape_cast %381 : vector<1x1x128xf32> to vector<1x128xf32>
    %383 = vector.shape_cast %382 : vector<1x128xf32> to vector<1x1x128xf32>
    %384 = vector.broadcast %383 : vector<1x1x128xf32> to vector<1x16x128xf32>
    %385 = arith.mulf %380, %384 : vector<1x16x128xf32>
    %386 = arith.addf %376, %385 : vector<1x16x128xf32>
    %c31 = arith.constant 31 : index
    %c0_106 = arith.constant 0 : index
    %c0_107 = arith.constant 0 : index
    %387 = vector.load %arg7[%c31, %c0_106, %c0_107] : memref<36x16x128xbf16, #tpu.memory_space<vmem>>, vector<1x16x128xbf16>
    %388 = vector.shape_cast %387 : vector<1x16x128xbf16> to vector<16x128xbf16>
    %389 = arith.extf %388 : vector<16x128xbf16> to vector<16x128xf32>
    %390 = vector.shape_cast %389 : vector<16x128xf32> to vector<1x16x128xf32>
    %391 = vector.extract_strided_slice %315 {offsets = [0, 7, 0], sizes = [1, 1, 128], strides = [1, 1, 1]} : vector<1x16x128xf32> to vector<1x1x128xf32>
    %392 = vector.shape_cast %391 : vector<1x1x128xf32> to vector<1x128xf32>
    %393 = vector.shape_cast %392 : vector<1x128xf32> to vector<1x1x128xf32>
    %394 = vector.broadcast %393 : vector<1x1x128xf32> to vector<1x16x128xf32>
    %395 = arith.mulf %390, %394 : vector<1x16x128xf32>
    %396 = arith.addf %386, %395 : vector<1x16x128xf32>
    %c32 = arith.constant 32 : index
    %c0_108 = arith.constant 0 : index
    %c0_109 = arith.constant 0 : index
    %397 = vector.load %arg7[%c32, %c0_108, %c0_109] : memref<36x16x128xbf16, #tpu.memory_space<vmem>>, vector<1x16x128xbf16>
    %398 = vector.shape_cast %397 : vector<1x16x128xbf16> to vector<16x128xbf16>
    %399 = arith.extf %398 : vector<16x128xbf16> to vector<16x128xf32>
    %400 = vector.shape_cast %399 : vector<16x128xf32> to vector<1x16x128xf32>
    %401 = vector.extract_strided_slice %315 {offsets = [0, 8, 0], sizes = [1, 1, 128], strides = [1, 1, 1]} : vector<1x16x128xf32> to vector<1x1x128xf32>
    %402 = vector.shape_cast %401 : vector<1x1x128xf32> to vector<1x128xf32>
    %403 = vector.shape_cast %402 : vector<1x128xf32> to vector<1x1x128xf32>
    %404 = vector.broadcast %403 : vector<1x1x128xf32> to vector<1x16x128xf32>
    %405 = arith.mulf %400, %404 : vector<1x16x128xf32>
    %406 = arith.addf %396, %405 : vector<1x16x128xf32>
    %c33 = arith.constant 33 : index
    %c0_110 = arith.constant 0 : index
    %c0_111 = arith.constant 0 : index
    %407 = vector.load %arg7[%c33, %c0_110, %c0_111] : memref<36x16x128xbf16, #tpu.memory_space<vmem>>, vector<1x16x128xbf16>
    %408 = vector.shape_cast %407 : vector<1x16x128xbf16> to vector<16x128xbf16>
    %409 = arith.extf %408 : vector<16x128xbf16> to vector<16x128xf32>
    %410 = vector.shape_cast %409 : vector<16x128xf32> to vector<1x16x128xf32>
    %411 = vector.extract_strided_slice %315 {offsets = [0, 9, 0], sizes = [1, 1, 128], strides = [1, 1, 1]} : vector<1x16x128xf32> to vector<1x1x128xf32>
    %412 = vector.shape_cast %411 : vector<1x1x128xf32> to vector<1x128xf32>
    %413 = vector.shape_cast %412 : vector<1x128xf32> to vector<1x1x128xf32>
    %414 = vector.broadcast %413 : vector<1x1x128xf32> to vector<1x16x128xf32>
    %415 = arith.mulf %410, %414 : vector<1x16x128xf32>
    %416 = arith.addf %406, %415 : vector<1x16x128xf32>
    %c34 = arith.constant 34 : index
    %c0_112 = arith.constant 0 : index
    %c0_113 = arith.constant 0 : index
    %417 = vector.load %arg7[%c34, %c0_112, %c0_113] : memref<36x16x128xbf16, #tpu.memory_space<vmem>>, vector<1x16x128xbf16>
    %418 = vector.shape_cast %417 : vector<1x16x128xbf16> to vector<16x128xbf16>
    %419 = arith.extf %418 : vector<16x128xbf16> to vector<16x128xf32>
    %420 = vector.shape_cast %419 : vector<16x128xf32> to vector<1x16x128xf32>
    %421 = vector.extract_strided_slice %315 {offsets = [0, 10, 0], sizes = [1, 1, 128], strides = [1, 1, 1]} : vector<1x16x128xf32> to vector<1x1x128xf32>
    %422 = vector.shape_cast %421 : vector<1x1x128xf32> to vector<1x128xf32>
    %423 = vector.shape_cast %422 : vector<1x128xf32> to vector<1x1x128xf32>
    %424 = vector.broadcast %423 : vector<1x1x128xf32> to vector<1x16x128xf32>
    %425 = arith.mulf %420, %424 : vector<1x16x128xf32>
    %426 = arith.addf %416, %425 : vector<1x16x128xf32>
    %c35 = arith.constant 35 : index
    %c0_114 = arith.constant 0 : index
    %c0_115 = arith.constant 0 : index
    %427 = vector.load %arg7[%c35, %c0_114, %c0_115] : memref<36x16x128xbf16, #tpu.memory_space<vmem>>, vector<1x16x128xbf16>
    %428 = vector.shape_cast %427 : vector<1x16x128xbf16> to vector<16x128xbf16>
    %429 = arith.extf %428 : vector<16x128xbf16> to vector<16x128xf32>
    %430 = vector.shape_cast %429 : vector<16x128xf32> to vector<1x16x128xf32>
    %431 = vector.extract_strided_slice %315 {offsets = [0, 11, 0], sizes = [1, 1, 128], strides = [1, 1, 1]} : vector<1x16x128xf32> to vector<1x1x128xf32>
    %432 = vector.shape_cast %431 : vector<1x1x128xf32> to vector<1x128xf32>
    %433 = vector.shape_cast %432 : vector<1x128xf32> to vector<1x1x128xf32>
    %434 = vector.broadcast %433 : vector<1x1x128xf32> to vector<1x16x128xf32>
    %435 = arith.mulf %430, %434 : vector<1x16x128xf32>
    %436 = arith.addf %426, %435 : vector<1x16x128xf32>
    %437 = vector.shape_cast %436 : vector<1x16x128xf32> to vector<16x128xf32>
    %c4_116 = arith.constant 4 : index
    %c0_117 = arith.constant 0 : index
    %438 = vector.load %arg12[%c4_116, %c0_117] : memref<15x128xf32, #tpu.memory_space<vmem>>, vector<1x128xf32>
    %439 = vector.broadcast %438 : vector<1x128xf32> to vector<16x128xf32>
    %440 = arith.mulf %314, %439 : vector<16x128xf32>
    %441 = arith.addf %437, %440 : vector<16x128xf32>
    %cst_118 = arith.constant 5.000000e-01 : f32
    %442 = vector.broadcast %cst_118 : f32 to vector<16x128xf32>
    %443 = arith.mulf %442, %441 : vector<16x128xf32>
    %cst_119 = arith.constant 4.471500e-02 : f32
    %444 = vector.broadcast %cst_119 : f32 to vector<16x128xf32>
    %445 = arith.mulf %444, %441 : vector<16x128xf32>
    %446 = arith.mulf %445, %441 : vector<16x128xf32>
    %447 = arith.mulf %446, %441 : vector<16x128xf32>
    %448 = arith.addf %441, %447 : vector<16x128xf32>
    %cst_120 = arith.constant 0.797884583 : f32
    %449 = vector.broadcast %cst_120 : f32 to vector<16x128xf32>
    %450 = arith.mulf %449, %448 : vector<16x128xf32>
    %451 = math.tanh %450 : vector<16x128xf32>
    %cst_121 = arith.constant 1.000000e+00 : f32
    %452 = vector.broadcast %cst_121 : f32 to vector<16x128xf32>
    %453 = arith.addf %452, %451 : vector<16x128xf32>
    %454 = arith.mulf %443, %453 : vector<16x128xf32>
    %c256 = arith.constant 256 : index
    %c0_122 = arith.constant 0 : index
    %455 = vector.load %arg8[%c256, %c0_122] : memref<1408x128xbf16, #tpu.memory_space<vmem>>, vector<128x128xbf16>
    %456 = arith.truncf %454 : vector<16x128xf32> to vector<16x128xbf16>
    %cst_123 = arith.constant dense<0.000000e+00> : vector<16x128xf32>
    %457 = tpu.matmul %456, %455, %cst_123 {dimension_numbers = #tpu.dot_dimension_numbers<[1], [0], [0], [1], [0, 0, 1, 1], [], []>} : vector<16x128xbf16>, vector<128x128xbf16>, vector<16x128xf32> -> vector<16x128xf32>
    %458 = arith.addf %314, %457 : vector<16x128xf32>
    %c7_124 = arith.constant 7 : index
    %c0_125 = arith.constant 0 : index
    %459 = vector.load %arg12[%c7_124, %c0_125] : memref<15x128xf32, #tpu.memory_space<vmem>>, vector<1x128xf32>
    %460 = vector.broadcast %459 : vector<1x128xf32> to vector<16x128xf32>
    %461 = arith.addf %458, %460 : vector<16x128xf32>
    %cst_126 = arith.constant 0.000000e+00 : f32
    %462 = vector.broadcast %cst_126 : f32 to vector<1x128xf32>
    %463 = vector.extract_strided_slice %461 {offsets = [0, 0], sizes = [15, 128], strides = [1, 1]} : vector<16x128xf32> to vector<15x128xf32>
    %464 = tpu.concatenate %462, %463 in 0 : vector<1x128xf32>, vector<15x128xf32> -> vector<16x128xf32>
    %465 = vector.broadcast %3 : vector<16x1xf32> to vector<16x128xf32>
    %466 = arith.mulf %464, %465 : vector<16x128xf32>
    %cst_127 = arith.constant 0.000000e+00 : f32
    %467 = vector.broadcast %cst_127 : f32 to vector<1x128xf32>
    %468 = vector.extract_strided_slice %461 {offsets = [1, 0], sizes = [15, 128], strides = [1, 1]} : vector<16x128xf32> to vector<15x128xf32>
    %469 = tpu.concatenate %468, %467 in 0 : vector<15x128xf32>, vector<1x128xf32> -> vector<16x128xf32>
    %470 = vector.broadcast %4 : vector<16x1xf32> to vector<16x128xf32>
    %471 = arith.mulf %469, %470 : vector<16x128xf32>
    %c0_128 = arith.constant 0 : index
    %c0_129 = arith.constant 0 : index
    %472 = vector.load %arg9[%c0_128, %c0_129] : memref<384x256xbf16, #tpu.memory_space<vmem>>, vector<128x256xbf16>
    %473 = arith.truncf %466 : vector<16x128xf32> to vector<16x128xbf16>
    %cst_130 = arith.constant dense<0.000000e+00> : vector<16x256xf32>
    %474 = tpu.matmul %473, %472, %cst_130 {dimension_numbers = #tpu.dot_dimension_numbers<[1], [0], [0], [1], [0, 0, 1, 1], [], []>} : vector<16x128xbf16>, vector<128x256xbf16>, vector<16x256xf32> -> vector<16x256xf32>
    %c128_131 = arith.constant 128 : index
    %c0_132 = arith.constant 0 : index
    %475 = vector.load %arg9[%c128_131, %c0_132] : memref<384x256xbf16, #tpu.memory_space<vmem>>, vector<128x256xbf16>
    %476 = arith.truncf %461 : vector<16x128xf32> to vector<16x128xbf16>
    %cst_133 = arith.constant dense<0.000000e+00> : vector<16x256xf32>
    %477 = tpu.matmul %476, %475, %cst_133 {dimension_numbers = #tpu.dot_dimension_numbers<[1], [0], [0], [1], [0, 0, 1, 1], [], []>} : vector<16x128xbf16>, vector<128x256xbf16>, vector<16x256xf32> -> vector<16x256xf32>
    %478 = arith.addf %474, %477 : vector<16x256xf32>
    %c256_134 = arith.constant 256 : index
    %c0_135 = arith.constant 0 : index
    %479 = vector.load %arg9[%c256_134, %c0_135] : memref<384x256xbf16, #tpu.memory_space<vmem>>, vector<128x256xbf16>
    %480 = arith.truncf %471 : vector<16x128xf32> to vector<16x128xbf16>
    %cst_136 = arith.constant dense<0.000000e+00> : vector<16x256xf32>
    %481 = tpu.matmul %480, %479, %cst_136 {dimension_numbers = #tpu.dot_dimension_numbers<[1], [0], [0], [1], [0, 0, 1, 1], [], []>} : vector<16x128xbf16>, vector<128x256xbf16>, vector<16x256xf32> -> vector<16x256xf32>
    %482 = arith.addf %478, %481 : vector<16x256xf32>
    %c0_137 = arith.constant 0 : index
    %c0_138 = arith.constant 0 : index
    %483 = vector.load %arg13[%c0_137, %c0_138] : memref<3x256xf32, #tpu.memory_space<vmem>>, vector<1x256xf32>
    %484 = vector.broadcast %483 : vector<1x256xf32> to vector<16x256xf32>
    %485 = arith.addf %482, %484 : vector<16x256xf32>
    %cst_139 = arith.constant 5.000000e-01 : f32
    %486 = vector.broadcast %cst_139 : f32 to vector<16x256xf32>
    %487 = arith.mulf %486, %485 : vector<16x256xf32>
    %cst_140 = arith.constant 4.471500e-02 : f32
    %488 = vector.broadcast %cst_140 : f32 to vector<16x256xf32>
    %489 = arith.mulf %488, %485 : vector<16x256xf32>
    %490 = arith.mulf %489, %485 : vector<16x256xf32>
    %491 = arith.mulf %490, %485 : vector<16x256xf32>
    %492 = arith.addf %485, %491 : vector<16x256xf32>
    %cst_141 = arith.constant 0.797884583 : f32
    %493 = vector.broadcast %cst_141 : f32 to vector<16x256xf32>
    %494 = arith.mulf %493, %492 : vector<16x256xf32>
    %495 = math.tanh %494 : vector<16x256xf32>
    %cst_142 = arith.constant 1.000000e+00 : f32
    %496 = vector.broadcast %cst_142 : f32 to vector<16x256xf32>
    %497 = arith.addf %496, %495 : vector<16x256xf32>
    %498 = arith.mulf %487, %497 : vector<16x256xf32>
    %c1_143 = arith.constant 1 : index
    %c0_144 = arith.constant 0 : index
    %499 = vector.load %arg13[%c1_143, %c0_144] : memref<3x256xf32, #tpu.memory_space<vmem>>, vector<1x256xf32>
    %c2_145 = arith.constant 2 : index
    %c0_146 = arith.constant 0 : index
    %500 = vector.load %arg13[%c2_145, %c0_146] : memref<3x256xf32, #tpu.memory_space<vmem>>, vector<1x256xf32>
    %cst_147 = arith.constant dense<0.000000e+00> : vector<1x256xf32>
    %501 = tpu.matmul %1, %498, %cst_147 {dimension_numbers = #tpu.dot_dimension_numbers<[1], [0], [0], [1], [0, 0, 1, 1], [], []>} : vector<1x16xf32>, vector<16x256xf32>, vector<1x256xf32> -> vector<1x256xf32>
    %cst_148 = arith.constant dense<0.000000e+00> : vector<1x256xf32>
    %502 = tpu.matmul %501, %6, %cst_148 {dimension_numbers = #tpu.dot_dimension_numbers<[1], [0], [0], [1], [0, 0, 1, 1], [], []>} : vector<1x256xf32>, vector<256x256xf32>, vector<1x256xf32> -> vector<1x256xf32>
    %cst_149 = arith.constant 0.0833333358 : f32
    %503 = vector.broadcast %cst_149 : f32 to vector<1x256xf32>
    %504 = arith.mulf %502, %503 : vector<1x256xf32>
    %cst_150 = arith.constant dense<0.000000e+00> : vector<16x256xf32>
    %505 = tpu.matmul %2, %504, %cst_150 {dimension_numbers = #tpu.dot_dimension_numbers<[1], [0], [0], [1], [0, 0, 1, 1], [], []>} : vector<16x1xf32>, vector<1x256xf32>, vector<16x256xf32> -> vector<16x256xf32>
    %506 = arith.subf %498, %505 : vector<16x256xf32>
    %507 = arith.mulf %506, %506 : vector<16x256xf32>
    %cst_151 = arith.constant dense<0.000000e+00> : vector<1x256xf32>
    %508 = tpu.matmul %1, %507, %cst_151 {dimension_numbers = #tpu.dot_dimension_numbers<[1], [0], [0], [1], [0, 0, 1, 1], [], []>} : vector<1x16xf32>, vector<16x256xf32>, vector<1x256xf32> -> vector<1x256xf32>
    %cst_152 = arith.constant dense<0.000000e+00> : vector<1x256xf32>
    %509 = tpu.matmul %508, %6, %cst_152 {dimension_numbers = #tpu.dot_dimension_numbers<[1], [0], [0], [1], [0, 0, 1, 1], [], []>} : vector<1x256xf32>, vector<256x256xf32>, vector<1x256xf32> -> vector<1x256xf32>
    %cst_153 = arith.constant 0.0833333358 : f32
    %510 = vector.broadcast %cst_153 : f32 to vector<1x256xf32>
    %511 = arith.mulf %509, %510 : vector<1x256xf32>
    %cst_154 = arith.constant dense<0.000000e+00> : vector<16x256xf32>
    %512 = tpu.matmul %2, %511, %cst_154 {dimension_numbers = #tpu.dot_dimension_numbers<[1], [0], [0], [1], [0, 0, 1, 1], [], []>} : vector<16x1xf32>, vector<1x256xf32>, vector<16x256xf32> -> vector<16x256xf32>
    %cst_155 = arith.constant 9.99999974E-6 : f32
    %513 = vector.broadcast %cst_155 : f32 to vector<16x256xf32>
    %514 = arith.addf %512, %513 : vector<16x256xf32>
    %515 = math.rsqrt %514 : vector<16x256xf32>
    %516 = arith.mulf %506, %515 : vector<16x256xf32>
    %517 = vector.broadcast %499 : vector<1x256xf32> to vector<16x256xf32>
    %518 = arith.mulf %516, %517 : vector<16x256xf32>
    %519 = vector.broadcast %500 : vector<1x256xf32> to vector<16x256xf32>
    %520 = arith.addf %518, %519 : vector<16x256xf32>
    %cst_156 = arith.constant 0.000000e+00 : f32
    %521 = vector.broadcast %cst_156 : f32 to vector<1x256xf32>
    %522 = vector.extract_strided_slice %520 {offsets = [0, 0], sizes = [15, 256], strides = [1, 1]} : vector<16x256xf32> to vector<15x256xf32>
    %523 = tpu.concatenate %521, %522 in 0 : vector<1x256xf32>, vector<15x256xf32> -> vector<16x256xf32>
    %524 = vector.broadcast %3 : vector<16x1xf32> to vector<16x256xf32>
    %525 = arith.mulf %523, %524 : vector<16x256xf32>
    %cst_157 = arith.constant 0.000000e+00 : f32
    %526 = vector.broadcast %cst_157 : f32 to vector<1x256xf32>
    %527 = vector.extract_strided_slice %520 {offsets = [1, 0], sizes = [15, 256], strides = [1, 1]} : vector<16x256xf32> to vector<15x256xf32>
    %528 = tpu.concatenate %527, %526 in 0 : vector<15x256xf32>, vector<1x256xf32> -> vector<16x256xf32>
    %529 = vector.broadcast %4 : vector<16x1xf32> to vector<16x256xf32>
    %530 = arith.mulf %528, %529 : vector<16x256xf32>
    %c384 = arith.constant 384 : index
    %c0_158 = arith.constant 0 : index
    %531 = vector.load %arg8[%c384, %c0_158] : memref<1408x128xbf16, #tpu.memory_space<vmem>>, vector<256x128xbf16>
    %532 = arith.truncf %525 : vector<16x256xf32> to vector<16x256xbf16>
    %cst_159 = arith.constant dense<0.000000e+00> : vector<16x128xf32>
    %533 = tpu.matmul %532, %531, %cst_159 {dimension_numbers = #tpu.dot_dimension_numbers<[1], [0], [0], [1], [0, 0, 1, 1], [], []>} : vector<16x256xbf16>, vector<256x128xbf16>, vector<16x128xf32> -> vector<16x128xf32>
    %c640 = arith.constant 640 : index
    %c0_160 = arith.constant 0 : index
    %534 = vector.load %arg8[%c640, %c0_160] : memref<1408x128xbf16, #tpu.memory_space<vmem>>, vector<256x128xbf16>
    %535 = arith.truncf %520 : vector<16x256xf32> to vector<16x256xbf16>
    %cst_161 = arith.constant dense<0.000000e+00> : vector<16x128xf32>
    %536 = tpu.matmul %535, %534, %cst_161 {dimension_numbers = #tpu.dot_dimension_numbers<[1], [0], [0], [1], [0, 0, 1, 1], [], []>} : vector<16x256xbf16>, vector<256x128xbf16>, vector<16x128xf32> -> vector<16x128xf32>
    %537 = arith.addf %533, %536 : vector<16x128xf32>
    %c896 = arith.constant 896 : index
    %c0_162 = arith.constant 0 : index
    %538 = vector.load %arg8[%c896, %c0_162] : memref<1408x128xbf16, #tpu.memory_space<vmem>>, vector<256x128xbf16>
    %539 = arith.truncf %530 : vector<16x256xf32> to vector<16x256xbf16>
    %cst_163 = arith.constant dense<0.000000e+00> : vector<16x128xf32>
    %540 = tpu.matmul %539, %538, %cst_163 {dimension_numbers = #tpu.dot_dimension_numbers<[1], [0], [0], [1], [0, 0, 1, 1], [], []>} : vector<16x256xbf16>, vector<256x128xbf16>, vector<16x128xf32> -> vector<16x128xf32>
    %541 = arith.addf %537, %540 : vector<16x128xf32>
    %c8_164 = arith.constant 8 : index
    %c0_165 = arith.constant 0 : index
    %542 = vector.load %arg12[%c8_164, %c0_165] : memref<15x128xf32, #tpu.memory_space<vmem>>, vector<1x128xf32>
    %543 = vector.broadcast %542 : vector<1x128xf32> to vector<16x128xf32>
    %544 = arith.addf %541, %543 : vector<16x128xf32>
    %cst_166 = arith.constant 5.000000e-01 : f32
    %545 = vector.broadcast %cst_166 : f32 to vector<16x128xf32>
    %546 = arith.mulf %545, %544 : vector<16x128xf32>
    %cst_167 = arith.constant 4.471500e-02 : f32
    %547 = vector.broadcast %cst_167 : f32 to vector<16x128xf32>
    %548 = arith.mulf %547, %544 : vector<16x128xf32>
    %549 = arith.mulf %548, %544 : vector<16x128xf32>
    %550 = arith.mulf %549, %544 : vector<16x128xf32>
    %551 = arith.addf %544, %550 : vector<16x128xf32>
    %cst_168 = arith.constant 0.797884583 : f32
    %552 = vector.broadcast %cst_168 : f32 to vector<16x128xf32>
    %553 = arith.mulf %552, %551 : vector<16x128xf32>
    %554 = math.tanh %553 : vector<16x128xf32>
    %cst_169 = arith.constant 1.000000e+00 : f32
    %555 = vector.broadcast %cst_169 : f32 to vector<16x128xf32>
    %556 = arith.addf %555, %554 : vector<16x128xf32>
    %557 = arith.mulf %546, %556 : vector<16x128xf32>
    %c9_170 = arith.constant 9 : index
    %c0_171 = arith.constant 0 : index
    %558 = vector.load %arg12[%c9_170, %c0_171] : memref<15x128xf32, #tpu.memory_space<vmem>>, vector<1x128xf32>
    %c10_172 = arith.constant 10 : index
    %c0_173 = arith.constant 0 : index
    %559 = vector.load %arg12[%c10_172, %c0_173] : memref<15x128xf32, #tpu.memory_space<vmem>>, vector<1x128xf32>
    %cst_174 = arith.constant dense<0.000000e+00> : vector<1x128xf32>
    %560 = tpu.matmul %1, %557, %cst_174 {dimension_numbers = #tpu.dot_dimension_numbers<[1], [0], [0], [1], [0, 0, 1, 1], [], []>} : vector<1x16xf32>, vector<16x128xf32>, vector<1x128xf32> -> vector<1x128xf32>
    %cst_175 = arith.constant dense<0.000000e+00> : vector<1x128xf32>
    %561 = tpu.matmul %560, %5, %cst_175 {dimension_numbers = #tpu.dot_dimension_numbers<[1], [0], [0], [1], [0, 0, 1, 1], [], []>} : vector<1x128xf32>, vector<128x128xf32>, vector<1x128xf32> -> vector<1x128xf32>
    %cst_176 = arith.constant 0.0833333358 : f32
    %562 = vector.broadcast %cst_176 : f32 to vector<1x128xf32>
    %563 = arith.mulf %561, %562 : vector<1x128xf32>
    %cst_177 = arith.constant dense<0.000000e+00> : vector<16x128xf32>
    %564 = tpu.matmul %2, %563, %cst_177 {dimension_numbers = #tpu.dot_dimension_numbers<[1], [0], [0], [1], [0, 0, 1, 1], [], []>} : vector<16x1xf32>, vector<1x128xf32>, vector<16x128xf32> -> vector<16x128xf32>
    %565 = arith.subf %557, %564 : vector<16x128xf32>
    %566 = arith.mulf %565, %565 : vector<16x128xf32>
    %cst_178 = arith.constant dense<0.000000e+00> : vector<1x128xf32>
    %567 = tpu.matmul %1, %566, %cst_178 {dimension_numbers = #tpu.dot_dimension_numbers<[1], [0], [0], [1], [0, 0, 1, 1], [], []>} : vector<1x16xf32>, vector<16x128xf32>, vector<1x128xf32> -> vector<1x128xf32>
    %cst_179 = arith.constant dense<0.000000e+00> : vector<1x128xf32>
    %568 = tpu.matmul %567, %5, %cst_179 {dimension_numbers = #tpu.dot_dimension_numbers<[1], [0], [0], [1], [0, 0, 1, 1], [], []>} : vector<1x128xf32>, vector<128x128xf32>, vector<1x128xf32> -> vector<1x128xf32>
    %cst_180 = arith.constant 0.0833333358 : f32
    %569 = vector.broadcast %cst_180 : f32 to vector<1x128xf32>
    %570 = arith.mulf %568, %569 : vector<1x128xf32>
    %cst_181 = arith.constant dense<0.000000e+00> : vector<16x128xf32>
    %571 = tpu.matmul %2, %570, %cst_181 {dimension_numbers = #tpu.dot_dimension_numbers<[1], [0], [0], [1], [0, 0, 1, 1], [], []>} : vector<16x1xf32>, vector<1x128xf32>, vector<16x128xf32> -> vector<16x128xf32>
    %cst_182 = arith.constant 9.99999974E-6 : f32
    %572 = vector.broadcast %cst_182 : f32 to vector<16x128xf32>
    %573 = arith.addf %571, %572 : vector<16x128xf32>
    %574 = math.rsqrt %573 : vector<16x128xf32>
    %575 = arith.mulf %565, %574 : vector<16x128xf32>
    %576 = vector.broadcast %558 : vector<1x128xf32> to vector<16x128xf32>
    %577 = arith.mulf %575, %576 : vector<16x128xf32>
    %578 = vector.broadcast %559 : vector<1x128xf32> to vector<16x128xf32>
    %579 = arith.addf %577, %578 : vector<16x128xf32>
    %cst_183 = arith.constant dense<0.000000e+00> : vector<1x128xf32>
    %580 = tpu.matmul %1, %579, %cst_183 {dimension_numbers = #tpu.dot_dimension_numbers<[1], [0], [0], [1], [0, 0, 1, 1], [], []>} : vector<1x16xf32>, vector<16x128xf32>, vector<1x128xf32> -> vector<1x128xf32>
    %cst_184 = arith.constant 0.0833333358 : f32
    %581 = vector.broadcast %cst_184 : f32 to vector<1x128xf32>
    %582 = arith.mulf %580, %581 : vector<1x128xf32>
    %c1152 = arith.constant 1152 : index
    %c0_185 = arith.constant 0 : index
    %583 = vector.load %arg8[%c1152, %c0_185] : memref<1408x128xbf16, #tpu.memory_space<vmem>>, vector<128x128xbf16>
    %584 = arith.truncf %582 : vector<1x128xf32> to vector<1x128xbf16>
    %cst_186 = arith.constant dense<0.000000e+00> : vector<1x128xf32>
    %585 = tpu.matmul %584, %583, %cst_186 {dimension_numbers = #tpu.dot_dimension_numbers<[1], [0], [0], [1], [0, 0, 1, 1], [], []>} : vector<1x128xbf16>, vector<128x128xbf16>, vector<1x128xf32> -> vector<1x128xf32>
    %c11_187 = arith.constant 11 : index
    %c0_188 = arith.constant 0 : index
    %586 = vector.load %arg12[%c11_187, %c0_188] : memref<15x128xf32, #tpu.memory_space<vmem>>, vector<1x128xf32>
    %587 = arith.addf %585, %586 : vector<1x128xf32>
    %cst_189 = arith.constant 5.000000e-01 : f32
    %588 = vector.broadcast %cst_189 : f32 to vector<1x128xf32>
    %589 = arith.mulf %588, %587 : vector<1x128xf32>
    %cst_190 = arith.constant 4.471500e-02 : f32
    %590 = vector.broadcast %cst_190 : f32 to vector<1x128xf32>
    %591 = arith.mulf %590, %587 : vector<1x128xf32>
    %592 = arith.mulf %591, %587 : vector<1x128xf32>
    %593 = arith.mulf %592, %587 : vector<1x128xf32>
    %594 = arith.addf %587, %593 : vector<1x128xf32>
    %cst_191 = arith.constant 0.797884583 : f32
    %595 = vector.broadcast %cst_191 : f32 to vector<1x128xf32>
    %596 = arith.mulf %595, %594 : vector<1x128xf32>
    %597 = math.tanh %596 : vector<1x128xf32>
    %cst_192 = arith.constant 1.000000e+00 : f32
    %598 = vector.broadcast %cst_192 : f32 to vector<1x128xf32>
    %599 = arith.addf %598, %597 : vector<1x128xf32>
    %600 = arith.mulf %589, %599 : vector<1x128xf32>
    %c1280 = arith.constant 1280 : index
    %c0_193 = arith.constant 0 : index
    %601 = vector.load %arg8[%c1280, %c0_193] : memref<1408x128xbf16, #tpu.memory_space<vmem>>, vector<128x128xbf16>
    %602 = arith.truncf %600 : vector<1x128xf32> to vector<1x128xbf16>
    %cst_194 = arith.constant dense<0.000000e+00> : vector<1x128xf32>
    %603 = tpu.matmul %602, %601, %cst_194 {dimension_numbers = #tpu.dot_dimension_numbers<[1], [0], [0], [1], [0, 0, 1, 1], [], []>} : vector<1x128xbf16>, vector<128x128xbf16>, vector<1x128xf32> -> vector<1x128xf32>
    %c12_195 = arith.constant 12 : index
    %c0_196 = arith.constant 0 : index
    %604 = vector.load %arg12[%c12_195, %c0_196] : memref<15x128xf32, #tpu.memory_space<vmem>>, vector<1x128xf32>
    %605 = arith.addf %603, %604 : vector<1x128xf32>
    %cst_197 = arith.constant 0.000000e+00 : f32
    %606 = vector.broadcast %cst_197 : f32 to vector<1x128xf32>
    %607 = arith.subf %606, %605 : vector<1x128xf32>
    %608 = math.exp %607 : vector<1x128xf32>
    %cst_198 = arith.constant 1.000000e+00 : f32
    %609 = vector.broadcast %cst_198 : f32 to vector<1x128xf32>
    %610 = arith.addf %609, %608 : vector<1x128xf32>
    %611 = tpu.reciprocal %610 {approx = true} : vector<1x128xf32> -> vector<1x128xf32>
    %cst_199 = arith.constant dense<0.000000e+00> : vector<16x128xf32>
    %612 = tpu.matmul %2, %611, %cst_199 {dimension_numbers = #tpu.dot_dimension_numbers<[1], [0], [0], [1], [0, 0, 1, 1], [], []>} : vector<16x1xf32>, vector<1x128xf32>, vector<16x128xf32> -> vector<16x128xf32>
    %613 = arith.mulf %579, %612 : vector<16x128xf32>
    %c0_200 = arith.constant 0 : index
    %c0_201 = arith.constant 0 : index
    %c0_202 = arith.constant 0 : index
    %614 = vector.load %arg2[%c0_200, %c0_201, %c0_202] : memref<1x2x128xf32, #tpu.memory_space<vmem>>, vector<1x2x128xf32>
    %615 = vector.extract_strided_slice %614 {offsets = [0, 0, 0], sizes = [1, 1, 128], strides = [1, 1, 1]} : vector<1x2x128xf32> to vector<1x1x128xf32>
    %616 = vector.shape_cast %615 : vector<1x1x128xf32> to vector<1x128xf32>
    %cst_203 = arith.constant dense<0.000000e+00> : vector<16x128xf32>
    %617 = tpu.matmul %2, %616, %cst_203 {dimension_numbers = #tpu.dot_dimension_numbers<[1], [0], [0], [1], [0, 0, 1, 1], [], []>} : vector<16x1xf32>, vector<1x128xf32>, vector<16x128xf32> -> vector<16x128xf32>
    %618 = arith.mulf %613, %617 : vector<16x128xf32>
    %619 = vector.extract_strided_slice %614 {offsets = [0, 1, 0], sizes = [1, 1, 128], strides = [1, 1, 1]} : vector<1x2x128xf32> to vector<1x1x128xf32>
    %620 = vector.shape_cast %619 : vector<1x1x128xf32> to vector<1x128xf32>
    %cst_204 = arith.constant dense<0.000000e+00> : vector<16x128xf32>
    %621 = tpu.matmul %2, %620, %cst_204 {dimension_numbers = #tpu.dot_dimension_numbers<[1], [0], [0], [1], [0, 0, 1, 1], [], []>} : vector<16x1xf32>, vector<1x128xf32>, vector<16x128xf32> -> vector<16x128xf32>
    %622 = arith.addf %618, %621 : vector<16x128xf32>
    %c13_205 = arith.constant 13 : index
    %c0_206 = arith.constant 0 : index
    %623 = vector.load %arg12[%c13_205, %c0_206] : memref<15x128xf32, #tpu.memory_space<vmem>>, vector<1x128xf32>
    %c14_207 = arith.constant 14 : index
    %c0_208 = arith.constant 0 : index
    %624 = vector.load %arg12[%c14_207, %c0_208] : memref<15x128xf32, #tpu.memory_space<vmem>>, vector<1x128xf32>
    %cst_209 = arith.constant dense<0.000000e+00> : vector<16x128xf32>
    %625 = tpu.matmul %622, %5, %cst_209 {dimension_numbers = #tpu.dot_dimension_numbers<[1], [0], [0], [1], [0, 0, 1, 1], [], []>} : vector<16x128xf32>, vector<128x128xf32>, vector<16x128xf32> -> vector<16x128xf32>
    %626 = arith.subf %622, %625 : vector<16x128xf32>
    %627 = arith.mulf %626, %626 : vector<16x128xf32>
    %cst_210 = arith.constant dense<0.000000e+00> : vector<16x128xf32>
    %628 = tpu.matmul %627, %5, %cst_210 {dimension_numbers = #tpu.dot_dimension_numbers<[1], [0], [0], [1], [0, 0, 1, 1], [], []>} : vector<16x128xf32>, vector<128x128xf32>, vector<16x128xf32> -> vector<16x128xf32>
    %cst_211 = arith.constant 9.99999974E-6 : f32
    %629 = vector.broadcast %cst_211 : f32 to vector<16x128xf32>
    %630 = arith.addf %628, %629 : vector<16x128xf32>
    %631 = math.rsqrt %630 : vector<16x128xf32>
    %632 = arith.mulf %626, %631 : vector<16x128xf32>
    %633 = vector.broadcast %623 : vector<1x128xf32> to vector<16x128xf32>
    %634 = arith.mulf %632, %633 : vector<16x128xf32>
    %635 = vector.broadcast %624 : vector<1x128xf32> to vector<16x128xf32>
    %636 = arith.addf %634, %635 : vector<16x128xf32>
    %637 = arith.addf %636, %0 : vector<16x128xf32>
    %c0_212 = arith.constant 0 : index
    %c0_213 = arith.constant 0 : index
    %638 = vector.load %arg14[%c0_212, %c0_213] : memref<16x128xf32, #tpu.memory_space<vmem>>, vector<16x128xf32>
    tpu.vector_store %arg14[%c0_212, %c0_213], %637 {strides = array<i32>} : memref<16x128xf32, #tpu.memory_space<vmem>>, vector<16x128xf32>,
    return
  }
  func.func @transform_0(%arg0: i32) -> (i32, i32) {
    %c0_i32 = arith.constant 0 : i32
    %c0_i32_0 = arith.constant 0 : i32
    return %arg0, %c0_i32 : i32, i32
  }
  func.func @transform_1(%arg0: i32) -> (i32, i32, i32) {
    %c0_i32 = arith.constant 0 : i32
    %c0_i32_0 = arith.constant 0 : i32
    %c0_i32_1 = arith.constant 0 : i32
    return %arg0, %c0_i32, %c0_i32_0 : i32, i32, i32
  }
  func.func @transform_2(%arg0: i32) -> (i32, i32) {
    %c0_i32 = arith.constant 0 : i32
    %c0_i32_0 = arith.constant 0 : i32
    %c0_i32_1 = arith.constant 0 : i32
    return %c0_i32, %c0_i32_0 : i32, i32
  }
  func.func @transform_3(%arg0: i32) -> (i32, i32) {
    %c0_i32 = arith.constant 0 : i32
    %c0_i32_0 = arith.constant 0 : i32
    %c0_i32_1 = arith.constant 0 : i32
    return %c0_i32, %c0_i32_0 : i32, i32
  }
  func.func @transform_4(%arg0: i32) -> (i32, i32) {
    %c0_i32 = arith.constant 0 : i32
    %c0_i32_0 = arith.constant 0 : i32
    %c0_i32_1 = arith.constant 0 : i32
    return %c0_i32, %c0_i32_0 : i32, i32
  }
  func.func @transform_5(%arg0: i32) -> (i32, i32) {
    %c0_i32 = arith.constant 0 : i32
    %c0_i32_0 = arith.constant 0 : i32
    %c0_i32_1 = arith.constant 0 : i32
    return %c0_i32, %c0_i32_0 : i32, i32
  }
  func.func @transform_6(%arg0: i32) -> (i32, i32, i32) {
    %c0_i32 = arith.constant 0 : i32
    %c0_i32_0 = arith.constant 0 : i32
    %c0_i32_1 = arith.constant 0 : i32
    %c0_i32_2 = arith.constant 0 : i32
    return %c0_i32, %c0_i32_0, %c0_i32_1 : i32, i32, i32
  }
  func.func @transform_7(%arg0: i32) -> (i32, i32) {
    %c0_i32 = arith.constant 0 : i32
    %c0_i32_0 = arith.constant 0 : i32
    %c0_i32_1 = arith.constant 0 : i32
    return %c0_i32, %c0_i32_0 : i32, i32
  }
  func.func @transform_8(%arg0: i32) -> (i32, i32) {
    %c0_i32 = arith.constant 0 : i32
    %c0_i32_0 = arith.constant 0 : i32
    %c0_i32_1 = arith.constant 0 : i32
    return %c0_i32, %c0_i32_0 : i32, i32
  }
  func.func @transform_9(%arg0: i32) -> (i32, i32) {
    %c0_i32 = arith.constant 0 : i32
    %c0_i32_0 = arith.constant 0 : i32
    %c0_i32_1 = arith.constant 0 : i32
    return %c0_i32, %c0_i32_0 : i32, i32
  }
  func.func @transform_10(%arg0: i32) -> (i32, i32) {
    %c0_i32 = arith.constant 0 : i32
    %c0_i32_0 = arith.constant 0 : i32
    %c0_i32_1 = arith.constant 0 : i32
    return %c0_i32, %c0_i32_0 : i32, i32
  }
  func.func @transform_11(%arg0: i32) -> (i32, i32) {
    %c0_i32 = arith.constant 0 : i32
    %c0_i32_0 = arith.constant 0 : i32
    %c0_i32_1 = arith.constant 0 : i32
    return %c0_i32, %c0_i32_0 : i32, i32
  }
  func.func @transform_12(%arg0: i32) -> (i32, i32) {
    %c0_i32 = arith.constant 0 : i32
    %c0_i32_0 = arith.constant 0 : i32
    %c0_i32_1 = arith.constant 0 : i32
    return %c0_i32, %c0_i32_0 : i32, i32
  }
  func.func @transform_13(%arg0: i32) -> (i32, i32) {
    %c0_i32 = arith.constant 0 : i32
    %c0_i32_0 = arith.constant 0 : i32
    return %arg0, %c0_i32 : i32, i32
  }
}

</mosaic_0001>

<llo_original>
// kernel: optimized_bottleneck_processor.1
$region0: #{optimized_bottleneck_processor.1}
  #allocation0 [shape = 'u32[]', space=smem, size = 0x4, offset = 0x4, fixed_abs, tag = 'smem constant byte address 0x4 - core index']
  #allocation1 [shape = 'u32[144,128]{1,0:T(1,128)}', space=vmem, size = 0x12000, scoped, tag = 'internal scratch']
  %s0 = inlined_call_operand.vmem [shape: f32[16,128], index: 0, kind: input, shape index: {}]
  %s1 = inlined_call_operand.vmem [shape: f32[1,2,128], index: 1, kind: input, shape index: {}]
  %s2 = inlined_call_operand.vmem [shape: f32[1,16], index: 2, kind: input, shape index: {}]
  %s3 = inlined_call_operand.vmem [shape: f32[16,1], index: 3, kind: input, shape index: {}]
  %s4 = inlined_call_operand.vmem [shape: f32[16,1], index: 4, kind: input, shape index: {}]
  %s5 = inlined_call_operand.hbm [shape: f32[16,1], index: 5, kind: input, shape index: {}]
  %s6 = inlined_call_operand.hbm [shape: bf16[36,16,128], index: 6, kind: input, shape index: {}]
  %s7 = inlined_call_operand.hbm [shape: bf16[1408,128], index: 7, kind: input, shape index: {}]
  %s8 = inlined_call_operand.vmem [shape: bf16[384,256], index: 8, kind: input, shape index: {}]
  %s9 = inlined_call_operand.hbm [shape: f32[128,128], index: 9, kind: input, shape index: {}]
  %s10 = inlined_call_operand.hbm [shape: f32[256,256], index: 10, kind: input, shape index: {}]
  %s11 = inlined_call_operand.hbm [shape: f32[15,128], index: 11, kind: input, shape index: {}]
  %s12 = inlined_call_operand.hbm [shape: f32[3,256], index: 12, kind: input, shape index: {}]
  %s13 = inlined_call_operand.vmem [shape: f32[16,128], index: 13, kind: output, shape index: {}]
  %s14 = sld [smem:[#allocation0]]
  $region90: #{optimized_bottleneck_processor.1} parent=0
    _
  %s16 = ssub.s32 1, %s14
  %s17 = scalar_select 0, %s16, %s14
  $region1: #{optimized_bottleneck_processor.1} parent=0
    #allocation2 [shape = 'u8[8192]{0}', space=vmem, size = 0x2000, scoped, tag = 'input window, operand 5, single buffered']
    #allocation3 [shape = 's32[1]{0}', space=sflag, size = 0x4, scoped, tag = 'scoped memory for optimized_bottleneck_processor.1']
    #allocation4 [shape = 'u8[147456]{0}', space=vmem, size = 0x24000, scoped, tag = 'input window, operand 6, single buffered']
    #allocation5 [shape = 's32[1]{0}', space=sflag, size = 0x4, scoped, tag = 'scoped memory for optimized_bottleneck_processor.1']
    #allocation6 [shape = 'u8[360448]{0}', space=vmem, size = 0x58000, scoped, tag = 'input window, operand 7, single buffered']
    #allocation7 [shape = 'u8[65536]{0}', space=vmem, size = 0x10000, scoped, tag = 'input window, operand 9, single buffered']
    #allocation8 [shape = 's32[1]{0}', space=sflag, size = 0x4, scoped, tag = 'scoped memory for optimized_bottleneck_processor.1']
    #allocation9 [shape = 'u8[262144]{0}', space=vmem, size = 0x40000, scoped, tag = 'input window, operand 10, single buffered']
    #allocation10 [shape = 'u8[8192]{0}', space=vmem, size = 0x2000, scoped, tag = 'input window, operand 11, single buffered']
    #allocation11 [shape = 's32[1]{0}', space=sflag, size = 0x4, scoped, tag = 'scoped memory for optimized_bottleneck_processor.1']
    #allocation12 [shape = 'u8[4096]{0}', space=vmem, size = 0x1000, scoped, tag = 'input window, operand 12, single buffered']
    %18 = vsyncpa [#allocation3], 0
    %19 = vsyncpa [#allocation5], 0
    %20 = vsyncpa [#allocation8], 0
    %21 = vsyncpa [#allocation11], 0
    // Predicated region
    $region2: #{optimized_bottleneck_processor.1} parent=1 // pred_check
      _
    $region3: #{optimized_bottleneck_processor.1} parent=1 // pred_check_branch
      %23 = sbr.rel (0) target = $region5
    $region4: #{optimized_bottleneck_processor.1} parent=1 // pred_region
      _
    $region5: #{optimized_bottleneck_processor.1} parent=1 // pred_fallthru
      _
    // Predicated region
    $region6: #{optimized_bottleneck_processor.1} parent=1 // pred_check
      _
    $region7: #{optimized_bottleneck_processor.1} parent=1 // pred_check_branch
      %25 = sbr.rel (0) target = $region9
    $region8: #{optimized_bottleneck_processor.1} parent=1 // pred_region
      _
    $region9: #{optimized_bottleneck_processor.1} parent=1 // pred_fallthru
      _
    // Predicated region
    $region10: #{optimized_bottleneck_processor.1} parent=1 // pred_check
      _
    $region11: #{optimized_bottleneck_processor.1} parent=1 // pred_check_branch
      %27 = sbr.rel (0) target = $region13
    $region12: #{optimized_bottleneck_processor.1} parent=1 // pred_region
      _
    $region13: #{optimized_bottleneck_processor.1} parent=1 // pred_fallthru
      _
    // Predicated region
    $region14: #{optimized_bottleneck_processor.1} parent=1 // pred_check
      _
    $region15: #{optimized_bottleneck_processor.1} parent=1 // pred_check_branch
      %29 = sbr.rel (0) target = $region17
    $region16: #{optimized_bottleneck_processor.1} parent=1 // pred_region
      _
    $region17: #{optimized_bottleneck_processor.1} parent=1 // pred_fallthru
      _
    // Predicated region
    $region18: #{optimized_bottleneck_processor.1} parent=1 // pred_check
      _
    $region19: #{optimized_bottleneck_processor.1} parent=1 // pred_check_branch
      %31 = sbr.rel (0) target = $region21
    $region20: #{optimized_bottleneck_processor.1} parent=1 // pred_region
      _
    $region21: #{optimized_bottleneck_processor.1} parent=1 // pred_fallthru
      _
    // Predicated region
    $region22: #{optimized_bottleneck_processor.1} parent=1 // pred_check
      _
    $region23: #{optimized_bottleneck_processor.1} parent=1 // pred_check_branch
      %33 = sbr.rel (0) target = $region25
    $region24: #{optimized_bottleneck_processor.1} parent=1 // pred_region
      %s35 = ssub.s32 256, 256
      %36 = vsyncadd [#allocation3], %s35
      %s37 = sshll.u32 [#allocation2], 4
      %s38 = int_to_ptr.vmem [resolvable:$true] %s37
      %43 = dma.hbm_to_vmem [thread:$0]  %s5, 256, %s38, [#allocation3], 128, 128, 8
    $region25: #{optimized_bottleneck_processor.1} parent=1 // pred_fallthru
      _
    // Predicated region
    $region26: #{optimized_bottleneck_processor.1} parent=1 // pred_check
      _
    $region27: #{optimized_bottleneck_processor.1} parent=1 // pred_check_branch
      %45 = sbr.rel (0) target = $region29
    $region28: #{optimized_bottleneck_processor.1} parent=1 // pred_region
      %s47 = ssub.s32 4608, 4608
      %48 = vsyncadd [#allocation5], %s47
      %s49 = sshll.u32 [#allocation4], 4
      %s50 = int_to_ptr.vmem [resolvable:$true] %s49
      %55 = dma.hbm_to_vmem [thread:$0]  %s6, 4608, %s50, [#allocation5], 64, 64, 4
    $region29: #{optimized_bottleneck_processor.1} parent=1 // pred_fallthru
      _
    // Predicated region
    $region30: #{optimized_bottleneck_processor.1} parent=1 // pred_check
      _
    $region31: #{optimized_bottleneck_processor.1} parent=1 // pred_check_branch
      %57 = sbr.rel (0) target = $region33
    $region32: #{optimized_bottleneck_processor.1} parent=1 // pred_region
      %s59 = ssub.s32 11264, 11264
      %60 = vsyncadd [#allocation5], %s59
      %s61 = sshll.u32 [#allocation6], 4
      %s62 = int_to_ptr.vmem [resolvable:$true] %s61
      %67 = dma.hbm_to_vmem [thread:$0]  %s7, 11264, %s62, [#allocation5], 64, 64, 4
    $region33: #{optimized_bottleneck_processor.1} parent=1 // pred_fallthru
      _
    // Predicated region
    $region34: #{optimized_bottleneck_processor.1} parent=1 // pred_check
      _
    $region35: #{optimized_bottleneck_processor.1} parent=1 // pred_check_branch
      %69 = sbr.rel (0) target = $region37
    $region36: #{optimized_bottleneck_processor.1} parent=1 // pred_region
      _
    $region37: #{optimized_bottleneck_processor.1} parent=1 // pred_fallthru
      _
    // Predicated region
    $region38: #{optimized_bottleneck_processor.1} parent=1 // pred_check
      _
    $region39: #{optimized_bottleneck_processor.1} parent=1 // pred_check_branch
      %71 = sbr.rel (0) target = $region41
    $region40: #{optimized_bottleneck_processor.1} parent=1 // pred_region
      %s73 = ssub.s32 2048, 2048
      %74 = vsyncadd [#allocation8], %s73
      %s75 = sshll.u32 [#allocation7], 4
      %s76 = int_to_ptr.vmem [resolvable:$true] %s75
      %81 = dma.hbm_to_vmem [thread:$0]  %s9, 2048, %s76, [#allocation8], 128, 128, 8
    $region41: #{optimized_bottleneck_processor.1} parent=1 // pred_fallthru
      _
    // Predicated region
    $region42: #{optimized_bottleneck_processor.1} parent=1 // pred_check
      _
    $region43: #{optimized_bottleneck_processor.1} parent=1 // pred_check_branch
      %83 = sbr.rel (0) target = $region45
    $region44: #{optimized_bottleneck_processor.1} parent=1 // pred_region
      %s85 = ssub.s32 8192, 8192
      %86 = vsyncadd [#allocation8], %s85
      %s87 = sshll.u32 [#allocation9], 4
      %s88 = int_to_ptr.vmem [resolvable:$true] %s87
      %93 = dma.hbm_to_vmem [thread:$0]  %s10, 8192, %s88, [#allocation8], 256, 256, 16
    $region45: #{optimized_bottleneck_processor.1} parent=1 // pred_fallthru
      _
    // Predicated region
    $region46: #{optimized_bottleneck_processor.1} parent=1 // pred_check
      _
    $region47: #{optimized_bottleneck_processor.1} parent=1 // pred_check_branch
      %95 = sbr.rel (0) target = $region49
    $region48: #{optimized_bottleneck_processor.1} parent=1 // pred_region
      %s97 = ssub.s32 256, 256
      %98 = vsyncadd [#allocation11], %s97
      %s99 = sshll.u32 [#allocation10], 4
      %s100 = int_to_ptr.vmem [resolvable:$true] %s99
      %105 = dma.hbm_to_vmem [thread:$0]  %s11, 256, %s100, [#allocation11], 128, 128, 8
    $region49: #{optimized_bottleneck_processor.1} parent=1 // pred_fallthru
      _
    // Predicated region
    $region50: #{optimized_bottleneck_processor.1} parent=1 // pred_check
      _
    $region51: #{optimized_bottleneck_processor.1} parent=1 // pred_check_branch
      %107 = sbr.rel (0) target = $region53
    $region52: #{optimized_bottleneck_processor.1} parent=1 // pred_region
      %s109 = ssub.s32 128, 128
      %110 = vsyncadd [#allocation11], %s109
      %s112 = sshll.u32 [#allocation12], 4
      %s113 = int_to_ptr.vmem [resolvable:$true] %s112
      %115 = dma.hbm_to_vmem [thread:$0]  %s12, 128, %s113, [#allocation11]
    $region53: #{optimized_bottleneck_processor.1} parent=1 // pred_fallthru
      _
    // Predicated region
    $region54: #{optimized_bottleneck_processor.1} parent=1 // pred_check
      _
    $region55: #{optimized_bottleneck_processor.1} parent=1 // pred_check_branch
      %117 = sbr.rel (0) target = $region57
    $region56: #{optimized_bottleneck_processor.1} parent=1 // pred_region
      %118 = dma.done [#allocation3], 256
    $region57: #{optimized_bottleneck_processor.1} parent=1 // pred_fallthru
      _
    // Predicated region
    $region58: #{optimized_bottleneck_processor.1} parent=1 // pred_check
      _
    $region59: #{optimized_bottleneck_processor.1} parent=1 // pred_check_branch
      %120 = sbr.rel (0) target = $region61
    $region60: #{optimized_bottleneck_processor.1} parent=1 // pred_region
      %121 = dma.done [#allocation5], 4608
    $region61: #{optimized_bottleneck_processor.1} parent=1 // pred_fallthru
      _
    // Predicated region
    $region62: #{optimized_bottleneck_processor.1} parent=1 // pred_check
      _
    $region63: #{optimized_bottleneck_processor.1} parent=1 // pred_check_branch
      %123 = sbr.rel (0) target = $region65
    $region64: #{optimized_bottleneck_processor.1} parent=1 // pred_region
      %124 = dma.done [#allocation5], 11264
    $region65: #{optimized_bottleneck_processor.1} parent=1 // pred_fallthru
      _
    // Predicated region
    $region66: #{optimized_bottleneck_processor.1} parent=1 // pred_check
      _
    $region67: #{optimized_bottleneck_processor.1} parent=1 // pred_check_branch
      %126 = sbr.rel (0) target = $region69
    $region68: #{optimized_bottleneck_processor.1} parent=1 // pred_region
      %127 = dma.done [#allocation8], 2048
    $region69: #{optimized_bottleneck_processor.1} parent=1 // pred_fallthru
      _
    // Predicated region
    $region70: #{optimized_bottleneck_processor.1} parent=1 // pred_check
      _
    $region71: #{optimized_bottleneck_processor.1} parent=1 // pred_check_branch
      %129 = sbr.rel (0) target = $region73
    $region72: #{optimized_bottleneck_processor.1} parent=1 // pred_region
      %130 = dma.done [#allocation8], 8192
    $region73: #{optimized_bottleneck_processor.1} parent=1 // pred_fallthru
      _
    // Predicated region
    $region74: #{optimized_bottleneck_processor.1} parent=1 // pred_check
      _
    $region75: #{optimized_bottleneck_processor.1} parent=1 // pred_check_branch
      %132 = sbr.rel (0) target = $region77
    $region76: #{optimized_bottleneck_processor.1} parent=1 // pred_region
      %133 = dma.done [#allocation11], 256
    $region77: #{optimized_bottleneck_processor.1} parent=1 // pred_fallthru
      _
    // Predicated region
    $region78: #{optimized_bottleneck_processor.1} parent=1 // pred_check
      _
    $region79: #{optimized_bottleneck_processor.1} parent=1 // pred_check_branch
      %135 = sbr.rel (0) target = $region81
    $region80: #{optimized_bottleneck_processor.1} parent=1 // pred_region
      %136 = dma.done [#allocation11], 128
    $region81: #{optimized_bottleneck_processor.1} parent=1 // pred_fallthru
      _
    %v138 = vld [vmem:[%s0] sm:$0xff]
    %v139 = vld [vmem:[%s0 + $0x8] sm:$0xff]
    %v140 = vld [vmem:[%s2] sm:$0x1]
    %v141 = vld [vmem:[%s3] sm:$0xff]
    %v142 = vld [vmem:[%s3 + $0x8] sm:$0xff]
    %v143 = vld [vmem:[%s4] sm:$0xff]
    %v144 = vld [vmem:[%s4 + $0x8] sm:$0xff]
    %v145 = vld [vmem:[#allocation2] sm:$0xff]
    %v146 = vld [vmem:[#allocation2 + $0x8] sm:$0xff]
    %v147 = vld [vmem:[#allocation7] sm:$0xff]
    %v148 = vld [vmem:[#allocation7 + $0x8] sm:$0xff]
    %v149 = vld [vmem:[#allocation7 + $0x10] sm:$0xff]
    %v150 = vld [vmem:[#allocation7 + $0x18] sm:$0xff]
    %v151 = vld [vmem:[#allocation7 + $0x20] sm:$0xff]
    %v152 = vld [vmem:[#allocation7 + $0x28] sm:$0xff]
    %v153 = vld [vmem:[#allocation7 + $0x30] sm:$0xff]
    %v154 = vld [vmem:[#allocation7 + $0x38] sm:$0xff]
    %v155 = vld [vmem:[#allocation7 + $0x40] sm:$0xff]
    %v156 = vld [vmem:[#allocation7 + $0x48] sm:$0xff]
    %v157 = vld [vmem:[#allocation7 + $0x50] sm:$0xff]
    %v158 = vld [vmem:[#allocation7 + $0x58] sm:$0xff]
    %v159 = vld [vmem:[#allocation7 + $0x60] sm:$0xff]
    %v160 = vld [vmem:[#allocation7 + $0x68] sm:$0xff]
    %v161 = vld [vmem:[#allocation7 + $0x70] sm:$0xff]
    %v162 = vld [vmem:[#allocation7 + $0x78] sm:$0xff]
    %v163 = vld [vmem:[#allocation9] sm:$0xff]
    %v164 = vld [vmem:[#allocation9 + $0x8] sm:$0xff]
    %v165 = vld [vmem:[#allocation9 + $0x10] sm:$0xff]
    %v166 = vld [vmem:[#allocation9 + $0x18] sm:$0xff]
    %v167 = vld [vmem:[#allocation9 + $0x20] sm:$0xff]
    %v168 = vld [vmem:[#allocation9 + $0x28] sm:$0xff]
    %v169 = vld [vmem:[#allocation9 + $0x30] sm:$0xff]
    %v170 = vld [vmem:[#allocation9 + $0x38] sm:$0xff]
    %v171 = vld [vmem:[#allocation9 + $0x40] sm:$0xff]
    %v172 = vld [vmem:[#allocation9 + $0x48] sm:$0xff]
    %v173 = vld [vmem:[#allocation9 + $0x50] sm:$0xff]
    %v174 = vld [vmem:[#allocation9 + $0x58] sm:$0xff]
    %v175 = vld [vmem:[#allocation9 + $0x60] sm:$0xff]
    %v176 = vld [vmem:[#allocation9 + $0x68] sm:$0xff]
    %v177 = vld [vmem:[#allocation9 + $0x70] sm:$0xff]
    %v178 = vld [vmem:[#allocation9 + $0x78] sm:$0xff]
    %v179 = vld [vmem:[#allocation9 + $0x80] sm:$0xff]
    %v180 = vld [vmem:[#allocation9 + $0x88] sm:$0xff]
    %v181 = vld [vmem:[#allocation9 + $0x90] sm:$0xff]
    %v182 = vld [vmem:[#allocation9 + $0x98] sm:$0xff]
    %v183 = vld [vmem:[#allocation9 + $0xa0] sm:$0xff]
    %v184 = vld [vmem:[#allocation9 + $0xa8] sm:$0xff]
    %v185 = vld [vmem:[#allocation9 + $0xb0] sm:$0xff]
    %v186 = vld [vmem:[#allocation9 + $0xb8] sm:$0xff]
    %v187 = vld [vmem:[#allocation9 + $0xc0] sm:$0xff]
    %v188 = vld [vmem:[#allocation9 + $0xc8] sm:$0xff]
    %v189 = vld [vmem:[#allocation9 + $0xd0] sm:$0xff]
    %v190 = vld [vmem:[#allocation9 + $0xd8] sm:$0xff]
    %v191 = vld [vmem:[#allocation9 + $0xe0] sm:$0xff]
    %v192 = vld [vmem:[#allocation9 + $0xe8] sm:$0xff]
    %v193 = vld [vmem:[#allocation9 + $0xf0] sm:$0xff]
    %v194 = vld [vmem:[#allocation9 + $0xf8] sm:$0xff]
    %v195 = vld [vmem:[#allocation9 + $0x100] sm:$0xff]
    %v196 = vld [vmem:[#allocation9 + $0x108] sm:$0xff]
    %v197 = vld [vmem:[#allocation9 + $0x110] sm:$0xff]
    %v198 = vld [vmem:[#allocation9 + $0x118] sm:$0xff]
    %v199 = vld [vmem:[#allocation9 + $0x120] sm:$0xff]
    %v200 = vld [vmem:[#allocation9 + $0x128] sm:$0xff]
    %v201 = vld [vmem:[#allocation9 + $0x130] sm:$0xff]
    %v202 = vld [vmem:[#allocation9 + $0x138] sm:$0xff]
    %v203 = vld [vmem:[#allocation9 + $0x140] sm:$0xff]
    %v204 = vld [vmem:[#allocation9 + $0x148] sm:$0xff]
    %v205 = vld [vmem:[#allocation9 + $0x150] sm:$0xff]
    %v206 = vld [vmem:[#allocation9 + $0x158] sm:$0xff]
    %v207 = vld [vmem:[#allocation9 + $0x160] sm:$0xff]
    %v208 = vld [vmem:[#allocation9 + $0x168] sm:$0xff]
    %v209 = vld [vmem:[#allocation9 + $0x170] sm:$0xff]
    %v210 = vld [vmem:[#allocation9 + $0x178] sm:$0xff]
    %v211 = vld [vmem:[#allocation9 + $0x180] sm:$0xff]
    %v212 = vld [vmem:[#allocation9 + $0x188] sm:$0xff]
    %v213 = vld [vmem:[#allocation9 + $0x190] sm:$0xff]
    %v214 = vld [vmem:[#allocation9 + $0x198] sm:$0xff]
    %v215 = vld [vmem:[#allocation9 + $0x1a0] sm:$0xff]
    %v216 = vld [vmem:[#allocation9 + $0x1a8] sm:$0xff]
    %v217 = vld [vmem:[#allocation9 + $0x1b0] sm:$0xff]
    %v218 = vld [vmem:[#allocation9 + $0x1b8] sm:$0xff]
    %v219 = vld [vmem:[#allocation9 + $0x1c0] sm:$0xff]
    %v220 = vld [vmem:[#allocation9 + $0x1c8] sm:$0xff]
    %v221 = vld [vmem:[#allocation9 + $0x1d0] sm:$0xff]
    %v222 = vld [vmem:[#allocation9 + $0x1d8] sm:$0xff]
    %v223 = vld [vmem:[#allocation9 + $0x1e0] sm:$0xff]
    %v224 = vld [vmem:[#allocation9 + $0x1e8] sm:$0xff]
    %v225 = vld [vmem:[#allocation9 + $0x1f0] sm:$0xff]
    %v226 = vld [vmem:[#allocation9 + $0x1f8] sm:$0xff]
    %v227 = vld [vmem:[#allocation10] sm:$0x1]
    %v228 = vld [vmem:[#allocation10 + $0x1] sm:$0x1]
    %229 = vmatprep.subr.mxu0 0.0
    %230 = vmatpush1.msra.mxu0 %v147
    %231 = vmatprep.subr.mxu0 0.0
    %232 = vmatpush1.msra.mxu0 %v148
    %233 = vmatprep.subr.mxu0 0.0
    %234 = vmatpush1.msra.mxu0 %v149
    %235 = vmatprep.subr.mxu0 0.0
    %236 = vmatpush1.msra.mxu0 %v150
    %237 = vmatprep.subr.mxu0 0.0
    %238 = vmatpush1.msra.mxu0 %v151
    %239 = vmatprep.subr.mxu0 0.0
    %240 = vmatpush1.msra.mxu0 %v152
    %241 = vmatprep.subr.mxu0 0.0
    %242 = vmatpush1.msra.mxu0 %v153
    %243 = vmatprep.subr.mxu0 0.0
    %244 = vmatpush1.msra.mxu0 %v154
    %245 = vmatprep.subr.mxu0 0.0
    %246 = vmatpush1.msra.mxu0 %v155
    %247 = vmatprep.subr.mxu0 0.0
    %248 = vmatpush1.msra.mxu0 %v156
    %249 = vmatprep.subr.mxu0 0.0
    %250 = vmatpush1.msra.mxu0 %v157
    %251 = vmatprep.subr.mxu0 0.0
    %252 = vmatpush1.msra.mxu0 %v158
    %253 = vmatprep.subr.mxu0 0.0
    %254 = vmatpush1.msra.mxu0 %v159
    %255 = vmatprep.subr.mxu0 0.0
    %256 = vmatpush1.msra.mxu0 %v160
    %257 = vmatprep.subr.mxu0 0.0
    %258 = vmatpush1.msra.mxu0 %v161
    %259 = vmatprep.subr.mxu0 0.0
    %260 = vmatpush1.msra.mxu0 %v162
    %261 = vmatprep.subr.mxu0 0.0
    %262 = vmatpush1.msra.mxu0 0.0
    %263 = vmatprep.subr.mxu0 0.0
    %264 = vmatpush1.msra.mxu0 0.0
    %265 = vmatprep.subr.mxu0 0.0
    %266 = vmatpush1.msra.mxu0 0.0
    %267 = vmatprep.subr.mxu0 0.0
    %268 = vmatpush1.msra.mxu0 0.0
    %269 = vmatprep.subr.mxu0 0.0
    %270 = vmatpush1.msra.mxu0 0.0
    %271 = vmatprep.subr.mxu0 0.0
    %272 = vmatpush1.msra.mxu0 0.0
    %273 = vmatprep.subr.mxu0 0.0
    %274 = vmatpush1.msra.mxu0 0.0
    %275 = vmatprep.subr.mxu0 0.0
    %276 = vmatpush1.msra.mxu0 0.0
    %277 = vmatprep.subr.mxu0 0.0
    %278 = vmatpush1.msra.mxu0 0.0
    %279 = vmatprep.subr.mxu0 0.0
    %280 = vmatpush1.msra.mxu0 0.0
    %281 = vmatprep.subr.mxu0 0.0
    %282 = vmatpush1.msra.mxu0 0.0
    %283 = vmatprep.subr.mxu0 0.0
    %284 = vmatpush1.msra.mxu0 0.0
    %285 = vmatprep.subr.mxu0 0.0
    %286 = vmatpush1.msra.mxu0 0.0
    %287 = vmatprep.subr.mxu0 0.0
    %288 = vmatpush1.msra.mxu0 0.0
    %289 = vmatprep.subr.mxu0 0.0
    %290 = vmatpush1.msra.mxu0 0.0
    %291 = vmatprep.subr.mxu0 0.0
    %292 = vmatpush1.msra.mxu0 0.0
    %293 = vmatprep.mubr.f32.mxu0 0.0
    %294 = vmatmul.mubr.f32.gmra.mrb[0].mxu0 %v138
    %v295 = vpop.f32.mrb[0].mxu0
    %v296 = vadd.f32 0.0, %v295
    %v297 = vpop.f32.mrb[0].mxu0
    %298 = vmatprep.mubr.f32.mxu0 0.0
    %299 = vmatmul.mubr.f32.gmra.mrb[0].mxu0 %v139
    %v300 = vpop.f32.mrb[0].mxu0
    %v301 = vadd.f32 0.0, %v300
    %v302 = vpop.f32.mrb[0].mxu0
    %303 = vdwg.mxu0
    %v304 = vsub.f32 %v138, %v296
    %v305 = vsub.f32 %v139, %v301
    %v306 = vmul.f32 %v304, %v304
    %v307 = vmul.f32 %v305, %v305
    %308 = vmatprep.subr.mxu0 0.0
    %309 = vmatpush1.msra.mxu0 %v147
    %310 = vmatprep.subr.mxu0 0.0
    %311 = vmatpush1.msra.mxu0 %v148
    %312 = vmatprep.subr.mxu0 0.0
    %313 = vmatpush1.msra.mxu0 %v149
    %314 = vmatprep.subr.mxu0 0.0
    %315 = vmatpush1.msra.mxu0 %v150
    %316 = vmatprep.subr.mxu0 0.0
    %317 = vmatpush1.msra.mxu0 %v151
    %318 = vmatprep.subr.mxu0 0.0
    %319 = vmatpush1.msra.mxu0 %v152
    %320 = vmatprep.subr.mxu0 0.0
    %321 = vmatpush1.msra.mxu0 %v153
    %322 = vmatprep.subr.mxu0 0.0
    %323 = vmatpush1.msra.mxu0 %v154
    %324 = vmatprep.subr.mxu0 0.0
    %325 = vmatpush1.msra.mxu0 %v155
    %326 = vmatprep.subr.mxu0 0.0
    %327 = vmatpush1.msra.mxu0 %v156
    %328 = vmatprep.subr.mxu0 0.0
    %329 = vmatpush1.msra.mxu0 %v157
    %330 = vmatprep.subr.mxu0 0.0
    %331 = vmatpush1.msra.mxu0 %v158
    %332 = vmatprep.subr.mxu0 0.0
    %333 = vmatpush1.msra.mxu0 %v159
    %334 = vmatprep.subr.mxu0 0.0
    %335 = vmatpush1.msra.mxu0 %v160
    %336 = vmatprep.subr.mxu0 0.0
    %337 = vmatpush1.msra.mxu0 %v161
    %338 = vmatprep.subr.mxu0 0.0
    %339 = vmatpush1.msra.mxu0 %v162
    %340 = vmatprep.subr.mxu0 0.0
    %341 = vmatpush1.msra.mxu0 0.0
    %342 = vmatprep.subr.mxu0 0.0
    %343 = vmatpush1.msra.mxu0 0.0
    %344 = vmatprep.subr.mxu0 0.0
    %345 = vmatpush1.msra.mxu0 0.0
    %346 = vmatprep.subr.mxu0 0.0
    %347 = vmatpush1.msra.mxu0 0.0
    %348 = vmatprep.subr.mxu0 0.0
    %349 = vmatpush1.msra.mxu0 0.0
    %350 = vmatprep.subr.mxu0 0.0
    %351 = vmatpush1.msra.mxu0 0.0
    %352 = vmatprep.subr.mxu0 0.0
    %353 = vmatpush1.msra.mxu0 0.0
    %354 = vmatprep.subr.mxu0 0.0
    %355 = vmatpush1.msra.mxu0 0.0
    %356 = vmatprep.subr.mxu0 0.0
    %357 = vmatpush1.msra.mxu0 0.0
    %358 = vmatprep.subr.mxu0 0.0
    %359 = vmatpush1.msra.mxu0 0.0
    %360 = vmatprep.subr.mxu0 0.0
    %361 = vmatpush1.msra.mxu0 0.0
    %362 = vmatprep.subr.mxu0 0.0
    %363 = vmatpush1.msra.mxu0 0.0
    %364 = vmatprep.subr.mxu0 0.0
    %365 = vmatpush1.msra.mxu0 0.0
    %366 = vmatprep.subr.mxu0 0.0
    %367 = vmatpush1.msra.mxu0 0.0
    %368 = vmatprep.subr.mxu0 0.0
    %369 = vmatpush1.msra.mxu0 0.0
    %370 = vmatprep.subr.mxu0 0.0
    %371 = vmatpush1.msra.mxu0 0.0
    %372 = vmatprep.mubr.f32.mxu0 0.0
    %373 = vmatmul.mubr.f32.gmra.mrb[0].mxu0 %v306
    %v374 = vpop.f32.mrb[0].mxu0
    %v375 = vadd.f32 1e-05, %v374
    %v376 = vpop.f32.mrb[0].mxu0
    %377 = vmatprep.mubr.f32.mxu0 0.0
    %378 = vmatmul.mubr.f32.gmra.mrb[0].mxu0 %v307
    %v379 = vpop.f32.mrb[0].mxu0
    %v380 = vadd.f32 1e-05, %v379
    %v381 = vpop.f32.mrb[0].mxu0
    %382 = vdwg.mxu0
    %v383 = vrsqrt.pop %v375
    %v384 = vrsqrt.pop %v380
    %v385 = vmul.f32 %v304, %v383
    %v386 = vmul.f32 %v305, %v384
    %v387 = vlaneseq
    %v388 = vshrl.u32 %v387, 7
    %v389 = vsub.s32 0, %v388
    %v390 = vrot.slane %v227, %v389
    %v391 = vmul.f32 %v385, %v390
    %v392 = vmul.f32 %v386, %v390
    %v393 = vlaneseq
    %v394 = vshrl.u32 %v393, 7
    %v395 = vsub.s32 0, %v394
    %v396 = vrot.slane %v228, %v395
    %v397 = vadd.f32 %v391, %v396
    %v398 = vadd.f32 %v392, %v396
    %v399 = vld [vmem:[#allocation4] sm:$0xf]
    %v400 = vld [vmem:[#allocation4 + $0x4] sm:$0xf]
    %v401 = vunpack.c.l.bf16 %v399
    %v402 = vunpack.c.l.bf16 %v400
    %v403 = vlaneseq
    %v404 = vshrl.u32 %v403, 7
    %v405 = vsub.s32 0, %v404
    %v406 = vrot.slane %v397, %v405
    %v407 = vmul.f32 %v401, %v406
    %v408 = vmul.f32 %v402, %v406
    %v409 = vadd.f32 %v407, 0.0
    %v410 = vadd.f32 %v408, 0.0
    %s411 = scalar_lea.vmem [#allocation4], 8
    %v412 = vld [vmem:[%s411] sm:$0xf]
    %v413 = vld [vmem:[%s411 + $0x4] sm:$0xf]
    %v414 = vunpack.c.l.bf16 %v412
    %v415 = vunpack.c.l.bf16 %v413
    %v416 = vlaneseq
    %v417 = vshrl.u32 %v416, 7
    %v418 = vsub.s32 1, %v417
    %v419 = vrot.slane %v397, %v418
    %v420 = vmul.f32 %v414, %v419
    %v421 = vmul.f32 %v415, %v419
    %v422 = vadd.f32 %v409, %v420
    %v423 = vadd.f32 %v410, %v421
    %s424 = scalar_lea.vmem [#allocation4], 16
    %v425 = vld [vmem:[%s424] sm:$0xf]
    %v426 = vld [vmem:[%s424 + $0x4] sm:$0xf]
    %v427 = vunpack.c.l.bf16 %v425
    %v428 = vunpack.c.l.bf16 %v426
    %v429 = vlaneseq
    %v430 = vshrl.u32 %v429, 7
    %v431 = vsub.s32 2, %v430
    %v432 = vrot.slane %v397, %v431
    %v433 = vmul.f32 %v427, %v432
    %v434 = vmul.f32 %v428, %v432
    %v435 = vadd.f32 %v422, %v433
    %v436 = vadd.f32 %v423, %v434
    %s437 = scalar_lea.vmem [#allocation4], 24
    %v438 = vld [vmem:[%s437] sm:$0xf]
    %v439 = vld [vmem:[%s437 + $0x4] sm:$0xf]
    %v440 = vunpack.c.l.bf16 %v438
    %v441 = vunpack.c.l.bf16 %v439
    %v442 = vlaneseq
    %v443 = vshrl.u32 %v442, 7
    %v444 = vsub.s32 3, %v443
    %v445 = vrot.slane %v397, %v444
    %v446 = vmul.f32 %v440, %v445
    %v447 = vmul.f32 %v441, %v445
    %v448 = vadd.f32 %v435, %v446
    %v449 = vadd.f32 %v436, %v447
    %s450 = scalar_lea.vmem [#allocation4], 32
    %v451 = vld [vmem:[%s450] sm:$0xf]
    %v452 = vld [vmem:[%s450 + $0x4] sm:$0xf]
    %v453 = vunpack.c.l.bf16 %v451
    %v454 = vunpack.c.l.bf16 %v452
    %v455 = vlaneseq
    %v456 = vshrl.u32 %v455, 7
    %v457 = vsub.s32 4, %v456
    %v458 = vrot.slane %v397, %v457
    %v459 = vmul.f32 %v453, %v458
    %v460 = vmul.f32 %v454, %v458
    %v461 = vadd.f32 %v448, %v459
    %v462 = vadd.f32 %v449, %v460
    %s463 = scalar_lea.vmem [#allocation4], 40
    %v464 = vld [vmem:[%s463] sm:$0xf]
    %v465 = vld [vmem:[%s463 + $0x4] sm:$0xf]
    %v466 = vunpack.c.l.bf16 %v464
    %v467 = vunpack.c.l.bf16 %v465
    %v468 = vlaneseq
    %v469 = vshrl.u32 %v468, 7
    %v470 = vsub.s32 5, %v469
    %v471 = vrot.slane %v397, %v470
    %v472 = vmul.f32 %v466, %v471
    %v473 = vmul.f32 %v467, %v471
    %v474 = vadd.f32 %v461, %v472
    %v475 = vadd.f32 %v462, %v473
    %s476 = scalar_lea.vmem [#allocation4], 48
    %v477 = vld [vmem:[%s476] sm:$0xf]
    %v478 = vld [vmem:[%s476 + $0x4] sm:$0xf]
    %v479 = vunpack.c.l.bf16 %v477
    %v480 = vunpack.c.l.bf16 %v478
    %v481 = vlaneseq
    %v482 = vshrl.u32 %v481, 7
    %v483 = vsub.s32 6, %v482
    %v484 = vrot.slane %v397, %v483
    %v485 = vmul.f32 %v479, %v484
    %v486 = vmul.f32 %v480, %v484
    %v487 = vadd.f32 %v474, %v485
    %v488 = vadd.f32 %v475, %v486
    %s489 = scalar_lea.vmem [#allocation4], 56
    %v490 = vld [vmem:[%s489] sm:$0xf]
    %v491 = vld [vmem:[%s489 + $0x4] sm:$0xf]
    %v492 = vunpack.c.l.bf16 %v490
    %v493 = vunpack.c.l.bf16 %v491
    %v494 = vlaneseq
    %v495 = vshrl.u32 %v494, 7
    %v496 = vsub.s32 7, %v495
    %v497 = vrot.slane %v397, %v496
    %v498 = vmul.f32 %v492, %v497
    %v499 = vmul.f32 %v493, %v497
    %v500 = vadd.f32 %v487, %v498
    %v501 = vadd.f32 %v488, %v499
    %s502 = scalar_lea.vmem [#allocation4], 64
    %v503 = vld [vmem:[%s502] sm:$0xf]
    %v504 = vld [vmem:[%s502 + $0x4] sm:$0xf]
    %v505 = vunpack.c.l.bf16 %v503
    %v506 = vunpack.c.l.bf16 %v504
    %v507 = vlaneseq
    %v508 = vshrl.u32 %v507, 7
    %v509 = vsub.s32 0, %v508
    %v510 = vrot.slane %v398, %v509
    %v511 = vmul.f32 %v505, %v510
    %v512 = vmul.f32 %v506, %v510
    %v513 = vadd.f32 %v500, %v511
    %v514 = vadd.f32 %v501, %v512
    %s515 = scalar_lea.vmem [#allocation4], 72
    %v516 = vld [vmem:[%s515] sm:$0xf]
    %v517 = vld [vmem:[%s515 + $0x4] sm:$0xf]
    %v518 = vunpack.c.l.bf16 %v516
    %v519 = vunpack.c.l.bf16 %v517
    %v520 = vlaneseq
    %v521 = vshrl.u32 %v520, 7
    %v522 = vsub.s32 1, %v521
    %v523 = vrot.slane %v398, %v522
    %v524 = vmul.f32 %v518, %v523
    %v525 = vmul.f32 %v519, %v523
    %v526 = vadd.f32 %v513, %v524
    %v527 = vadd.f32 %v514, %v525
    %s528 = scalar_lea.vmem [#allocation4], 80
    %v529 = vld [vmem:[%s528] sm:$0xf]
    %v530 = vld [vmem:[%s528 + $0x4] sm:$0xf]
    %v531 = vunpack.c.l.bf16 %v529
    %v532 = vunpack.c.l.bf16 %v530
    %v533 = vlaneseq
    %v534 = vshrl.u32 %v533, 7
    %v535 = vsub.s32 2, %v534
    %v536 = vrot.slane %v398, %v535
    %v537 = vmul.f32 %v531, %v536
    %v538 = vmul.f32 %v532, %v536
    %v539 = vadd.f32 %v526, %v537
    %v540 = vadd.f32 %v527, %v538
    %s541 = scalar_lea.vmem [#allocation4], 88
    %v542 = vld [vmem:[%s541] sm:$0xf]
    %v543 = vld [vmem:[%s541 + $0x4] sm:$0xf]
    %v544 = vunpack.c.l.bf16 %v542
    %v545 = vunpack.c.l.bf16 %v543
    %v546 = vlaneseq
    %v547 = vshrl.u32 %v546, 7
    %v548 = vsub.s32 3, %v547
    %v549 = vrot.slane %v398, %v548
    %v550 = vmul.f32 %v544, %v549
    %v551 = vmul.f32 %v545, %v549
    %v552 = vadd.f32 %v539, %v550
    %v553 = vadd.f32 %v540, %v551
    %v554 = vld [vmem:[#allocation10 + $0x2] sm:$0x1]
    %v555 = vlaneseq
    %v556 = vshrl.u32 %v555, 7
    %v557 = vsub.s32 0, %v556
    %v558 = vrot.slane %v554, %v557
    %v559 = vmul.f32 %v397, %v558
    %v560 = vmul.f32 %v398, %v558
    %v561 = vadd.f32 %v552, %v559
    %v562 = vadd.f32 %v553, %v560
    %v563 = vmul.f32 %v561, 0.5
    %v564 = vmul.f32 %v562, 0.5
    %v565 = vmul.f32 %v561, 0.044715
    %v566 = vmul.f32 %v562, 0.044715
    %v567 = vmul.f32 %v565, %v561
    %v568 = vmul.f32 %v566, %v562
    %v569 = vmul.f32 %v567, %v561
    %v570 = vmul.f32 %v568, %v562
    %v571 = vadd.f32 %v561, %v569
    %v572 = vadd.f32 %v562, %v570
    %v573 = vmul.f32 %v571, 0.7978846
    %v574 = vmul.f32 %v572, 0.7978846
    %v575 = vtanh.pop %v573
    %v576 = vtanh.pop %v574
    %v577 = vadd.f32 %v575, 1.0
    %v578 = vadd.f32 %v576, 1.0
    %v579 = vmul.f32 %v563, %v577
    %v580 = vmul.f32 %v564, %v578
    %v581 = vld [vmem:[#allocation6] sm:$0xf]
    %v582 = vld [vmem:[#allocation6 + $0x4] sm:$0xf]
    %v583 = vld [vmem:[#allocation6 + $0x8] sm:$0xf]
    %v584 = vld [vmem:[#allocation6 + $0xc] sm:$0xf]
    %v585 = vld [vmem:[#allocation6 + $0x10] sm:$0xf]
    %v586 = vld [vmem:[#allocation6 + $0x14] sm:$0xf]
    %v587 = vld [vmem:[#allocation6 + $0x18] sm:$0xf]
    %v588 = vld [vmem:[#allocation6 + $0x1c] sm:$0xf]
    %v589 = vld [vmem:[#allocation6 + $0x20] sm:$0xf]
    %v590 = vld [vmem:[#allocation6 + $0x24] sm:$0xf]
    %v591 = vld [vmem:[#allocation6 + $0x28] sm:$0xf]
    %v592 = vld [vmem:[#allocation6 + $0x2c] sm:$0xf]
    %v593 = vld [vmem:[#allocation6 + $0x30] sm:$0xf]
    %v594 = vld [vmem:[#allocation6 + $0x34] sm:$0xf]
    %v595 = vld [vmem:[#allocation6 + $0x38] sm:$0xf]
    %v596 = vld [vmem:[#allocation6 + $0x3c] sm:$0xf]
    %v597 = vpack.c.bf16 %v580, %v579
    %v614 = vunpack.c.l.b16 %v581
    %v615 = vunpack.c.l.b16 %v582
    %v616 = vunpack.c.l.b16 %v583
    %v617 = vunpack.c.l.b16 %v584
    %v618 = vunpack.c.l.b16 %v585
    %v619 = vunpack.c.l.b16 %v586
    %v620 = vunpack.c.l.b16 %v587
    %v621 = vunpack.c.l.b16 %v588
    %v622 = vunpack.c.l.b16 %v589
    %v623 = vunpack.c.l.b16 %v590
    %v624 = vunpack.c.l.b16 %v591
    %v625 = vunpack.c.l.b16 %v592
    %v626 = vunpack.c.l.b16 %v593
    %v627 = vunpack.c.l.b16 %v594
    %v628 = vunpack.c.l.b16 %v595
    %v629 = vunpack.c.l.b16 %v596
    %v630 = vpack.c.b16 %v615, %v614
    %v631 = vpack.c.b16 %v617, %v616
    %v632 = vpack.c.b16 %v619, %v618
    %v633 = vpack.c.b16 %v621, %v620
    %v634 = vpack.c.b16 %v623, %v622
    %v635 = vpack.c.b16 %v625, %v624
    %v636 = vpack.c.b16 %v627, %v626
    %v637 = vpack.c.b16 %v629, %v628
    %646 = vmatprep.subr.bf16.mxu0 0
    %647 = vmatpush1.bf16.msra.mxu0 %v630
    %648 = vmatprep.subr.bf16.mxu0 0
    %649 = vmatpush1.bf16.msra.mxu0 %v631
    %650 = vmatprep.subr.bf16.mxu0 0
    %651 = vmatpush1.bf16.msra.mxu0 %v632
    %652 = vmatprep.subr.bf16.mxu0 0
    %653 = vmatpush1.bf16.msra.mxu0 %v633
    %654 = vmatprep.subr.bf16.mxu0 0
    %655 = vmatpush1.bf16.msra.mxu0 %v634
    %656 = vmatprep.subr.bf16.mxu0 0
    %657 = vmatpush1.bf16.msra.mxu0 %v635
    %658 = vmatprep.subr.bf16.mxu0 0
    %659 = vmatpush1.bf16.msra.mxu0 %v636
    %660 = vmatprep.subr.bf16.mxu0 0
    %661 = vmatpush1.bf16.msra.mxu0 %v637
    %662 = vmatprep.subr.bf16.mxu0 0
    %663 = vmatpush1.bf16.msra.mxu0 0
    %664 = vmatprep.subr.bf16.mxu0 0
    %665 = vmatpush1.bf16.msra.mxu0 0
    %666 = vmatprep.subr.bf16.mxu0 0
    %667 = vmatpush1.bf16.msra.mxu0 0
    %668 = vmatprep.subr.bf16.mxu0 0
    %669 = vmatpush1.bf16.msra.mxu0 0
    %670 = vmatprep.subr.bf16.mxu0 0
    %671 = vmatpush1.bf16.msra.mxu0 0
    %672 = vmatprep.subr.bf16.mxu0 0
    %673 = vmatpush1.bf16.msra.mxu0 0
    %674 = vmatprep.subr.bf16.mxu0 0
    %675 = vmatpush1.bf16.msra.mxu0 0
    %676 = vmatprep.subr.bf16.mxu0 0
    %677 = vmatpush1.bf16.msra.mxu0 0
    %678 = vmatprep.mubr.bf16.mxu0 0
    %679 = vmatmul.mubr.bf16.gmra.mrb[0].mxu0 %v597
    %v680 = vpop.f32.mrb[0].mxu0
    %v681 = vadd.f32 0.0, %v680
    %v682 = vpop.f32.mrb[0].mxu0
    %v683 = vpop.f32.mrb[0].mxu0
    %v684 = vadd.f32 0.0, %v683
    %v685 = vpop.f32.mrb[0].mxu0
    %686 = vdwg.mxu0
    %v687 = vadd.f32 %v397, %v681
    %v688 = vadd.f32 %v398, %v684
    %v689 = vld [vmem:[#allocation10 + $0x5] sm:$0x1]
    %v690 = vlaneseq
    %v691 = vshrl.u32 %v690, 7
    %v692 = vsub.s32 0, %v691
    %v693 = vrot.slane %v689, %v692
    %v694 = vadd.f32 %v687, %v693
    %v695 = vadd.f32 %v688, %v693
    %s696 = scalar_lea.vmem [#allocation4], 96
    %v697 = vld [vmem:[%s696] sm:$0xf]
    %v698 = vld [vmem:[%s696 + $0x4] sm:$0xf]
    %v699 = vunpack.c.l.bf16 %v697
    %v700 = vunpack.c.l.bf16 %v698
    %v701 = vlaneseq
    %v702 = vshrl.u32 %v701, 7
    %v703 = vsub.s32 0, %v702
    %v704 = vrot.slane %v694, %v703
    %v705 = vmul.f32 %v699, %v704
    %v706 = vmul.f32 %v700, %v704
    %v707 = vadd.f32 %v705, 0.0
    %v708 = vadd.f32 %v706, 0.0
    %s709 = scalar_lea.vmem [#allocation4], 104
    %v710 = vld [vmem:[%s709] sm:$0xf]
    %v711 = vld [vmem:[%s709 + $0x4] sm:$0xf]
    %v712 = vunpack.c.l.bf16 %v710
    %v713 = vunpack.c.l.bf16 %v711
    %v714 = vlaneseq
    %v715 = vshrl.u32 %v714, 7
    %v716 = vsub.s32 1, %v715
    %v717 = vrot.slane %v694, %v716
    %v718 = vmul.f32 %v712, %v717
    %v719 = vmul.f32 %v713, %v717
    %v720 = vadd.f32 %v707, %v718
    %v721 = vadd.f32 %v708, %v719
    %s722 = scalar_lea.vmem [#allocation4], 112
    %v723 = vld [vmem:[%s722] sm:$0xf]
    %v724 = vld [vmem:[%s722 + $0x4] sm:$0xf]
    %v725 = vunpack.c.l.bf16 %v723
    %v726 = vunpack.c.l.bf16 %v724
    %v727 = vlaneseq
    %v728 = vshrl.u32 %v727, 7
    %v729 = vsub.s32 2, %v728
    %v730 = vrot.slane %v694, %v729
    %v731 = vmul.f32 %v725, %v730
    %v732 = vmul.f32 %v726, %v730
    %v733 = vadd.f32 %v720, %v731
    %v734 = vadd.f32 %v721, %v732
    %s735 = scalar_lea.vmem [#allocation4], 120
    %v736 = vld [vmem:[%s735] sm:$0xf]
    %v737 = vld [vmem:[%s735 + $0x4] sm:$0xf]
    %v738 = vunpack.c.l.bf16 %v736
    %v739 = vunpack.c.l.bf16 %v737
    %v740 = vlaneseq
    %v741 = vshrl.u32 %v740, 7
    %v742 = vsub.s32 3, %v741
    %v743 = vrot.slane %v694, %v742
    %v744 = vmul.f32 %v738, %v743
    %v745 = vmul.f32 %v739, %v743
    %v746 = vadd.f32 %v733, %v744
    %v747 = vadd.f32 %v734, %v745
    %s748 = scalar_lea.vmem [#allocation4], 128
    %v749 = vld [vmem:[%s748] sm:$0xf]
    %v750 = vld [vmem:[%s748 + $0x4] sm:$0xf]
    %v751 = vunpack.c.l.bf16 %v749
    %v752 = vunpack.c.l.bf16 %v750
    %v753 = vlaneseq
    %v754 = vshrl.u32 %v753, 7
    %v755 = vsub.s32 4, %v754
    %v756 = vrot.slane %v694, %v755
    %v757 = vmul.f32 %v751, %v756
    %v758 = vmul.f32 %v752, %v756
    %v759 = vadd.f32 %v746, %v757
    %v760 = vadd.f32 %v747, %v758
    %s761 = scalar_lea.vmem [#allocation4], 136
    %v762 = vld [vmem:[%s761] sm:$0xf]
    %v763 = vld [vmem:[%s761 + $0x4] sm:$0xf]
    %v764 = vunpack.c.l.bf16 %v762
    %v765 = vunpack.c.l.bf16 %v763
    %v766 = vlaneseq
    %v767 = vshrl.u32 %v766, 7
    %v768 = vsub.s32 5, %v767
    %v769 = vrot.slane %v694, %v768
    %v770 = vmul.f32 %v764, %v769
    %v771 = vmul.f32 %v765, %v769
    %v772 = vadd.f32 %v759, %v770
    %v773 = vadd.f32 %v760, %v771
    %s774 = scalar_lea.vmem [#allocation4], 144
    %v775 = vld [vmem:[%s774] sm:$0xf]
    %v776 = vld [vmem:[%s774 + $0x4] sm:$0xf]
    %v777 = vunpack.c.l.bf16 %v775
    %v778 = vunpack.c.l.bf16 %v776
    %v779 = vlaneseq
    %v780 = vshrl.u32 %v779, 7
    %v781 = vsub.s32 6, %v780
    %v782 = vrot.slane %v694, %v781
    %v783 = vmul.f32 %v777, %v782
    %v784 = vmul.f32 %v778, %v782
    %v785 = vadd.f32 %v772, %v783
    %v786 = vadd.f32 %v773, %v784
    %s787 = scalar_lea.vmem [#allocation4], 152
    %v788 = vld [vmem:[%s787] sm:$0xf]
    %v789 = vld [vmem:[%s787 + $0x4] sm:$0xf]
    %v790 = vunpack.c.l.bf16 %v788
    %v791 = vunpack.c.l.bf16 %v789
    %v792 = vlaneseq
    %v793 = vshrl.u32 %v792, 7
    %v794 = vsub.s32 7, %v793
    %v795 = vrot.slane %v694, %v794
    %v796 = vmul.f32 %v790, %v795
    %v797 = vmul.f32 %v791, %v795
    %v798 = vadd.f32 %v785, %v796
    %v799 = vadd.f32 %v786, %v797
    %s800 = scalar_lea.vmem [#allocation4], 160
    %v801 = vld [vmem:[%s800] sm:$0xf]
    %v802 = vld [vmem:[%s800 + $0x4] sm:$0xf]
    %v803 = vunpack.c.l.bf16 %v801
    %v804 = vunpack.c.l.bf16 %v802
    %v805 = vlaneseq
    %v806 = vshrl.u32 %v805, 7
    %v807 = vsub.s32 0, %v806
    %v808 = vrot.slane %v695, %v807
    %v809 = vmul.f32 %v803, %v808
    %v810 = vmul.f32 %v804, %v808
    %v811 = vadd.f32 %v798, %v809
    %v812 = vadd.f32 %v799, %v810
    %s813 = scalar_lea.vmem [#allocation4], 168
    %v814 = vld [vmem:[%s813] sm:$0xf]
    %v815 = vld [vmem:[%s813 + $0x4] sm:$0xf]
    %v816 = vunpack.c.l.bf16 %v814
    %v817 = vunpack.c.l.bf16 %v815
    %v818 = vlaneseq
    %v819 = vshrl.u32 %v818, 7
    %v820 = vsub.s32 1, %v819
    %v821 = vrot.slane %v695, %v820
    %v822 = vmul.f32 %v816, %v821
    %v823 = vmul.f32 %v817, %v821
    %v824 = vadd.f32 %v811, %v822
    %v825 = vadd.f32 %v812, %v823
    %s826 = scalar_lea.vmem [#allocation4], 176
    %v827 = vld [vmem:[%s826] sm:$0xf]
    %v828 = vld [vmem:[%s826 + $0x4] sm:$0xf]
    %v829 = vunpack.c.l.bf16 %v827
    %v830 = vunpack.c.l.bf16 %v828
    %v831 = vlaneseq
    %v832 = vshrl.u32 %v831, 7
    %v833 = vsub.s32 2, %v832
    %v834 = vrot.slane %v695, %v833
    %v835 = vmul.f32 %v829, %v834
    %v836 = vmul.f32 %v830, %v834
    %v837 = vadd.f32 %v824, %v835
    %v838 = vadd.f32 %v825, %v836
    %s839 = scalar_lea.vmem [#allocation4], 184
    %v840 = vld [vmem:[%s839] sm:$0xf]
    %v841 = vld [vmem:[%s839 + $0x4] sm:$0xf]
    %v842 = vunpack.c.l.bf16 %v840
    %v843 = vunpack.c.l.bf16 %v841
    %v844 = vlaneseq
    %v845 = vshrl.u32 %v844, 7
    %v846 = vsub.s32 3, %v845
    %v847 = vrot.slane %v695, %v846
    %v848 = vmul.f32 %v842, %v847
    %v849 = vmul.f32 %v843, %v847
    %v850 = vadd.f32 %v837, %v848
    %v851 = vadd.f32 %v838, %v849
    %v852 = vld [vmem:[#allocation10 + $0x3] sm:$0x1]
    %v853 = vlaneseq
    %v854 = vshrl.u32 %v853, 7
    %v855 = vsub.s32 0, %v854
    %v856 = vrot.slane %v852, %v855
    %v857 = vmul.f32 %v694, %v856
    %v858 = vmul.f32 %v695, %v856
    %v859 = vadd.f32 %v850, %v857
    %v860 = vadd.f32 %v851, %v858
    %v861 = vmul.f32 %v859, 0.5
    %v862 = vmul.f32 %v860, 0.5
    %v863 = vmul.f32 %v859, 0.044715
    %v864 = vmul.f32 %v860, 0.044715
    %v865 = vmul.f32 %v863, %v859
    %v866 = vmul.f32 %v864, %v860
    %v867 = vmul.f32 %v865, %v859
    %v868 = vmul.f32 %v866, %v860
    %v869 = vadd.f32 %v859, %v867
    %v870 = vadd.f32 %v860, %v868
    %v871 = vmul.f32 %v869, 0.7978846
    %v872 = vmul.f32 %v870, 0.7978846
    %v873 = vtanh.pop %v871
    %v874 = vtanh.pop %v872
    %v875 = vadd.f32 %v873, 1.0
    %v876 = vadd.f32 %v874, 1.0
    %v877 = vmul.f32 %v861, %v875
    %v878 = vmul.f32 %v862, %v876
    %v879 = vld [vmem:[#allocation6 + $0x40] sm:$0xf]
    %v880 = vld [vmem:[#allocation6 + $0x44] sm:$0xf]
    %v881 = vld [vmem:[#allocation6 + $0x48] sm:$0xf]
    %v882 = vld [vmem:[#allocation6 + $0x4c] sm:$0xf]
    %v883 = vld [vmem:[#allocation6 + $0x50] sm:$0xf]
    %v884 = vld [vmem:[#allocation6 + $0x54] sm:$0xf]
    %v885 = vld [vmem:[#allocation6 + $0x58] sm:$0xf]
    %v886 = vld [vmem:[#allocation6 + $0x5c] sm:$0xf]
    %v887 = vld [vmem:[#allocation6 + $0x60] sm:$0xf]
    %v888 = vld [vmem:[#allocation6 + $0x64] sm:$0xf]
    %v889 = vld [vmem:[#allocation6 + $0x68] sm:$0xf]
    %v890 = vld [vmem:[#allocation6 + $0x6c] sm:$0xf]
    %v891 = vld [vmem:[#allocation6 + $0x70] sm:$0xf]
    %v892 = vld [vmem:[#allocation6 + $0x74] sm:$0xf]
    %v893 = vld [vmem:[#allocation6 + $0x78] sm:$0xf]
    %v894 = vld [vmem:[#allocation6 + $0x7c] sm:$0xf]
    %v895 = vpack.c.bf16 %v878, %v877
    %v912 = vunpack.c.l.b16 %v879
    %v913 = vunpack.c.l.b16 %v880
    %v914 = vunpack.c.l.b16 %v881
    %v915 = vunpack.c.l.b16 %v882
    %v916 = vunpack.c.l.b16 %v883
    %v917 = vunpack.c.l.b16 %v884
    %v918 = vunpack.c.l.b16 %v885
    %v919 = vunpack.c.l.b16 %v886
    %v920 = vunpack.c.l.b16 %v887
    %v921 = vunpack.c.l.b16 %v888
    %v922 = vunpack.c.l.b16 %v889
    %v923 = vunpack.c.l.b16 %v890
    %v924 = vunpack.c.l.b16 %v891
    %v925 = vunpack.c.l.b16 %v892
    %v926 = vunpack.c.l.b16 %v893
    %v927 = vunpack.c.l.b16 %v894
    %v928 = vpack.c.b16 %v913, %v912
    %v929 = vpack.c.b16 %v915, %v914
    %v930 = vpack.c.b16 %v917, %v916
    %v931 = vpack.c.b16 %v919, %v918
    %v932 = vpack.c.b16 %v921, %v920
    %v933 = vpack.c.b16 %v923, %v922
    %v934 = vpack.c.b16 %v925, %v924
    %v935 = vpack.c.b16 %v927, %v926
    %944 = vmatprep.subr.bf16.mxu0 0
    %945 = vmatpush1.bf16.msra.mxu0 %v928
    %946 = vmatprep.subr.bf16.mxu0 0
    %947 = vmatpush1.bf16.msra.mxu0 %v929
    %948 = vmatprep.subr.bf16.mxu0 0
    %949 = vmatpush1.bf16.msra.mxu0 %v930
    %950 = vmatprep.subr.bf16.mxu0 0
    %951 = vmatpush1.bf16.msra.mxu0 %v931
    %952 = vmatprep.subr.bf16.mxu0 0
    %953 = vmatpush1.bf16.msra.mxu0 %v932
    %954 = vmatprep.subr.bf16.mxu0 0
    %955 = vmatpush1.bf16.msra.mxu0 %v933
    %956 = vmatprep.subr.bf16.mxu0 0
    %957 = vmatpush1.bf16.msra.mxu0 %v934
    %958 = vmatprep.subr.bf16.mxu0 0
    %959 = vmatpush1.bf16.msra.mxu0 %v935
    %960 = vmatprep.subr.bf16.mxu0 0
    %961 = vmatpush1.bf16.msra.mxu0 0
    %962 = vmatprep.subr.bf16.mxu0 0
    %963 = vmatpush1.bf16.msra.mxu0 0
    %964 = vmatprep.subr.bf16.mxu0 0
    %965 = vmatpush1.bf16.msra.mxu0 0
    %966 = vmatprep.subr.bf16.mxu0 0
    %967 = vmatpush1.bf16.msra.mxu0 0
    %968 = vmatprep.subr.bf16.mxu0 0
    %969 = vmatpush1.bf16.msra.mxu0 0
    %970 = vmatprep.subr.bf16.mxu0 0
    %971 = vmatpush1.bf16.msra.mxu0 0
    %972 = vmatprep.subr.bf16.mxu0 0
    %973 = vmatpush1.bf16.msra.mxu0 0
    %974 = vmatprep.subr.bf16.mxu0 0
    %975 = vmatpush1.bf16.msra.mxu0 0
    %976 = vmatprep.mubr.bf16.mxu0 0
    %977 = vmatmul.mubr.bf16.gmra.mrb[0].mxu0 %v895
    %v978 = vpop.f32.mrb[0].mxu0
    %v979 = vadd.f32 0.0, %v978
    %v980 = vpop.f32.mrb[0].mxu0
    %v981 = vpop.f32.mrb[0].mxu0
    %v982 = vadd.f32 0.0, %v981
    %v983 = vpop.f32.mrb[0].mxu0
    %984 = vdwg.mxu0
    %v985 = vadd.f32 %v694, %v979
    %v986 = vadd.f32 %v695, %v982
    %v987 = vld [vmem:[#allocation10 + $0x6] sm:$0x1]
    %v988 = vlaneseq
    %v989 = vshrl.u32 %v988, 7
    %v990 = vsub.s32 0, %v989
    %v991 = vrot.slane %v987, %v990
    %v992 = vadd.f32 %v985, %v991
    %v993 = vadd.f32 %v986, %v991
    %s994 = scalar_lea.vmem [#allocation4], 192
    %v995 = vld [vmem:[%s994] sm:$0xf]
    %v996 = vld [vmem:[%s994 + $0x4] sm:$0xf]
    %v997 = vunpack.c.l.bf16 %v995
    %v998 = vunpack.c.l.bf16 %v996
    %v999 = vlaneseq
    %v1000 = vshrl.u32 %v999, 7
    %v1001 = vsub.s32 0, %v1000
    %v1002 = vrot.slane %v992, %v1001
    %v1003 = vmul.f32 %v997, %v1002
    %v1004 = vmul.f32 %v998, %v1002
    %v1005 = vadd.f32 %v1003, 0.0
    %v1006 = vadd.f32 %v1004, 0.0
    %s1007 = scalar_lea.vmem [#allocation4], 200
    %v1008 = vld [vmem:[%s1007] sm:$0xf]
    %v1009 = vld [vmem:[%s1007 + $0x4] sm:$0xf]
    %v1010 = vunpack.c.l.bf16 %v1008
    %v1011 = vunpack.c.l.bf16 %v1009
    %v1012 = vlaneseq
    %v1013 = vshrl.u32 %v1012, 7
    %v1014 = vsub.s32 1, %v1013
    %v1015 = vrot.slane %v992, %v1014
    %v1016 = vmul.f32 %v1010, %v1015
    %v1017 = vmul.f32 %v1011, %v1015
    %v1018 = vadd.f32 %v1005, %v1016
    %v1019 = vadd.f32 %v1006, %v1017
    %s1020 = scalar_lea.vmem [#allocation4], 208
    %v1021 = vld [vmem:[%s1020] sm:$0xf]
    %v1022 = vld [vmem:[%s1020 + $0x4] sm:$0xf]
    %v1023 = vunpack.c.l.bf16 %v1021
    %v1024 = vunpack.c.l.bf16 %v1022
    %v1025 = vlaneseq
    %v1026 = vshrl.u32 %v1025, 7
    %v1027 = vsub.s32 2, %v1026
    %v1028 = vrot.slane %v992, %v1027
    %v1029 = vmul.f32 %v1023, %v1028
    %v1030 = vmul.f32 %v1024, %v1028
    %v1031 = vadd.f32 %v1018, %v1029
    %v1032 = vadd.f32 %v1019, %v1030
    %s1033 = scalar_lea.vmem [#allocation4], 216
    %v1034 = vld [vmem:[%s1033] sm:$0xf]
    %v1035 = vld [vmem:[%s1033 + $0x4] sm:$0xf]
    %v1036 = vunpack.c.l.bf16 %v1034
    %v1037 = vunpack.c.l.bf16 %v1035
    %v1038 = vlaneseq
    %v1039 = vshrl.u32 %v1038, 7
    %v1040 = vsub.s32 3, %v1039
    %v1041 = vrot.slane %v992, %v1040
    %v1042 = vmul.f32 %v1036, %v1041
    %v1043 = vmul.f32 %v1037, %v1041
    %v1044 = vadd.f32 %v1031, %v1042
    %v1045 = vadd.f32 %v1032, %v1043
    %s1046 = scalar_lea.vmem [#allocation4], 224
    %v1047 = vld [vmem:[%s1046] sm:$0xf]
    %v1048 = vld [vmem:[%s1046 + $0x4] sm:$0xf]
    %v1049 = vunpack.c.l.bf16 %v1047
    %v1050 = vunpack.c.l.bf16 %v1048
    %v1051 = vlaneseq
    %v1052 = vshrl.u32 %v1051, 7
    %v1053 = vsub.s32 4, %v1052
    %v1054 = vrot.slane %v992, %v1053
    %v1055 = vmul.f32 %v1049, %v1054
    %v1056 = vmul.f32 %v1050, %v1054
    %v1057 = vadd.f32 %v1044, %v1055
    %v1058 = vadd.f32 %v1045, %v1056
    %s1059 = scalar_lea.vmem [#allocation4], 232
    %v1060 = vld [vmem:[%s1059] sm:$0xf]
    %v1061 = vld [vmem:[%s1059 + $0x4] sm:$0xf]
    %v1062 = vunpack.c.l.bf16 %v1060
    %v1063 = vunpack.c.l.bf16 %v1061
    %v1064 = vlaneseq
    %v1065 = vshrl.u32 %v1064, 7
    %v1066 = vsub.s32 5, %v1065
    %v1067 = vrot.slane %v992, %v1066
    %v1068 = vmul.f32 %v1062, %v1067
    %v1069 = vmul.f32 %v1063, %v1067
    %v1070 = vadd.f32 %v1057, %v1068
    %v1071 = vadd.f32 %v1058, %v1069
    %s1072 = scalar_lea.vmem [#allocation4], 240
    %v1073 = vld [vmem:[%s1072] sm:$0xf]
    %v1074 = vld [vmem:[%s1072 + $0x4] sm:$0xf]
    %v1075 = vunpack.c.l.bf16 %v1073
    %v1076 = vunpack.c.l.bf16 %v1074
    %v1077 = vlaneseq
    %v1078 = vshrl.u32 %v1077, 7
    %v1079 = vsub.s32 6, %v1078
    %v1080 = vrot.slane %v992, %v1079
    %v1081 = vmul.f32 %v1075, %v1080
    %v1082 = vmul.f32 %v1076, %v1080
    %v1083 = vadd.f32 %v1070, %v1081
    %v1084 = vadd.f32 %v1071, %v1082
    %s1085 = scalar_lea.vmem [#allocation4], 248
    %v1086 = vld [vmem:[%s1085] sm:$0xf]
    %v1087 = vld [vmem:[%s1085 + $0x4] sm:$0xf]
    %v1088 = vunpack.c.l.bf16 %v1086
    %v1089 = vunpack.c.l.bf16 %v1087
    %v1090 = vlaneseq
    %v1091 = vshrl.u32 %v1090, 7
    %v1092 = vsub.s32 7, %v1091
    %v1093 = vrot.slane %v992, %v1092
    %v1094 = vmul.f32 %v1088, %v1093
    %v1095 = vmul.f32 %v1089, %v1093
    %v1096 = vadd.f32 %v1083, %v1094
    %v1097 = vadd.f32 %v1084, %v1095
    %s1098 = scalar_lea.vmem [#allocation4], 256
    %v1099 = vld [vmem:[%s1098] sm:$0xf]
    %v1100 = vld [vmem:[%s1098 + $0x4] sm:$0xf]
    %v1101 = vunpack.c.l.bf16 %v1099
    %v1102 = vunpack.c.l.bf16 %v1100
    %v1103 = vlaneseq
    %v1104 = vshrl.u32 %v1103, 7
    %v1105 = vsub.s32 0, %v1104
    %v1106 = vrot.slane %v993, %v1105
    %v1107 = vmul.f32 %v1101, %v1106
    %v1108 = vmul.f32 %v1102, %v1106
    %v1109 = vadd.f32 %v1096, %v1107
    %v1110 = vadd.f32 %v1097, %v1108
    %s1111 = scalar_lea.vmem [#allocation4], 264
    %v1112 = vld [vmem:[%s1111] sm:$0xf]
    %v1113 = vld [vmem:[%s1111 + $0x4] sm:$0xf]
    %v1114 = vunpack.c.l.bf16 %v1112
    %v1115 = vunpack.c.l.bf16 %v1113
    %v1116 = vlaneseq
    %v1117 = vshrl.u32 %v1116, 7
    %v1118 = vsub.s32 1, %v1117
    %v1119 = vrot.slane %v993, %v1118
    %v1120 = vmul.f32 %v1114, %v1119
    %v1121 = vmul.f32 %v1115, %v1119
    %v1122 = vadd.f32 %v1109, %v1120
    %v1123 = vadd.f32 %v1110, %v1121
    %s1124 = scalar_lea.vmem [#allocation4], 272
    %v1125 = vld [vmem:[%s1124] sm:$0xf]
    %v1126 = vld [vmem:[%s1124 + $0x4] sm:$0xf]
    %v1127 = vunpack.c.l.bf16 %v1125
    %v1128 = vunpack.c.l.bf16 %v1126
    %v1129 = vlaneseq
    %v1130 = vshrl.u32 %v1129, 7
    %v1131 = vsub.s32 2, %v1130
    %v1132 = vrot.slane %v993, %v1131
    %v1133 = vmul.f32 %v1127, %v1132
    %v1134 = vmul.f32 %v1128, %v1132
    %v1135 = vadd.f32 %v1122, %v1133
    %v1136 = vadd.f32 %v1123, %v1134
    %s1137 = scalar_lea.vmem [#allocation4], 280
    %v1138 = vld [vmem:[%s1137] sm:$0xf]
    %v1139 = vld [vmem:[%s1137 + $0x4] sm:$0xf]
    %v1140 = vunpack.c.l.bf16 %v1138
    %v1141 = vunpack.c.l.bf16 %v1139
    %v1142 = vlaneseq
    %v1143 = vshrl.u32 %v1142, 7
    %v1144 = vsub.s32 3, %v1143
    %v1145 = vrot.slane %v993, %v1144
    %v1146 = vmul.f32 %v1140, %v1145
    %v1147 = vmul.f32 %v1141, %v1145
    %v1148 = vadd.f32 %v1135, %v1146
    %v1149 = vadd.f32 %v1136, %v1147
    %v1150 = vld [vmem:[#allocation10 + $0x4] sm:$0x1]
    %v1151 = vlaneseq
    %v1152 = vshrl.u32 %v1151, 7
    %v1153 = vsub.s32 0, %v1152
    %v1154 = vrot.slane %v1150, %v1153
    %v1155 = vmul.f32 %v992, %v1154
    %v1156 = vmul.f32 %v993, %v1154
    %v1157 = vadd.f32 %v1148, %v1155
    %v1158 = vadd.f32 %v1149, %v1156
    %v1159 = vmul.f32 %v1157, 0.5
    %v1160 = vmul.f32 %v1158, 0.5
    %v1161 = vmul.f32 %v1157, 0.044715
    %v1162 = vmul.f32 %v1158, 0.044715
    %v1163 = vmul.f32 %v1161, %v1157
    %v1164 = vmul.f32 %v1162, %v1158
    %v1165 = vmul.f32 %v1163, %v1157
    %v1166 = vmul.f32 %v1164, %v1158
    %v1167 = vadd.f32 %v1157, %v1165
    %v1168 = vadd.f32 %v1158, %v1166
    %v1169 = vmul.f32 %v1167, 0.7978846
    %v1170 = vmul.f32 %v1168, 0.7978846
    %v1171 = vtanh.pop %v1169
    %v1172 = vtanh.pop %v1170
    %v1173 = vadd.f32 %v1171, 1.0
    %v1174 = vadd.f32 %v1172, 1.0
    %v1175 = vmul.f32 %v1159, %v1173
    %v1176 = vmul.f32 %v1160, %v1174
    %v1177 = vld [vmem:[#allocation6 + $0x80] sm:$0xf]
    %v1178 = vld [vmem:[#allocation6 + $0x84] sm:$0xf]
    %v1179 = vld [vmem:[#allocation6 + $0x88] sm:$0xf]
    %v1180 = vld [vmem:[#allocation6 + $0x8c] sm:$0xf]
    %v1181 = vld [vmem:[#allocation6 + $0x90] sm:$0xf]
    %v1182 = vld [vmem:[#allocation6 + $0x94] sm:$0xf]
    %v1183 = vld [vmem:[#allocation6 + $0x98] sm:$0xf]
    %v1184 = vld [vmem:[#allocation6 + $0x9c] sm:$0xf]
    %v1185 = vld [vmem:[#allocation6 + $0xa0] sm:$0xf]
    %v1186 = vld [vmem:[#allocation6 + $0xa4] sm:$0xf]
    %v1187 = vld [vmem:[#allocation6 + $0xa8] sm:$0xf]
    %v1188 = vld [vmem:[#allocation6 + $0xac] sm:$0xf]
    %v1189 = vld [vmem:[#allocation6 + $0xb0] sm:$0xf]
    %v1190 = vld [vmem:[#allocation6 + $0xb4] sm:$0xf]
    %v1191 = vld [vmem:[#allocation6 + $0xb8] sm:$0xf]
    %v1192 = vld [vmem:[#allocation6 + $0xbc] sm:$0xf]
    %v1193 = vpack.c.bf16 %v1176, %v1175
    %v1210 = vunpack.c.l.b16 %v1177
    %v1211 = vunpack.c.l.b16 %v1178
    %v1212 = vunpack.c.l.b16 %v1179
    %v1213 = vunpack.c.l.b16 %v1180
    %v1214 = vunpack.c.l.b16 %v1181
    %v1215 = vunpack.c.l.b16 %v1182
    %v1216 = vunpack.c.l.b16 %v1183
    %v1217 = vunpack.c.l.b16 %v1184
    %v1218 = vunpack.c.l.b16 %v1185
    %v1219 = vunpack.c.l.b16 %v1186
    %v1220 = vunpack.c.l.b16 %v1187
    %v1221 = vunpack.c.l.b16 %v1188
    %v1222 = vunpack.c.l.b16 %v1189
    %v1223 = vunpack.c.l.b16 %v1190
    %v1224 = vunpack.c.l.b16 %v1191
    %v1225 = vunpack.c.l.b16 %v1192
    %v1226 = vpack.c.b16 %v1211, %v1210
    %v1227 = vpack.c.b16 %v1213, %v1212
    %v1228 = vpack.c.b16 %v1215, %v1214
    %v1229 = vpack.c.b16 %v1217, %v1216
    %v1230 = vpack.c.b16 %v1219, %v1218
    %v1231 = vpack.c.b16 %v1221, %v1220
    %v1232 = vpack.c.b16 %v1223, %v1222
    %v1233 = vpack.c.b16 %v1225, %v1224
    %1242 = vmatprep.subr.bf16.mxu0 0
    %1243 = vmatpush1.bf16.msra.mxu0 %v1226
    %1244 = vmatprep.subr.bf16.mxu0 0
    %1245 = vmatpush1.bf16.msra.mxu0 %v1227
    %1246 = vmatprep.subr.bf16.mxu0 0
    %1247 = vmatpush1.bf16.msra.mxu0 %v1228
    %1248 = vmatprep.subr.bf16.mxu0 0
    %1249 = vmatpush1.bf16.msra.mxu0 %v1229
    %1250 = vmatprep.subr.bf16.mxu0 0
    %1251 = vmatpush1.bf16.msra.mxu0 %v1230
    %1252 = vmatprep.subr.bf16.mxu0 0
    %1253 = vmatpush1.bf16.msra.mxu0 %v1231
    %1254 = vmatprep.subr.bf16.mxu0 0
    %1255 = vmatpush1.bf16.msra.mxu0 %v1232
    %1256 = vmatprep.subr.bf16.mxu0 0
    %1257 = vmatpush1.bf16.msra.mxu0 %v1233
    %1258 = vmatprep.subr.bf16.mxu0 0
    %1259 = vmatpush1.bf16.msra.mxu0 0
    %1260 = vmatprep.subr.bf16.mxu0 0
    %1261 = vmatpush1.bf16.msra.mxu0 0
    %1262 = vmatprep.subr.bf16.mxu0 0
    %1263 = vmatpush1.bf16.msra.mxu0 0
    %1264 = vmatprep.subr.bf16.mxu0 0
    %1265 = vmatpush1.bf16.msra.mxu0 0
    %1266 = vmatprep.subr.bf16.mxu0 0
    %1267 = vmatpush1.bf16.msra.mxu0 0
    %1268 = vmatprep.subr.bf16.mxu0 0
    %1269 = vmatpush1.bf16.msra.mxu0 0
    %1270 = vmatprep.subr.bf16.mxu0 0
    %1271 = vmatpush1.bf16.msra.mxu0 0
    %1272 = vmatprep.subr.bf16.mxu0 0
    %1273 = vmatpush1.bf16.msra.mxu0 0
    %1274 = vmatprep.mubr.bf16.mxu0 0
    %1275 = vmatmul.mubr.bf16.gmra.mrb[0].mxu0 %v1193
    %v1276 = vpop.f32.mrb[0].mxu0
    %v1277 = vadd.f32 0.0, %v1276
    %v1278 = vpop.f32.mrb[0].mxu0
    %v1279 = vpop.f32.mrb[0].mxu0
    %v1280 = vadd.f32 0.0, %v1279
    %v1281 = vpop.f32.mrb[0].mxu0
    %1282 = vdwg.mxu0
    %v1283 = vadd.f32 %v992, %v1277
    %v1284 = vadd.f32 %v993, %v1280
    %v1285 = vld [vmem:[#allocation10 + $0x7] sm:$0x1]
    %v1286 = vlaneseq
    %v1287 = vshrl.u32 %v1286, 7
    %v1288 = vsub.s32 0, %v1287
    %v1289 = vrot.slane %v1285, %v1288
    %v1290 = vadd.f32 %v1283, %v1289
    %v1291 = vadd.f32 %v1284, %v1289
    %vm1294 = vcmask 1040384
    %v1295 = vrot.slane %v1290, 7
    %v1296 = vrot.slane %v1291, 7
    %v1297 = vsel %vm1294, %v1295, %v1296
    %v1300 = vsel %vm1294, 0.0, %v1295
    %1302 = vset.pattern.permute.xlu0 0
    %1303 = vperm.xlu0 %1302, %v143
    %v1304 = vpop.permute.xlu0 %1303
    %1307 = vset.pattern.permute.xlu0 0
    %1308 = vperm.xlu0 %1307, %v144
    %v1309 = vpop.permute.xlu0 %1308
    %v1311 = vmul.f32 %v1300, %v1304
    %v1312 = vmul.f32 %v1297, %v1309
    %vm1313 = vcmask 1046528
    %v1314 = vrot.slane %v1290, 1
    %v1315 = vrot.slane %v1291, 1
    %v1316 = vsel %vm1313, %v1314, %v1315
    %v1319 = vsel %vm1313, %v1315, 0.0
    %1321 = vset.pattern.permute.xlu0 0
    %1322 = vperm.xlu0 %1321, %v145
    %v1323 = vpop.permute.xlu0 %1322
    %1326 = vset.pattern.permute.xlu0 0
    %1327 = vperm.xlu0 %1326, %v146
    %v1328 = vpop.permute.xlu0 %1327
    %v1330 = vmul.f32 %v1316, %v1323
    %v1331 = vmul.f32 %v1319, %v1328
    %v1332 = vld [vmem:[%s8] sm:$0xff]
    %v1333 = vld [vmem:[%s8 + $0x8] sm:$0xff]
    %v1334 = vld [vmem:[%s8 + $0x10] sm:$0xff]
    %v1335 = vld [vmem:[%s8 + $0x18] sm:$0xff]
    %v1336 = vld [vmem:[%s8 + $0x20] sm:$0xff]
    %v1337 = vld [vmem:[%s8 + $0x28] sm:$0xff]
    %v1338 = vld [vmem:[%s8 + $0x30] sm:$0xff]
    %v1339 = vld [vmem:[%s8 + $0x38] sm:$0xff]
    %v1340 = vld [vmem:[%s8 + $0x40] sm:$0xff]
    %v1341 = vld [vmem:[%s8 + $0x48] sm:$0xff]
    %v1342 = vld [vmem:[%s8 + $0x50] sm:$0xff]
    %v1343 = vld [vmem:[%s8 + $0x58] sm:$0xff]
    %v1344 = vld [vmem:[%s8 + $0x60] sm:$0xff]
    %v1345 = vld [vmem:[%s8 + $0x68] sm:$0xff]
    %v1346 = vld [vmem:[%s8 + $0x70] sm:$0xff]
    %v1347 = vld [vmem:[%s8 + $0x78] sm:$0xff]
    %v1348 = vpack.c.bf16 %v1312, %v1311
    %v1349 = vld [vmem:[%s8 + $0x80] sm:$0xff]
    %v1350 = vld [vmem:[%s8 + $0x88] sm:$0xff]
    %v1351 = vld [vmem:[%s8 + $0x90] sm:$0xff]
    %v1352 = vld [vmem:[%s8 + $0x98] sm:$0xff]
    %v1353 = vld [vmem:[%s8 + $0xa0] sm:$0xff]
    %v1354 = vld [vmem:[%s8 + $0xa8] sm:$0xff]
    %v1355 = vld [vmem:[%s8 + $0xb0] sm:$0xff]
    %v1356 = vld [vmem:[%s8 + $0xb8] sm:$0xff]
    %v1357 = vld [vmem:[%s8 + $0xc0] sm:$0xff]
    %v1358 = vld [vmem:[%s8 + $0xc8] sm:$0xff]
    %v1359 = vld [vmem:[%s8 + $0xd0] sm:$0xff]
    %v1360 = vld [vmem:[%s8 + $0xd8] sm:$0xff]
    %v1361 = vld [vmem:[%s8 + $0xe0] sm:$0xff]
    %v1362 = vld [vmem:[%s8 + $0xe8] sm:$0xff]
    %v1363 = vld [vmem:[%s8 + $0xf0] sm:$0xff]
    %v1364 = vld [vmem:[%s8 + $0xf8] sm:$0xff]
    %v1365 = vpack.c.bf16 %v1291, %v1290
    %v1382 = vunpack.c.l.b16 %v1349
    %v1383 = vunpack.c.h.b16 %v1349
    %v1384 = vunpack.c.l.b16 %v1350
    %v1385 = vunpack.c.h.b16 %v1350
    %v1386 = vunpack.c.l.b16 %v1351
    %v1387 = vunpack.c.h.b16 %v1351
    %v1388 = vunpack.c.l.b16 %v1352
    %v1389 = vunpack.c.h.b16 %v1352
    %v1390 = vunpack.c.l.b16 %v1353
    %v1391 = vunpack.c.h.b16 %v1353
    %v1392 = vunpack.c.l.b16 %v1354
    %v1393 = vunpack.c.h.b16 %v1354
    %v1394 = vunpack.c.l.b16 %v1355
    %v1395 = vunpack.c.h.b16 %v1355
    %v1396 = vunpack.c.l.b16 %v1356
    %v1397 = vunpack.c.h.b16 %v1356
    %v1398 = vunpack.c.l.b16 %v1357
    %v1399 = vunpack.c.h.b16 %v1357
    %v1400 = vunpack.c.l.b16 %v1358
    %v1401 = vunpack.c.h.b16 %v1358
    %v1402 = vunpack.c.l.b16 %v1359
    %v1403 = vunpack.c.h.b16 %v1359
    %v1404 = vunpack.c.l.b16 %v1360
    %v1405 = vunpack.c.h.b16 %v1360
    %v1406 = vunpack.c.l.b16 %v1361
    %v1407 = vunpack.c.h.b16 %v1361
    %v1408 = vunpack.c.l.b16 %v1362
    %v1409 = vunpack.c.h.b16 %v1362
    %v1410 = vunpack.c.l.b16 %v1363
    %v1411 = vunpack.c.h.b16 %v1363
    %v1412 = vunpack.c.l.b16 %v1364
    %v1413 = vunpack.c.h.b16 %v1364
    %v1414 = vpack.c.b16 %v1384, %v1382
    %v1415 = vpack.c.b16 %v1385, %v1383
    %v1416 = vpack.c.b16 %v1388, %v1386
    %v1417 = vpack.c.b16 %v1389, %v1387
    %v1418 = vpack.c.b16 %v1392, %v1390
    %v1419 = vpack.c.b16 %v1393, %v1391
    %v1420 = vpack.c.b16 %v1396, %v1394
    %v1421 = vpack.c.b16 %v1397, %v1395
    %v1422 = vpack.c.b16 %v1400, %v1398
    %v1423 = vpack.c.b16 %v1401, %v1399
    %v1424 = vpack.c.b16 %v1404, %v1402
    %v1425 = vpack.c.b16 %v1405, %v1403
    %v1426 = vpack.c.b16 %v1408, %v1406
    %v1427 = vpack.c.b16 %v1409, %v1407
    %v1428 = vpack.c.b16 %v1412, %v1410
    %v1429 = vpack.c.b16 %v1413, %v1411
    %1446 = vmatprep.subr.bf16.mxu0 %v1415
    %1447 = vmatpush1.bf16.msra.mxu0 %v1414
    %1448 = vmatprep.subr.bf16.mxu0 %v1417
    %1449 = vmatpush1.bf16.msra.mxu0 %v1416
    %1450 = vmatprep.subr.bf16.mxu0 %v1419
    %1451 = vmatpush1.bf16.msra.mxu0 %v1418
    %1452 = vmatprep.subr.bf16.mxu0 %v1421
    %1453 = vmatpush1.bf16.msra.mxu0 %v1420
    %1454 = vmatprep.subr.bf16.mxu0 %v1423
    %1455 = vmatpush1.bf16.msra.mxu0 %v1422
    %1456 = vmatprep.subr.bf16.mxu0 %v1425
    %1457 = vmatpush1.bf16.msra.mxu0 %v1424
    %1458 = vmatprep.subr.bf16.mxu0 %v1427
    %1459 = vmatpush1.bf16.msra.mxu0 %v1426
    %1460 = vmatprep.subr.bf16.mxu0 %v1429
    %1461 = vmatpush1.bf16.msra.mxu0 %v1428
    %1462 = vmatprep.subr.bf16.mxu0 0
    %1463 = vmatpush1.bf16.msra.mxu0 0
    %1464 = vmatprep.subr.bf16.mxu0 0
    %1465 = vmatpush1.bf16.msra.mxu0 0
    %1466 = vmatprep.subr.bf16.mxu0 0
    %1467 = vmatpush1.bf16.msra.mxu0 0
    %1468 = vmatprep.subr.bf16.mxu0 0
    %1469 = vmatpush1.bf16.msra.mxu0 0
    %1470 = vmatprep.subr.bf16.mxu0 0
    %1471 = vmatpush1.bf16.msra.mxu0 0
    %1472 = vmatprep.subr.bf16.mxu0 0
    %1473 = vmatpush1.bf16.msra.mxu0 0
    %1474 = vmatprep.subr.bf16.mxu0 0
    %1475 = vmatpush1.bf16.msra.mxu0 0
    %1476 = vmatprep.subr.bf16.mxu0 0
    %1477 = vmatpush1.bf16.msra.mxu0 0
    %1478 = vmatprep.mubr.bf16.mxu0 0
    %1479 = vmatmul.mubr.bf16.gmra.mrb[0].mxu0 %v1365
    %v1480 = vpop.f32.mrb[0].mxu0
    %v1481 = vadd.f32 0.0, %v1480
    %v1482 = vpop.f32.mrb[0].mxu0
    %v1483 = vadd.f32 0.0, %v1482
    %v1484 = vpop.f32.mrb[0].mxu0
    %v1485 = vadd.f32 0.0, %v1484
    %v1486 = vpop.f32.mrb[0].mxu0
    %v1487 = vadd.f32 0.0, %v1486
    %1488 = vdwg.mxu0
    %v1505 = vunpack.c.l.b16 %v1332
    %v1506 = vunpack.c.h.b16 %v1332
    %v1507 = vunpack.c.l.b16 %v1333
    %v1508 = vunpack.c.h.b16 %v1333
    %v1509 = vunpack.c.l.b16 %v1334
    %v1510 = vunpack.c.h.b16 %v1334
    %v1511 = vunpack.c.l.b16 %v1335
    %v1512 = vunpack.c.h.b16 %v1335
    %v1513 = vunpack.c.l.b16 %v1336
    %v1514 = vunpack.c.h.b16 %v1336
    %v1515 = vunpack.c.l.b16 %v1337
    %v1516 = vunpack.c.h.b16 %v1337
    %v1517 = vunpack.c.l.b16 %v1338
    %v1518 = vunpack.c.h.b16 %v1338
    %v1519 = vunpack.c.l.b16 %v1339
    %v1520 = vunpack.c.h.b16 %v1339
    %v1521 = vunpack.c.l.b16 %v1340
    %v1522 = vunpack.c.h.b16 %v1340
    %v1523 = vunpack.c.l.b16 %v1341
    %v1524 = vunpack.c.h.b16 %v1341
    %v1525 = vunpack.c.l.b16 %v1342
    %v1526 = vunpack.c.h.b16 %v1342
    %v1527 = vunpack.c.l.b16 %v1343
    %v1528 = vunpack.c.h.b16 %v1343
    %v1529 = vunpack.c.l.b16 %v1344
    %v1530 = vunpack.c.h.b16 %v1344
    %v1531 = vunpack.c.l.b16 %v1345
    %v1532 = vunpack.c.h.b16 %v1345
    %v1533 = vunpack.c.l.b16 %v1346
    %v1534 = vunpack.c.h.b16 %v1346
    %v1535 = vunpack.c.l.b16 %v1347
    %v1536 = vunpack.c.h.b16 %v1347
    %v1537 = vpack.c.b16 %v1507, %v1505
    %v1538 = vpack.c.b16 %v1508, %v1506
    %v1539 = vpack.c.b16 %v1511, %v1509
    %v1540 = vpack.c.b16 %v1512, %v1510
    %v1541 = vpack.c.b16 %v1515, %v1513
    %v1542 = vpack.c.b16 %v1516, %v1514
    %v1543 = vpack.c.b16 %v1519, %v1517
    %v1544 = vpack.c.b16 %v1520, %v1518
    %v1545 = vpack.c.b16 %v1523, %v1521
    %v1546 = vpack.c.b16 %v1524, %v1522
    %v1547 = vpack.c.b16 %v1527, %v1525
    %v1548 = vpack.c.b16 %v1528, %v1526
    %v1549 = vpack.c.b16 %v1531, %v1529
    %v1550 = vpack.c.b16 %v1532, %v1530
    %v1551 = vpack.c.b16 %v1535, %v1533
    %v1552 = vpack.c.b16 %v1536, %v1534
    %1569 = vmatprep.subr.bf16.mxu0 %v1538
    %1570 = vmatpush1.bf16.msra.mxu0 %v1537
    %1571 = vmatprep.subr.bf16.mxu0 %v1540
    %1572 = vmatpush1.bf16.msra.mxu0 %v1539
    %1573 = vmatprep.subr.bf16.mxu0 %v1542
    %1574 = vmatpush1.bf16.msra.mxu0 %v1541
    %1575 = vmatprep.subr.bf16.mxu0 %v1544
    %1576 = vmatpush1.bf16.msra.mxu0 %v1543
    %1577 = vmatprep.subr.bf16.mxu0 %v1546
    %1578 = vmatpush1.bf16.msra.mxu0 %v1545
    %1579 = vmatprep.subr.bf16.mxu0 %v1548
    %1580 = vmatpush1.bf16.msra.mxu0 %v1547
    %1581 = vmatprep.subr.bf16.mxu0 %v1550
    %1582 = vmatpush1.bf16.msra.mxu0 %v1549
    %1583 = vmatprep.subr.bf16.mxu0 %v1552
    %1584 = vmatpush1.bf16.msra.mxu0 %v1551
    %1585 = vmatprep.subr.bf16.mxu0 0
    %1586 = vmatpush1.bf16.msra.mxu0 0
    %1587 = vmatprep.subr.bf16.mxu0 0
    %1588 = vmatpush1.bf16.msra.mxu0 0
    %1589 = vmatprep.subr.bf16.mxu0 0
    %1590 = vmatpush1.bf16.msra.mxu0 0
    %1591 = vmatprep.subr.bf16.mxu0 0
    %1592 = vmatpush1.bf16.msra.mxu0 0
    %1593 = vmatprep.subr.bf16.mxu0 0
    %1594 = vmatpush1.bf16.msra.mxu0 0
    %1595 = vmatprep.subr.bf16.mxu0 0
    %1596 = vmatpush1.bf16.msra.mxu0 0
    %1597 = vmatprep.subr.bf16.mxu0 0
    %1598 = vmatpush1.bf16.msra.mxu0 0
    %1599 = vmatprep.subr.bf16.mxu0 0
    %1600 = vmatpush1.bf16.msra.mxu0 0
    %1601 = vmatprep.mubr.bf16.mxu0 0
    %1602 = vmatmul.mubr.bf16.gmra.mrb[0].mxu0 %v1348
    %v1603 = vpop.f32.mrb[0].mxu0
    %v1604 = vadd.f32 %v1481, %v1603
    %v1605 = vpop.f32.mrb[0].mxu0
    %v1606 = vadd.f32 %v1483, %v1605
    %v1607 = vpop.f32.mrb[0].mxu0
    %v1608 = vadd.f32 %v1485, %v1607
    %v1609 = vpop.f32.mrb[0].mxu0
    %v1610 = vadd.f32 %v1487, %v1609
    %1611 = vdwg.mxu0
    %v1612 = vld [vmem:[%s8 + $0x100] sm:$0xff]
    %v1613 = vld [vmem:[%s8 + $0x108] sm:$0xff]
    %v1614 = vld [vmem:[%s8 + $0x110] sm:$0xff]
    %v1615 = vld [vmem:[%s8 + $0x118] sm:$0xff]
    %v1616 = vld [vmem:[%s8 + $0x120] sm:$0xff]
    %v1617 = vld [vmem:[%s8 + $0x128] sm:$0xff]
    %v1618 = vld [vmem:[%s8 + $0x130] sm:$0xff]
    %v1619 = vld [vmem:[%s8 + $0x138] sm:$0xff]
    %v1620 = vld [vmem:[%s8 + $0x140] sm:$0xff]
    %v1621 = vld [vmem:[%s8 + $0x148] sm:$0xff]
    %v1622 = vld [vmem:[%s8 + $0x150] sm:$0xff]
    %v1623 = vld [vmem:[%s8 + $0x158] sm:$0xff]
    %v1624 = vld [vmem:[%s8 + $0x160] sm:$0xff]
    %v1625 = vld [vmem:[%s8 + $0x168] sm:$0xff]
    %v1626 = vld [vmem:[%s8 + $0x170] sm:$0xff]
    %v1627 = vld [vmem:[%s8 + $0x178] sm:$0xff]
    %v1628 = vpack.c.bf16 %v1331, %v1330
    %v1645 = vunpack.c.l.b16 %v1612
    %v1646 = vunpack.c.h.b16 %v1612
    %v1647 = vunpack.c.l.b16 %v1613
    %v1648 = vunpack.c.h.b16 %v1613
    %v1649 = vunpack.c.l.b16 %v1614
    %v1650 = vunpack.c.h.b16 %v1614
    %v1651 = vunpack.c.l.b16 %v1615
    %v1652 = vunpack.c.h.b16 %v1615
    %v1653 = vunpack.c.l.b16 %v1616
    %v1654 = vunpack.c.h.b16 %v1616
    %v1655 = vunpack.c.l.b16 %v1617
    %v1656 = vunpack.c.h.b16 %v1617
    %v1657 = vunpack.c.l.b16 %v1618
    %v1658 = vunpack.c.h.b16 %v1618
    %v1659 = vunpack.c.l.b16 %v1619
    %v1660 = vunpack.c.h.b16 %v1619
    %v1661 = vunpack.c.l.b16 %v1620
    %v1662 = vunpack.c.h.b16 %v1620
    %v1663 = vunpack.c.l.b16 %v1621
    %v1664 = vunpack.c.h.b16 %v1621
    %v1665 = vunpack.c.l.b16 %v1622
    %v1666 = vunpack.c.h.b16 %v1622
    %v1667 = vunpack.c.l.b16 %v1623
    %v1668 = vunpack.c.h.b16 %v1623
    %v1669 = vunpack.c.l.b16 %v1624
    %v1670 = vunpack.c.h.b16 %v1624
    %v1671 = vunpack.c.l.b16 %v1625
    %v1672 = vunpack.c.h.b16 %v1625
    %v1673 = vunpack.c.l.b16 %v1626
    %v1674 = vunpack.c.h.b16 %v1626
    %v1675 = vunpack.c.l.b16 %v1627
    %v1676 = vunpack.c.h.b16 %v1627
    %v1677 = vpack.c.b16 %v1647, %v1645
    %v1678 = vpack.c.b16 %v1648, %v1646
    %v1679 = vpack.c.b16 %v1651, %v1649
    %v1680 = vpack.c.b16 %v1652, %v1650
    %v1681 = vpack.c.b16 %v1655, %v1653
    %v1682 = vpack.c.b16 %v1656, %v1654
    %v1683 = vpack.c.b16 %v1659, %v1657
    %v1684 = vpack.c.b16 %v1660, %v1658
    %v1685 = vpack.c.b16 %v1663, %v1661
    %v1686 = vpack.c.b16 %v1664, %v1662
    %v1687 = vpack.c.b16 %v1667, %v1665
    %v1688 = vpack.c.b16 %v1668, %v1666
    %v1689 = vpack.c.b16 %v1671, %v1669
    %v1690 = vpack.c.b16 %v1672, %v1670
    %v1691 = vpack.c.b16 %v1675, %v1673
    %v1692 = vpack.c.b16 %v1676, %v1674
    %1709 = vmatprep.subr.bf16.mxu0 %v1678
    %1710 = vmatpush1.bf16.msra.mxu0 %v1677
    %1711 = vmatprep.subr.bf16.mxu0 %v1680
    %1712 = vmatpush1.bf16.msra.mxu0 %v1679
    %1713 = vmatprep.subr.bf16.mxu0 %v1682
    %1714 = vmatpush1.bf16.msra.mxu0 %v1681
    %1715 = vmatprep.subr.bf16.mxu0 %v1684
    %1716 = vmatpush1.bf16.msra.mxu0 %v1683
    %1717 = vmatprep.subr.bf16.mxu0 %v1686
    %1718 = vmatpush1.bf16.msra.mxu0 %v1685
    %1719 = vmatprep.subr.bf16.mxu0 %v1688
    %1720 = vmatpush1.bf16.msra.mxu0 %v1687
    %1721 = vmatprep.subr.bf16.mxu0 %v1690
    %1722 = vmatpush1.bf16.msra.mxu0 %v1689
    %1723 = vmatprep.subr.bf16.mxu0 %v1692
    %1724 = vmatpush1.bf16.msra.mxu0 %v1691
    %1725 = vmatprep.subr.bf16.mxu0 0
    %1726 = vmatpush1.bf16.msra.mxu0 0
    %1727 = vmatprep.subr.bf16.mxu0 0
    %1728 = vmatpush1.bf16.msra.mxu0 0
    %1729 = vmatprep.subr.bf16.mxu0 0
    %1730 = vmatpush1.bf16.msra.mxu0 0
    %1731 = vmatprep.subr.bf16.mxu0 0
    %1732 = vmatpush1.bf16.msra.mxu0 0
    %1733 = vmatprep.subr.bf16.mxu0 0
    %1734 = vmatpush1.bf16.msra.mxu0 0
    %1735 = vmatprep.subr.bf16.mxu0 0
    %1736 = vmatpush1.bf16.msra.mxu0 0
    %1737 = vmatprep.subr.bf16.mxu0 0
    %1738 = vmatpush1.bf16.msra.mxu0 0
    %1739 = vmatprep.subr.bf16.mxu0 0
    %1740 = vmatpush1.bf16.msra.mxu0 0
    %1741 = vmatprep.mubr.bf16.mxu0 0
    %1742 = vmatmul.mubr.bf16.gmra.mrb[0].mxu0 %v1628
    %v1743 = vpop.f32.mrb[0].mxu0
    %v1744 = vadd.f32 0.0, %v1743
    %v1745 = vpop.f32.mrb[0].mxu0
    %v1746 = vadd.f32 0.0, %v1745
    %v1747 = vpop.f32.mrb[0].mxu0
    %v1748 = vadd.f32 0.0, %v1747
    %v1749 = vpop.f32.mrb[0].mxu0
    %v1750 = vadd.f32 0.0, %v1749
    %1751 = vdwg.mxu0
    %v1752 = vadd.f32 %v1604, %v1744
    %v1753 = vadd.f32 %v1606, %v1746
    %v1754 = vadd.f32 %v1608, %v1748
    %v1755 = vadd.f32 %v1610, %v1750
    %v1756 = vld [vmem:[#allocation12] ss:$4 sm:$0x3]
    %v1758 = vlaneseq
    %v1759 = vshrl.u32 %v1758, 7
    %v1760 = vsub.s32 0, %v1759
    %v1761 = vrot.slane %v1756, %v1760
    %v1762 = vlaneseq
    %v1763 = vshrl.u32 %v1762, 7
    %v1764 = vsub.s32 1, %v1763
    %v1765 = vrot.slane %v1756, %v1764
    %v1768 = vadd.f32 %v1752, %v1761
    %v1769 = vadd.f32 %v1753, %v1765
    %v1770 = vadd.f32 %v1754, %v1761
    %v1771 = vadd.f32 %v1755, %v1765
    %v1772 = vmul.f32 %v1768, 0.5
    %v1773 = vmul.f32 %v1769, 0.5
    %v1774 = vmul.f32 %v1770, 0.5
    %v1775 = vmul.f32 %v1771, 0.5
    %v1776 = vmul.f32 %v1768, 0.044715
    %v1777 = vmul.f32 %v1769, 0.044715
    %v1778 = vmul.f32 %v1770, 0.044715
    %v1779 = vmul.f32 %v1771, 0.044715
    %v1780 = vmul.f32 %v1776, %v1768
    %v1781 = vmul.f32 %v1777, %v1769
    %v1782 = vmul.f32 %v1778, %v1770
    %v1783 = vmul.f32 %v1779, %v1771
    %v1784 = vmul.f32 %v1780, %v1768
    %v1785 = vmul.f32 %v1781, %v1769
    %v1786 = vmul.f32 %v1782, %v1770
    %v1787 = vmul.f32 %v1783, %v1771
    %v1788 = vadd.f32 %v1768, %v1784
    %v1789 = vadd.f32 %v1769, %v1785
    %v1790 = vadd.f32 %v1770, %v1786
    %v1791 = vadd.f32 %v1771, %v1787
    %v1792 = vmul.f32 %v1788, 0.7978846
    %v1793 = vmul.f32 %v1789, 0.7978846
    %v1794 = vmul.f32 %v1790, 0.7978846
    %v1795 = vmul.f32 %v1791, 0.7978846
    %v1796 = vtanh.pop %v1792
    %v1797 = vtanh.pop %v1793
    %v1798 = vtanh.pop %v1794
    %v1799 = vtanh.pop %v1795
    %v1800 = vadd.f32 %v1796, 1.0
    %v1801 = vadd.f32 %v1797, 1.0
    %v1802 = vadd.f32 %v1798, 1.0
    %v1803 = vadd.f32 %v1799, 1.0
    %v1804 = vmul.f32 %v1772, %v1800
    %v1805 = vmul.f32 %v1773, %v1801
    %v1806 = vmul.f32 %v1774, %v1802
    %v1807 = vmul.f32 %v1775, %v1803
    %s1808 = scalar_lea.vmem [#allocation12], 1
    %v1809 = vld [vmem:[%s1808] ss:$4 sm:$0x3]
    %s1810 = scalar_lea.vmem [#allocation12], 2
    %v1811 = vld [vmem:[%s1810] ss:$4 sm:$0x3]
    %vm1812 = vcmask 130048
    %v1814 = vsel %vm1812, %v140, 0
    %1816 = vmatprep.subr.mxu0 %v1805
    %1817 = vmatpush1.msra.mxu0 %v1804
    %1818 = vmatprep.subr.mxu0 %v1807
    %1819 = vmatpush1.msra.mxu0 %v1806
    %1820 = vmatprep.subr.mxu0 0.0
    %1821 = vmatpush1.msra.mxu0 0.0
    %1822 = vmatprep.subr.mxu0 0.0
    %1823 = vmatpush1.msra.mxu0 0.0
    %1824 = vmatprep.subr.mxu0 0.0
    %1825 = vmatpush1.msra.mxu0 0.0
    %1826 = vmatprep.subr.mxu0 0.0
    %1827 = vmatpush1.msra.mxu0 0.0
    %1828 = vmatprep.subr.mxu0 0.0
    %1829 = vmatpush1.msra.mxu0 0.0
    %1830 = vmatprep.subr.mxu0 0.0
    %1831 = vmatpush1.msra.mxu0 0.0
    %1832 = vmatprep.subr.mxu0 0.0
    %1833 = vmatpush1.msra.mxu0 0.0
    %1834 = vmatprep.subr.mxu0 0.0
    %1835 = vmatpush1.msra.mxu0 0.0
    %1836 = vmatprep.subr.mxu0 0.0
    %1837 = vmatpush1.msra.mxu0 0.0
    %1838 = vmatprep.subr.mxu0 0.0
    %1839 = vmatpush1.msra.mxu0 0.0
    %1840 = vmatprep.subr.mxu0 0.0
    %1841 = vmatpush1.msra.mxu0 0.0
    %1842 = vmatprep.subr.mxu0 0.0
    %1843 = vmatpush1.msra.mxu0 0.0
    %1844 = vmatprep.subr.mxu0 0.0
    %1845 = vmatpush1.msra.mxu0 0.0
    %1846 = vmatprep.subr.mxu0 0.0
    %1847 = vmatpush1.msra.mxu0 0.0
    %1848 = vmatprep.subr.mxu0 0.0
    %1849 = vmatpush1.msra.mxu0 0.0
    %1850 = vmatprep.subr.mxu0 0.0
    %1851 = vmatpush1.msra.mxu0 0.0
    %1852 = vmatprep.subr.mxu0 0.0
    %1853 = vmatpush1.msra.mxu0 0.0
    %1854 = vmatprep.subr.mxu0 0.0
    %1855 = vmatpush1.msra.mxu0 0.0
    %1856 = vmatprep.subr.mxu0 0.0
    %1857 = vmatpush1.msra.mxu0 0.0
    %1858 = vmatprep.subr.mxu0 0.0
    %1859 = vmatpush1.msra.mxu0 0.0
    %1860 = vmatprep.subr.mxu0 0.0
    %1861 = vmatpush1.msra.mxu0 0.0
    %1862 = vmatprep.subr.mxu0 0.0
    %1863 = vmatpush1.msra.mxu0 0.0
    %1864 = vmatprep.subr.mxu0 0.0
    %1865 = vmatpush1.msra.mxu0 0.0
    %1866 = vmatprep.subr.mxu0 0.0
    %1867 = vmatpush1.msra.mxu0 0.0
    %1868 = vmatprep.subr.mxu0 0.0
    %1869 = vmatpush1.msra.mxu0 0.0
    %1870 = vmatprep.subr.mxu0 0.0
    %1871 = vmatpush1.msra.mxu0 0.0
    %1872 = vmatprep.subr.mxu0 0.0
    %1873 = vmatpush1.msra.mxu0 0.0
    %1874 = vmatprep.subr.mxu0 0.0
    %1875 = vmatpush1.msra.mxu0 0.0
    %1876 = vmatprep.subr.mxu0 0.0
    %1877 = vmatpush1.msra.mxu0 0.0
    %1878 = vmatprep.subr.mxu0 0.0
    %1879 = vmatpush1.msra.mxu0 0.0
    %1880 = vmatprep.mubr.f32.mxu0 0.0
    %1881 = vmatmul.mubr.f32.gmra.mrb[0].mxu0 %v1814
    %v1882 = vpop.f32.mrb[0].mxu0
    %v1883 = vadd.f32 0.0, %v1882
    %v1884 = vpop.f32.mrb[0].mxu0
    %v1885 = vadd.f32 0.0, %v1884
    %1886 = vdwg.mxu0
    %1887 = vmatprep.subr.mxu0 %v164
    %1888 = vmatpush1.msra.mxu0 %v163
    %1889 = vmatprep.subr.mxu0 %v166
    %1890 = vmatpush1.msra.mxu0 %v165
    %1891 = vmatprep.subr.mxu0 %v168
    %1892 = vmatpush1.msra.mxu0 %v167
    %1893 = vmatprep.subr.mxu0 %v170
    %1894 = vmatpush1.msra.mxu0 %v169
    %1895 = vmatprep.subr.mxu0 %v172
    %1896 = vmatpush1.msra.mxu0 %v171
    %1897 = vmatprep.subr.mxu0 %v174
    %1898 = vmatpush1.msra.mxu0 %v173
    %1899 = vmatprep.subr.mxu0 %v176
    %1900 = vmatpush1.msra.mxu0 %v175
    %1901 = vmatprep.subr.mxu0 %v178
    %1902 = vmatpush1.msra.mxu0 %v177
    %1903 = vmatprep.subr.mxu0 %v180
    %1904 = vmatpush1.msra.mxu0 %v179
    %1905 = vmatprep.subr.mxu0 %v182
    %1906 = vmatpush1.msra.mxu0 %v181
    %1907 = vmatprep.subr.mxu0 %v184
    %1908 = vmatpush1.msra.mxu0 %v183
    %1909 = vmatprep.subr.mxu0 %v186
    %1910 = vmatpush1.msra.mxu0 %v185
    %1911 = vmatprep.subr.mxu0 %v188
    %1912 = vmatpush1.msra.mxu0 %v187
    %1913 = vmatprep.subr.mxu0 %v190
    %1914 = vmatpush1.msra.mxu0 %v189
    %1915 = vmatprep.subr.mxu0 %v192
    %1916 = vmatpush1.msra.mxu0 %v191
    %1917 = vmatprep.subr.mxu0 %v194
    %1918 = vmatpush1.msra.mxu0 %v193
    %1919 = vmatprep.subr.mxu0 %v196
    %1920 = vmatpush1.msra.mxu0 %v195
    %1921 = vmatprep.subr.mxu0 %v198
    %1922 = vmatpush1.msra.mxu0 %v197
    %1923 = vmatprep.subr.mxu0 %v200
    %1924 = vmatpush1.msra.mxu0 %v199
    %1925 = vmatprep.subr.mxu0 %v202
    %1926 = vmatpush1.msra.mxu0 %v201
    %1927 = vmatprep.subr.mxu0 %v204
    %1928 = vmatpush1.msra.mxu0 %v203
    %1929 = vmatprep.subr.mxu0 %v206
    %1930 = vmatpush1.msra.mxu0 %v205
    %1931 = vmatprep.subr.mxu0 %v208
    %1932 = vmatpush1.msra.mxu0 %v207
    %1933 = vmatprep.subr.mxu0 %v210
    %1934 = vmatpush1.msra.mxu0 %v209
    %1935 = vmatprep.subr.mxu0 %v212
    %1936 = vmatpush1.msra.mxu0 %v211
    %1937 = vmatprep.subr.mxu0 %v214
    %1938 = vmatpush1.msra.mxu0 %v213
    %1939 = vmatprep.subr.mxu0 %v216
    %1940 = vmatpush1.msra.mxu0 %v215
    %1941 = vmatprep.subr.mxu0 %v218
    %1942 = vmatpush1.msra.mxu0 %v217
    %1943 = vmatprep.subr.mxu0 %v220
    %1944 = vmatpush1.msra.mxu0 %v219
    %1945 = vmatprep.subr.mxu0 %v222
    %1946 = vmatpush1.msra.mxu0 %v221
    %1947 = vmatprep.subr.mxu0 %v224
    %1948 = vmatpush1.msra.mxu0 %v223
    %1949 = vmatprep.subr.mxu0 %v226
    %1950 = vmatpush1.msra.mxu0 %v225
    %1951 = vmatprep.mubr.f32.mxu0 %v1885
    %1952 = vmatmul.mubr.f32.gmra.mrb[0].mxu0 %v1883
    %v1953 = vpop.f32.mrb[0].mxu0
    %v1954 = vadd.f32 0.0, %v1953
    %v1955 = vpop.f32.mrb[0].mxu0
    %v1956 = vadd.f32 0.0, %v1955
    %1957 = vdwg.mxu0
    %v1958 = vmul.f32 %v1954, 0.083333336
    %v1959 = vmul.f32 %v1956, 0.083333336
    %vm1960 = vcmask 7168
    %v1962 = vsel %vm1960, %v141, 0
    %v1965 = vsel %vm1960, %v142, 0
    %v1968 = vsel %vm1294, %v1958, 0
    %v1971 = vsel %vm1294, %v1959, 0
    %1973 = vmatprep.subr.mxu0 %v1971
    %1974 = vmatpush1.msra.mxu0 %v1968
    %1975 = vmatprep.subr.mxu0 0.0
    %1976 = vmatpush1.msra.mxu0 0.0
    %1977 = vmatprep.subr.mxu0 0.0
    %1978 = vmatpush1.msra.mxu0 0.0
    %1979 = vmatprep.subr.mxu0 0.0
    %1980 = vmatpush1.msra.mxu0 0.0
    %1981 = vmatprep.subr.mxu0 0.0
    %1982 = vmatpush1.msra.mxu0 0.0
    %1983 = vmatprep.subr.mxu0 0.0
    %1984 = vmatpush1.msra.mxu0 0.0
    %1985 = vmatprep.subr.mxu0 0.0
    %1986 = vmatpush1.msra.mxu0 0.0
    %1987 = vmatprep.subr.mxu0 0.0
    %1988 = vmatpush1.msra.mxu0 0.0
    %1989 = vmatprep.subr.mxu0 0.0
    %1990 = vmatpush1.msra.mxu0 0.0
    %1991 = vmatprep.subr.mxu0 0.0
    %1992 = vmatpush1.msra.mxu0 0.0
    %1993 = vmatprep.subr.mxu0 0.0
    %1994 = vmatpush1.msra.mxu0 0.0
    %1995 = vmatprep.subr.mxu0 0.0
    %1996 = vmatpush1.msra.mxu0 0.0
    %1997 = vmatprep.subr.mxu0 0.0
    %1998 = vmatpush1.msra.mxu0 0.0
    %1999 = vmatprep.subr.mxu0 0.0
    %2000 = vmatpush1.msra.mxu0 0.0
    %2001 = vmatprep.subr.mxu0 0.0
    %2002 = vmatpush1.msra.mxu0 0.0
    %2003 = vmatprep.subr.mxu0 0.0
    %2004 = vmatpush1.msra.mxu0 0.0
    %2005 = vmatprep.subr.mxu0 0.0
    %2006 = vmatpush1.msra.mxu0 0.0
    %2007 = vmatprep.subr.mxu0 0.0
    %2008 = vmatpush1.msra.mxu0 0.0
    %2009 = vmatprep.subr.mxu0 0.0
    %2010 = vmatpush1.msra.mxu0 0.0
    %2011 = vmatprep.subr.mxu0 0.0
    %2012 = vmatpush1.msra.mxu0 0.0
    %2013 = vmatprep.subr.mxu0 0.0
    %2014 = vmatpush1.msra.mxu0 0.0
    %2015 = vmatprep.subr.mxu0 0.0
    %2016 = vmatpush1.msra.mxu0 0.0
    %2017 = vmatprep.subr.mxu0 0.0
    %2018 = vmatpush1.msra.mxu0 0.0
    %2019 = vmatprep.subr.mxu0 0.0
    %2020 = vmatpush1.msra.mxu0 0.0
    %2021 = vmatprep.subr.mxu0 0.0
    %2022 = vmatpush1.msra.mxu0 0.0
    %2023 = vmatprep.subr.mxu0 0.0
    %2024 = vmatpush1.msra.mxu0 0.0
    %2025 = vmatprep.subr.mxu0 0.0
    %2026 = vmatpush1.msra.mxu0 0.0
    %2027 = vmatprep.subr.mxu0 0.0
    %2028 = vmatpush1.msra.mxu0 0.0
    %2029 = vmatprep.subr.mxu0 0.0
    %2030 = vmatpush1.msra.mxu0 0.0
    %2031 = vmatprep.subr.mxu0 0.0
    %2032 = vmatpush1.msra.mxu0 0.0
    %2033 = vmatprep.subr.mxu0 0.0
    %2034 = vmatpush1.msra.mxu0 0.0
    %2035 = vmatprep.subr.mxu0 0.0
    %2036 = vmatpush1.msra.mxu0 0.0
    %2037 = vmatprep.mubr.f32.mxu0 0.0
    %2038 = vmatmul.mubr.f32.gmra.mrb[0].mxu0 %v1962
    %v2039 = vpop.f32.mrb[0].mxu0
    %v2040 = vadd.f32 0.0, %v2039
    %v2041 = vpop.f32.mrb[0].mxu0
    %v2042 = vadd.f32 0.0, %v2041
    %2043 = vmatprep.mubr.f32.mxu0 0.0
    %2044 = vmatmul.mubr.f32.gmra.mrb[0].mxu0 %v1965
    %v2045 = vpop.f32.mrb[0].mxu0
    %v2046 = vadd.f32 0.0, %v2045
    %v2047 = vpop.f32.mrb[0].mxu0
    %v2048 = vadd.f32 0.0, %v2047
    %2049 = vdwg.mxu0
    %v2050 = vsub.f32 %v1804, %v2040
    %v2051 = vsub.f32 %v1805, %v2042
    %v2052 = vsub.f32 %v1806, %v2046
    %v2053 = vsub.f32 %v1807, %v2048
    %v2054 = vmul.f32 %v2050, %v2050
    %v2055 = vmul.f32 %v2051, %v2051
    %v2056 = vmul.f32 %v2052, %v2052
    %v2057 = vmul.f32 %v2053, %v2053
    %2058 = vmatprep.subr.mxu0 %v2055
    %2059 = vmatpush1.msra.mxu0 %v2054
    %2060 = vmatprep.subr.mxu0 %v2057
    %2061 = vmatpush1.msra.mxu0 %v2056
    %2062 = vmatprep.subr.mxu0 0.0
    %2063 = vmatpush1.msra.mxu0 0.0
    %2064 = vmatprep.subr.mxu0 0.0
    %2065 = vmatpush1.msra.mxu0 0.0
    %2066 = vmatprep.subr.mxu0 0.0
    %2067 = vmatpush1.msra.mxu0 0.0
    %2068 = vmatprep.subr.mxu0 0.0
    %2069 = vmatpush1.msra.mxu0 0.0
    %2070 = vmatprep.subr.mxu0 0.0
    %2071 = vmatpush1.msra.mxu0 0.0
    %2072 = vmatprep.subr.mxu0 0.0
    %2073 = vmatpush1.msra.mxu0 0.0
    %2074 = vmatprep.subr.mxu0 0.0
    %2075 = vmatpush1.msra.mxu0 0.0
    %2076 = vmatprep.subr.mxu0 0.0
    %2077 = vmatpush1.msra.mxu0 0.0
    %2078 = vmatprep.subr.mxu0 0.0
    %2079 = vmatpush1.msra.mxu0 0.0
    %2080 = vmatprep.subr.mxu0 0.0
    %2081 = vmatpush1.msra.mxu0 0.0
    %2082 = vmatprep.subr.mxu0 0.0
    %2083 = vmatpush1.msra.mxu0 0.0
    %2084 = vmatprep.subr.mxu0 0.0
    %2085 = vmatpush1.msra.mxu0 0.0
    %2086 = vmatprep.subr.mxu0 0.0
    %2087 = vmatpush1.msra.mxu0 0.0
    %2088 = vmatprep.subr.mxu0 0.0
    %2089 = vmatpush1.msra.mxu0 0.0
    %2090 = vmatprep.subr.mxu0 0.0
    %2091 = vmatpush1.msra.mxu0 0.0
    %2092 = vmatprep.subr.mxu0 0.0
    %2093 = vmatpush1.msra.mxu0 0.0
    %2094 = vmatprep.subr.mxu0 0.0
    %2095 = vmatpush1.msra.mxu0 0.0
    %2096 = vmatprep.subr.mxu0 0.0
    %2097 = vmatpush1.msra.mxu0 0.0
    %2098 = vmatprep.subr.mxu0 0.0
    %2099 = vmatpush1.msra.mxu0 0.0
    %2100 = vmatprep.subr.mxu0 0.0
    %2101 = vmatpush1.msra.mxu0 0.0
    %2102 = vmatprep.subr.mxu0 0.0
    %2103 = vmatpush1.msra.mxu0 0.0
    %2104 = vmatprep.subr.mxu0 0.0
    %2105 = vmatpush1.msra.mxu0 0.0
    %2106 = vmatprep.subr.mxu0 0.0
    %2107 = vmatpush1.msra.mxu0 0.0
    %2108 = vmatprep.subr.mxu0 0.0
    %2109 = vmatpush1.msra.mxu0 0.0
    %2110 = vmatprep.subr.mxu0 0.0
    %2111 = vmatpush1.msra.mxu0 0.0
    %2112 = vmatprep.subr.mxu0 0.0
    %2113 = vmatpush1.msra.mxu0 0.0
    %2114 = vmatprep.subr.mxu0 0.0
    %2115 = vmatpush1.msra.mxu0 0.0
    %2116 = vmatprep.subr.mxu0 0.0
    %2117 = vmatpush1.msra.mxu0 0.0
    %2118 = vmatprep.subr.mxu0 0.0
    %2119 = vmatpush1.msra.mxu0 0.0
    %2120 = vmatprep.subr.mxu0 0.0
    %2121 = vmatpush1.msra.mxu0 0.0
    %2122 = vmatprep.mubr.f32.mxu0 0.0
    %2123 = vmatmul.mubr.f32.gmra.mrb[0].mxu0 %v1814
    %v2124 = vpop.f32.mrb[0].mxu0
    %v2125 = vadd.f32 0.0, %v2124
    %v2126 = vpop.f32.mrb[0].mxu0
    %v2127 = vadd.f32 0.0, %v2126
    %2128 = vdwg.mxu0
    %2129 = vmatprep.subr.mxu0 %v164
    %2130 = vmatpush1.msra.mxu0 %v163
    %2131 = vmatprep.subr.mxu0 %v166
    %2132 = vmatpush1.msra.mxu0 %v165
    %2133 = vmatprep.subr.mxu0 %v168
    %2134 = vmatpush1.msra.mxu0 %v167
    %2135 = vmatprep.subr.mxu0 %v170
    %2136 = vmatpush1.msra.mxu0 %v169
    %2137 = vmatprep.subr.mxu0 %v172
    %2138 = vmatpush1.msra.mxu0 %v171
    %2139 = vmatprep.subr.mxu0 %v174
    %2140 = vmatpush1.msra.mxu0 %v173
    %2141 = vmatprep.subr.mxu0 %v176
    %2142 = vmatpush1.msra.mxu0 %v175
    %2143 = vmatprep.subr.mxu0 %v178
    %2144 = vmatpush1.msra.mxu0 %v177
    %2145 = vmatprep.subr.mxu0 %v180
    %2146 = vmatpush1.msra.mxu0 %v179
    %2147 = vmatprep.subr.mxu0 %v182
    %2148 = vmatpush1.msra.mxu0 %v181
    %2149 = vmatprep.subr.mxu0 %v184
    %2150 = vmatpush1.msra.mxu0 %v183
    %2151 = vmatprep.subr.mxu0 %v186
    %2152 = vmatpush1.msra.mxu0 %v185
    %2153 = vmatprep.subr.mxu0 %v188
    %2154 = vmatpush1.msra.mxu0 %v187
    %2155 = vmatprep.subr.mxu0 %v190
    %2156 = vmatpush1.msra.mxu0 %v189
    %2157 = vmatprep.subr.mxu0 %v192
    %2158 = vmatpush1.msra.mxu0 %v191
    %2159 = vmatprep.subr.mxu0 %v194
    %2160 = vmatpush1.msra.mxu0 %v193
    %2161 = vmatprep.subr.mxu0 %v196
    %2162 = vmatpush1.msra.mxu0 %v195
    %2163 = vmatprep.subr.mxu0 %v198
    %2164 = vmatpush1.msra.mxu0 %v197
    %2165 = vmatprep.subr.mxu0 %v200
    %2166 = vmatpush1.msra.mxu0 %v199
    %2167 = vmatprep.subr.mxu0 %v202
    %2168 = vmatpush1.msra.mxu0 %v201
    %2169 = vmatprep.subr.mxu0 %v204
    %2170 = vmatpush1.msra.mxu0 %v203
    %2171 = vmatprep.subr.mxu0 %v206
    %2172 = vmatpush1.msra.mxu0 %v205
    %2173 = vmatprep.subr.mxu0 %v208
    %2174 = vmatpush1.msra.mxu0 %v207
    %2175 = vmatprep.subr.mxu0 %v210
    %2176 = vmatpush1.msra.mxu0 %v209
    %2177 = vmatprep.subr.mxu0 %v212
    %2178 = vmatpush1.msra.mxu0 %v211
    %2179 = vmatprep.subr.mxu0 %v214
    %2180 = vmatpush1.msra.mxu0 %v213
    %2181 = vmatprep.subr.mxu0 %v216
    %2182 = vmatpush1.msra.mxu0 %v215
    %2183 = vmatprep.subr.mxu0 %v218
    %2184 = vmatpush1.msra.mxu0 %v217
    %2185 = vmatprep.subr.mxu0 %v220
    %2186 = vmatpush1.msra.mxu0 %v219
    %2187 = vmatprep.subr.mxu0 %v222
    %2188 = vmatpush1.msra.mxu0 %v221
    %2189 = vmatprep.subr.mxu0 %v224
    %2190 = vmatpush1.msra.mxu0 %v223
    %2191 = vmatprep.subr.mxu0 %v226
    %2192 = vmatpush1.msra.mxu0 %v225
    %2193 = vmatprep.mubr.f32.mxu0 %v2127
    %2194 = vmatmul.mubr.f32.gmra.mrb[0].mxu0 %v2125
    %v2195 = vpop.f32.mrb[0].mxu0
    %v2196 = vadd.f32 0.0, %v2195
    %v2197 = vpop.f32.mrb[0].mxu0
    %v2198 = vadd.f32 0.0, %v2197
    %2199 = vdwg.mxu0
    %v2200 = vmul.f32 %v2196, 0.083333336
    %v2201 = vmul.f32 %v2198, 0.083333336
    %v2203 = vsel %vm1294, %v2200, 0
    %v2206 = vsel %vm1294, %v2201, 0
    %2208 = vmatprep.subr.mxu0 %v2206
    %2209 = vmatpush1.msra.mxu0 %v2203
    %2210 = vmatprep.subr.mxu0 0.0
    %2211 = vmatpush1.msra.mxu0 0.0
    %2212 = vmatprep.subr.mxu0 0.0
    %2213 = vmatpush1.msra.mxu0 0.0
    %2214 = vmatprep.subr.mxu0 0.0
    %2215 = vmatpush1.msra.mxu0 0.0
    %2216 = vmatprep.subr.mxu0 0.0
    %2217 = vmatpush1.msra.mxu0 0.0
    %2218 = vmatprep.subr.mxu0 0.0
    %2219 = vmatpush1.msra.mxu0 0.0
    %2220 = vmatprep.subr.mxu0 0.0
    %2221 = vmatpush1.msra.mxu0 0.0
    %2222 = vmatprep.subr.mxu0 0.0
    %2223 = vmatpush1.msra.mxu0 0.0
    %2224 = vmatprep.subr.mxu0 0.0
    %2225 = vmatpush1.msra.mxu0 0.0
    %2226 = vmatprep.subr.mxu0 0.0
    %2227 = vmatpush1.msra.mxu0 0.0
    %2228 = vmatprep.subr.mxu0 0.0
    %2229 = vmatpush1.msra.mxu0 0.0
    %2230 = vmatprep.subr.mxu0 0.0
    %2231 = vmatpush1.msra.mxu0 0.0
    %2232 = vmatprep.subr.mxu0 0.0
    %2233 = vmatpush1.msra.mxu0 0.0
    %2234 = vmatprep.subr.mxu0 0.0
    %2235 = vmatpush1.msra.mxu0 0.0
    %2236 = vmatprep.subr.mxu0 0.0
    %2237 = vmatpush1.msra.mxu0 0.0
    %2238 = vmatprep.subr.mxu0 0.0
    %2239 = vmatpush1.msra.mxu0 0.0
    %2240 = vmatprep.subr.mxu0 0.0
    %2241 = vmatpush1.msra.mxu0 0.0
    %2242 = vmatprep.subr.mxu0 0.0
    %2243 = vmatpush1.msra.mxu0 0.0
    %2244 = vmatprep.subr.mxu0 0.0
    %2245 = vmatpush1.msra.mxu0 0.0
    %2246 = vmatprep.subr.mxu0 0.0
    %2247 = vmatpush1.msra.mxu0 0.0
    %2248 = vmatprep.subr.mxu0 0.0
    %2249 = vmatpush1.msra.mxu0 0.0
    %2250 = vmatprep.subr.mxu0 0.0
    %2251 = vmatpush1.msra.mxu0 0.0
    %2252 = vmatprep.subr.mxu0 0.0
    %2253 = vmatpush1.msra.mxu0 0.0
    %2254 = vmatprep.subr.mxu0 0.0
    %2255 = vmatpush1.msra.mxu0 0.0
    %2256 = vmatprep.subr.mxu0 0.0
    %2257 = vmatpush1.msra.mxu0 0.0
    %2258 = vmatprep.subr.mxu0 0.0
    %2259 = vmatpush1.msra.mxu0 0.0
    %2260 = vmatprep.subr.mxu0 0.0
    %2261 = vmatpush1.msra.mxu0 0.0
    %2262 = vmatprep.subr.mxu0 0.0
    %2263 = vmatpush1.msra.mxu0 0.0
    %2264 = vmatprep.subr.mxu0 0.0
    %2265 = vmatpush1.msra.mxu0 0.0
    %2266 = vmatprep.subr.mxu0 0.0
    %2267 = vmatpush1.msra.mxu0 0.0
    %2268 = vmatprep.subr.mxu0 0.0
    %2269 = vmatpush1.msra.mxu0 0.0
    %2270 = vmatprep.subr.mxu0 0.0
    %2271 = vmatpush1.msra.mxu0 0.0
    %2272 = vmatprep.mubr.f32.mxu0 0.0
    %2273 = vmatmul.mubr.f32.gmra.mrb[0].mxu0 %v1962
    %v2274 = vpop.f32.mrb[0].mxu0
    %v2275 = vadd.f32 1e-05, %v2274
    %v2276 = vpop.f32.mrb[0].mxu0
    %v2277 = vadd.f32 1e-05, %v2276
    %2278 = vmatprep.mubr.f32.mxu0 0.0
    %2279 = vmatmul.mubr.f32.gmra.mrb[0].mxu0 %v1965
    %v2280 = vpop.f32.mrb[0].mxu0
    %v2281 = vadd.f32 1e-05, %v2280
    %v2282 = vpop.f32.mrb[0].mxu0
    %v2283 = vadd.f32 1e-05, %v2282
    %2284 = vdwg.mxu0
    %v2285 = vrsqrt.pop %v2275
    %v2286 = vrsqrt.pop %v2277
    %v2287 = vrsqrt.pop %v2281
    %v2288 = vrsqrt.pop %v2283
    %v2289 = vmul.f32 %v2050, %v2285
    %v2290 = vmul.f32 %v2051, %v2286
    %v2291 = vmul.f32 %v2052, %v2287
    %v2292 = vmul.f32 %v2053, %v2288
    %v2294 = vlaneseq
    %v2295 = vshrl.u32 %v2294, 7
    %v2296 = vsub.s32 0, %v2295
    %v2297 = vrot.slane %v1809, %v2296
    %v2298 = vlaneseq
    %v2299 = vshrl.u32 %v2298, 7
    %v2300 = vsub.s32 1, %v2299
    %v2301 = vrot.slane %v1809, %v2300
    %v2304 = vmul.f32 %v2289, %v2297
    %v2305 = vmul.f32 %v2290, %v2301
    %v2306 = vmul.f32 %v2291, %v2297
    %v2307 = vmul.f32 %v2292, %v2301
    %v2309 = vlaneseq
    %v2310 = vshrl.u32 %v2309, 7
    %v2311 = vsub.s32 0, %v2310
    %v2312 = vrot.slane %v1811, %v2311
    %v2313 = vlaneseq
    %v2314 = vshrl.u32 %v2313, 7
    %v2315 = vsub.s32 1, %v2314
    %v2316 = vrot.slane %v1811, %v2315
    %v2319 = vadd.f32 %v2304, %v2312
    %v2320 = vadd.f32 %v2305, %v2316
    %v2321 = vadd.f32 %v2306, %v2312
    %v2322 = vadd.f32 %v2307, %v2316
    %v2327 = vrot.slane %v2319, 7
    %v2328 = vrot.slane %v2320, 7
    %v2329 = vrot.slane %v2321, 7
    %v2330 = vsel %vm1294, %v2327, %v2329
    %v2331 = vrot.slane %v2322, 7
    %v2332 = vsel %vm1294, %v2328, %v2331
    %v2337 = vsel %vm1294, 0.0, %v2327
    %v2338 = vsel %vm1294, 0.0, %v2328
    %v2339 = vmul.f32 %v2337, %v1304
    %v2340 = vmul.f32 %v2338, %v1304
    %v2341 = vmul.f32 %v2330, %v1309
    %v2342 = vmul.f32 %v2332, %v1309
    %v2343 = vrot.slane %v2319, 1
    %v2344 = vrot.slane %v2321, 1
    %v2345 = vsel %vm1313, %v2343, %v2344
    %v2346 = vrot.slane %v2320, 1
    %v2347 = vrot.slane %v2322, 1
    %v2348 = vsel %vm1313, %v2346, %v2347
    %v2353 = vsel %vm1313, %v2344, 0.0
    %v2354 = vsel %vm1313, %v2347, 0.0
    %v2355 = vmul.f32 %v2345, %v1323
    %v2356 = vmul.f32 %v2348, %v1323
    %v2357 = vmul.f32 %v2353, %v1328
    %v2358 = vmul.f32 %v2354, %v1328
    %v2359 = vld [vmem:[#allocation6 + $0xc0] sm:$0xf]
    %v2360 = vld [vmem:[#allocation6 + $0xc4] sm:$0xf]
    %v2361 = vld [vmem:[#allocation6 + $0xc8] sm:$0xf]
    %v2362 = vld [vmem:[#allocation6 + $0xcc] sm:$0xf]
    %v2363 = vld [vmem:[#allocation6 + $0xd0] sm:$0xf]
    %v2364 = vld [vmem:[#allocation6 + $0xd4] sm:$0xf]
    %v2365 = vld [vmem:[#allocation6 + $0xd8] sm:$0xf]
    %v2366 = vld [vmem:[#allocation6 + $0xdc] sm:$0xf]
    %v2367 = vld [vmem:[#allocation6 + $0xe0] sm:$0xf]
    %v2368 = vld [vmem:[#allocation6 + $0xe4] sm:$0xf]
    %v2369 = vld [vmem:[#allocation6 + $0xe8] sm:$0xf]
    %v2370 = vld [vmem:[#allocation6 + $0xec] sm:$0xf]
    %v2371 = vld [vmem:[#allocation6 + $0xf0] sm:$0xf]
    %v2372 = vld [vmem:[#allocation6 + $0xf4] sm:$0xf]
    %v2373 = vld [vmem:[#allocation6 + $0xf8] sm:$0xf]
    %v2374 = vld [vmem:[#allocation6 + $0xfc] sm:$0xf]
    %v2375 = vld [vmem:[#allocation6 + $0x100] sm:$0xf]
    %v2376 = vld [vmem:[#allocation6 + $0x104] sm:$0xf]
    %v2377 = vld [vmem:[#allocation6 + $0x108] sm:$0xf]
    %v2378 = vld [vmem:[#allocation6 + $0x10c] sm:$0xf]
    %v2379 = vld [vmem:[#allocation6 + $0x110] sm:$0xf]
    %v2380 = vld [vmem:[#allocation6 + $0x114] sm:$0xf]
    %v2381 = vld [vmem:[#allocation6 + $0x118] sm:$0xf]
    %v2382 = vld [vmem:[#allocation6 + $0x11c] sm:$0xf]
    %v2383 = vld [vmem:[#allocation6 + $0x120] sm:$0xf]
    %v2384 = vld [vmem:[#allocation6 + $0x124] sm:$0xf]
    %v2385 = vld [vmem:[#allocation6 + $0x128] sm:$0xf]
    %v2386 = vld [vmem:[#allocation6 + $0x12c] sm:$0xf]
    %v2387 = vld [vmem:[#allocation6 + $0x130] sm:$0xf]
    %v2388 = vld [vmem:[#allocation6 + $0x134] sm:$0xf]
    %v2389 = vld [vmem:[#allocation6 + $0x138] sm:$0xf]
    %v2390 = vld [vmem:[#allocation6 + $0x13c] sm:$0xf]
    %v2391 = vpack.c.bf16 %v2341, %v2339
    %v2392 = vpack.c.bf16 %v2342, %v2340
    %v2393 = vld [vmem:[#allocation6 + $0x140] sm:$0xf]
    %v2394 = vld [vmem:[#allocation6 + $0x144] sm:$0xf]
    %v2395 = vld [vmem:[#allocation6 + $0x148] sm:$0xf]
    %v2396 = vld [vmem:[#allocation6 + $0x14c] sm:$0xf]
    %v2397 = vld [vmem:[#allocation6 + $0x150] sm:$0xf]
    %v2398 = vld [vmem:[#allocation6 + $0x154] sm:$0xf]
    %v2399 = vld [vmem:[#allocation6 + $0x158] sm:$0xf]
    %v2400 = vld [vmem:[#allocation6 + $0x15c] sm:$0xf]
    %v2401 = vld [vmem:[#allocation6 + $0x160] sm:$0xf]
    %v2402 = vld [vmem:[#allocation6 + $0x164] sm:$0xf]
    %v2403 = vld [vmem:[#allocation6 + $0x168] sm:$0xf]
    %v2404 = vld [vmem:[#allocation6 + $0x16c] sm:$0xf]
    %v2405 = vld [vmem:[#allocation6 + $0x170] sm:$0xf]
    %v2406 = vld [vmem:[#allocation6 + $0x174] sm:$0xf]
    %v2407 = vld [vmem:[#allocation6 + $0x178] sm:$0xf]
    %v2408 = vld [vmem:[#allocation6 + $0x17c] sm:$0xf]
    %v2409 = vld [vmem:[#allocation6 + $0x180] sm:$0xf]
    %v2410 = vld [vmem:[#allocation6 + $0x184] sm:$0xf]
    %v2411 = vld [vmem:[#allocation6 + $0x188] sm:$0xf]
    %v2412 = vld [vmem:[#allocation6 + $0x18c] sm:$0xf]
    %v2413 = vld [vmem:[#allocation6 + $0x190] sm:$0xf]
    %v2414 = vld [vmem:[#allocation6 + $0x194] sm:$0xf]
    %v2415 = vld [vmem:[#allocation6 + $0x198] sm:$0xf]
    %v2416 = vld [vmem:[#allocation6 + $0x19c] sm:$0xf]
    %v2417 = vld [vmem:[#allocation6 + $0x1a0] sm:$0xf]
    %v2418 = vld [vmem:[#allocation6 + $0x1a4] sm:$0xf]
    %v2419 = vld [vmem:[#allocation6 + $0x1a8] sm:$0xf]
    %v2420 = vld [vmem:[#allocation6 + $0x1ac] sm:$0xf]
    %v2421 = vld [vmem:[#allocation6 + $0x1b0] sm:$0xf]
    %v2422 = vld [vmem:[#allocation6 + $0x1b4] sm:$0xf]
    %v2423 = vld [vmem:[#allocation6 + $0x1b8] sm:$0xf]
    %v2424 = vld [vmem:[#allocation6 + $0x1bc] sm:$0xf]
    %v2425 = vpack.c.bf16 %v2321, %v2319
    %v2426 = vpack.c.bf16 %v2322, %v2320
    %v2459 = vunpack.c.l.b16 %v2393
    %v2460 = vunpack.c.l.b16 %v2394
    %v2461 = vunpack.c.l.b16 %v2395
    %v2462 = vunpack.c.l.b16 %v2396
    %v2463 = vunpack.c.l.b16 %v2397
    %v2464 = vunpack.c.l.b16 %v2398
    %v2465 = vunpack.c.l.b16 %v2399
    %v2466 = vunpack.c.l.b16 %v2400
    %v2467 = vunpack.c.l.b16 %v2401
    %v2468 = vunpack.c.l.b16 %v2402
    %v2469 = vunpack.c.l.b16 %v2403
    %v2470 = vunpack.c.l.b16 %v2404
    %v2471 = vunpack.c.l.b16 %v2405
    %v2472 = vunpack.c.l.b16 %v2406
    %v2473 = vunpack.c.l.b16 %v2407
    %v2474 = vunpack.c.l.b16 %v2408
    %v2475 = vunpack.c.l.b16 %v2409
    %v2476 = vunpack.c.l.b16 %v2410
    %v2477 = vunpack.c.l.b16 %v2411
    %v2478 = vunpack.c.l.b16 %v2412
    %v2479 = vunpack.c.l.b16 %v2413
    %v2480 = vunpack.c.l.b16 %v2414
    %v2481 = vunpack.c.l.b16 %v2415
    %v2482 = vunpack.c.l.b16 %v2416
    %v2483 = vunpack.c.l.b16 %v2417
    %v2484 = vunpack.c.l.b16 %v2418
    %v2485 = vunpack.c.l.b16 %v2419
    %v2486 = vunpack.c.l.b16 %v2420
    %v2487 = vunpack.c.l.b16 %v2421
    %v2488 = vunpack.c.l.b16 %v2422
    %v2489 = vunpack.c.l.b16 %v2423
    %v2490 = vunpack.c.l.b16 %v2424
    %v2491 = vpack.c.b16 %v2460, %v2459
    %v2492 = vpack.c.b16 %v2462, %v2461
    %v2493 = vpack.c.b16 %v2464, %v2463
    %v2494 = vpack.c.b16 %v2466, %v2465
    %v2495 = vpack.c.b16 %v2468, %v2467
    %v2496 = vpack.c.b16 %v2470, %v2469
    %v2497 = vpack.c.b16 %v2472, %v2471
    %v2498 = vpack.c.b16 %v2474, %v2473
    %v2499 = vpack.c.b16 %v2476, %v2475
    %v2500 = vpack.c.b16 %v2478, %v2477
    %v2501 = vpack.c.b16 %v2480, %v2479
    %v2502 = vpack.c.b16 %v2482, %v2481
    %v2503 = vpack.c.b16 %v2484, %v2483
    %v2504 = vpack.c.b16 %v2486, %v2485
    %v2505 = vpack.c.b16 %v2488, %v2487
    %v2506 = vpack.c.b16 %v2490, %v2489
    %2523 = vmatprep.subr.bf16.mxu0 0
    %2524 = vmatpush1.bf16.msra.mxu0 %v2491
    %2525 = vmatprep.subr.bf16.mxu0 0
    %2526 = vmatpush1.bf16.msra.mxu0 %v2492
    %2527 = vmatprep.subr.bf16.mxu0 0
    %2528 = vmatpush1.bf16.msra.mxu0 %v2493
    %2529 = vmatprep.subr.bf16.mxu0 0
    %2530 = vmatpush1.bf16.msra.mxu0 %v2494
    %2531 = vmatprep.subr.bf16.mxu0 0
    %2532 = vmatpush1.bf16.msra.mxu0 %v2495
    %2533 = vmatprep.subr.bf16.mxu0 0
    %2534 = vmatpush1.bf16.msra.mxu0 %v2496
    %2535 = vmatprep.subr.bf16.mxu0 0
    %2536 = vmatpush1.bf16.msra.mxu0 %v2497
    %2537 = vmatprep.subr.bf16.mxu0 0
    %2538 = vmatpush1.bf16.msra.mxu0 %v2498
    %2539 = vmatprep.subr.bf16.mxu0 0
    %2540 = vmatpush1.bf16.msra.mxu0 %v2499
    %2541 = vmatprep.subr.bf16.mxu0 0
    %2542 = vmatpush1.bf16.msra.mxu0 %v2500
    %2543 = vmatprep.subr.bf16.mxu0 0
    %2544 = vmatpush1.bf16.msra.mxu0 %v2501
    %2545 = vmatprep.subr.bf16.mxu0 0
    %2546 = vmatpush1.bf16.msra.mxu0 %v2502
    %2547 = vmatprep.subr.bf16.mxu0 0
    %2548 = vmatpush1.bf16.msra.mxu0 %v2503
    %2549 = vmatprep.subr.bf16.mxu0 0
    %2550 = vmatpush1.bf16.msra.mxu0 %v2504
    %2551 = vmatprep.subr.bf16.mxu0 0
    %2552 = vmatpush1.bf16.msra.mxu0 %v2505
    %2553 = vmatprep.subr.bf16.mxu0 0
    %2554 = vmatpush1.bf16.msra.mxu0 %v2506
    %2555 = vmatprep.mubr.bf16.mxu0 %v2426
    %2556 = vmatmul.mubr.bf16.gmra.mrb[0].mxu0 %v2425
    %v2557 = vpop.f32.mrb[0].mxu0
    %v2558 = vadd.f32 0.0, %v2557
    %v2559 = vpop.f32.mrb[0].mxu0
    %v2560 = vpop.f32.mrb[0].mxu0
    %v2561 = vadd.f32 0.0, %v2560
    %v2562 = vpop.f32.mrb[0].mxu0
    %2563 = vdwg.mxu0
    %v2596 = vunpack.c.l.b16 %v2359
    %v2597 = vunpack.c.l.b16 %v2360
    %v2598 = vunpack.c.l.b16 %v2361
    %v2599 = vunpack.c.l.b16 %v2362
    %v2600 = vunpack.c.l.b16 %v2363
    %v2601 = vunpack.c.l.b16 %v2364
    %v2602 = vunpack.c.l.b16 %v2365
    %v2603 = vunpack.c.l.b16 %v2366
    %v2604 = vunpack.c.l.b16 %v2367
    %v2605 = vunpack.c.l.b16 %v2368
    %v2606 = vunpack.c.l.b16 %v2369
    %v2607 = vunpack.c.l.b16 %v2370
    %v2608 = vunpack.c.l.b16 %v2371
    %v2609 = vunpack.c.l.b16 %v2372
    %v2610 = vunpack.c.l.b16 %v2373
    %v2611 = vunpack.c.l.b16 %v2374
    %v2612 = vunpack.c.l.b16 %v2375
    %v2613 = vunpack.c.l.b16 %v2376
    %v2614 = vunpack.c.l.b16 %v2377
    %v2615 = vunpack.c.l.b16 %v2378
    %v2616 = vunpack.c.l.b16 %v2379
    %v2617 = vunpack.c.l.b16 %v2380
    %v2618 = vunpack.c.l.b16 %v2381
    %v2619 = vunpack.c.l.b16 %v2382
    %v2620 = vunpack.c.l.b16 %v2383
    %v2621 = vunpack.c.l.b16 %v2384
    %v2622 = vunpack.c.l.b16 %v2385
    %v2623 = vunpack.c.l.b16 %v2386
    %v2624 = vunpack.c.l.b16 %v2387
    %v2625 = vunpack.c.l.b16 %v2388
    %v2626 = vunpack.c.l.b16 %v2389
    %v2627 = vunpack.c.l.b16 %v2390
    %v2628 = vpack.c.b16 %v2597, %v2596
    %v2629 = vpack.c.b16 %v2599, %v2598
    %v2630 = vpack.c.b16 %v2601, %v2600
    %v2631 = vpack.c.b16 %v2603, %v2602
    %v2632 = vpack.c.b16 %v2605, %v2604
    %v2633 = vpack.c.b16 %v2607, %v2606
    %v2634 = vpack.c.b16 %v2609, %v2608
    %v2635 = vpack.c.b16 %v2611, %v2610
    %v2636 = vpack.c.b16 %v2613, %v2612
    %v2637 = vpack.c.b16 %v2615, %v2614
    %v2638 = vpack.c.b16 %v2617, %v2616
    %v2639 = vpack.c.b16 %v2619, %v2618
    %v2640 = vpack.c.b16 %v2621, %v2620
    %v2641 = vpack.c.b16 %v2623, %v2622
    %v2642 = vpack.c.b16 %v2625, %v2624
    %v2643 = vpack.c.b16 %v2627, %v2626
    %2660 = vmatprep.subr.bf16.mxu0 0
    %2661 = vmatpush1.bf16.msra.mxu0 %v2628
    %2662 = vmatprep.subr.bf16.mxu0 0
    %2663 = vmatpush1.bf16.msra.mxu0 %v2629
    %2664 = vmatprep.subr.bf16.mxu0 0
    %2665 = vmatpush1.bf16.msra.mxu0 %v2630
    %2666 = vmatprep.subr.bf16.mxu0 0
    %2667 = vmatpush1.bf16.msra.mxu0 %v2631
    %2668 = vmatprep.subr.bf16.mxu0 0
    %2669 = vmatpush1.bf16.msra.mxu0 %v2632
    %2670 = vmatprep.subr.bf16.mxu0 0
    %2671 = vmatpush1.bf16.msra.mxu0 %v2633
    %2672 = vmatprep.subr.bf16.mxu0 0
    %2673 = vmatpush1.bf16.msra.mxu0 %v2634
    %2674 = vmatprep.subr.bf16.mxu0 0
    %2675 = vmatpush1.bf16.msra.mxu0 %v2635
    %2676 = vmatprep.subr.bf16.mxu0 0
    %2677 = vmatpush1.bf16.msra.mxu0 %v2636
    %2678 = vmatprep.subr.bf16.mxu0 0
    %2679 = vmatpush1.bf16.msra.mxu0 %v2637
    %2680 = vmatprep.subr.bf16.mxu0 0
    %2681 = vmatpush1.bf16.msra.mxu0 %v2638
    %2682 = vmatprep.subr.bf16.mxu0 0
    %2683 = vmatpush1.bf16.msra.mxu0 %v2639
    %2684 = vmatprep.subr.bf16.mxu0 0
    %2685 = vmatpush1.bf16.msra.mxu0 %v2640
    %2686 = vmatprep.subr.bf16.mxu0 0
    %2687 = vmatpush1.bf16.msra.mxu0 %v2641
    %2688 = vmatprep.subr.bf16.mxu0 0
    %2689 = vmatpush1.bf16.msra.mxu0 %v2642
    %2690 = vmatprep.subr.bf16.mxu0 0
    %2691 = vmatpush1.bf16.msra.mxu0 %v2643
    %2692 = vmatprep.mubr.bf16.mxu0 %v2392
    %2693 = vmatmul.mubr.bf16.gmra.mrb[0].mxu0 %v2391
    %v2694 = vpop.f32.mrb[0].mxu0
    %v2695 = vadd.f32 %v2558, %v2694
    %v2696 = vpop.f32.mrb[0].mxu0
    %v2697 = vpop.f32.mrb[0].mxu0
    %v2698 = vadd.f32 %v2561, %v2697
    %v2699 = vpop.f32.mrb[0].mxu0
    %2700 = vdwg.mxu0
    %v2701 = vld [vmem:[#allocation6 + $0x1c0] sm:$0xf]
    %v2702 = vld [vmem:[#allocation6 + $0x1c4] sm:$0xf]
    %v2703 = vld [vmem:[#allocation6 + $0x1c8] sm:$0xf]
    %v2704 = vld [vmem:[#allocation6 + $0x1cc] sm:$0xf]
    %v2705 = vld [vmem:[#allocation6 + $0x1d0] sm:$0xf]
    %v2706 = vld [vmem:[#allocation6 + $0x1d4] sm:$0xf]
    %v2707 = vld [vmem:[#allocation6 + $0x1d8] sm:$0xf]
    %v2708 = vld [vmem:[#allocation6 + $0x1dc] sm:$0xf]
    %v2709 = vld [vmem:[#allocation6 + $0x1e0] sm:$0xf]
    %v2710 = vld [vmem:[#allocation6 + $0x1e4] sm:$0xf]
    %v2711 = vld [vmem:[#allocation6 + $0x1e8] sm:$0xf]
    %v2712 = vld [vmem:[#allocation6 + $0x1ec] sm:$0xf]
    %v2713 = vld [vmem:[#allocation6 + $0x1f0] sm:$0xf]
    %v2714 = vld [vmem:[#allocation6 + $0x1f4] sm:$0xf]
    %v2715 = vld [vmem:[#allocation6 + $0x1f8] sm:$0xf]
    %v2716 = vld [vmem:[#allocation6 + $0x1fc] sm:$0xf]
    %v2717 = vld [vmem:[#allocation6 + $0x200] sm:$0xf]
    %v2718 = vld [vmem:[#allocation6 + $0x204] sm:$0xf]
    %v2719 = vld [vmem:[#allocation6 + $0x208] sm:$0xf]
    %v2720 = vld [vmem:[#allocation6 + $0x20c] sm:$0xf]
    %v2721 = vld [vmem:[#allocation6 + $0x210] sm:$0xf]
    %v2722 = vld [vmem:[#allocation6 + $0x214] sm:$0xf]
    %v2723 = vld [vmem:[#allocation6 + $0x218] sm:$0xf]
    %v2724 = vld [vmem:[#allocation6 + $0x21c] sm:$0xf]
    %v2725 = vld [vmem:[#allocation6 + $0x220] sm:$0xf]
    %v2726 = vld [vmem:[#allocation6 + $0x224] sm:$0xf]
    %v2727 = vld [vmem:[#allocation6 + $0x228] sm:$0xf]
    %v2728 = vld [vmem:[#allocation6 + $0x22c] sm:$0xf]
    %v2729 = vld [vmem:[#allocation6 + $0x230] sm:$0xf]
    %v2730 = vld [vmem:[#allocation6 + $0x234] sm:$0xf]
    %v2731 = vld [vmem:[#allocation6 + $0x238] sm:$0xf]
    %v2732 = vld [vmem:[#allocation6 + $0x23c] sm:$0xf]
    %v2733 = vpack.c.bf16 %v2357, %v2355
    %v2734 = vpack.c.bf16 %v2358, %v2356
    %v2767 = vunpack.c.l.b16 %v2701
    %v2768 = vunpack.c.l.b16 %v2702
    %v2769 = vunpack.c.l.b16 %v2703
    %v2770 = vunpack.c.l.b16 %v2704
    %v2771 = vunpack.c.l.b16 %v2705
    %v2772 = vunpack.c.l.b16 %v2706
    %v2773 = vunpack.c.l.b16 %v2707
    %v2774 = vunpack.c.l.b16 %v2708
    %v2775 = vunpack.c.l.b16 %v2709
    %v2776 = vunpack.c.l.b16 %v2710
    %v2777 = vunpack.c.l.b16 %v2711
    %v2778 = vunpack.c.l.b16 %v2712
    %v2779 = vunpack.c.l.b16 %v2713
    %v2780 = vunpack.c.l.b16 %v2714
    %v2781 = vunpack.c.l.b16 %v2715
    %v2782 = vunpack.c.l.b16 %v2716
    %v2783 = vunpack.c.l.b16 %v2717
    %v2784 = vunpack.c.l.b16 %v2718
    %v2785 = vunpack.c.l.b16 %v2719
    %v2786 = vunpack.c.l.b16 %v2720
    %v2787 = vunpack.c.l.b16 %v2721
    %v2788 = vunpack.c.l.b16 %v2722
    %v2789 = vunpack.c.l.b16 %v2723
    %v2790 = vunpack.c.l.b16 %v2724
    %v2791 = vunpack.c.l.b16 %v2725
    %v2792 = vunpack.c.l.b16 %v2726
    %v2793 = vunpack.c.l.b16 %v2727
    %v2794 = vunpack.c.l.b16 %v2728
    %v2795 = vunpack.c.l.b16 %v2729
    %v2796 = vunpack.c.l.b16 %v2730
    %v2797 = vunpack.c.l.b16 %v2731
    %v2798 = vunpack.c.l.b16 %v2732
    %v2799 = vpack.c.b16 %v2768, %v2767
    %v2800 = vpack.c.b16 %v2770, %v2769
    %v2801 = vpack.c.b16 %v2772, %v2771
    %v2802 = vpack.c.b16 %v2774, %v2773
    %v2803 = vpack.c.b16 %v2776, %v2775
    %v2804 = vpack.c.b16 %v2778, %v2777
    %v2805 = vpack.c.b16 %v2780, %v2779
    %v2806 = vpack.c.b16 %v2782, %v2781
    %v2807 = vpack.c.b16 %v2784, %v2783
    %v2808 = vpack.c.b16 %v2786, %v2785
    %v2809 = vpack.c.b16 %v2788, %v2787
    %v2810 = vpack.c.b16 %v2790, %v2789
    %v2811 = vpack.c.b16 %v2792, %v2791
    %v2812 = vpack.c.b16 %v2794, %v2793
    %v2813 = vpack.c.b16 %v2796, %v2795
    %v2814 = vpack.c.b16 %v2798, %v2797
    %2831 = vmatprep.subr.bf16.mxu0 0
    %2832 = vmatpush1.bf16.msra.mxu0 %v2799
    %2833 = vmatprep.subr.bf16.mxu0 0
    %2834 = vmatpush1.bf16.msra.mxu0 %v2800
    %2835 = vmatprep.subr.bf16.mxu0 0
    %2836 = vmatpush1.bf16.msra.mxu0 %v2801
    %2837 = vmatprep.subr.bf16.mxu0 0
    %2838 = vmatpush1.bf16.msra.mxu0 %v2802
    %2839 = vmatprep.subr.bf16.mxu0 0
    %2840 = vmatpush1.bf16.msra.mxu0 %v2803
    %2841 = vmatprep.subr.bf16.mxu0 0
    %2842 = vmatpush1.bf16.msra.mxu0 %v2804
    %2843 = vmatprep.subr.bf16.mxu0 0
    %2844 = vmatpush1.bf16.msra.mxu0 %v2805
    %2845 = vmatprep.subr.bf16.mxu0 0
    %2846 = vmatpush1.bf16.msra.mxu0 %v2806
    %2847 = vmatprep.subr.bf16.mxu0 0
    %2848 = vmatpush1.bf16.msra.mxu0 %v2807
    %2849 = vmatprep.subr.bf16.mxu0 0
    %2850 = vmatpush1.bf16.msra.mxu0 %v2808
    %2851 = vmatprep.subr.bf16.mxu0 0
    %2852 = vmatpush1.bf16.msra.mxu0 %v2809
    %2853 = vmatprep.subr.bf16.mxu0 0
    %2854 = vmatpush1.bf16.msra.mxu0 %v2810
    %2855 = vmatprep.subr.bf16.mxu0 0
    %2856 = vmatpush1.bf16.msra.mxu0 %v2811
    %2857 = vmatprep.subr.bf16.mxu0 0
    %2858 = vmatpush1.bf16.msra.mxu0 %v2812
    %2859 = vmatprep.subr.bf16.mxu0 0
    %2860 = vmatpush1.bf16.msra.mxu0 %v2813
    %2861 = vmatprep.subr.bf16.mxu0 0
    %2862 = vmatpush1.bf16.msra.mxu0 %v2814
    %2863 = vmatprep.mubr.bf16.mxu0 %v2734
    %2864 = vmatmul.mubr.bf16.gmra.mrb[0].mxu0 %v2733
    %v2865 = vpop.f32.mrb[0].mxu0
    %v2866 = vadd.f32 0.0, %v2865
    %v2867 = vpop.f32.mrb[0].mxu0
    %v2868 = vpop.f32.mrb[0].mxu0
    %v2869 = vadd.f32 0.0, %v2868
    %v2870 = vpop.f32.mrb[0].mxu0
    %2871 = vdwg.mxu0
    %v2872 = vadd.f32 %v2695, %v2866
    %v2873 = vadd.f32 %v2698, %v2869
    %v2874 = vld [vmem:[#allocation10 + $0x8] sm:$0x1]
    %v2875 = vlaneseq
    %v2876 = vshrl.u32 %v2875, 7
    %v2877 = vsub.s32 0, %v2876
    %v2878 = vrot.slane %v2874, %v2877
    %v2879 = vadd.f32 %v2872, %v2878
    %v2880 = vadd.f32 %v2873, %v2878
    %v2881 = vmul.f32 %v2879, 0.5
    %v2882 = vmul.f32 %v2880, 0.5
    %v2883 = vmul.f32 %v2879, 0.044715
    %v2884 = vmul.f32 %v2880, 0.044715
    %v2885 = vmul.f32 %v2883, %v2879
    %v2886 = vmul.f32 %v2884, %v2880
    %v2887 = vmul.f32 %v2885, %v2879
    %v2888 = vmul.f32 %v2886, %v2880
    %v2889 = vadd.f32 %v2879, %v2887
    %v2890 = vadd.f32 %v2880, %v2888
    %v2891 = vmul.f32 %v2889, 0.7978846
    %v2892 = vmul.f32 %v2890, 0.7978846
    %v2893 = vtanh.pop %v2891
    %v2894 = vtanh.pop %v2892
    %v2895 = vadd.f32 %v2893, 1.0
    %v2896 = vadd.f32 %v2894, 1.0
    %v2897 = vmul.f32 %v2881, %v2895
    %v2898 = vmul.f32 %v2882, %v2896
    %v2899 = vld [vmem:[#allocation10 + $0x9] sm:$0x1]
    %v2900 = vld [vmem:[#allocation10 + $0xa] sm:$0x1]
    %2901 = vmatprep.subr.mxu0 0.0
    %2902 = vmatpush1.msra.mxu0 %v2897
    %2903 = vmatprep.subr.mxu0 0.0
    %2904 = vmatpush1.msra.mxu0 %v2898
    %2905 = vmatprep.subr.mxu0 0.0
    %2906 = vmatpush1.msra.mxu0 0.0
    %2907 = vmatprep.subr.mxu0 0.0
    %2908 = vmatpush1.msra.mxu0 0.0
    %2909 = vmatprep.subr.mxu0 0.0
    %2910 = vmatpush1.msra.mxu0 0.0
    %2911 = vmatprep.subr.mxu0 0.0
    %2912 = vmatpush1.msra.mxu0 0.0
    %2913 = vmatprep.subr.mxu0 0.0
    %2914 = vmatpush1.msra.mxu0 0.0
    %2915 = vmatprep.subr.mxu0 0.0
    %2916 = vmatpush1.msra.mxu0 0.0
    %2917 = vmatprep.subr.mxu0 0.0
    %2918 = vmatpush1.msra.mxu0 0.0
    %2919 = vmatprep.subr.mxu0 0.0
    %2920 = vmatpush1.msra.mxu0 0.0
    %2921 = vmatprep.subr.mxu0 0.0
    %2922 = vmatpush1.msra.mxu0 0.0
    %2923 = vmatprep.subr.mxu0 0.0
    %2924 = vmatpush1.msra.mxu0 0.0
    %2925 = vmatprep.subr.mxu0 0.0
    %2926 = vmatpush1.msra.mxu0 0.0
    %2927 = vmatprep.subr.mxu0 0.0
    %2928 = vmatpush1.msra.mxu0 0.0
    %2929 = vmatprep.subr.mxu0 0.0
    %2930 = vmatpush1.msra.mxu0 0.0
    %2931 = vmatprep.subr.mxu0 0.0
    %2932 = vmatpush1.msra.mxu0 0.0
    %2933 = vmatprep.subr.mxu0 0.0
    %2934 = vmatpush1.msra.mxu0 0.0
    %2935 = vmatprep.subr.mxu0 0.0
    %2936 = vmatpush1.msra.mxu0 0.0
    %2937 = vmatprep.subr.mxu0 0.0
    %2938 = vmatpush1.msra.mxu0 0.0
    %2939 = vmatprep.subr.mxu0 0.0
    %2940 = vmatpush1.msra.mxu0 0.0
    %2941 = vmatprep.subr.mxu0 0.0
    %2942 = vmatpush1.msra.mxu0 0.0
    %2943 = vmatprep.subr.mxu0 0.0
    %2944 = vmatpush1.msra.mxu0 0.0
    %2945 = vmatprep.subr.mxu0 0.0
    %2946 = vmatpush1.msra.mxu0 0.0
    %2947 = vmatprep.subr.mxu0 0.0
    %2948 = vmatpush1.msra.mxu0 0.0
    %2949 = vmatprep.subr.mxu0 0.0
    %2950 = vmatpush1.msra.mxu0 0.0
    %2951 = vmatprep.subr.mxu0 0.0
    %2952 = vmatpush1.msra.mxu0 0.0
    %2953 = vmatprep.subr.mxu0 0.0
    %2954 = vmatpush1.msra.mxu0 0.0
    %2955 = vmatprep.subr.mxu0 0.0
    %2956 = vmatpush1.msra.mxu0 0.0
    %2957 = vmatprep.subr.mxu0 0.0
    %2958 = vmatpush1.msra.mxu0 0.0
    %2959 = vmatprep.subr.mxu0 0.0
    %2960 = vmatpush1.msra.mxu0 0.0
    %2961 = vmatprep.subr.mxu0 0.0
    %2962 = vmatpush1.msra.mxu0 0.0
    %2963 = vmatprep.subr.mxu0 0.0
    %2964 = vmatpush1.msra.mxu0 0.0
    %2965 = vmatprep.mubr.f32.mxu0 0.0
    %2966 = vmatmul.mubr.f32.gmra.mrb[0].mxu0 %v1814
    %v2967 = vpop.f32.mrb[0].mxu0
    %v2968 = vadd.f32 0.0, %v2967
    %v2969 = vpop.f32.mrb[0].mxu0
    %2970 = vdwg.mxu0
    %2971 = vmatprep.subr.mxu0 0.0
    %2972 = vmatpush1.msra.mxu0 %v147
    %2973 = vmatprep.subr.mxu0 0.0
    %2974 = vmatpush1.msra.mxu0 %v148
    %2975 = vmatprep.subr.mxu0 0.0
    %2976 = vmatpush1.msra.mxu0 %v149
    %2977 = vmatprep.subr.mxu0 0.0
    %2978 = vmatpush1.msra.mxu0 %v150
    %2979 = vmatprep.subr.mxu0 0.0
    %2980 = vmatpush1.msra.mxu0 %v151
    %2981 = vmatprep.subr.mxu0 0.0
    %2982 = vmatpush1.msra.mxu0 %v152
    %2983 = vmatprep.subr.mxu0 0.0
    %2984 = vmatpush1.msra.mxu0 %v153
    %2985 = vmatprep.subr.mxu0 0.0
    %2986 = vmatpush1.msra.mxu0 %v154
    %2987 = vmatprep.subr.mxu0 0.0
    %2988 = vmatpush1.msra.mxu0 %v155
    %2989 = vmatprep.subr.mxu0 0.0
    %2990 = vmatpush1.msra.mxu0 %v156
    %2991 = vmatprep.subr.mxu0 0.0
    %2992 = vmatpush1.msra.mxu0 %v157
    %2993 = vmatprep.subr.mxu0 0.0
    %2994 = vmatpush1.msra.mxu0 %v158
    %2995 = vmatprep.subr.mxu0 0.0
    %2996 = vmatpush1.msra.mxu0 %v159
    %2997 = vmatprep.subr.mxu0 0.0
    %2998 = vmatpush1.msra.mxu0 %v160
    %2999 = vmatprep.subr.mxu0 0.0
    %3000 = vmatpush1.msra.mxu0 %v161
    %3001 = vmatprep.subr.mxu0 0.0
    %3002 = vmatpush1.msra.mxu0 %v162
    %3003 = vmatprep.subr.mxu0 0.0
    %3004 = vmatpush1.msra.mxu0 0.0
    %3005 = vmatprep.subr.mxu0 0.0
    %3006 = vmatpush1.msra.mxu0 0.0
    %3007 = vmatprep.subr.mxu0 0.0
    %3008 = vmatpush1.msra.mxu0 0.0
    %3009 = vmatprep.subr.mxu0 0.0
    %3010 = vmatpush1.msra.mxu0 0.0
    %3011 = vmatprep.subr.mxu0 0.0
    %3012 = vmatpush1.msra.mxu0 0.0
    %3013 = vmatprep.subr.mxu0 0.0
    %3014 = vmatpush1.msra.mxu0 0.0
    %3015 = vmatprep.subr.mxu0 0.0
    %3016 = vmatpush1.msra.mxu0 0.0
    %3017 = vmatprep.subr.mxu0 0.0
    %3018 = vmatpush1.msra.mxu0 0.0
    %3019 = vmatprep.subr.mxu0 0.0
    %3020 = vmatpush1.msra.mxu0 0.0
    %3021 = vmatprep.subr.mxu0 0.0
    %3022 = vmatpush1.msra.mxu0 0.0
    %3023 = vmatprep.subr.mxu0 0.0
    %3024 = vmatpush1.msra.mxu0 0.0
    %3025 = vmatprep.subr.mxu0 0.0
    %3026 = vmatpush1.msra.mxu0 0.0
    %3027 = vmatprep.subr.mxu0 0.0
    %3028 = vmatpush1.msra.mxu0 0.0
    %3029 = vmatprep.subr.mxu0 0.0
    %3030 = vmatpush1.msra.mxu0 0.0
    %3031 = vmatprep.subr.mxu0 0.0
    %3032 = vmatpush1.msra.mxu0 0.0
    %3033 = vmatprep.subr.mxu0 0.0
    %3034 = vmatpush1.msra.mxu0 0.0
    %3035 = vmatprep.mubr.f32.mxu0 0.0
    %3036 = vmatmul.mubr.f32.gmra.mrb[0].mxu0 %v2968
    %v3037 = vpop.f32.mrb[0].mxu0
    %v3038 = vadd.f32 0.0, %v3037
    %v3039 = vpop.f32.mrb[0].mxu0
    %3040 = vdwg.mxu0
    %v3041 = vmul.f32 %v3038, 0.083333336
    %v3043 = vsel %vm1294, %v3041, 0
    %3045 = vmatprep.subr.mxu0 0.0
    %3046 = vmatpush1.msra.mxu0 %v3043
    %3047 = vmatprep.subr.mxu0 0.0
    %3048 = vmatpush1.msra.mxu0 0.0
    %3049 = vmatprep.subr.mxu0 0.0
    %3050 = vmatpush1.msra.mxu0 0.0
    %3051 = vmatprep.subr.mxu0 0.0
    %3052 = vmatpush1.msra.mxu0 0.0
    %3053 = vmatprep.subr.mxu0 0.0
    %3054 = vmatpush1.msra.mxu0 0.0
    %3055 = vmatprep.subr.mxu0 0.0
    %3056 = vmatpush1.msra.mxu0 0.0
    %3057 = vmatprep.subr.mxu0 0.0
    %3058 = vmatpush1.msra.mxu0 0.0
    %3059 = vmatprep.subr.mxu0 0.0
    %3060 = vmatpush1.msra.mxu0 0.0
    %3061 = vmatprep.subr.mxu0 0.0
    %3062 = vmatpush1.msra.mxu0 0.0
    %3063 = vmatprep.subr.mxu0 0.0
    %3064 = vmatpush1.msra.mxu0 0.0
    %3065 = vmatprep.subr.mxu0 0.0
    %3066 = vmatpush1.msra.mxu0 0.0
    %3067 = vmatprep.subr.mxu0 0.0
    %3068 = vmatpush1.msra.mxu0 0.0
    %3069 = vmatprep.subr.mxu0 0.0
    %3070 = vmatpush1.msra.mxu0 0.0
    %3071 = vmatprep.subr.mxu0 0.0
    %3072 = vmatpush1.msra.mxu0 0.0
    %3073 = vmatprep.subr.mxu0 0.0
    %3074 = vmatpush1.msra.mxu0 0.0
    %3075 = vmatprep.subr.mxu0 0.0
    %3076 = vmatpush1.msra.mxu0 0.0
    %3077 = vmatprep.subr.mxu0 0.0
    %3078 = vmatpush1.msra.mxu0 0.0
    %3079 = vmatprep.subr.mxu0 0.0
    %3080 = vmatpush1.msra.mxu0 0.0
    %3081 = vmatprep.subr.mxu0 0.0
    %3082 = vmatpush1.msra.mxu0 0.0
    %3083 = vmatprep.subr.mxu0 0.0
    %3084 = vmatpush1.msra.mxu0 0.0
    %3085 = vmatprep.subr.mxu0 0.0
    %3086 = vmatpush1.msra.mxu0 0.0
    %3087 = vmatprep.subr.mxu0 0.0
    %3088 = vmatpush1.msra.mxu0 0.0
    %3089 = vmatprep.subr.mxu0 0.0
    %3090 = vmatpush1.msra.mxu0 0.0
    %3091 = vmatprep.subr.mxu0 0.0
    %3092 = vmatpush1.msra.mxu0 0.0
    %3093 = vmatprep.subr.mxu0 0.0
    %3094 = vmatpush1.msra.mxu0 0.0
    %3095 = vmatprep.subr.mxu0 0.0
    %3096 = vmatpush1.msra.mxu0 0.0
    %3097 = vmatprep.subr.mxu0 0.0
    %3098 = vmatpush1.msra.mxu0 0.0
    %3099 = vmatprep.subr.mxu0 0.0
    %3100 = vmatpush1.msra.mxu0 0.0
    %3101 = vmatprep.subr.mxu0 0.0
    %3102 = vmatpush1.msra.mxu0 0.0
    %3103 = vmatprep.subr.mxu0 0.0
    %3104 = vmatpush1.msra.mxu0 0.0
    %3105 = vmatprep.subr.mxu0 0.0
    %3106 = vmatpush1.msra.mxu0 0.0
    %3107 = vmatprep.subr.mxu0 0.0
    %3108 = vmatpush1.msra.mxu0 0.0
    %3109 = vmatprep.mubr.f32.mxu0 0.0
    %3110 = vmatmul.mubr.f32.gmra.mrb[0].mxu0 %v1962
    %v3111 = vpop.f32.mrb[0].mxu0
    %v3112 = vadd.f32 0.0, %v3111
    %v3113 = vpop.f32.mrb[0].mxu0
    %3114 = vmatprep.mubr.f32.mxu0 0.0
    %3115 = vmatmul.mubr.f32.gmra.mrb[0].mxu0 %v1965
    %v3116 = vpop.f32.mrb[0].mxu0
    %v3117 = vadd.f32 0.0, %v3116
    %v3118 = vpop.f32.mrb[0].mxu0
    %3119 = vdwg.mxu0
    %v3120 = vsub.f32 %v2897, %v3112
    %v3121 = vsub.f32 %v2898, %v3117
    %v3122 = vmul.f32 %v3120, %v3120
    %v3123 = vmul.f32 %v3121, %v3121
    %3124 = vmatprep.subr.mxu0 0.0
    %3125 = vmatpush1.msra.mxu0 %v3122
    %3126 = vmatprep.subr.mxu0 0.0
    %3127 = vmatpush1.msra.mxu0 %v3123
    %3128 = vmatprep.subr.mxu0 0.0
    %3129 = vmatpush1.msra.mxu0 0.0
    %3130 = vmatprep.subr.mxu0 0.0
    %3131 = vmatpush1.msra.mxu0 0.0
    %3132 = vmatprep.subr.mxu0 0.0
    %3133 = vmatpush1.msra.mxu0 0.0
    %3134 = vmatprep.subr.mxu0 0.0
    %3135 = vmatpush1.msra.mxu0 0.0
    %3136 = vmatprep.subr.mxu0 0.0
    %3137 = vmatpush1.msra.mxu0 0.0
    %3138 = vmatprep.subr.mxu0 0.0
    %3139 = vmatpush1.msra.mxu0 0.0
    %3140 = vmatprep.subr.mxu0 0.0
    %3141 = vmatpush1.msra.mxu0 0.0
    %3142 = vmatprep.subr.mxu0 0.0
    %3143 = vmatpush1.msra.mxu0 0.0
    %3144 = vmatprep.subr.mxu0 0.0
    %3145 = vmatpush1.msra.mxu0 0.0
    %3146 = vmatprep.subr.mxu0 0.0
    %3147 = vmatpush1.msra.mxu0 0.0
    %3148 = vmatprep.subr.mxu0 0.0
    %3149 = vmatpush1.msra.mxu0 0.0
    %3150 = vmatprep.subr.mxu0 0.0
    %3151 = vmatpush1.msra.mxu0 0.0
    %3152 = vmatprep.subr.mxu0 0.0
    %3153 = vmatpush1.msra.mxu0 0.0
    %3154 = vmatprep.subr.mxu0 0.0
    %3155 = vmatpush1.msra.mxu0 0.0
    %3156 = vmatprep.subr.mxu0 0.0
    %3157 = vmatpush1.msra.mxu0 0.0
    %3158 = vmatprep.subr.mxu0 0.0
    %3159 = vmatpush1.msra.mxu0 0.0
    %3160 = vmatprep.subr.mxu0 0.0
    %3161 = vmatpush1.msra.mxu0 0.0
    %3162 = vmatprep.subr.mxu0 0.0
    %3163 = vmatpush1.msra.mxu0 0.0
    %3164 = vmatprep.subr.mxu0 0.0
    %3165 = vmatpush1.msra.mxu0 0.0
    %3166 = vmatprep.subr.mxu0 0.0
    %3167 = vmatpush1.msra.mxu0 0.0
    %3168 = vmatprep.subr.mxu0 0.0
    %3169 = vmatpush1.msra.mxu0 0.0
    %3170 = vmatprep.subr.mxu0 0.0
    %3171 = vmatpush1.msra.mxu0 0.0
    %3172 = vmatprep.subr.mxu0 0.0
    %3173 = vmatpush1.msra.mxu0 0.0
    %3174 = vmatprep.subr.mxu0 0.0
    %3175 = vmatpush1.msra.mxu0 0.0
    %3176 = vmatprep.subr.mxu0 0.0
    %3177 = vmatpush1.msra.mxu0 0.0
    %3178 = vmatprep.subr.mxu0 0.0
    %3179 = vmatpush1.msra.mxu0 0.0
    %3180 = vmatprep.subr.mxu0 0.0
    %3181 = vmatpush1.msra.mxu0 0.0
    %3182 = vmatprep.subr.mxu0 0.0
    %3183 = vmatpush1.msra.mxu0 0.0
    %3184 = vmatprep.subr.mxu0 0.0
    %3185 = vmatpush1.msra.mxu0 0.0
    %3186 = vmatprep.subr.mxu0 0.0
    %3187 = vmatpush1.msra.mxu0 0.0
    %3188 = vmatprep.mubr.f32.mxu0 0.0
    %3189 = vmatmul.mubr.f32.gmra.mrb[0].mxu0 %v1814
    %v3190 = vpop.f32.mrb[0].mxu0
    %v3191 = vadd.f32 0.0, %v3190
    %v3192 = vpop.f32.mrb[0].mxu0
    %3193 = vdwg.mxu0
    %3194 = vmatprep.subr.mxu0 0.0
    %3195 = vmatpush1.msra.mxu0 %v147
    %3196 = vmatprep.subr.mxu0 0.0
    %3197 = vmatpush1.msra.mxu0 %v148
    %3198 = vmatprep.subr.mxu0 0.0
    %3199 = vmatpush1.msra.mxu0 %v149
    %3200 = vmatprep.subr.mxu0 0.0
    %3201 = vmatpush1.msra.mxu0 %v150
    %3202 = vmatprep.subr.mxu0 0.0
    %3203 = vmatpush1.msra.mxu0 %v151
    %3204 = vmatprep.subr.mxu0 0.0
    %3205 = vmatpush1.msra.mxu0 %v152
    %3206 = vmatprep.subr.mxu0 0.0
    %3207 = vmatpush1.msra.mxu0 %v153
    %3208 = vmatprep.subr.mxu0 0.0
    %3209 = vmatpush1.msra.mxu0 %v154
    %3210 = vmatprep.subr.mxu0 0.0
    %3211 = vmatpush1.msra.mxu0 %v155
    %3212 = vmatprep.subr.mxu0 0.0
    %3213 = vmatpush1.msra.mxu0 %v156
    %3214 = vmatprep.subr.mxu0 0.0
    %3215 = vmatpush1.msra.mxu0 %v157
    %3216 = vmatprep.subr.mxu0 0.0
    %3217 = vmatpush1.msra.mxu0 %v158
    %3218 = vmatprep.subr.mxu0 0.0
    %3219 = vmatpush1.msra.mxu0 %v159
    %3220 = vmatprep.subr.mxu0 0.0
    %3221 = vmatpush1.msra.mxu0 %v160
    %3222 = vmatprep.subr.mxu0 0.0
    %3223 = vmatpush1.msra.mxu0 %v161
    %3224 = vmatprep.subr.mxu0 0.0
    %3225 = vmatpush1.msra.mxu0 %v162
    %3226 = vmatprep.subr.mxu0 0.0
    %3227 = vmatpush1.msra.mxu0 0.0
    %3228 = vmatprep.subr.mxu0 0.0
    %3229 = vmatpush1.msra.mxu0 0.0
    %3230 = vmatprep.subr.mxu0 0.0
    %3231 = vmatpush1.msra.mxu0 0.0
    %3232 = vmatprep.subr.mxu0 0.0
    %3233 = vmatpush1.msra.mxu0 0.0
    %3234 = vmatprep.subr.mxu0 0.0
    %3235 = vmatpush1.msra.mxu0 0.0
    %3236 = vmatprep.subr.mxu0 0.0
    %3237 = vmatpush1.msra.mxu0 0.0
    %3238 = vmatprep.subr.mxu0 0.0
    %3239 = vmatpush1.msra.mxu0 0.0
    %3240 = vmatprep.subr.mxu0 0.0
    %3241 = vmatpush1.msra.mxu0 0.0
    %3242 = vmatprep.subr.mxu0 0.0
    %3243 = vmatpush1.msra.mxu0 0.0
    %3244 = vmatprep.subr.mxu0 0.0
    %3245 = vmatpush1.msra.mxu0 0.0
    %3246 = vmatprep.subr.mxu0 0.0
    %3247 = vmatpush1.msra.mxu0 0.0
    %3248 = vmatprep.subr.mxu0 0.0
    %3249 = vmatpush1.msra.mxu0 0.0
    %3250 = vmatprep.subr.mxu0 0.0
    %3251 = vmatpush1.msra.mxu0 0.0
    %3252 = vmatprep.subr.mxu0 0.0
    %3253 = vmatpush1.msra.mxu0 0.0
    %3254 = vmatprep.subr.mxu0 0.0
    %3255 = vmatpush1.msra.mxu0 0.0
    %3256 = vmatprep.subr.mxu0 0.0
    %3257 = vmatpush1.msra.mxu0 0.0
    %3258 = vmatprep.mubr.f32.mxu0 0.0
    %3259 = vmatmul.mubr.f32.gmra.mrb[0].mxu0 %v3191
    %v3260 = vpop.f32.mrb[0].mxu0
    %v3261 = vadd.f32 0.0, %v3260
    %v3262 = vpop.f32.mrb[0].mxu0
    %3263 = vdwg.mxu0
    %v3264 = vmul.f32 %v3261, 0.083333336
    %v3266 = vsel %vm1294, %v3264, 0
    %3268 = vmatprep.subr.mxu0 0.0
    %3269 = vmatpush1.msra.mxu0 %v3266
    %3270 = vmatprep.subr.mxu0 0.0
    %3271 = vmatpush1.msra.mxu0 0.0
    %3272 = vmatprep.subr.mxu0 0.0
    %3273 = vmatpush1.msra.mxu0 0.0
    %3274 = vmatprep.subr.mxu0 0.0
    %3275 = vmatpush1.msra.mxu0 0.0
    %3276 = vmatprep.subr.mxu0 0.0
    %3277 = vmatpush1.msra.mxu0 0.0
    %3278 = vmatprep.subr.mxu0 0.0
    %3279 = vmatpush1.msra.mxu0 0.0
    %3280 = vmatprep.subr.mxu0 0.0
    %3281 = vmatpush1.msra.mxu0 0.0
    %3282 = vmatprep.subr.mxu0 0.0
    %3283 = vmatpush1.msra.mxu0 0.0
    %3284 = vmatprep.subr.mxu0 0.0
    %3285 = vmatpush1.msra.mxu0 0.0
    %3286 = vmatprep.subr.mxu0 0.0
    %3287 = vmatpush1.msra.mxu0 0.0
    %3288 = vmatprep.subr.mxu0 0.0
    %3289 = vmatpush1.msra.mxu0 0.0
    %3290 = vmatprep.subr.mxu0 0.0
    %3291 = vmatpush1.msra.mxu0 0.0
    %3292 = vmatprep.subr.mxu0 0.0
    %3293 = vmatpush1.msra.mxu0 0.0
    %3294 = vmatprep.subr.mxu0 0.0
    %3295 = vmatpush1.msra.mxu0 0.0
    %3296 = vmatprep.subr.mxu0 0.0
    %3297 = vmatpush1.msra.mxu0 0.0
    %3298 = vmatprep.subr.mxu0 0.0
    %3299 = vmatpush1.msra.mxu0 0.0
    %3300 = vmatprep.subr.mxu0 0.0
    %3301 = vmatpush1.msra.mxu0 0.0
    %3302 = vmatprep.subr.mxu0 0.0
    %3303 = vmatpush1.msra.mxu0 0.0
    %3304 = vmatprep.subr.mxu0 0.0
    %3305 = vmatpush1.msra.mxu0 0.0
    %3306 = vmatprep.subr.mxu0 0.0
    %3307 = vmatpush1.msra.mxu0 0.0
    %3308 = vmatprep.subr.mxu0 0.0
    %3309 = vmatpush1.msra.mxu0 0.0
    %3310 = vmatprep.subr.mxu0 0.0
    %3311 = vmatpush1.msra.mxu0 0.0
    %3312 = vmatprep.subr.mxu0 0.0
    %3313 = vmatpush1.msra.mxu0 0.0
    %3314 = vmatprep.subr.mxu0 0.0
    %3315 = vmatpush1.msra.mxu0 0.0
    %3316 = vmatprep.subr.mxu0 0.0
    %3317 = vmatpush1.msra.mxu0 0.0
    %3318 = vmatprep.subr.mxu0 0.0
    %3319 = vmatpush1.msra.mxu0 0.0
    %3320 = vmatprep.subr.mxu0 0.0
    %3321 = vmatpush1.msra.mxu0 0.0
    %3322 = vmatprep.subr.mxu0 0.0
    %3323 = vmatpush1.msra.mxu0 0.0
    %3324 = vmatprep.subr.mxu0 0.0
    %3325 = vmatpush1.msra.mxu0 0.0
    %3326 = vmatprep.subr.mxu0 0.0
    %3327 = vmatpush1.msra.mxu0 0.0
    %3328 = vmatprep.subr.mxu0 0.0
    %3329 = vmatpush1.msra.mxu0 0.0
    %3330 = vmatprep.subr.mxu0 0.0
    %3331 = vmatpush1.msra.mxu0 0.0
    %3332 = vmatprep.mubr.f32.mxu0 0.0
    %3333 = vmatmul.mubr.f32.gmra.mrb[0].mxu0 %v1962
    %v3334 = vpop.f32.mrb[0].mxu0
    %v3335 = vadd.f32 1e-05, %v3334
    %v3336 = vpop.f32.mrb[0].mxu0
    %3337 = vmatprep.mubr.f32.mxu0 0.0
    %3338 = vmatmul.mubr.f32.gmra.mrb[0].mxu0 %v1965
    %v3339 = vpop.f32.mrb[0].mxu0
    %v3340 = vadd.f32 1e-05, %v3339
    %v3341 = vpop.f32.mrb[0].mxu0
    %3342 = vdwg.mxu0
    %v3343 = vrsqrt.pop %v3335
    %v3344 = vrsqrt.pop %v3340
    %v3345 = vmul.f32 %v3120, %v3343
    %v3346 = vmul.f32 %v3121, %v3344
    %v3347 = vlaneseq
    %v3348 = vshrl.u32 %v3347, 7
    %v3349 = vsub.s32 0, %v3348
    %v3350 = vrot.slane %v2899, %v3349
    %v3351 = vmul.f32 %v3345, %v3350
    %v3352 = vmul.f32 %v3346, %v3350
    %v3353 = vlaneseq
    %v3354 = vshrl.u32 %v3353, 7
    %v3355 = vsub.s32 0, %v3354
    %v3356 = vrot.slane %v2900, %v3355
    %v3357 = vadd.f32 %v3351, %v3356
    %v3358 = vadd.f32 %v3352, %v3356
    %3359 = vmatprep.subr.mxu0 0.0
    %3360 = vmatpush1.msra.mxu0 %v3357
    %3361 = vmatprep.subr.mxu0 0.0
    %3362 = vmatpush1.msra.mxu0 %v3358
    %3363 = vmatprep.subr.mxu0 0.0
    %3364 = vmatpush1.msra.mxu0 0.0
    %3365 = vmatprep.subr.mxu0 0.0
    %3366 = vmatpush1.msra.mxu0 0.0
    %3367 = vmatprep.subr.mxu0 0.0
    %3368 = vmatpush1.msra.mxu0 0.0
    %3369 = vmatprep.subr.mxu0 0.0
    %3370 = vmatpush1.msra.mxu0 0.0
    %3371 = vmatprep.subr.mxu0 0.0
    %3372 = vmatpush1.msra.mxu0 0.0
    %3373 = vmatprep.subr.mxu0 0.0
    %3374 = vmatpush1.msra.mxu0 0.0
    %3375 = vmatprep.subr.mxu0 0.0
    %3376 = vmatpush1.msra.mxu0 0.0
    %3377 = vmatprep.subr.mxu0 0.0
    %3378 = vmatpush1.msra.mxu0 0.0
    %3379 = vmatprep.subr.mxu0 0.0
    %3380 = vmatpush1.msra.mxu0 0.0
    %3381 = vmatprep.subr.mxu0 0.0
    %3382 = vmatpush1.msra.mxu0 0.0
    %3383 = vmatprep.subr.mxu0 0.0
    %3384 = vmatpush1.msra.mxu0 0.0
    %3385 = vmatprep.subr.mxu0 0.0
    %3386 = vmatpush1.msra.mxu0 0.0
    %3387 = vmatprep.subr.mxu0 0.0
    %3388 = vmatpush1.msra.mxu0 0.0
    %3389 = vmatprep.subr.mxu0 0.0
    %3390 = vmatpush1.msra.mxu0 0.0
    %3391 = vmatprep.subr.mxu0 0.0
    %3392 = vmatpush1.msra.mxu0 0.0
    %3393 = vmatprep.subr.mxu0 0.0
    %3394 = vmatpush1.msra.mxu0 0.0
    %3395 = vmatprep.subr.mxu0 0.0
    %3396 = vmatpush1.msra.mxu0 0.0
    %3397 = vmatprep.subr.mxu0 0.0
    %3398 = vmatpush1.msra.mxu0 0.0
    %3399 = vmatprep.subr.mxu0 0.0
    %3400 = vmatpush1.msra.mxu0 0.0
    %3401 = vmatprep.subr.mxu0 0.0
    %3402 = vmatpush1.msra.mxu0 0.0
    %3403 = vmatprep.subr.mxu0 0.0
    %3404 = vmatpush1.msra.mxu0 0.0
    %3405 = vmatprep.subr.mxu0 0.0
    %3406 = vmatpush1.msra.mxu0 0.0
    %3407 = vmatprep.subr.mxu0 0.0
    %3408 = vmatpush1.msra.mxu0 0.0
    %3409 = vmatprep.subr.mxu0 0.0
    %3410 = vmatpush1.msra.mxu0 0.0
    %3411 = vmatprep.subr.mxu0 0.0
    %3412 = vmatpush1.msra.mxu0 0.0
    %3413 = vmatprep.subr.mxu0 0.0
    %3414 = vmatpush1.msra.mxu0 0.0
    %3415 = vmatprep.subr.mxu0 0.0
    %3416 = vmatpush1.msra.mxu0 0.0
    %3417 = vmatprep.subr.mxu0 0.0
    %3418 = vmatpush1.msra.mxu0 0.0
    %3419 = vmatprep.subr.mxu0 0.0
    %3420 = vmatpush1.msra.mxu0 0.0
    %3421 = vmatprep.subr.mxu0 0.0
    %3422 = vmatpush1.msra.mxu0 0.0
    %3423 = vmatprep.mubr.f32.mxu0 0.0
    %3424 = vmatmul.mubr.f32.gmra.mrb[0].mxu0 %v1814
    %v3425 = vpop.f32.mrb[0].mxu0
    %v3426 = vadd.f32 0.0, %v3425
    %v3427 = vpop.f32.mrb[0].mxu0
    %3428 = vdwg.mxu0
    %v3429 = vmul.f32 %v3426, 0.083333336
    %v3430 = vld [vmem:[#allocation6 + $0x240] sm:$0xf]
    %v3431 = vld [vmem:[#allocation6 + $0x244] sm:$0xf]
    %v3432 = vld [vmem:[#allocation6 + $0x248] sm:$0xf]
    %v3433 = vld [vmem:[#allocation6 + $0x24c] sm:$0xf]
    %v3434 = vld [vmem:[#allocation6 + $0x250] sm:$0xf]
    %v3435 = vld [vmem:[#allocation6 + $0x254] sm:$0xf]
    %v3436 = vld [vmem:[#allocation6 + $0x258] sm:$0xf]
    %v3437 = vld [vmem:[#allocation6 + $0x25c] sm:$0xf]
    %v3438 = vld [vmem:[#allocation6 + $0x260] sm:$0xf]
    %v3439 = vld [vmem:[#allocation6 + $0x264] sm:$0xf]
    %v3440 = vld [vmem:[#allocation6 + $0x268] sm:$0xf]
    %v3441 = vld [vmem:[#allocation6 + $0x26c] sm:$0xf]
    %v3442 = vld [vmem:[#allocation6 + $0x270] sm:$0xf]
    %v3443 = vld [vmem:[#allocation6 + $0x274] sm:$0xf]
    %v3444 = vld [vmem:[#allocation6 + $0x278] sm:$0xf]
    %v3445 = vld [vmem:[#allocation6 + $0x27c] sm:$0xf]
    %v3446 = vpack.c.bf16 %v3429, %v3429
    %v3447 = vld [vmem:[#allocation10 + $0xb] sm:$0x1]
    %v3464 = vunpack.c.l.b16 %v3430
    %v3465 = vunpack.c.l.b16 %v3431
    %v3466 = vunpack.c.l.b16 %v3432
    %v3467 = vunpack.c.l.b16 %v3433
    %v3468 = vunpack.c.l.b16 %v3434
    %v3469 = vunpack.c.l.b16 %v3435
    %v3470 = vunpack.c.l.b16 %v3436
    %v3471 = vunpack.c.l.b16 %v3437
    %v3472 = vunpack.c.l.b16 %v3438
    %v3473 = vunpack.c.l.b16 %v3439
    %v3474 = vunpack.c.l.b16 %v3440
    %v3475 = vunpack.c.l.b16 %v3441
    %v3476 = vunpack.c.l.b16 %v3442
    %v3477 = vunpack.c.l.b16 %v3443
    %v3478 = vunpack.c.l.b16 %v3444
    %v3479 = vunpack.c.l.b16 %v3445
    %v3480 = vpack.c.b16 %v3465, %v3464
    %v3481 = vpack.c.b16 %v3467, %v3466
    %v3482 = vpack.c.b16 %v3469, %v3468
    %v3483 = vpack.c.b16 %v3471, %v3470
    %v3484 = vpack.c.b16 %v3473, %v3472
    %v3485 = vpack.c.b16 %v3475, %v3474
    %v3486 = vpack.c.b16 %v3477, %v3476
    %v3487 = vpack.c.b16 %v3479, %v3478
    %3496 = vmatprep.subr.bf16.mxu0 0
    %3497 = vmatpush1.bf16.msra.mxu0 %v3480
    %3498 = vmatprep.subr.bf16.mxu0 0
    %3499 = vmatpush1.bf16.msra.mxu0 %v3481
    %3500 = vmatprep.subr.bf16.mxu0 0
    %3501 = vmatpush1.bf16.msra.mxu0 %v3482
    %3502 = vmatprep.subr.bf16.mxu0 0
    %3503 = vmatpush1.bf16.msra.mxu0 %v3483
    %3504 = vmatprep.subr.bf16.mxu0 0
    %3505 = vmatpush1.bf16.msra.mxu0 %v3484
    %3506 = vmatprep.subr.bf16.mxu0 0
    %3507 = vmatpush1.bf16.msra.mxu0 %v3485
    %3508 = vmatprep.subr.bf16.mxu0 0
    %3509 = vmatpush1.bf16.msra.mxu0 %v3486
    %3510 = vmatprep.subr.bf16.mxu0 0
    %3511 = vmatpush1.bf16.msra.mxu0 %v3487
    %3512 = vmatprep.subr.bf16.mxu0 0
    %3513 = vmatpush1.bf16.msra.mxu0 0
    %3514 = vmatprep.subr.bf16.mxu0 0
    %3515 = vmatpush1.bf16.msra.mxu0 0
    %3516 = vmatprep.subr.bf16.mxu0 0
    %3517 = vmatpush1.bf16.msra.mxu0 0
    %3518 = vmatprep.subr.bf16.mxu0 0
    %3519 = vmatpush1.bf16.msra.mxu0 0
    %3520 = vmatprep.subr.bf16.mxu0 0
    %3521 = vmatpush1.bf16.msra.mxu0 0
    %3522 = vmatprep.subr.bf16.mxu0 0
    %3523 = vmatpush1.bf16.msra.mxu0 0
    %3524 = vmatprep.subr.bf16.mxu0 0
    %3525 = vmatpush1.bf16.msra.mxu0 0
    %3526 = vmatprep.subr.bf16.mxu0 0
    %3527 = vmatpush1.bf16.msra.mxu0 0
    %3528 = vmatprep.mubr.bf16.mxu0 0
    %3529 = vmatmul.mubr.bf16.gmra.mrb[0].mxu0 %v3446
    %v3530 = vpop.f32.mrb[0].mxu0
    %v3531 = vadd.f32 %v3447, %v3530
    %v3532 = vpop.f32.mrb[0].mxu0
    %v3533 = vpop.f32.mrb[0].mxu0
    %v3534 = vpop.f32.mrb[0].mxu0
    %3535 = vdwg.mxu0
    %v3536 = vmul.f32 %v3531, 0.5
    %v3537 = vmul.f32 %v3531, 0.044715
    %v3538 = vmul.f32 %v3537, %v3531
    %v3539 = vmul.f32 %v3538, %v3531
    %v3540 = vadd.f32 %v3531, %v3539
    %v3541 = vmul.f32 %v3540, 0.7978846
    %v3542 = vtanh.pop %v3541
    %v3543 = vadd.f32 %v3542, 1.0
    %v3544 = vmul.f32 %v3536, %v3543
    %v3545 = vld [vmem:[#allocation6 + $0x280] sm:$0xf]
    %v3546 = vld [vmem:[#allocation6 + $0x284] sm:$0xf]
    %v3547 = vld [vmem:[#allocation6 + $0x288] sm:$0xf]
    %v3548 = vld [vmem:[#allocation6 + $0x28c] sm:$0xf]
    %v3549 = vld [vmem:[#allocation6 + $0x290] sm:$0xf]
    %v3550 = vld [vmem:[#allocation6 + $0x294] sm:$0xf]
    %v3551 = vld [vmem:[#allocation6 + $0x298] sm:$0xf]
    %v3552 = vld [vmem:[#allocation6 + $0x29c] sm:$0xf]
    %v3553 = vld [vmem:[#allocation6 + $0x2a0] sm:$0xf]
    %v3554 = vld [vmem:[#allocation6 + $0x2a4] sm:$0xf]
    %v3555 = vld [vmem:[#allocation6 + $0x2a8] sm:$0xf]
    %v3556 = vld [vmem:[#allocation6 + $0x2ac] sm:$0xf]
    %v3557 = vld [vmem:[#allocation6 + $0x2b0] sm:$0xf]
    %v3558 = vld [vmem:[#allocation6 + $0x2b4] sm:$0xf]
    %v3559 = vld [vmem:[#allocation6 + $0x2b8] sm:$0xf]
    %v3560 = vld [vmem:[#allocation6 + $0x2bc] sm:$0xf]
    %v3561 = vpack.c.bf16 %v3544, %v3544
    %v3562 = vld [vmem:[#allocation10 + $0xc] sm:$0x1]
    %v3579 = vunpack.c.l.b16 %v3545
    %v3580 = vunpack.c.l.b16 %v3546
    %v3581 = vunpack.c.l.b16 %v3547
    %v3582 = vunpack.c.l.b16 %v3548
    %v3583 = vunpack.c.l.b16 %v3549
    %v3584 = vunpack.c.l.b16 %v3550
    %v3585 = vunpack.c.l.b16 %v3551
    %v3586 = vunpack.c.l.b16 %v3552
    %v3587 = vunpack.c.l.b16 %v3553
    %v3588 = vunpack.c.l.b16 %v3554
    %v3589 = vunpack.c.l.b16 %v3555
    %v3590 = vunpack.c.l.b16 %v3556
    %v3591 = vunpack.c.l.b16 %v3557
    %v3592 = vunpack.c.l.b16 %v3558
    %v3593 = vunpack.c.l.b16 %v3559
    %v3594 = vunpack.c.l.b16 %v3560
    %v3595 = vpack.c.b16 %v3580, %v3579
    %v3596 = vpack.c.b16 %v3582, %v3581
    %v3597 = vpack.c.b16 %v3584, %v3583
    %v3598 = vpack.c.b16 %v3586, %v3585
    %v3599 = vpack.c.b16 %v3588, %v3587
    %v3600 = vpack.c.b16 %v3590, %v3589
    %v3601 = vpack.c.b16 %v3592, %v3591
    %v3602 = vpack.c.b16 %v3594, %v3593
    %3611 = vmatprep.subr.bf16.mxu0 0
    %3612 = vmatpush1.bf16.msra.mxu0 %v3595
    %3613 = vmatprep.subr.bf16.mxu0 0
    %3614 = vmatpush1.bf16.msra.mxu0 %v3596
    %3615 = vmatprep.subr.bf16.mxu0 0
    %3616 = vmatpush1.bf16.msra.mxu0 %v3597
    %3617 = vmatprep.subr.bf16.mxu0 0
    %3618 = vmatpush1.bf16.msra.mxu0 %v3598
    %3619 = vmatprep.subr.bf16.mxu0 0
    %3620 = vmatpush1.bf16.msra.mxu0 %v3599
    %3621 = vmatprep.subr.bf16.mxu0 0
    %3622 = vmatpush1.bf16.msra.mxu0 %v3600
    %3623 = vmatprep.subr.bf16.mxu0 0
    %3624 = vmatpush1.bf16.msra.mxu0 %v3601
    %3625 = vmatprep.subr.bf16.mxu0 0
    %3626 = vmatpush1.bf16.msra.mxu0 %v3602
    %3627 = vmatprep.subr.bf16.mxu0 0
    %3628 = vmatpush1.bf16.msra.mxu0 0
    %3629 = vmatprep.subr.bf16.mxu0 0
    %3630 = vmatpush1.bf16.msra.mxu0 0
    %3631 = vmatprep.subr.bf16.mxu0 0
    %3632 = vmatpush1.bf16.msra.mxu0 0
    %3633 = vmatprep.subr.bf16.mxu0 0
    %3634 = vmatpush1.bf16.msra.mxu0 0
    %3635 = vmatprep.subr.bf16.mxu0 0
    %3636 = vmatpush1.bf16.msra.mxu0 0
    %3637 = vmatprep.subr.bf16.mxu0 0
    %3638 = vmatpush1.bf16.msra.mxu0 0
    %3639 = vmatprep.subr.bf16.mxu0 0
    %3640 = vmatpush1.bf16.msra.mxu0 0
    %3641 = vmatprep.subr.bf16.mxu0 0
    %3642 = vmatpush1.bf16.msra.mxu0 0
    %3643 = vmatprep.mubr.bf16.mxu0 0
    %3644 = vmatmul.mubr.bf16.gmra.mrb[0].mxu0 %v3561
    %v3645 = vpop.f32.mrb[0].mxu0
    %v3646 = vadd.f32 %v3562, %v3645
    %v3647 = vpop.f32.mrb[0].mxu0
    %v3648 = vpop.f32.mrb[0].mxu0
    %v3649 = vpop.f32.mrb[0].mxu0
    %3650 = vdwg.mxu0
    %v3651 = vsub.f32 0.0, %v3646
    %v3652 = vmul.f32 %v3651, 1.442695
    %v3653 = vpow.pop %v3652
    %v3654 = vadd.f32 %v3653, 1.0
    %v3655 = vrcp.pop %v3654
    %v3657 = vsel %vm1294, %v3655, 0
    %3659 = vmatprep.subr.mxu0 0.0
    %3660 = vmatpush1.msra.mxu0 %v3657
    %3661 = vmatprep.subr.mxu0 0.0
    %3662 = vmatpush1.msra.mxu0 0.0
    %3663 = vmatprep.subr.mxu0 0.0
    %3664 = vmatpush1.msra.mxu0 0.0
    %3665 = vmatprep.subr.mxu0 0.0
    %3666 = vmatpush1.msra.mxu0 0.0
    %3667 = vmatprep.subr.mxu0 0.0
    %3668 = vmatpush1.msra.mxu0 0.0
    %3669 = vmatprep.subr.mxu0 0.0
    %3670 = vmatpush1.msra.mxu0 0.0
    %3671 = vmatprep.subr.mxu0 0.0
    %3672 = vmatpush1.msra.mxu0 0.0
    %3673 = vmatprep.subr.mxu0 0.0
    %3674 = vmatpush1.msra.mxu0 0.0
    %3675 = vmatprep.subr.mxu0 0.0
    %3676 = vmatpush1.msra.mxu0 0.0
    %3677 = vmatprep.subr.mxu0 0.0
    %3678 = vmatpush1.msra.mxu0 0.0
    %3679 = vmatprep.subr.mxu0 0.0
    %3680 = vmatpush1.msra.mxu0 0.0
    %3681 = vmatprep.subr.mxu0 0.0
    %3682 = vmatpush1.msra.mxu0 0.0
    %3683 = vmatprep.subr.mxu0 0.0
    %3684 = vmatpush1.msra.mxu0 0.0
    %3685 = vmatprep.subr.mxu0 0.0
    %3686 = vmatpush1.msra.mxu0 0.0
    %3687 = vmatprep.subr.mxu0 0.0
    %3688 = vmatpush1.msra.mxu0 0.0
    %3689 = vmatprep.subr.mxu0 0.0
    %3690 = vmatpush1.msra.mxu0 0.0
    %3691 = vmatprep.subr.mxu0 0.0
    %3692 = vmatpush1.msra.mxu0 0.0
    %3693 = vmatprep.subr.mxu0 0.0
    %3694 = vmatpush1.msra.mxu0 0.0
    %3695 = vmatprep.subr.mxu0 0.0
    %3696 = vmatpush1.msra.mxu0 0.0
    %3697 = vmatprep.subr.mxu0 0.0
    %3698 = vmatpush1.msra.mxu0 0.0
    %3699 = vmatprep.subr.mxu0 0.0
    %3700 = vmatpush1.msra.mxu0 0.0
    %3701 = vmatprep.subr.mxu0 0.0
    %3702 = vmatpush1.msra.mxu0 0.0
    %3703 = vmatprep.subr.mxu0 0.0
    %3704 = vmatpush1.msra.mxu0 0.0
    %3705 = vmatprep.subr.mxu0 0.0
    %3706 = vmatpush1.msra.mxu0 0.0
    %3707 = vmatprep.subr.mxu0 0.0
    %3708 = vmatpush1.msra.mxu0 0.0
    %3709 = vmatprep.subr.mxu0 0.0
    %3710 = vmatpush1.msra.mxu0 0.0
    %3711 = vmatprep.subr.mxu0 0.0
    %3712 = vmatpush1.msra.mxu0 0.0
    %3713 = vmatprep.subr.mxu0 0.0
    %3714 = vmatpush1.msra.mxu0 0.0
    %3715 = vmatprep.subr.mxu0 0.0
    %3716 = vmatpush1.msra.mxu0 0.0
    %3717 = vmatprep.subr.mxu0 0.0
    %3718 = vmatpush1.msra.mxu0 0.0
    %3719 = vmatprep.subr.mxu0 0.0
    %3720 = vmatpush1.msra.mxu0 0.0
    %3721 = vmatprep.subr.mxu0 0.0
    %3722 = vmatpush1.msra.mxu0 0.0
    %3723 = vmatprep.mubr.f32.mxu0 0.0
    %3724 = vmatmul.mubr.f32.gmra.mrb[0].mxu0 %v1962
    %v3725 = vpop.f32.mrb[0].mxu0
    %v3726 = vadd.f32 0.0, %v3725
    %v3727 = vpop.f32.mrb[0].mxu0
    %3728 = vmatprep.mubr.f32.mxu0 0.0
    %3729 = vmatmul.mubr.f32.gmra.mrb[0].mxu0 %v1965
    %v3730 = vpop.f32.mrb[0].mxu0
    %v3731 = vadd.f32 0.0, %v3730
    %v3732 = vpop.f32.mrb[0].mxu0
    %3733 = vdwg.mxu0
    %v3734 = vmul.f32 %v3357, %v3726
    %v3735 = vmul.f32 %v3358, %v3731
    %v3736 = vld [vmem:[%s1] sm:$0x3]
    %v3738 = vsel %vm1294, %v3736, 0
    %3740 = vmatprep.subr.mxu0 0.0
    %3741 = vmatpush1.msra.mxu0 %v3738
    %3742 = vmatprep.subr.mxu0 0.0
    %3743 = vmatpush1.msra.mxu0 0.0
    %3744 = vmatprep.subr.mxu0 0.0
    %3745 = vmatpush1.msra.mxu0 0.0
    %3746 = vmatprep.subr.mxu0 0.0
    %3747 = vmatpush1.msra.mxu0 0.0
    %3748 = vmatprep.subr.mxu0 0.0
    %3749 = vmatpush1.msra.mxu0 0.0
    %3750 = vmatprep.subr.mxu0 0.0
    %3751 = vmatpush1.msra.mxu0 0.0
    %3752 = vmatprep.subr.mxu0 0.0
    %3753 = vmatpush1.msra.mxu0 0.0
    %3754 = vmatprep.subr.mxu0 0.0
    %3755 = vmatpush1.msra.mxu0 0.0
    %3756 = vmatprep.subr.mxu0 0.0
    %3757 = vmatpush1.msra.mxu0 0.0
    %3758 = vmatprep.subr.mxu0 0.0
    %3759 = vmatpush1.msra.mxu0 0.0
    %3760 = vmatprep.subr.mxu0 0.0
    %3761 = vmatpush1.msra.mxu0 0.0
    %3762 = vmatprep.subr.mxu0 0.0
    %3763 = vmatpush1.msra.mxu0 0.0
    %3764 = vmatprep.subr.mxu0 0.0
    %3765 = vmatpush1.msra.mxu0 0.0
    %3766 = vmatprep.subr.mxu0 0.0
    %3767 = vmatpush1.msra.mxu0 0.0
    %3768 = vmatprep.subr.mxu0 0.0
    %3769 = vmatpush1.msra.mxu0 0.0
    %3770 = vmatprep.subr.mxu0 0.0
    %3771 = vmatpush1.msra.mxu0 0.0
    %3772 = vmatprep.subr.mxu0 0.0
    %3773 = vmatpush1.msra.mxu0 0.0
    %3774 = vmatprep.subr.mxu0 0.0
    %3775 = vmatpush1.msra.mxu0 0.0
    %3776 = vmatprep.subr.mxu0 0.0
    %3777 = vmatpush1.msra.mxu0 0.0
    %3778 = vmatprep.subr.mxu0 0.0
    %3779 = vmatpush1.msra.mxu0 0.0
    %3780 = vmatprep.subr.mxu0 0.0
    %3781 = vmatpush1.msra.mxu0 0.0
    %3782 = vmatprep.subr.mxu0 0.0
    %3783 = vmatpush1.msra.mxu0 0.0
    %3784 = vmatprep.subr.mxu0 0.0
    %3785 = vmatpush1.msra.mxu0 0.0
    %3786 = vmatprep.subr.mxu0 0.0
    %3787 = vmatpush1.msra.mxu0 0.0
    %3788 = vmatprep.subr.mxu0 0.0
    %3789 = vmatpush1.msra.mxu0 0.0
    %3790 = vmatprep.subr.mxu0 0.0
    %3791 = vmatpush1.msra.mxu0 0.0
    %3792 = vmatprep.subr.mxu0 0.0
    %3793 = vmatpush1.msra.mxu0 0.0
    %3794 = vmatprep.subr.mxu0 0.0
    %3795 = vmatpush1.msra.mxu0 0.0
    %3796 = vmatprep.subr.mxu0 0.0
    %3797 = vmatpush1.msra.mxu0 0.0
    %3798 = vmatprep.subr.mxu0 0.0
    %3799 = vmatpush1.msra.mxu0 0.0
    %3800 = vmatprep.subr.mxu0 0.0
    %3801 = vmatpush1.msra.mxu0 0.0
    %3802 = vmatprep.subr.mxu0 0.0
    %3803 = vmatpush1.msra.mxu0 0.0
    %3804 = vmatprep.mubr.f32.mxu0 0.0
    %3805 = vmatmul.mubr.f32.gmra.mrb[0].mxu0 %v1962
    %v3806 = vpop.f32.mrb[0].mxu0
    %v3807 = vadd.f32 0.0, %v3806
    %v3808 = vpop.f32.mrb[0].mxu0
    %3809 = vmatprep.mubr.f32.mxu0 0.0
    %3810 = vmatmul.mubr.f32.gmra.mrb[0].mxu0 %v1965
    %v3811 = vpop.f32.mrb[0].mxu0
    %v3812 = vadd.f32 0.0, %v3811
    %v3813 = vpop.f32.mrb[0].mxu0
    %3814 = vdwg.mxu0
    %v3815 = vmul.f32 %v3734, %v3807
    %v3816 = vmul.f32 %v3735, %v3812
    %v3817 = vrot.slane %v3736, 1
    %v3818 = vsel %vm1294, %v3817, 0
    %3820 = vmatprep.subr.mxu0 0.0
    %3821 = vmatpush1.msra.mxu0 %v3818
    %3822 = vmatprep.subr.mxu0 0.0
    %3823 = vmatpush1.msra.mxu0 0.0
    %3824 = vmatprep.subr.mxu0 0.0
    %3825 = vmatpush1.msra.mxu0 0.0
    %3826 = vmatprep.subr.mxu0 0.0
    %3827 = vmatpush1.msra.mxu0 0.0
    %3828 = vmatprep.subr.mxu0 0.0
    %3829 = vmatpush1.msra.mxu0 0.0
    %3830 = vmatprep.subr.mxu0 0.0
    %3831 = vmatpush1.msra.mxu0 0.0
    %3832 = vmatprep.subr.mxu0 0.0
    %3833 = vmatpush1.msra.mxu0 0.0
    %3834 = vmatprep.subr.mxu0 0.0
    %3835 = vmatpush1.msra.mxu0 0.0
    %3836 = vmatprep.subr.mxu0 0.0
    %3837 = vmatpush1.msra.mxu0 0.0
    %3838 = vmatprep.subr.mxu0 0.0
    %3839 = vmatpush1.msra.mxu0 0.0
    %3840 = vmatprep.subr.mxu0 0.0
    %3841 = vmatpush1.msra.mxu0 0.0
    %3842 = vmatprep.subr.mxu0 0.0
    %3843 = vmatpush1.msra.mxu0 0.0
    %3844 = vmatprep.subr.mxu0 0.0
    %3845 = vmatpush1.msra.mxu0 0.0
    %3846 = vmatprep.subr.mxu0 0.0
    %3847 = vmatpush1.msra.mxu0 0.0
    %3848 = vmatprep.subr.mxu0 0.0
    %3849 = vmatpush1.msra.mxu0 0.0
    %3850 = vmatprep.subr.mxu0 0.0
    %3851 = vmatpush1.msra.mxu0 0.0
    %3852 = vmatprep.subr.mxu0 0.0
    %3853 = vmatpush1.msra.mxu0 0.0
    %3854 = vmatprep.subr.mxu0 0.0
    %3855 = vmatpush1.msra.mxu0 0.0
    %3856 = vmatprep.subr.mxu0 0.0
    %3857 = vmatpush1.msra.mxu0 0.0
    %3858 = vmatprep.subr.mxu0 0.0
    %3859 = vmatpush1.msra.mxu0 0.0
    %3860 = vmatprep.subr.mxu0 0.0
    %3861 = vmatpush1.msra.mxu0 0.0
    %3862 = vmatprep.subr.mxu0 0.0
    %3863 = vmatpush1.msra.mxu0 0.0
    %3864 = vmatprep.subr.mxu0 0.0
    %3865 = vmatpush1.msra.mxu0 0.0
    %3866 = vmatprep.subr.mxu0 0.0
    %3867 = vmatpush1.msra.mxu0 0.0
    %3868 = vmatprep.subr.mxu0 0.0
    %3869 = vmatpush1.msra.mxu0 0.0
    %3870 = vmatprep.subr.mxu0 0.0
    %3871 = vmatpush1.msra.mxu0 0.0
    %3872 = vmatprep.subr.mxu0 0.0
    %3873 = vmatpush1.msra.mxu0 0.0
    %3874 = vmatprep.subr.mxu0 0.0
    %3875 = vmatpush1.msra.mxu0 0.0
    %3876 = vmatprep.subr.mxu0 0.0
    %3877 = vmatpush1.msra.mxu0 0.0
    %3878 = vmatprep.subr.mxu0 0.0
    %3879 = vmatpush1.msra.mxu0 0.0
    %3880 = vmatprep.subr.mxu0 0.0
    %3881 = vmatpush1.msra.mxu0 0.0
    %3882 = vmatprep.subr.mxu0 0.0
    %3883 = vmatpush1.msra.mxu0 0.0
    %3884 = vmatprep.mubr.f32.mxu0 0.0
    %3885 = vmatmul.mubr.f32.gmra.mrb[0].mxu0 %v1962
    %v3886 = vpop.f32.mrb[0].mxu0
    %v3887 = vadd.f32 0.0, %v3886
    %v3888 = vpop.f32.mrb[0].mxu0
    %3889 = vmatprep.mubr.f32.mxu0 0.0
    %3890 = vmatmul.mubr.f32.gmra.mrb[0].mxu0 %v1965
    %v3891 = vpop.f32.mrb[0].mxu0
    %v3892 = vadd.f32 0.0, %v3891
    %v3893 = vpop.f32.mrb[0].mxu0
    %3894 = vdwg.mxu0
    %v3895 = vadd.f32 %v3815, %v3887
    %v3896 = vadd.f32 %v3816, %v3892
    %v3897 = vld [vmem:[#allocation10 + $0xd] sm:$0x1]
    %v3898 = vld [vmem:[#allocation10 + $0xe] sm:$0x1]
    %3899 = vmatprep.subr.mxu0 0.0
    %3900 = vmatpush1.msra.mxu0 %v147
    %3901 = vmatprep.subr.mxu0 0.0
    %3902 = vmatpush1.msra.mxu0 %v148
    %3903 = vmatprep.subr.mxu0 0.0
    %3904 = vmatpush1.msra.mxu0 %v149
    %3905 = vmatprep.subr.mxu0 0.0
    %3906 = vmatpush1.msra.mxu0 %v150
    %3907 = vmatprep.subr.mxu0 0.0
    %3908 = vmatpush1.msra.mxu0 %v151
    %3909 = vmatprep.subr.mxu0 0.0
    %3910 = vmatpush1.msra.mxu0 %v152
    %3911 = vmatprep.subr.mxu0 0.0
    %3912 = vmatpush1.msra.mxu0 %v153
    %3913 = vmatprep.subr.mxu0 0.0
    %3914 = vmatpush1.msra.mxu0 %v154
    %3915 = vmatprep.subr.mxu0 0.0
    %3916 = vmatpush1.msra.mxu0 %v155
    %3917 = vmatprep.subr.mxu0 0.0
    %3918 = vmatpush1.msra.mxu0 %v156
    %3919 = vmatprep.subr.mxu0 0.0
    %3920 = vmatpush1.msra.mxu0 %v157
    %3921 = vmatprep.subr.mxu0 0.0
    %3922 = vmatpush1.msra.mxu0 %v158
    %3923 = vmatprep.subr.mxu0 0.0
    %3924 = vmatpush1.msra.mxu0 %v159
    %3925 = vmatprep.subr.mxu0 0.0
    %3926 = vmatpush1.msra.mxu0 %v160
    %3927 = vmatprep.subr.mxu0 0.0
    %3928 = vmatpush1.msra.mxu0 %v161
    %3929 = vmatprep.subr.mxu0 0.0
    %3930 = vmatpush1.msra.mxu0 %v162
    %3931 = vmatprep.subr.mxu0 0.0
    %3932 = vmatpush1.msra.mxu0 0.0
    %3933 = vmatprep.subr.mxu0 0.0
    %3934 = vmatpush1.msra.mxu0 0.0
    %3935 = vmatprep.subr.mxu0 0.0
    %3936 = vmatpush1.msra.mxu0 0.0
    %3937 = vmatprep.subr.mxu0 0.0
    %3938 = vmatpush1.msra.mxu0 0.0
    %3939 = vmatprep.subr.mxu0 0.0
    %3940 = vmatpush1.msra.mxu0 0.0
    %3941 = vmatprep.subr.mxu0 0.0
    %3942 = vmatpush1.msra.mxu0 0.0
    %3943 = vmatprep.subr.mxu0 0.0
    %3944 = vmatpush1.msra.mxu0 0.0
    %3945 = vmatprep.subr.mxu0 0.0
    %3946 = vmatpush1.msra.mxu0 0.0
    %3947 = vmatprep.subr.mxu0 0.0
    %3948 = vmatpush1.msra.mxu0 0.0
    %3949 = vmatprep.subr.mxu0 0.0
    %3950 = vmatpush1.msra.mxu0 0.0
    %3951 = vmatprep.subr.mxu0 0.0
    %3952 = vmatpush1.msra.mxu0 0.0
    %3953 = vmatprep.subr.mxu0 0.0
    %3954 = vmatpush1.msra.mxu0 0.0
    %3955 = vmatprep.subr.mxu0 0.0
    %3956 = vmatpush1.msra.mxu0 0.0
    %3957 = vmatprep.subr.mxu0 0.0
    %3958 = vmatpush1.msra.mxu0 0.0
    %3959 = vmatprep.subr.mxu0 0.0
    %3960 = vmatpush1.msra.mxu0 0.0
    %3961 = vmatprep.subr.mxu0 0.0
    %3962 = vmatpush1.msra.mxu0 0.0
    %3963 = vmatprep.mubr.f32.mxu0 0.0
    %3964 = vmatmul.mubr.f32.gmra.mrb[0].mxu0 %v3895
    %v3965 = vpop.f32.mrb[0].mxu0
    %v3966 = vadd.f32 0.0, %v3965
    %v3967 = vpop.f32.mrb[0].mxu0
    %3968 = vmatprep.mubr.f32.mxu0 0.0
    %3969 = vmatmul.mubr.f32.gmra.mrb[0].mxu0 %v3896
    %v3970 = vpop.f32.mrb[0].mxu0
    %v3971 = vadd.f32 0.0, %v3970
    %v3972 = vpop.f32.mrb[0].mxu0
    %3973 = vdwg.mxu0
    %v3974 = vsub.f32 %v3895, %v3966
    %v3975 = vsub.f32 %v3896, %v3971
    %v3976 = vmul.f32 %v3974, %v3974
    %v3977 = vmul.f32 %v3975, %v3975
    %3978 = vmatprep.subr.mxu0 0.0
    %3979 = vmatpush1.msra.mxu0 %v147
    %3980 = vmatprep.subr.mxu0 0.0
    %3981 = vmatpush1.msra.mxu0 %v148
    %3982 = vmatprep.subr.mxu0 0.0
    %3983 = vmatpush1.msra.mxu0 %v149
    %3984 = vmatprep.subr.mxu0 0.0
    %3985 = vmatpush1.msra.mxu0 %v150
    %3986 = vmatprep.subr.mxu0 0.0
    %3987 = vmatpush1.msra.mxu0 %v151
    %3988 = vmatprep.subr.mxu0 0.0
    %3989 = vmatpush1.msra.mxu0 %v152
    %3990 = vmatprep.subr.mxu0 0.0
    %3991 = vmatpush1.msra.mxu0 %v153
    %3992 = vmatprep.subr.mxu0 0.0
    %3993 = vmatpush1.msra.mxu0 %v154
    %3994 = vmatprep.subr.mxu0 0.0
    %3995 = vmatpush1.msra.mxu0 %v155
    %3996 = vmatprep.subr.mxu0 0.0
    %3997 = vmatpush1.msra.mxu0 %v156
    %3998 = vmatprep.subr.mxu0 0.0
    %3999 = vmatpush1.msra.mxu0 %v157
    %4000 = vmatprep.subr.mxu0 0.0
    %4001 = vmatpush1.msra.mxu0 %v158
    %4002 = vmatprep.subr.mxu0 0.0
    %4003 = vmatpush1.msra.mxu0 %v159
    %4004 = vmatprep.subr.mxu0 0.0
    %4005 = vmatpush1.msra.mxu0 %v160
    %4006 = vmatprep.subr.mxu0 0.0
    %4007 = vmatpush1.msra.mxu0 %v161
    %4008 = vmatprep.subr.mxu0 0.0
    %4009 = vmatpush1.msra.mxu0 %v162
    %4010 = vmatprep.subr.mxu0 0.0
    %4011 = vmatpush1.msra.mxu0 0.0
    %4012 = vmatprep.subr.mxu0 0.0
    %4013 = vmatpush1.msra.mxu0 0.0
    %4014 = vmatprep.subr.mxu0 0.0
    %4015 = vmatpush1.msra.mxu0 0.0
    %4016 = vmatprep.subr.mxu0 0.0
    %4017 = vmatpush1.msra.mxu0 0.0
    %4018 = vmatprep.subr.mxu0 0.0
    %4019 = vmatpush1.msra.mxu0 0.0
    %4020 = vmatprep.subr.mxu0 0.0
    %4021 = vmatpush1.msra.mxu0 0.0
    %4022 = vmatprep.subr.mxu0 0.0
    %4023 = vmatpush1.msra.mxu0 0.0
    %4024 = vmatprep.subr.mxu0 0.0
    %4025 = vmatpush1.msra.mxu0 0.0
    %4026 = vmatprep.subr.mxu0 0.0
    %4027 = vmatpush1.msra.mxu0 0.0
    %4028 = vmatprep.subr.mxu0 0.0
    %4029 = vmatpush1.msra.mxu0 0.0
    %4030 = vmatprep.subr.mxu0 0.0
    %4031 = vmatpush1.msra.mxu0 0.0
    %4032 = vmatprep.subr.mxu0 0.0
    %4033 = vmatpush1.msra.mxu0 0.0
    %4034 = vmatprep.subr.mxu0 0.0
    %4035 = vmatpush1.msra.mxu0 0.0
    %4036 = vmatprep.subr.mxu0 0.0
    %4037 = vmatpush1.msra.mxu0 0.0
    %4038 = vmatprep.subr.mxu0 0.0
    %4039 = vmatpush1.msra.mxu0 0.0
    %4040 = vmatprep.subr.mxu0 0.0
    %4041 = vmatpush1.msra.mxu0 0.0
    %4042 = vmatprep.mubr.f32.mxu0 0.0
    %4043 = vmatmul.mubr.f32.gmra.mrb[0].mxu0 %v3976
    %v4044 = vpop.f32.mrb[0].mxu0
    %v4045 = vadd.f32 1e-05, %v4044
    %v4046 = vpop.f32.mrb[0].mxu0
    %4047 = vmatprep.mubr.f32.mxu0 0.0
    %4048 = vmatmul.mubr.f32.gmra.mrb[0].mxu0 %v3977
    %v4049 = vpop.f32.mrb[0].mxu0
    %v4050 = vadd.f32 1e-05, %v4049
    %v4051 = vpop.f32.mrb[0].mxu0
    %4052 = vdwg.mxu0
    %v4053 = vrsqrt.pop %v4045
    %v4054 = vrsqrt.pop %v4050
    %v4055 = vmul.f32 %v3974, %v4053
    %v4056 = vmul.f32 %v3975, %v4054
    %v4057 = vlaneseq
    %v4058 = vshrl.u32 %v4057, 7
    %v4059 = vsub.s32 0, %v4058
    %v4060 = vrot.slane %v3897, %v4059
    %v4061 = vmul.f32 %v4055, %v4060
    %v4062 = vmul.f32 %v4056, %v4060
    %v4063 = vlaneseq
    %v4064 = vshrl.u32 %v4063, 7
    %v4065 = vsub.s32 0, %v4064
    %v4066 = vrot.slane %v3898, %v4065
    %v4067 = vadd.f32 %v4061, %v4066
    %v4068 = vadd.f32 %v4062, %v4066
    %v4069 = vadd.f32 %v4067, %v138
    %v4070 = vadd.f32 %v4068, %v139
    %4071 = vst [vmem:[%s13] sm:$0xff] %v4069
    %4072 = vst [vmem:[%s13 + $0x8] sm:$0xff] %v4070
    // Predicated region
    $region82: #{optimized_bottleneck_processor.1} parent=1 // pred_check
      _
    $region83: #{optimized_bottleneck_processor.1} parent=1 // pred_check_branch
      %4074 = sbr.rel (0) target = $region85
    $region84: #{optimized_bottleneck_processor.1} parent=1 // pred_region
      _
    $region85: #{optimized_bottleneck_processor.1} parent=1 // pred_fallthru
      _
    // Predicated region
    $region86: #{optimized_bottleneck_processor.1} parent=1 // pred_check
      _
    $region87: #{optimized_bottleneck_processor.1} parent=1 // pred_check_branch
      %4076 = sbr.rel (0) target = $region89
    $region88: #{optimized_bottleneck_processor.1} parent=1 // pred_region
      _
    $region89: #{optimized_bottleneck_processor.1} parent=1 // pred_fallthru
      _
    %4077 = vsyncpa [#allocation3], 1
    %4078 = vsyncpa [#allocation5], 1
    %4079 = vsyncpa [#allocation8], 1
    %4080 = vsyncpa [#allocation11], 1

// kernel: optimized_bottleneck_processor.1
$region0: #{optimized_bottleneck_processor.1}
  #allocation0 [shape = 'u32[]', space=smem, size = 0x4, offset = 0x4, fixed_abs, tag = 'smem constant byte address 0x4 - core index']
  #allocation1 [shape = 'u32[144,128]{1,0:T(1,128)}', space=vmem, size = 0x12000, scoped, tag = 'internal scratch']
  %s0 = inlined_call_operand.vmem [shape: f32[16,128], index: 0, kind: input, shape index: {}]
  %s1 = inlined_call_operand.vmem [shape: f32[1,2,128], index: 1, kind: input, shape index: {}]
  %s2 = inlined_call_operand.vmem [shape: f32[1,16], index: 2, kind: input, shape index: {}]
  %s3 = inlined_call_operand.vmem [shape: f32[16,1], index: 3, kind: input, shape index: {}]
  %s4 = inlined_call_operand.vmem [shape: f32[16,1], index: 4, kind: input, shape index: {}]
  %s5 = inlined_call_operand.hbm [shape: f32[16,1], index: 5, kind: input, shape index: {}]
  %s6 = inlined_call_operand.hbm [shape: bf16[36,16,128], index: 6, kind: input, shape index: {}]
  %s7 = inlined_call_operand.hbm [shape: bf16[1408,128], index: 7, kind: input, shape index: {}]
  %s8 = inlined_call_operand.vmem [shape: bf16[384,256], index: 8, kind: input, shape index: {}]
  %s9 = inlined_call_operand.hbm [shape: f32[128,128], index: 9, kind: input, shape index: {}]
  %s10 = inlined_call_operand.hbm [shape: f32[256,256], index: 10, kind: input, shape index: {}]
  %s11 = inlined_call_operand.hbm [shape: f32[15,128], index: 11, kind: input, shape index: {}]
  %s12 = inlined_call_operand.hbm [shape: f32[3,256], index: 12, kind: input, shape index: {}]
  %s13 = inlined_call_operand.vmem [shape: f32[16,128], index: 13, kind: output, shape index: {}]
  %s14 = sld [smem:[#allocation0]]
  $region90: #{optimized_bottleneck_processor.1} parent=0
    _
  %s16 = ssub.s32 1, %s14
  %s17 = scalar_select 0, %s16, %s14
  $region1: #{optimized_bottleneck_processor.1} parent=0
    #allocation2 [shape = 'u8[8192]{0}', space=vmem, size = 0x2000, scoped, tag = 'input window, operand 5, single buffered']
    #allocation3 [shape = 's32[1]{0}', space=sflag, size = 0x4, scoped, tag = 'scoped memory for optimized_bottleneck_processor.1']
    #allocation4 [shape = 'u8[147456]{0}', space=vmem, size = 0x24000, scoped, tag = 'input window, operand 6, single buffered']
    #allocation5 [shape = 's32[1]{0}', space=sflag, size = 0x4, scoped, tag = 'scoped memory for optimized_bottleneck_processor.1']
    #allocation6 [shape = 'u8[360448]{0}', space=vmem, size = 0x58000, scoped, tag = 'input window, operand 7, single buffered']
    #allocation7 [shape = 'u8[65536]{0}', space=vmem, size = 0x10000, scoped, tag = 'input window, operand 9, single buffered']
    #allocation8 [shape = 's32[1]{0}', space=sflag, size = 0x4, scoped, tag = 'scoped memory for optimized_bottleneck_processor.1']
    #allocation9 [shape = 'u8[262144]{0}', space=vmem, size = 0x40000, scoped, tag = 'input window, operand 10, single buffered']
    #allocation10 [shape = 'u8[8192]{0}', space=vmem, size = 0x2000, scoped, tag = 'input window, operand 11, single buffered']
    #allocation11 [shape = 's32[1]{0}', space=sflag, size = 0x4, scoped, tag = 'scoped memory for optimized_bottleneck_processor.1']
    #allocation12 [shape = 'u8[4096]{0}', space=vmem, size = 0x1000, scoped, tag = 'input window, operand 12, single buffered']
    %18 = vsyncpa [#allocation3], 0
    %19 = vsyncpa [#allocation5], 0
    %20 = vsyncpa [#allocation8], 0
    %21 = vsyncpa [#allocation11], 0
    // Predicated region
    $region2: #{optimized_bottleneck_processor.1} parent=1 // pred_check
      _
    $region3: #{optimized_bottleneck_processor.1} parent=1 // pred_check_branch
      %23 = sbr.rel (0) target = $region5
    $region4: #{optimized_bottleneck_processor.1} parent=1 // pred_region
      _
    $region5: #{optimized_bottleneck_processor.1} parent=1 // pred_fallthru
      _
    // Predicated region
    $region6: #{optimized_bottleneck_processor.1} parent=1 // pred_check
      _
    $region7: #{optimized_bottleneck_processor.1} parent=1 // pred_check_branch
      %25 = sbr.rel (0) target = $region9
    $region8: #{optimized_bottleneck_processor.1} parent=1 // pred_region
      _
    $region9: #{optimized_bottleneck_processor.1} parent=1 // pred_fallthru
      _
    // Predicated region
    $region10: #{optimized_bottleneck_processor.1} parent=1 // pred_check
      _
    $region11: #{optimized_bottleneck_processor.1} parent=1 // pred_check_branch
      %27 = sbr.rel (0) target = $region13
    $region12: #{optimized_bottleneck_processor.1} parent=1 // pred_region
      _
    $region13: #{optimized_bottleneck_processor.1} parent=1 // pred_fallthru
      _
    // Predicated region
    $region14: #{optimized_bottleneck_processor.1} parent=1 // pred_check
      _
    $region15: #{optimized_bottleneck_processor.1} parent=1 // pred_check_branch
      %29 = sbr.rel (0) target = $region17
    $region16: #{optimized_bottleneck_processor.1} parent=1 // pred_region
      _
    $region17: #{optimized_bottleneck_processor.1} parent=1 // pred_fallthru
      _
    // Predicated region
    $region18: #{optimized_bottleneck_processor.1} parent=1 // pred_check
      _
    $region19: #{optimized_bottleneck_processor.1} parent=1 // pred_check_branch
      %31 = sbr.rel (0) target = $region21
    $region20: #{optimized_bottleneck_processor.1} parent=1 // pred_region
      _
    $region21: #{optimized_bottleneck_processor.1} parent=1 // pred_fallthru
      _
    // Predicated region
    $region22: #{optimized_bottleneck_processor.1} parent=1 // pred_check
      _
    $region23: #{optimized_bottleneck_processor.1} parent=1 // pred_check_branch
      %33 = sbr.rel (0) target = $region25
    $region24: #{optimized_bottleneck_processor.1} parent=1 // pred_region
      %s35 = ssub.s32 256, 256
      %36 = vsyncadd [#allocation3], %s35
      %s37 = sshll.u32 [#allocation2], 4
      %s38 = int_to_ptr.vmem [resolvable:$true] %s37
      %43 = dma.hbm_to_vmem [thread:$0]  %s5, 256, %s38, [#allocation3], 128, 128, 8
    $region25: #{optimized_bottleneck_processor.1} parent=1 // pred_fallthru
      _
    // Predicated region
    $region26: #{optimized_bottleneck_processor.1} parent=1 // pred_check
      _
    $region27: #{optimized_bottleneck_processor.1} parent=1 // pred_check_branch
      %45 = sbr.rel (0) target = $region29
    $region28: #{optimized_bottleneck_processor.1} parent=1 // pred_region
      %s47 = ssub.s32 4608, 4608
      %48 = vsyncadd [#allocation5], %s47
      %s49 = sshll.u32 [#allocation4], 4
      %s50 = int_to_ptr.vmem [resolvable:$true] %s49
      %55 = dma.hbm_to_vmem [thread:$0]  %s6, 4608, %s50, [#allocation5], 64, 64, 4
    $region29: #{optimized_bottleneck_processor.1} parent=1 // pred_fallthru
      _
    // Predicated region
    $region30: #{optimized_bottleneck_processor.1} parent=1 // pred_check
      _
    $region31: #{optimized_bottleneck_processor.1} parent=1 // pred_check_branch
      %57 = sbr.rel (0) target = $region33
    $region32: #{optimized_bottleneck_processor.1} parent=1 // pred_region
      %s59 = ssub.s32 11264, 11264
      %60 = vsyncadd [#allocation5], %s59
      %s61 = sshll.u32 [#allocation6], 4
      %s62 = int_to_ptr.vmem [resolvable:$true] %s61
      %67 = dma.hbm_to_vmem [thread:$0]  %s7, 11264, %s62, [#allocation5], 64, 64, 4
    $region33: #{optimized_bottleneck_processor.1} parent=1 // pred_fallthru
      _
    // Predicated region
    $region34: #{optimized_bottleneck_processor.1} parent=1 // pred_check
      _
    $region35: #{optimized_bottleneck_processor.1} parent=1 // pred_check_branch
      %69 = sbr.rel (0) target = $region37
    $region36: #{optimized_bottleneck_processor.1} parent=1 // pred_region
      _
    $region37: #{optimized_bottleneck_processor.1} parent=1 // pred_fallthru
      _
    // Predicated region
    $region38: #{optimized_bottleneck_processor.1} parent=1 // pred_check
      _
    $region39: #{optimized_bottleneck_processor.1} parent=1 // pred_check_branch
      %71 = sbr.rel (0) target = $region41
    $region40: #{optimized_bottleneck_processor.1} parent=1 // pred_region
      %s73 = ssub.s32 2048, 2048
      %74 = vsyncadd [#allocation8], %s73
      %s75 = sshll.u32 [#allocation7], 4
      %s76 = int_to_ptr.vmem [resolvable:$true] %s75
      %81 = dma.hbm_to_vmem [thread:$0]  %s9, 2048, %s76, [#allocation8], 128, 128, 8
    $region41: #{optimized_bottleneck_processor.1} parent=1 // pred_fallthru
      _
    // Predicated region
    $region42: #{optimized_bottleneck_processor.1} parent=1 // pred_check
      _
    $region43: #{optimized_bottleneck_processor.1} parent=1 // pred_check_branch
      %83 = sbr.rel (0) target = $region45
    $region44: #{optimized_bottleneck_processor.1} parent=1 // pred_region
      %s85 = ssub.s32 8192, 8192
      %86 = vsyncadd [#allocation8], %s85
      %s87 = sshll.u32 [#allocation9], 4
      %s88 = int_to_ptr.vmem [resolvable:$true] %s87
      %93 = dma.hbm_to_vmem [thread:$0]  %s10, 8192, %s88, [#allocation8], 256, 256, 16
    $region45: #{optimized_bottleneck_processor.1} parent=1 // pred_fallthru
      _
    // Predicated region
    $region46: #{optimized_bottleneck_processor.1} parent=1 // pred_check
      _
    $region47: #{optimized_bottleneck_processor.1} parent=1 // pred_check_branch
      %95 = sbr.rel (0) target = $region49
    $region48: #{optimized_bottleneck_processor.1} parent=1 // pred_region
      %s97 = ssub.s32 256, 256
      %98 = vsyncadd [#allocation11], %s97
      %s99 = sshll.u32 [#allocation10], 4
      %s100 = int_to_ptr.vmem [resolvable:$true] %s99
      %105 = dma.hbm_to_vmem [thread:$0]  %s11, 256, %s100, [#allocation11], 128, 128, 8
    $region49: #{optimized_bottleneck_processor.1} parent=1 // pred_fallthru
      _
    // Predicated region
    $region50: #{optimized_bottleneck_processor.1} parent=1 // pred_check
      _
    $region51: #{optimized_bottleneck_processor.1} parent=1 // pred_check_branch
      %107 = sbr.rel (0) target = $region53
    $region52: #{optimized_bottleneck_processor.1} parent=1 // pred_region
      %s109 = ssub.s32 128, 128
      %110 = vsyncadd [#allocation11], %s109
      %s112 = sshll.u32 [#allocation12], 4
      %s113 = int_to_ptr.vmem [resolvable:$true] %s112
      %115 = dma.hbm_to_vmem [thread:$0]  %s12, 128, %s113, [#allocation11]
    $region53: #{optimized_bottleneck_processor.1} parent=1 // pred_fallthru
      _
    // Predicated region
    $region54: #{optimized_bottleneck_processor.1} parent=1 // pred_check
      _
    $region55: #{optimized_bottleneck_processor.1} parent=1 // pred_check_branch
      %117 = sbr.rel (0) target = $region57
    $region56: #{optimized_bottleneck_processor.1} parent=1 // pred_region
      %118 = dma.done [#allocation3], 256
    $region57: #{optimized_bottleneck_processor.1} parent=1 // pred_fallthru
      _
    // Predicated region
    $region58: #{optimized_bottleneck_processor.1} parent=1 // pred_check
      _
    $region59: #{optimized_bottleneck_processor.1} parent=1 // pred_check_branch
      %120 = sbr.rel (0) target = $region61
    $region60: #{optimized_bottleneck_processor.1} parent=1 // pred_region
      %121 = dma.done [#allocation5], 4608
    $region61: #{optimized_bottleneck_processor.1} parent=1 // pred_fallthru
      _
    // Predicated region
    $region62: #{optimized_bottleneck_processor.1} parent=1 // pred_check
      _
    $region63: #{optimized_bottleneck_processor.1} parent=1 // pred_check_branch
      %123 = sbr.rel (0) target = $region65
    $region64: #{optimized_bottleneck_processor.1} parent=1 // pred_region
      %124 = dma.done [#allocation5], 11264
    $region65: #{optimized_bottleneck_processor.1} parent=1 // pred_fallthru
      _
    // Predicated region
    $region66: #{optimized_bottleneck_processor.1} parent=1 // pred_check
      _
    $region67: #{optimized_bottleneck_processor.1} parent=1 // pred_check_branch
      %126 = sbr.rel (0) target = $region69
    $region68: #{optimized_bottleneck_processor.1} parent=1 // pred_region
      %127 = dma.done [#allocation8], 2048
    $region69: #{optimized_bottleneck_processor.1} parent=1 // pred_fallthru
      _
    // Predicated region
    $region70: #{optimized_bottleneck_processor.1} parent=1 // pred_check
      _
    $region71: #{optimized_bottleneck_processor.1} parent=1 // pred_check_branch
      %129 = sbr.rel (0) target = $region73
    $region72: #{optimized_bottleneck_processor.1} parent=1 // pred_region
      %130 = dma.done [#allocation8], 8192
    $region73: #{optimized_bottleneck_processor.1} parent=1 // pred_fallthru
      _
    // Predicated region
    $region74: #{optimized_bottleneck_processor.1} parent=1 // pred_check
      _
    $region75: #{optimized_bottleneck_processor.1} parent=1 // pred_check_branch
      %132 = sbr.rel (0) target = $region77
    $region76: #{optimized_bottleneck_processor.1} parent=1 // pred_region
      %133 = dma.done [#allocation11], 256
    $region77: #{optimized_bottleneck_processor.1} parent=1 // pred_fallthru
      _
    // Predicated region
    $region78: #{optimized_bottleneck_processor.1} parent=1 // pred_check
      _
    $region79: #{optimized_bottleneck_processor.1} parent=1 // pred_check_branch
      %135 = sbr.rel (0) target = $region81
    $region80: #{optimized_bottleneck_processor.1} parent=1 // pred_region
      %136 = dma.done [#allocation11], 128
    $region81: #{optimized_bottleneck_processor.1} parent=1 // pred_fallthru
      _
    %v138 = vld [vmem:[%s0] sm:$0xff]
    %v139 = vld [vmem:[%s0 + $0x8] sm:$0xff]
    %v140 = vld [vmem:[%s2] sm:$0x1]
    %v141 = vld [vmem:[%s3] sm:$0xff]
    %v142 = vld [vmem:[%s3 + $0x8] sm:$0xff]
    %v143 = vld [vmem:[%s4] sm:$0xff]
    %v144 = vld [vmem:[%s4 + $0x8] sm:$0xff]
    %v145 = vld [vmem:[#allocation2] sm:$0xff]
    %v146 = vld [vmem:[#allocation2 + $0x8] sm:$0xff]
    %v147 = vld [vmem:[#allocation7] sm:$0xff]
    %v148 = vld [vmem:[#allocation7 + $0x8] sm:$0xff]
    %v149 = vld [vmem:[#allocation7 + $0x10] sm:$0xff]
    %v150 = vld [vmem:[#allocation7 + $0x18] sm:$0xff]
    %v151 = vld [vmem:[#allocation7 + $0x20] sm:$0xff]
    %v152 = vld [vmem:[#allocation7 + $0x28] sm:$0xff]
    %v153 = vld [vmem:[#allocation7 + $0x30] sm:$0xff]
    %v154 = vld [vmem:[#allocation7 + $0x38] sm:$0xff]
    %v155 = vld [vmem:[#allocation7 + $0x40] sm:$0xff]
    %v156 = vld [vmem:[#allocation7 + $0x48] sm:$0xff]
    %v157 = vld [vmem:[#allocation7 + $0x50] sm:$0xff]
    %v158 = vld [vmem:[#allocation7 + $0x58] sm:$0xff]
    %v159 = vld [vmem:[#allocation7 + $0x60] sm:$0xff]
    %v160 = vld [vmem:[#allocation7 + $0x68] sm:$0xff]
    %v161 = vld [vmem:[#allocation7 + $0x70] sm:$0xff]
    %v162 = vld [vmem:[#allocation7 + $0x78] sm:$0xff]
    %v163 = vld [vmem:[#allocation9] sm:$0xff]
    %v164 = vld [vmem:[#allocation9 + $0x8] sm:$0xff]
    %v165 = vld [vmem:[#allocation9 + $0x10] sm:$0xff]
    %v166 = vld [vmem:[#allocation9 + $0x18] sm:$0xff]
    %v167 = vld [vmem:[#allocation9 + $0x20] sm:$0xff]
    %v168 = vld [vmem:[#allocation9 + $0x28] sm:$0xff]
    %v169 = vld [vmem:[#allocation9 + $0x30] sm:$0xff]
    %v170 = vld [vmem:[#allocation9 + $0x38] sm:$0xff]
    %v171 = vld [vmem:[#allocation9 + $0x40] sm:$0xff]
    %v172 = vld [vmem:[#allocation9 + $0x48] sm:$0xff]
    %v173 = vld [vmem:[#allocation9 + $0x50] sm:$0xff]
    %v174 = vld [vmem:[#allocation9 + $0x58] sm:$0xff]
    %v175 = vld [vmem:[#allocation9 + $0x60] sm:$0xff]
    %v176 = vld [vmem:[#allocation9 + $0x68] sm:$0xff]
    %v177 = vld [vmem:[#allocation9 + $0x70] sm:$0xff]
    %v178 = vld [vmem:[#allocation9 + $0x78] sm:$0xff]
    %v179 = vld [vmem:[#allocation9 + $0x80] sm:$0xff]
    %v180 = vld [vmem:[#allocation9 + $0x88] sm:$0xff]
    %v181 = vld [vmem:[#allocation9 + $0x90] sm:$0xff]
    %v182 = vld [vmem:[#allocation9 + $0x98] sm:$0xff]
    %v183 = vld [vmem:[#allocation9 + $0xa0] sm:$0xff]
    %v184 = vld [vmem:[#allocation9 + $0xa8] sm:$0xff]
    %v185 = vld [vmem:[#allocation9 + $0xb0] sm:$0xff]
    %v186 = vld [vmem:[#allocation9 + $0xb8] sm:$0xff]
    %v187 = vld [vmem:[#allocation9 + $0xc0] sm:$0xff]
    %v188 = vld [vmem:[#allocation9 + $0xc8] sm:$0xff]
    %v189 = vld [vmem:[#allocation9 + $0xd0] sm:$0xff]
    %v190 = vld [vmem:[#allocation9 + $0xd8] sm:$0xff]
    %v191 = vld [vmem:[#allocation9 + $0xe0] sm:$0xff]
    %v192 = vld [vmem:[#allocation9 + $0xe8] sm:$0xff]
    %v193 = vld [vmem:[#allocation9 + $0xf0] sm:$0xff]
    %v194 = vld [vmem:[#allocation9 + $0xf8] sm:$0xff]
    %v195 = vld [vmem:[#allocation9 + $0x100] sm:$0xff]
    %v196 = vld [vmem:[#allocation9 + $0x108] sm:$0xff]
    %v197 = vld [vmem:[#allocation9 + $0x110] sm:$0xff]
    %v198 = vld [vmem:[#allocation9 + $0x118] sm:$0xff]
    %v199 = vld [vmem:[#allocation9 + $0x120] sm:$0xff]
    %v200 = vld [vmem:[#allocation9 + $0x128] sm:$0xff]
    %v201 = vld [vmem:[#allocation9 + $0x130] sm:$0xff]
    %v202 = vld [vmem:[#allocation9 + $0x138] sm:$0xff]
    %v203 = vld [vmem:[#allocation9 + $0x140] sm:$0xff]
    %v204 = vld [vmem:[#allocation9 + $0x148] sm:$0xff]
    %v205 = vld [vmem:[#allocation9 + $0x150] sm:$0xff]
    %v206 = vld [vmem:[#allocation9 + $0x158] sm:$0xff]
    %v207 = vld [vmem:[#allocation9 + $0x160] sm:$0xff]
    %v208 = vld [vmem:[#allocation9 + $0x168] sm:$0xff]
    %v209 = vld [vmem:[#allocation9 + $0x170] sm:$0xff]
    %v210 = vld [vmem:[#allocation9 + $0x178] sm:$0xff]
    %v211 = vld [vmem:[#allocation9 + $0x180] sm:$0xff]
    %v212 = vld [vmem:[#allocation9 + $0x188] sm:$0xff]
    %v213 = vld [vmem:[#allocation9 + $0x190] sm:$0xff]
    %v214 = vld [vmem:[#allocation9 + $0x198] sm:$0xff]
    %v215 = vld [vmem:[#allocation9 + $0x1a0] sm:$0xff]
    %v216 = vld [vmem:[#allocation9 + $0x1a8] sm:$0xff]
    %v217 = vld [vmem:[#allocation9 + $0x1b0] sm:$0xff]
    %v218 = vld [vmem:[#allocation9 + $0x1b8] sm:$0xff]
    %v219 = vld [vmem:[#allocation9 + $0x1c0] sm:$0xff]
    %v220 = vld [vmem:[#allocation9 + $0x1c8] sm:$0xff]
    %v221 = vld [vmem:[#allocation9 + $0x1d0] sm:$0xff]
    %v222 = vld [vmem:[#allocation9 + $0x1d8] sm:$0xff]
    %v223 = vld [vmem:[#allocation9 + $0x1e0] sm:$0xff]
    %v224 = vld [vmem:[#allocation9 + $0x1e8] sm:$0xff]
    %v225 = vld [vmem:[#allocation9 + $0x1f0] sm:$0xff]
    %v226 = vld [vmem:[#allocation9 + $0x1f8] sm:$0xff]
    %v227 = vld [vmem:[#allocation10] sm:$0x1]
    %v228 = vld [vmem:[#allocation10 + $0x1] sm:$0x1]
    %229 = vmatprep.subr.mxu0 0.0
    %230 = vmatpush1.msra.mxu0 %v147
    %231 = vmatprep.subr.mxu0 0.0
    %232 = vmatpush1.msra.mxu0 %v148
    %233 = vmatprep.subr.mxu0 0.0
    %234 = vmatpush1.msra.mxu0 %v149
    %235 = vmatprep.subr.mxu0 0.0
    %236 = vmatpush1.msra.mxu0 %v150
    %237 = vmatprep.subr.mxu0 0.0
    %238 = vmatpush1.msra.mxu0 %v151
    %239 = vmatprep.subr.mxu0 0.0
    %240 = vmatpush1.msra.mxu0 %v152
    %241 = vmatprep.subr.mxu0 0.0
    %242 = vmatpush1.msra.mxu0 %v153
    %243 = vmatprep.subr.mxu0 0.0
    %244 = vmatpush1.msra.mxu0 %v154
    %245 = vmatprep.subr.mxu0 0.0
    %246 = vmatpush1.msra.mxu0 %v155
    %247 = vmatprep.subr.mxu0 0.0
    %248 = vmatpush1.msra.mxu0 %v156
    %249 = vmatprep.subr.mxu0 0.0
    %250 = vmatpush1.msra.mxu0 %v157
    %251 = vmatprep.subr.mxu0 0.0
    %252 = vmatpush1.msra.mxu0 %v158
    %253 = vmatprep.subr.mxu0 0.0
    %254 = vmatpush1.msra.mxu0 %v159
    %255 = vmatprep.subr.mxu0 0.0
    %256 = vmatpush1.msra.mxu0 %v160
    %257 = vmatprep.subr.mxu0 0.0
    %258 = vmatpush1.msra.mxu0 %v161
    %259 = vmatprep.subr.mxu0 0.0
    %260 = vmatpush1.msra.mxu0 %v162
    %261 = vmatprep.subr.mxu0 0.0
    %262 = vmatpush1.msra.mxu0 0.0
    %263 = vmatprep.subr.mxu0 0.0
    %264 = vmatpush1.msra.mxu0 0.0
    %265 = vmatprep.subr.mxu0 0.0
    %266 = vmatpush1.msra.mxu0 0.0
    %267 = vmatprep.subr.mxu0 0.0
    %268 = vmatpush1.msra.mxu0 0.0
    %269 = vmatprep.subr.mxu0 0.0
    %270 = vmatpush1.msra.mxu0 0.0
    %271 = vmatprep.subr.mxu0 0.0
    %272 = vmatpush1.msra.mxu0 0.0
    %273 = vmatprep.subr.mxu0 0.0
    %274 = vmatpush1.msra.mxu0 0.0
    %275 = vmatprep.subr.mxu0 0.0
    %276 = vmatpush1.msra.mxu0 0.0
    %277 = vmatprep.subr.mxu0 0.0
    %278 = vmatpush1.msra.mxu0 0.0
    %279 = vmatprep.subr.mxu0 0.0
    %280 = vmatpush1.msra.mxu0 0.0
    %281 = vmatprep.subr.mxu0 0.0
    %282 = vmatpush1.msra.mxu0 0.0
    %283 = vmatprep.subr.mxu0 0.0
    %284 = vmatpush1.msra.mxu0 0.0
    %285 = vmatprep.subr.mxu0 0.0
    %286 = vmatpush1.msra.mxu0 0.0
    %287 = vmatprep.subr.mxu0 0.0
    %288 = vmatpush1.msra.mxu0 0.0
    %289 = vmatprep.subr.mxu0 0.0
    %290 = vmatpush1.msra.mxu0 0.0
    %291 = vmatprep.subr.mxu0 0.0
    %292 = vmatpush1.msra.mxu0 0.0
    %293 = vmatprep.mubr.f32.mxu0 0.0
    %294 = vmatmul.mubr.f32.gmra.mrb[0].mxu0 %v138
    %v295 = vpop.f32.mrb[0].mxu0
    %v296 = vadd.f32 0.0, %v295
    %v297 = vpop.f32.mrb[0].mxu0
    %298 = vmatprep.mubr.f32.mxu0 0.0
    %299 = vmatmul.mubr.f32.gmra.mrb[0].mxu0 %v139
    %v300 = vpop.f32.mrb[0].mxu0
    %v301 = vadd.f32 0.0, %v300
    %v302 = vpop.f32.mrb[0].mxu0
    %303 = vdwg.mxu0
    %v304 = vsub.f32 %v138, %v296
    %v305 = vsub.f32 %v139, %v301
    %v306 = vmul.f32 %v304, %v304
    %v307 = vmul.f32 %v305, %v305
    %308 = vmatprep.subr.mxu0 0.0
    %309 = vmatpush1.msra.mxu0 %v147
    %310 = vmatprep.subr.mxu0 0.0
    %311 = vmatpush1.msra.mxu0 %v148
    %312 = vmatprep.subr.mxu0 0.0
    %313 = vmatpush1.msra.mxu0 %v149
    %314 = vmatprep.subr.mxu0 0.0
    %315 = vmatpush1.msra.mxu0 %v150
    %316 = vmatprep.subr.mxu0 0.0
    %317 = vmatpush1.msra.mxu0 %v151
    %318 = vmatprep.subr.mxu0 0.0
    %319 = vmatpush1.msra.mxu0 %v152
    %320 = vmatprep.subr.mxu0 0.0
    %321 = vmatpush1.msra.mxu0 %v153
    %322 = vmatprep.subr.mxu0 0.0
    %323 = vmatpush1.msra.mxu0 %v154
    %324 = vmatprep.subr.mxu0 0.0
    %325 = vmatpush1.msra.mxu0 %v155
    %326 = vmatprep.subr.mxu0 0.0
    %327 = vmatpush1.msra.mxu0 %v156
    %328 = vmatprep.subr.mxu0 0.0
    %329 = vmatpush1.msra.mxu0 %v157
    %330 = vmatprep.subr.mxu0 0.0
    %331 = vmatpush1.msra.mxu0 %v158
    %332 = vmatprep.subr.mxu0 0.0
    %333 = vmatpush1.msra.mxu0 %v159
    %334 = vmatprep.subr.mxu0 0.0
    %335 = vmatpush1.msra.mxu0 %v160
    %336 = vmatprep.subr.mxu0 0.0
    %337 = vmatpush1.msra.mxu0 %v161
    %338 = vmatprep.subr.mxu0 0.0
    %339 = vmatpush1.msra.mxu0 %v162
    %340 = vmatprep.subr.mxu0 0.0
    %341 = vmatpush1.msra.mxu0 0.0
    %342 = vmatprep.subr.mxu0 0.0
    %343 = vmatpush1.msra.mxu0 0.0
    %344 = vmatprep.subr.mxu0 0.0
    %345 = vmatpush1.msra.mxu0 0.0
    %346 = vmatprep.subr.mxu0 0.0
    %347 = vmatpush1.msra.mxu0 0.0
    %348 = vmatprep.subr.mxu0 0.0
    %349 = vmatpush1.msra.mxu0 0.0
    %350 = vmatprep.subr.mxu0 0.0
    %351 = vmatpush1.msra.mxu0 0.0
    %352 = vmatprep.subr.mxu0 0.0
    %353 = vmatpush1.msra.mxu0 0.0
    %354 = vmatprep.subr.mxu0 0.0
    %355 = vmatpush1.msra.mxu0 0.0
    %356 = vmatprep.subr.mxu0 0.0
    %357 = vmatpush1.msra.mxu0 0.0
    %358 = vmatprep.subr.mxu0 0.0
    %359 = vmatpush1.msra.mxu0 0.0
    %360 = vmatprep.subr.mxu0 0.0
    %361 = vmatpush1.msra.mxu0 0.0
    %362 = vmatprep.subr.mxu0 0.0
    %363 = vmatpush1.msra.mxu0 0.0
    %364 = vmatprep.subr.mxu0 0.0
    %365 = vmatpush1.msra.mxu0 0.0
    %366 = vmatprep.subr.mxu0 0.0
    %367 = vmatpush1.msra.mxu0 0.0
    %368 = vmatprep.subr.mxu0 0.0
    %369 = vmatpush1.msra.mxu0 0.0
    %370 = vmatprep.subr.mxu0 0.0
    %371 = vmatpush1.msra.mxu0 0.0
    %372 = vmatprep.mubr.f32.mxu0 0.0
    %373 = vmatmul.mubr.f32.gmra.mrb[0].mxu0 %v306
    %v374 = vpop.f32.mrb[0].mxu0
    %v375 = vadd.f32 1e-05, %v374
    %v376 = vpop.f32.mrb[0].mxu0
    %377 = vmatprep.mubr.f32.mxu0 0.0
    %378 = vmatmul.mubr.f32.gmra.mrb[0].mxu0 %v307
    %v379 = vpop.f32.mrb[0].mxu0
    %v380 = vadd.f32 1e-05, %v379
    %v381 = vpop.f32.mrb[0].mxu0
    %382 = vdwg.mxu0
    %v383 = vrsqrt.pop %v375
    %v384 = vrsqrt.pop %v380
    %v385 = vmul.f32 %v304, %v383
    %v386 = vmul.f32 %v305, %v384
    %v387 = vlaneseq
    %v388 = vshrl.u32 %v387, 7
    %v389 = vsub.s32 0, %v388
    %v390 = vrot.slane %v227, %v389
    %v391 = vmul.f32 %v385, %v390
    %v392 = vmul.f32 %v386, %v390
    %v393 = vlaneseq
    %v394 = vshrl.u32 %v393, 7
    %v395 = vsub.s32 0, %v394
    %v396 = vrot.slane %v228, %v395
    %v397 = vadd.f32 %v391, %v396
    %v398 = vadd.f32 %v392, %v396
    %v399 = vld [vmem:[#allocation4] sm:$0xf]
    %v400 = vld [vmem:[#allocation4 + $0x4] sm:$0xf]
    %v401 = vunpack.c.l.bf16 %v399
    %v402 = vunpack.c.l.bf16 %v400
    %v403 = vlaneseq
    %v404 = vshrl.u32 %v403, 7
    %v405 = vsub.s32 0, %v404
    %v406 = vrot.slane %v397, %v405
    %v407 = vmul.f32 %v401, %v406
    %v408 = vmul.f32 %v402, %v406
    %v409 = vadd.f32 %v407, 0.0
    %v410 = vadd.f32 %v408, 0.0
    %s411 = scalar_lea.vmem [#allocation4], 8
    %v412 = vld [vmem:[%s411] sm:$0xf]
    %v413 = vld [vmem:[%s411 + $0x4] sm:$0xf]
    %v414 = vunpack.c.l.bf16 %v412
    %v415 = vunpack.c.l.bf16 %v413
    %v416 = vlaneseq
    %v417 = vshrl.u32 %v416, 7
    %v418 = vsub.s32 1, %v417
    %v419 = vrot.slane %v397, %v418
    %v420 = vmul.f32 %v414, %v419
    %v421 = vmul.f32 %v415, %v419
    %v422 = vadd.f32 %v409, %v420
    %v423 = vadd.f32 %v410, %v421
    %s424 = scalar_lea.vmem [#allocation4], 16
    %v425 = vld [vmem:[%s424] sm:$0xf]
    %v426 = vld [vmem:[%s424 + $0x4] sm:$0xf]
    %v427 = vunpack.c.l.bf16 %v425
    %v428 = vunpack.c.l.bf16 %v426
    %v429 = vlaneseq
    %v430 = vshrl.u32 %v429, 7
    %v431 = vsub.s32 2, %v430
    %v432 = vrot.slane %v397, %v431
    %v433 = vmul.f32 %v427, %v432
    %v434 = vmul.f32 %v428, %v432
    %v435 = vadd.f32 %v422, %v433
    %v436 = vadd.f32 %v423, %v434
    %s437 = scalar_lea.vmem [#allocation4], 24
    %v438 = vld [vmem:[%s437] sm:$0xf]
    %v439 = vld [vmem:[%s437 + $0x4] sm:$0xf]
    %v440 = vunpack.c.l.bf16 %v438
    %v441 = vunpack.c.l.bf16 %v439
    %v442 = vlaneseq
    %v443 = vshrl.u32 %v442, 7
    %v444 = vsub.s32 3, %v443
    %v445 = vrot.slane %v397, %v444
    %v446 = vmul.f32 %v440, %v445
    %v447 = vmul.f32 %v441, %v445
    %v448 = vadd.f32 %v435, %v446
    %v449 = vadd.f32 %v436, %v447
    %s450 = scalar_lea.vmem [#allocation4], 32
    %v451 = vld [vmem:[%s450] sm:$0xf]
    %v452 = vld [vmem:[%s450 + $0x4] sm:$0xf]
    %v453 = vunpack.c.l.bf16 %v451
    %v454 = vunpack.c.l.bf16 %v452
    %v455 = vlaneseq
    %v456 = vshrl.u32 %v455, 7
    %v457 = vsub.s32 4, %v456
    %v458 = vrot.slane %v397, %v457
    %v459 = vmul.f32 %v453, %v458
    %v460 = vmul.f32 %v454, %v458
    %v461 = vadd.f32 %v448, %v459
    %v462 = vadd.f32 %v449, %v460
    %s463 = scalar_lea.vmem [#allocation4], 40
    %v464 = vld [vmem:[%s463] sm:$0xf]
    %v465 = vld [vmem:[%s463 + $0x4] sm:$0xf]
    %v466 = vunpack.c.l.bf16 %v464
    %v467 = vunpack.c.l.bf16 %v465
    %v468 = vlaneseq
    %v469 = vshrl.u32 %v468, 7
    %v470 = vsub.s32 5, %v469
    %v471 = vrot.slane %v397, %v470
    %v472 = vmul.f32 %v466, %v471
    %v473 = vmul.f32 %v467, %v471
    %v474 = vadd.f32 %v461, %v472
    %v475 = vadd.f32 %v462, %v473
    %s476 = scalar_lea.vmem [#allocation4], 48
    %v477 = vld [vmem:[%s476] sm:$0xf]
    %v478 = vld [vmem:[%s476 + $0x4] sm:$0xf]
    %v479 = vunpack.c.l.bf16 %v477
    %v480 = vunpack.c.l.bf16 %v478
    %v481 = vlaneseq
    %v482 = vshrl.u32 %v481, 7
    %v483 = vsub.s32 6, %v482
    %v484 = vrot.slane %v397, %v483
    %v485 = vmul.f32 %v479, %v484
    %v486 = vmul.f32 %v480, %v484
    %v487 = vadd.f32 %v474, %v485
    %v488 = vadd.f32 %v475, %v486
    %s489 = scalar_lea.vmem [#allocation4], 56
    %v490 = vld [vmem:[%s489] sm:$0xf]
    %v491 = vld [vmem:[%s489 + $0x4] sm:$0xf]
    %v492 = vunpack.c.l.bf16 %v490
    %v493 = vunpack.c.l.bf16 %v491
    %v494 = vlaneseq
    %v495 = vshrl.u32 %v494, 7
    %v496 = vsub.s32 7, %v495
    %v497 = vrot.slane %v397, %v496
    %v498 = vmul.f32 %v492, %v497
    %v499 = vmul.f32 %v493, %v497
    %v500 = vadd.f32 %v487, %v498
    %v501 = vadd.f32 %v488, %v499
    %s502 = scalar_lea.vmem [#allocation4], 64
    %v503 = vld [vmem:[%s502] sm:$0xf]
    %v504 = vld [vmem:[%s502 + $0x4] sm:$0xf]
    %v505 = vunpack.c.l.bf16 %v503
    %v506 = vunpack.c.l.bf16 %v504
    %v507 = vlaneseq
    %v508 = vshrl.u32 %v507, 7
    %v509 = vsub.s32 0, %v508
    %v510 = vrot.slane %v398, %v509
    %v511 = vmul.f32 %v505, %v510
    %v512 = vmul.f32 %v506, %v510
    %v513 = vadd.f32 %v500, %v511
    %v514 = vadd.f32 %v501, %v512
    %s515 = scalar_lea.vmem [#allocation4], 72
    %v516 = vld [vmem:[%s515] sm:$0xf]
    %v517 = vld [vmem:[%s515 + $0x4] sm:$0xf]
    %v518 = vunpack.c.l.bf16 %v516
    %v519 = vunpack.c.l.bf16 %v517
    %v520 = vlaneseq
    %v521 = vshrl.u32 %v520, 7
    %v522 = vsub.s32 1, %v521
    %v523 = vrot.slane %v398, %v522
    %v524 = vmul.f32 %v518, %v523
    %v525 = vmul.f32 %v519, %v523
    %v526 = vadd.f32 %v513, %v524
    %v527 = vadd.f32 %v514, %v525
    %s528 = scalar_lea.vmem [#allocation4], 80
    %v529 = vld [vmem:[%s528] sm:$0xf]
    %v530 = vld [vmem:[%s528 + $0x4] sm:$0xf]
    %v531 = vunpack.c.l.bf16 %v529
    %v532 = vunpack.c.l.bf16 %v530
    %v533 = vlaneseq
    %v534 = vshrl.u32 %v533, 7
    %v535 = vsub.s32 2, %v534
    %v536 = vrot.slane %v398, %v535
    %v537 = vmul.f32 %v531, %v536
    %v538 = vmul.f32 %v532, %v536
    %v539 = vadd.f32 %v526, %v537
    %v540 = vadd.f32 %v527, %v538
    %s541 = scalar_lea.vmem [#allocation4], 88
    %v542 = vld [vmem:[%s541] sm:$0xf]
    %v543 = vld [vmem:[%s541 + $0x4] sm:$0xf]
    %v544 = vunpack.c.l.bf16 %v542
    %v545 = vunpack.c.l.bf16 %v543
    %v546 = vlaneseq
    %v547 = vshrl.u32 %v546, 7
    %v548 = vsub.s32 3, %v547
    %v549 = vrot.slane %v398, %v548
    %v550 = vmul.f32 %v544, %v549
    %v551 = vmul.f32 %v545, %v549
    %v552 = vadd.f32 %v539, %v550
    %v553 = vadd.f32 %v540, %v551
    %v554 = vld [vmem:[#allocation10 + $0x2] sm:$0x1]
    %v555 = vlaneseq
    %v556 = vshrl.u32 %v555, 7
    %v557 = vsub.s32 0, %v556
    %v558 = vrot.slane %v554, %v557
    %v559 = vmul.f32 %v397, %v558
    %v560 = vmul.f32 %v398, %v558
    %v561 = vadd.f32 %v552, %v559
    %v562 = vadd.f32 %v553, %v560
    %v563 = vmul.f32 %v561, 0.5
    %v564 = vmul.f32 %v562, 0.5
    %v565 = vmul.f32 %v561, 0.044715
    %v566 = vmul.f32 %v562, 0.044715
    %v567 = vmul.f32 %v565, %v561
    %v568 = vmul.f32 %v566, %v562
    %v569 = vmul.f32 %v567, %v561
    %v570 = vmul.f32 %v568, %v562
    %v571 = vadd.f32 %v561, %v569
    %v572 = vadd.f32 %v562, %v570
    %v573 = vmul.f32 %v571, 0.7978846
    %v574 = vmul.f32 %v572, 0.7978846
    %v575 = vtanh.pop %v573
    %v576 = vtanh.pop %v574
    %v577 = vadd.f32 %v575, 1.0
    %v578 = vadd.f32 %v576, 1.0
    %v579 = vmul.f32 %v563, %v577
    %v580 = vmul.f32 %v564, %v578
    %v581 = vld [vmem:[#allocation6] sm:$0xf]
    %v582 = vld [vmem:[#allocation6 + $0x4] sm:$0xf]
    %v583 = vld [vmem:[#allocation6 + $0x8] sm:$0xf]
    %v584 = vld [vmem:[#allocation6 + $0xc] sm:$0xf]
    %v585 = vld [vmem:[#allocation6 + $0x10] sm:$0xf]
    %v586 = vld [vmem:[#allocation6 + $0x14] sm:$0xf]
    %v587 = vld [vmem:[#allocation6 + $0x18] sm:$0xf]
    %v588 = vld [vmem:[#allocation6 + $0x1c] sm:$0xf]
    %v589 = vld [vmem:[#allocation6 + $0x20] sm:$0xf]
    %v590 = vld [vmem:[#allocation6 + $0x24] sm:$0xf]
    %v591 = vld [vmem:[#allocation6 + $0x28] sm:$0xf]
    %v592 = vld [vmem:[#allocation6 + $0x2c] sm:$0xf]
    %v593 = vld [vmem:[#allocation6 + $0x30] sm:$0xf]
    %v594 = vld [vmem:[#allocation6 + $0x34] sm:$0xf]
    %v595 = vld [vmem:[#allocation6 + $0x38] sm:$0xf]
    %v596 = vld [vmem:[#allocation6 + $0x3c] sm:$0xf]
    %v597 = vpack.c.bf16 %v580, %v579
    %v614 = vunpack.c.l.b16 %v581
    %v615 = vunpack.c.l.b16 %v582
    %v616 = vunpack.c.l.b16 %v583
    %v617 = vunpack.c.l.b16 %v584
    %v618 = vunpack.c.l.b16 %v585
    %v619 = vunpack.c.l.b16 %v586
    %v620 = vunpack.c.l.b16 %v587
    %v621 = vunpack.c.l.b16 %v588
    %v622 = vunpack.c.l.b16 %v589
    %v623 = vunpack.c.l.b16 %v590
    %v624 = vunpack.c.l.b16 %v591
    %v625 = vunpack.c.l.b16 %v592
    %v626 = vunpack.c.l.b16 %v593
    %v627 = vunpack.c.l.b16 %v594
    %v628 = vunpack.c.l.b16 %v595
    %v629 = vunpack.c.l.b16 %v596
    %v630 = vpack.c.b16 %v615, %v614
    %v631 = vpack.c.b16 %v617, %v616
    %v632 = vpack.c.b16 %v619, %v618
    %v633 = vpack.c.b16 %v621, %v620
    %v634 = vpack.c.b16 %v623, %v622
    %v635 = vpack.c.b16 %v625, %v624
    %v636 = vpack.c.b16 %v627, %v626
    %v637 = vpack.c.b16 %v629, %v628
    %646 = vmatprep.subr.bf16.mxu0 0
    %647 = vmatpush1.bf16.msra.mxu0 %v630
    %648 = vmatprep.subr.bf16.mxu0 0
    %649 = vmatpush1.bf16.msra.mxu0 %v631
    %650 = vmatprep.subr.bf16.mxu0 0
    %651 = vmatpush1.bf16.msra.mxu0 %v632
    %652 = vmatprep.subr.bf16.mxu0 0
    %653 = vmatpush1.bf16.msra.mxu0 %v633
    %654 = vmatprep.subr.bf16.mxu0 0
    %655 = vmatpush1.bf16.msra.mxu0 %v634
    %656 = vmatprep.subr.bf16.mxu0 0
    %657 = vmatpush1.bf16.msra.mxu0 %v635
    %658 = vmatprep.subr.bf16.mxu0 0
    %659 = vmatpush1.bf16.msra.mxu0 %v636
    %660 = vmatprep.subr.bf16.mxu0 0
    %661 = vmatpush1.bf16.msra.mxu0 %v637
    %662 = vmatprep.subr.bf16.mxu0 0
    %663 = vmatpush1.bf16.msra.mxu0 0
    %664 = vmatprep.subr.bf16.mxu0 0
    %665 = vmatpush1.bf16.msra.mxu0 0
    %666 = vmatprep.subr.bf16.mxu0 0
    %667 = vmatpush1.bf16.msra.mxu0 0
    %668 = vmatprep.subr.bf16.mxu0 0
    %669 = vmatpush1.bf16.msra.mxu0 0
    %670 = vmatprep.subr.bf16.mxu0 0
    %671 = vmatpush1.bf16.msra.mxu0 0
    %672 = vmatprep.subr.bf16.mxu0 0
    %673 = vmatpush1.bf16.msra.mxu0 0
    %674 = vmatprep.subr.bf16.mxu0 0
    %675 = vmatpush1.bf16.msra.mxu0 0
    %676 = vmatprep.subr.bf16.mxu0 0
    %677 = vmatpush1.bf16.msra.mxu0 0
    %678 = vmatprep.mubr.bf16.mxu0 0
    %679 = vmatmul.mubr.bf16.gmra.mrb[0].mxu0 %v597
    %v680 = vpop.f32.mrb[0].mxu0
    %v681 = vadd.f32 0.0, %v680
    %v682 = vpop.f32.mrb[0].mxu0
    %v683 = vpop.f32.mrb[0].mxu0
    %v684 = vadd.f32 0.0, %v683
    %v685 = vpop.f32.mrb[0].mxu0
    %686 = vdwg.mxu0
    %v687 = vadd.f32 %v397, %v681
    %v688 = vadd.f32 %v398, %v684
    %v689 = vld [vmem:[#allocation10 + $0x5] sm:$0x1]
    %v690 = vlaneseq
    %v691 = vshrl.u32 %v690, 7
    %v692 = vsub.s32 0, %v691
    %v693 = vrot.slane %v689, %v692
    %v694 = vadd.f32 %v687, %v693
    %v695 = vadd.f32 %v688, %v693
    %s696 = scalar_lea.vmem [#allocation4], 96
    %v697 = vld [vmem:[%s696] sm:$0xf]
    %v698 = vld [vmem:[%s696 + $0x4] sm:$0xf]
    %v699 = vunpack.c.l.bf16 %v697
    %v700 = vunpack.c.l.bf16 %v698
    %v701 = vlaneseq
    %v702 = vshrl.u32 %v701, 7
    %v703 = vsub.s32 0, %v702
    %v704 = vrot.slane %v694, %v703
    %v705 = vmul.f32 %v699, %v704
    %v706 = vmul.f32 %v700, %v704
    %v707 = vadd.f32 %v705, 0.0
    %v708 = vadd.f32 %v706, 0.0
    %s709 = scalar_lea.vmem [#allocation4], 104
    %v710 = vld [vmem:[%s709] sm:$0xf]
    %v711 = vld [vmem:[%s709 + $0x4] sm:$0xf]
    %v712 = vunpack.c.l.bf16 %v710
    %v713 = vunpack.c.l.bf16 %v711
    %v714 = vlaneseq
    %v715 = vshrl.u32 %v714, 7
    %v716 = vsub.s32 1, %v715
    %v717 = vrot.slane %v694, %v716
    %v718 = vmul.f32 %v712, %v717
    %v719 = vmul.f32 %v713, %v717
    %v720 = vadd.f32 %v707, %v718
    %v721 = vadd.f32 %v708, %v719
    %s722 = scalar_lea.vmem [#allocation4], 112
    %v723 = vld [vmem:[%s722] sm:$0xf]
    %v724 = vld [vmem:[%s722 + $0x4] sm:$0xf]
    %v725 = vunpack.c.l.bf16 %v723
    %v726 = vunpack.c.l.bf16 %v724
    %v727 = vlaneseq
    %v728 = vshrl.u32 %v727, 7
    %v729 = vsub.s32 2, %v728
    %v730 = vrot.slane %v694, %v729
    %v731 = vmul.f32 %v725, %v730
    %v732 = vmul.f32 %v726, %v730
    %v733 = vadd.f32 %v720, %v731
    %v734 = vadd.f32 %v721, %v732
    %s735 = scalar_lea.vmem [#allocation4], 120
    %v736 = vld [vmem:[%s735] sm:$0xf]
    %v737 = vld [vmem:[%s735 + $0x4] sm:$0xf]
    %v738 = vunpack.c.l.bf16 %v736
    %v739 = vunpack.c.l.bf16 %v737
    %v740 = vlaneseq
    %v741 = vshrl.u32 %v740, 7
    %v742 = vsub.s32 3, %v741
    %v743 = vrot.slane %v694, %v742
    %v744 = vmul.f32 %v738, %v743
    %v745 = vmul.f32 %v739, %v743
    %v746 = vadd.f32 %v733, %v744
    %v747 = vadd.f32 %v734, %v745
    %s748 = scalar_lea.vmem [#allocation4], 128
    %v749 = vld [vmem:[%s748] sm:$0xf]
    %v750 = vld [vmem:[%s748 + $0x4] sm:$0xf]
    %v751 = vunpack.c.l.bf16 %v749
    %v752 = vunpack.c.l.bf16 %v750
    %v753 = vlaneseq
    %v754 = vshrl.u32 %v753, 7
    %v755 = vsub.s32 4, %v754
    %v756 = vrot.slane %v694, %v755
    %v757 = vmul.f32 %v751, %v756
    %v758 = vmul.f32 %v752, %v756
    %v759 = vadd.f32 %v746, %v757
    %v760 = vadd.f32 %v747, %v758
    %s761 = scalar_lea.vmem [#allocation4], 136
    %v762 = vld [vmem:[%s761] sm:$0xf]
    %v763 = vld [vmem:[%s761 + $0x4] sm:$0xf]
    %v764 = vunpack.c.l.bf16 %v762
    %v765 = vunpack.c.l.bf16 %v763
    %v766 = vlaneseq
    %v767 = vshrl.u32 %v766, 7
    %v768 = vsub.s32 5, %v767
    %v769 = vrot.slane %v694, %v768
    %v770 = vmul.f32 %v764, %v769
    %v771 = vmul.f32 %v765, %v769
    %v772 = vadd.f32 %v759, %v770
    %v773 = vadd.f32 %v760, %v771
    %s774 = scalar_lea.vmem [#allocation4], 144
    %v775 = vld [vmem:[%s774] sm:$0xf]
    %v776 = vld [vmem:[%s774 + $0x4] sm:$0xf]
    %v777 = vunpack.c.l.bf16 %v775
    %v778 = vunpack.c.l.bf16 %v776
    %v779 = vlaneseq
    %v780 = vshrl.u32 %v779, 7
    %v781 = vsub.s32 6, %v780
    %v782 = vrot.slane %v694, %v781
    %v783 = vmul.f32 %v777, %v782
    %v784 = vmul.f32 %v778, %v782
    %v785 = vadd.f32 %v772, %v783
    %v786 = vadd.f32 %v773, %v784
    %s787 = scalar_lea.vmem [#allocation4], 152
    %v788 = vld [vmem:[%s787] sm:$0xf]
    %v789 = vld [vmem:[%s787 + $0x4] sm:$0xf]
    %v790 = vunpack.c.l.bf16 %v788
    %v791 = vunpack.c.l.bf16 %v789
    %v792 = vlaneseq
    %v793 = vshrl.u32 %v792, 7
    %v794 = vsub.s32 7, %v793
    %v795 = vrot.slane %v694, %v794
    %v796 = vmul.f32 %v790, %v795
    %v797 = vmul.f32 %v791, %v795
    %v798 = vadd.f32 %v785, %v796
    %v799 = vadd.f32 %v786, %v797
    %s800 = scalar_lea.vmem [#allocation4], 160
    %v801 = vld [vmem:[%s800] sm:$0xf]
    %v802 = vld [vmem:[%s800 + $0x4] sm:$0xf]
    %v803 = vunpack.c.l.bf16 %v801
    %v804 = vunpack.c.l.bf16 %v802
    %v805 = vlaneseq
    %v806 = vshrl.u32 %v805, 7
    %v807 = vsub.s32 0, %v806
    %v808 = vrot.slane %v695, %v807
    %v809 = vmul.f32 %v803, %v808
    %v810 = vmul.f32 %v804, %v808
    %v811 = vadd.f32 %v798, %v809
    %v812 = vadd.f32 %v799, %v810
    %s813 = scalar_lea.vmem [#allocation4], 168
    %v814 = vld [vmem:[%s813] sm:$0xf]
    %v815 = vld [vmem:[%s813 + $0x4] sm:$0xf]
    %v816 = vunpack.c.l.bf16 %v814
    %v817 = vunpack.c.l.bf16 %v815
    %v818 = vlaneseq
    %v819 = vshrl.u32 %v818, 7
    %v820 = vsub.s32 1, %v819
    %v821 = vrot.slane %v695, %v820
    %v822 = vmul.f32 %v816, %v821
    %v823 = vmul.f32 %v817, %v821
    %v824 = vadd.f32 %v811, %v822
    %v825 = vadd.f32 %v812, %v823
    %s826 = scalar_lea.vmem [#allocation4], 176
    %v827 = vld [vmem:[%s826] sm:$0xf]
    %v828 = vld [vmem:[%s826 + $0x4] sm:$0xf]
    %v829 = vunpack.c.l.bf16 %v827
    %v830 = vunpack.c.l.bf16 %v828
    %v831 = vlaneseq
    %v832 = vshrl.u32 %v831, 7
    %v833 = vsub.s32 2, %v832
    %v834 = vrot.slane %v695, %v833
    %v835 = vmul.f32 %v829, %v834
    %v836 = vmul.f32 %v830, %v834
    %v837 = vadd.f32 %v824, %v835
    %v838 = vadd.f32 %v825, %v836
    %s839 = scalar_lea.vmem [#allocation4], 184
    %v840 = vld [vmem:[%s839] sm:$0xf]
    %v841 = vld [vmem:[%s839 + $0x4] sm:$0xf]
    %v842 = vunpack.c.l.bf16 %v840
    %v843 = vunpack.c.l.bf16 %v841
    %v844 = vlaneseq
    %v845 = vshrl.u32 %v844, 7
    %v846 = vsub.s32 3, %v845
    %v847 = vrot.slane %v695, %v846
    %v848 = vmul.f32 %v842, %v847
    %v849 = vmul.f32 %v843, %v847
    %v850 = vadd.f32 %v837, %v848
    %v851 = vadd.f32 %v838, %v849
    %v852 = vld [vmem:[#allocation10 + $0x3] sm:$0x1]
    %v853 = vlaneseq
    %v854 = vshrl.u32 %v853, 7
    %v855 = vsub.s32 0, %v854
    %v856 = vrot.slane %v852, %v855
    %v857 = vmul.f32 %v694, %v856
    %v858 = vmul.f32 %v695, %v856
    %v859 = vadd.f32 %v850, %v857
    %v860 = vadd.f32 %v851, %v858
    %v861 = vmul.f32 %v859, 0.5
    %v862 = vmul.f32 %v860, 0.5
    %v863 = vmul.f32 %v859, 0.044715
    %v864 = vmul.f32 %v860, 0.044715
    %v865 = vmul.f32 %v863, %v859
    %v866 = vmul.f32 %v864, %v860
    %v867 = vmul.f32 %v865, %v859
    %v868 = vmul.f32 %v866, %v860
    %v869 = vadd.f32 %v859, %v867
    %v870 = vadd.f32 %v860, %v868
    %v871 = vmul.f32 %v869, 0.7978846
    %v872 = vmul.f32 %v870, 0.7978846
    %v873 = vtanh.pop %v871
    %v874 = vtanh.pop %v872
    %v875 = vadd.f32 %v873, 1.0
    %v876 = vadd.f32 %v874, 1.0
    %v877 = vmul.f32 %v861, %v875
    %v878 = vmul.f32 %v862, %v876
    %v879 = vld [vmem:[#allocation6 + $0x40] sm:$0xf]
    %v880 = vld [vmem:[#allocation6 + $0x44] sm:$0xf]
    %v881 = vld [vmem:[#allocation6 + $0x48] sm:$0xf]
    %v882 = vld [vmem:[#allocation6 + $0x4c] sm:$0xf]
    %v883 = vld [vmem:[#allocation6 + $0x50] sm:$0xf]
    %v884 = vld [vmem:[#allocation6 + $0x54] sm:$0xf]
    %v885 = vld [vmem:[#allocation6 + $0x58] sm:$0xf]
    %v886 = vld [vmem:[#allocation6 + $0x5c] sm:$0xf]
    %v887 = vld [vmem:[#allocation6 + $0x60] sm:$0xf]
    %v888 = vld [vmem:[#allocation6 + $0x64] sm:$0xf]
    %v889 = vld [vmem:[#allocation6 + $0x68] sm:$0xf]
    %v890 = vld [vmem:[#allocation6 + $0x6c] sm:$0xf]
    %v891 = vld [vmem:[#allocation6 + $0x70] sm:$0xf]
    %v892 = vld [vmem:[#allocation6 + $0x74] sm:$0xf]
    %v893 = vld [vmem:[#allocation6 + $0x78] sm:$0xf]
    %v894 = vld [vmem:[#allocation6 + $0x7c] sm:$0xf]
    %v895 = vpack.c.bf16 %v878, %v877
    %v912 = vunpack.c.l.b16 %v879
    %v913 = vunpack.c.l.b16 %v880
    %v914 = vunpack.c.l.b16 %v881
    %v915 = vunpack.c.l.b16 %v882
    %v916 = vunpack.c.l.b16 %v883
    %v917 = vunpack.c.l.b16 %v884
    %v918 = vunpack.c.l.b16 %v885
    %v919 = vunpack.c.l.b16 %v886
    %v920 = vunpack.c.l.b16 %v887
    %v921 = vunpack.c.l.b16 %v888
    %v922 = vunpack.c.l.b16 %v889
    %v923 = vunpack.c.l.b16 %v890
    %v924 = vunpack.c.l.b16 %v891
    %v925 = vunpack.c.l.b16 %v892
    %v926 = vunpack.c.l.b16 %v893
    %v927 = vunpack.c.l.b16 %v894
    %v928 = vpack.c.b16 %v913, %v912
    %v929 = vpack.c.b16 %v915, %v914
    %v930 = vpack.c.b16 %v917, %v916
    %v931 = vpack.c.b16 %v919, %v918
    %v932 = vpack.c.b16 %v921, %v920
    %v933 = vpack.c.b16 %v923, %v922
    %v934 = vpack.c.b16 %v925, %v924
    %v935 = vpack.c.b16 %v927, %v926
    %944 = vmatprep.subr.bf16.mxu0 0
    %945 = vmatpush1.bf16.msra.mxu0 %v928
    %946 = vmatprep.subr.bf16.mxu0 0
    %947 = vmatpush1.bf16.msra.mxu0 %v929
    %948 = vmatprep.subr.bf16.mxu0 0
    %949 = vmatpush1.bf16.msra.mxu0 %v930
    %950 = vmatprep.subr.bf16.mxu0 0
    %951 = vmatpush1.bf16.msra.mxu0 %v931
    %952 = vmatprep.subr.bf16.mxu0 0
    %953 = vmatpush1.bf16.msra.mxu0 %v932
    %954 = vmatprep.subr.bf16.mxu0 0
    %955 = vmatpush1.bf16.msra.mxu0 %v933
    %956 = vmatprep.subr.bf16.mxu0 0
    %957 = vmatpush1.bf16.msra.mxu0 %v934
    %958 = vmatprep.subr.bf16.mxu0 0
    %959 = vmatpush1.bf16.msra.mxu0 %v935
    %960 = vmatprep.subr.bf16.mxu0 0
    %961 = vmatpush1.bf16.msra.mxu0 0
    %962 = vmatprep.subr.bf16.mxu0 0
    %963 = vmatpush1.bf16.msra.mxu0 0
    %964 = vmatprep.subr.bf16.mxu0 0
    %965 = vmatpush1.bf16.msra.mxu0 0
    %966 = vmatprep.subr.bf16.mxu0 0
    %967 = vmatpush1.bf16.msra.mxu0 0
    %968 = vmatprep.subr.bf16.mxu0 0
    %969 = vmatpush1.bf16.msra.mxu0 0
    %970 = vmatprep.subr.bf16.mxu0 0
    %971 = vmatpush1.bf16.msra.mxu0 0
    %972 = vmatprep.subr.bf16.mxu0 0
    %973 = vmatpush1.bf16.msra.mxu0 0
    %974 = vmatprep.subr.bf16.mxu0 0
    %975 = vmatpush1.bf16.msra.mxu0 0
    %976 = vmatprep.mubr.bf16.mxu0 0
    %977 = vmatmul.mubr.bf16.gmra.mrb[0].mxu0 %v895
    %v978 = vpop.f32.mrb[0].mxu0
    %v979 = vadd.f32 0.0, %v978
    %v980 = vpop.f32.mrb[0].mxu0
    %v981 = vpop.f32.mrb[0].mxu0
    %v982 = vadd.f32 0.0, %v981
    %v983 = vpop.f32.mrb[0].mxu0
    %984 = vdwg.mxu0
    %v985 = vadd.f32 %v694, %v979
    %v986 = vadd.f32 %v695, %v982
    %v987 = vld [vmem:[#allocation10 + $0x6] sm:$0x1]
    %v988 = vlaneseq
    %v989 = vshrl.u32 %v988, 7
    %v990 = vsub.s32 0, %v989
    %v991 = vrot.slane %v987, %v990
    %v992 = vadd.f32 %v985, %v991
    %v993 = vadd.f32 %v986, %v991
    %s994 = scalar_lea.vmem [#allocation4], 192
    %v995 = vld [vmem:[%s994] sm:$0xf]
    %v996 = vld [vmem:[%s994 + $0x4] sm:$0xf]
    %v997 = vunpack.c.l.bf16 %v995
    %v998 = vunpack.c.l.bf16 %v996
    %v999 = vlaneseq
    %v1000 = vshrl.u32 %v999, 7
    %v1001 = vsub.s32 0, %v1000
    %v1002 = vrot.slane %v992, %v1001
    %v1003 = vmul.f32 %v997, %v1002
    %v1004 = vmul.f32 %v998, %v1002
    %v1005 = vadd.f32 %v1003, 0.0
    %v1006 = vadd.f32 %v1004, 0.0
    %s1007 = scalar_lea.vmem [#allocation4], 200
    %v1008 = vld [vmem:[%s1007] sm:$0xf]
    %v1009 = vld [vmem:[%s1007 + $0x4] sm:$0xf]
    %v1010 = vunpack.c.l.bf16 %v1008
    %v1011 = vunpack.c.l.bf16 %v1009
    %v1012 = vlaneseq
    %v1013 = vshrl.u32 %v1012, 7
    %v1014 = vsub.s32 1, %v1013
    %v1015 = vrot.slane %v992, %v1014
    %v1016 = vmul.f32 %v1010, %v1015
    %v1017 = vmul.f32 %v1011, %v1015
    %v1018 = vadd.f32 %v1005, %v1016
    %v1019 = vadd.f32 %v1006, %v1017
    %s1020 = scalar_lea.vmem [#allocation4], 208
    %v1021 = vld [vmem:[%s1020] sm:$0xf]
    %v1022 = vld [vmem:[%s1020 + $0x4] sm:$0xf]
    %v1023 = vunpack.c.l.bf16 %v1021
    %v1024 = vunpack.c.l.bf16 %v1022
    %v1025 = vlaneseq
    %v1026 = vshrl.u32 %v1025, 7
    %v1027 = vsub.s32 2, %v1026
    %v1028 = vrot.slane %v992, %v1027
    %v1029 = vmul.f32 %v1023, %v1028
    %v1030 = vmul.f32 %v1024, %v1028
    %v1031 = vadd.f32 %v1018, %v1029
    %v1032 = vadd.f32 %v1019, %v1030
    %s1033 = scalar_lea.vmem [#allocation4], 216
    %v1034 = vld [vmem:[%s1033] sm:$0xf]
    %v1035 = vld [vmem:[%s1033 + $0x4] sm:$0xf]
    %v1036 = vunpack.c.l.bf16 %v1034
    %v1037 = vunpack.c.l.bf16 %v1035
    %v1038 = vlaneseq
    %v1039 = vshrl.u32 %v1038, 7
    %v1040 = vsub.s32 3, %v1039
    %v1041 = vrot.slane %v992, %v1040
    %v1042 = vmul.f32 %v1036, %v1041
    %v1043 = vmul.f32 %v1037, %v1041
    %v1044 = vadd.f32 %v1031, %v1042
    %v1045 = vadd.f32 %v1032, %v1043
    %s1046 = scalar_lea.vmem [#allocation4], 224
    %v1047 = vld [vmem:[%s1046] sm:$0xf]
    %v1048 = vld [vmem:[%s1046 + $0x4] sm:$0xf]
    %v1049 = vunpack.c.l.bf16 %v1047
    %v1050 = vunpack.c.l.bf16 %v1048
    %v1051 = vlaneseq
    %v1052 = vshrl.u32 %v1051, 7
    %v1053 = vsub.s32 4, %v1052
    %v1054 = vrot.slane %v992, %v1053
    %v1055 = vmul.f32 %v1049, %v1054
    %v1056 = vmul.f32 %v1050, %v1054
    %v1057 = vadd.f32 %v1044, %v1055
    %v1058 = vadd.f32 %v1045, %v1056
    %s1059 = scalar_lea.vmem [#allocation4], 232
    %v1060 = vld [vmem:[%s1059] sm:$0xf]
    %v1061 = vld [vmem:[%s1059 + $0x4] sm:$0xf]
    %v1062 = vunpack.c.l.bf16 %v1060
    %v1063 = vunpack.c.l.bf16 %v1061
    %v1064 = vlaneseq
    %v1065 = vshrl.u32 %v1064, 7
    %v1066 = vsub.s32 5, %v1065
    %v1067 = vrot.slane %v992, %v1066
    %v1068 = vmul.f32 %v1062, %v1067
    %v1069 = vmul.f32 %v1063, %v1067
    %v1070 = vadd.f32 %v1057, %v1068
    %v1071 = vadd.f32 %v1058, %v1069
    %s1072 = scalar_lea.vmem [#allocation4], 240
    %v1073 = vld [vmem:[%s1072] sm:$0xf]
    %v1074 = vld [vmem:[%s1072 + $0x4] sm:$0xf]
    %v1075 = vunpack.c.l.bf16 %v1073
    %v1076 = vunpack.c.l.bf16 %v1074
    %v1077 = vlaneseq
    %v1078 = vshrl.u32 %v1077, 7
    %v1079 = vsub.s32 6, %v1078
    %v1080 = vrot.slane %v992, %v1079
    %v1081 = vmul.f32 %v1075, %v1080
    %v1082 = vmul.f32 %v1076, %v1080
    %v1083 = vadd.f32 %v1070, %v1081
    %v1084 = vadd.f32 %v1071, %v1082
    %s1085 = scalar_lea.vmem [#allocation4], 248
    %v1086 = vld [vmem:[%s1085] sm:$0xf]
    %v1087 = vld [vmem:[%s1085 + $0x4] sm:$0xf]
    %v1088 = vunpack.c.l.bf16 %v1086
    %v1089 = vunpack.c.l.bf16 %v1087
    %v1090 = vlaneseq
    %v1091 = vshrl.u32 %v1090, 7
    %v1092 = vsub.s32 7, %v1091
    %v1093 = vrot.slane %v992, %v1092
    %v1094 = vmul.f32 %v1088, %v1093
    %v1095 = vmul.f32 %v1089, %v1093
    %v1096 = vadd.f32 %v1083, %v1094
    %v1097 = vadd.f32 %v1084, %v1095
    %s1098 = scalar_lea.vmem [#allocation4], 256
    %v1099 = vld [vmem:[%s1098] sm:$0xf]
    %v1100 = vld [vmem:[%s1098 + $0x4] sm:$0xf]
    %v1101 = vunpack.c.l.bf16 %v1099
    %v1102 = vunpack.c.l.bf16 %v1100
    %v1103 = vlaneseq
    %v1104 = vshrl.u32 %v1103, 7
    %v1105 = vsub.s32 0, %v1104
    %v1106 = vrot.slane %v993, %v1105
    %v1107 = vmul.f32 %v1101, %v1106
    %v1108 = vmul.f32 %v1102, %v1106
    %v1109 = vadd.f32 %v1096, %v1107
    %v1110 = vadd.f32 %v1097, %v1108
    %s1111 = scalar_lea.vmem [#allocation4], 264
    %v1112 = vld [vmem:[%s1111] sm:$0xf]
    %v1113 = vld [vmem:[%s1111 + $0x4] sm:$0xf]
    %v1114 = vunpack.c.l.bf16 %v1112
    %v1115 = vunpack.c.l.bf16 %v1113
    %v1116 = vlaneseq
    %v1117 = vshrl.u32 %v1116, 7
    %v1118 = vsub.s32 1, %v1117
    %v1119 = vrot.slane %v993, %v1118
    %v1120 = vmul.f32 %v1114, %v1119
    %v1121 = vmul.f32 %v1115, %v1119
    %v1122 = vadd.f32 %v1109, %v1120
    %v1123 = vadd.f32 %v1110, %v1121
    %s1124 = scalar_lea.vmem [#allocation4], 272
    %v1125 = vld [vmem:[%s1124] sm:$0xf]
    %v1126 = vld [vmem:[%s1124 + $0x4] sm:$0xf]
    %v1127 = vunpack.c.l.bf16 %v1125
    %v1128 = vunpack.c.l.bf16 %v1126
    %v1129 = vlaneseq
    %v1130 = vshrl.u32 %v1129, 7
    %v1131 = vsub.s32 2, %v1130
    %v1132 = vrot.slane %v993, %v1131
    %v1133 = vmul.f32 %v1127, %v1132
    %v1134 = vmul.f32 %v1128, %v1132
    %v1135 = vadd.f32 %v1122, %v1133
    %v1136 = vadd.f32 %v1123, %v1134
    %s1137 = scalar_lea.vmem [#allocation4], 280
    %v1138 = vld [vmem:[%s1137] sm:$0xf]
    %v1139 = vld [vmem:[%s1137 + $0x4] sm:$0xf]
    %v1140 = vunpack.c.l.bf16 %v1138
    %v1141 = vunpack.c.l.bf16 %v1139
    %v1142 = vlaneseq
    %v1143 = vshrl.u32 %v1142, 7
    %v1144 = vsub.s32 3, %v1143
    %v1145 = vrot.slane %v993, %v1144
    %v1146 = vmul.f32 %v1140, %v1145
    %v1147 = vmul.f32 %v1141, %v1145
    %v1148 = vadd.f32 %v1135, %v1146
    %v1149 = vadd.f32 %v1136, %v1147
    %v1150 = vld [vmem:[#allocation10 + $0x4] sm:$0x1]
    %v1151 = vlaneseq
    %v1152 = vshrl.u32 %v1151, 7
    %v1153 = vsub.s32 0, %v1152
    %v1154 = vrot.slane %v1150, %v1153
    %v1155 = vmul.f32 %v992, %v1154
    %v1156 = vmul.f32 %v993, %v1154
    %v1157 = vadd.f32 %v1148, %v1155
    %v1158 = vadd.f32 %v1149, %v1156
    %v1159 = vmul.f32 %v1157, 0.5
    %v1160 = vmul.f32 %v1158, 0.5
    %v1161 = vmul.f32 %v1157, 0.044715
    %v1162 = vmul.f32 %v1158, 0.044715
    %v1163 = vmul.f32 %v1161, %v1157
    %v1164 = vmul.f32 %v1162, %v1158
    %v1165 = vmul.f32 %v1163, %v1157
    %v1166 = vmul.f32 %v1164, %v1158
    %v1167 = vadd.f32 %v1157, %v1165
    %v1168 = vadd.f32 %v1158, %v1166
    %v1169 = vmul.f32 %v1167, 0.7978846
    %v1170 = vmul.f32 %v1168, 0.7978846
    %v1171 = vtanh.pop %v1169
    %v1172 = vtanh.pop %v1170
    %v1173 = vadd.f32 %v1171, 1.0
    %v1174 = vadd.f32 %v1172, 1.0
    %v1175 = vmul.f32 %v1159, %v1173
    %v1176 = vmul.f32 %v1160, %v1174
    %v1177 = vld [vmem:[#allocation6 + $0x80] sm:$0xf]
    %v1178 = vld [vmem:[#allocation6 + $0x84] sm:$0xf]
    %v1179 = vld [vmem:[#allocation6 + $0x88] sm:$0xf]
    %v1180 = vld [vmem:[#allocation6 + $0x8c] sm:$0xf]
    %v1181 = vld [vmem:[#allocation6 + $0x90] sm:$0xf]
    %v1182 = vld [vmem:[#allocation6 + $0x94] sm:$0xf]
    %v1183 = vld [vmem:[#allocation6 + $0x98] sm:$0xf]
    %v1184 = vld [vmem:[#allocation6 + $0x9c] sm:$0xf]
    %v1185 = vld [vmem:[#allocation6 + $0xa0] sm:$0xf]
    %v1186 = vld [vmem:[#allocation6 + $0xa4] sm:$0xf]
    %v1187 = vld [vmem:[#allocation6 + $0xa8] sm:$0xf]
    %v1188 = vld [vmem:[#allocation6 + $0xac] sm:$0xf]
    %v1189 = vld [vmem:[#allocation6 + $0xb0] sm:$0xf]
    %v1190 = vld [vmem:[#allocation6 + $0xb4] sm:$0xf]
    %v1191 = vld [vmem:[#allocation6 + $0xb8] sm:$0xf]
    %v1192 = vld [vmem:[#allocation6 + $0xbc] sm:$0xf]
    %v1193 = vpack.c.bf16 %v1176, %v1175
    %v1210 = vunpack.c.l.b16 %v1177
    %v1211 = vunpack.c.l.b16 %v1178
    %v1212 = vunpack.c.l.b16 %v1179
    %v1213 = vunpack.c.l.b16 %v1180
    %v1214 = vunpack.c.l.b16 %v1181
    %v1215 = vunpack.c.l.b16 %v1182
    %v1216 = vunpack.c.l.b16 %v1183
    %v1217 = vunpack.c.l.b16 %v1184
    %v1218 = vunpack.c.l.b16 %v1185
    %v1219 = vunpack.c.l.b16 %v1186
    %v1220 = vunpack.c.l.b16 %v1187
    %v1221 = vunpack.c.l.b16 %v1188
    %v1222 = vunpack.c.l.b16 %v1189
    %v1223 = vunpack.c.l.b16 %v1190
    %v1224 = vunpack.c.l.b16 %v1191
    %v1225 = vunpack.c.l.b16 %v1192
    %v1226 = vpack.c.b16 %v1211, %v1210
    %v1227 = vpack.c.b16 %v1213, %v1212
    %v1228 = vpack.c.b16 %v1215, %v1214
    %v1229 = vpack.c.b16 %v1217, %v1216
    %v1230 = vpack.c.b16 %v1219, %v1218
    %v1231 = vpack.c.b16 %v1221, %v1220
    %v1232 = vpack.c.b16 %v1223, %v1222
    %v1233 = vpack.c.b16 %v1225, %v1224
    %1242 = vmatprep.subr.bf16.mxu0 0
    %1243 = vmatpush1.bf16.msra.mxu0 %v1226
    %1244 = vmatprep.subr.bf16.mxu0 0
    %1245 = vmatpush1.bf16.msra.mxu0 %v1227
    %1246 = vmatprep.subr.bf16.mxu0 0
    %1247 = vmatpush1.bf16.msra.mxu0 %v1228
    %1248 = vmatprep.subr.bf16.mxu0 0
    %1249 = vmatpush1.bf16.msra.mxu0 %v1229
    %1250 = vmatprep.subr.bf16.mxu0 0
    %1251 = vmatpush1.bf16.msra.mxu0 %v1230
    %1252 = vmatprep.subr.bf16.mxu0 0
    %1253 = vmatpush1.bf16.msra.mxu0 %v1231
    %1254 = vmatprep.subr.bf16.mxu0 0
    %1255 = vmatpush1.bf16.msra.mxu0 %v1232
    %1256 = vmatprep.subr.bf16.mxu0 0
    %1257 = vmatpush1.bf16.msra.mxu0 %v1233
    %1258 = vmatprep.subr.bf16.mxu0 0
    %1259 = vmatpush1.bf16.msra.mxu0 0
    %1260 = vmatprep.subr.bf16.mxu0 0
    %1261 = vmatpush1.bf16.msra.mxu0 0
    %1262 = vmatprep.subr.bf16.mxu0 0
    %1263 = vmatpush1.bf16.msra.mxu0 0
    %1264 = vmatprep.subr.bf16.mxu0 0
    %1265 = vmatpush1.bf16.msra.mxu0 0
    %1266 = vmatprep.subr.bf16.mxu0 0
    %1267 = vmatpush1.bf16.msra.mxu0 0
    %1268 = vmatprep.subr.bf16.mxu0 0
    %1269 = vmatpush1.bf16.msra.mxu0 0
    %1270 = vmatprep.subr.bf16.mxu0 0
    %1271 = vmatpush1.bf16.msra.mxu0 0
    %1272 = vmatprep.subr.bf16.mxu0 0
    %1273 = vmatpush1.bf16.msra.mxu0 0
    %1274 = vmatprep.mubr.bf16.mxu0 0
    %1275 = vmatmul.mubr.bf16.gmra.mrb[0].mxu0 %v1193
    %v1276 = vpop.f32.mrb[0].mxu0
    %v1277 = vadd.f32 0.0, %v1276
    %v1278 = vpop.f32.mrb[0].mxu0
    %v1279 = vpop.f32.mrb[0].mxu0
    %v1280 = vadd.f32 0.0, %v1279
    %v1281 = vpop.f32.mrb[0].mxu0
    %1282 = vdwg.mxu0
    %v1283 = vadd.f32 %v992, %v1277
    %v1284 = vadd.f32 %v993, %v1280
    %v1285 = vld [vmem:[#allocation10 + $0x7] sm:$0x1]
    %v1286 = vlaneseq
    %v1287 = vshrl.u32 %v1286, 7
    %v1288 = vsub.s32 0, %v1287
    %v1289 = vrot.slane %v1285, %v1288
    %v1290 = vadd.f32 %v1283, %v1289
    %v1291 = vadd.f32 %v1284, %v1289
    %vm1294 = vcmask 1040384
    %v1295 = vrot.slane %v1290, 7
    %v1296 = vrot.slane %v1291, 7
    %v1297 = vsel %vm1294, %v1295, %v1296
    %v1300 = vsel %vm1294, 0.0, %v1295
    %1302 = vset.pattern.permute.xlu0 0
    %1303 = vperm.xlu0 %1302, %v143
    %v1304 = vpop.permute.xlu0 %1303
    %1307 = vset.pattern.permute.xlu0 0
    %1308 = vperm.xlu0 %1307, %v144
    %v1309 = vpop.permute.xlu0 %1308
    %v1311 = vmul.f32 %v1300, %v1304
    %v1312 = vmul.f32 %v1297, %v1309
    %vm1313 = vcmask 1046528
    %v1314 = vrot.slane %v1290, 1
    %v1315 = vrot.slane %v1291, 1
    %v1316 = vsel %vm1313, %v1314, %v1315
    %v1319 = vsel %vm1313, %v1315, 0.0
    %1321 = vset.pattern.permute.xlu0 0
    %1322 = vperm.xlu0 %1321, %v145
    %v1323 = vpop.permute.xlu0 %1322
    %1326 = vset.pattern.permute.xlu0 0
    %1327 = vperm.xlu0 %1326, %v146
    %v1328 = vpop.permute.xlu0 %1327
    %v1330 = vmul.f32 %v1316, %v1323
    %v1331 = vmul.f32 %v1319, %v1328
    %v1332 = vld [vmem:[%s8] sm:$0xff]
    %v1333 = vld [vmem:[%s8 + $0x8] sm:$0xff]
    %v1334 = vld [vmem:[%s8 + $0x10] sm:$0xff]
    %v1335 = vld [vmem:[%s8 + $0x18] sm:$0xff]
    %v1336 = vld [vmem:[%s8 + $0x20] sm:$0xff]
    %v1337 = vld [vmem:[%s8 + $0x28] sm:$0xff]
    %v1338 = vld [vmem:[%s8 + $0x30] sm:$0xff]
    %v1339 = vld [vmem:[%s8 + $0x38] sm:$0xff]
    %v1340 = vld [vmem:[%s8 + $0x40] sm:$0xff]
    %v1341 = vld [vmem:[%s8 + $0x48] sm:$0xff]
    %v1342 = vld [vmem:[%s8 + $0x50] sm:$0xff]
    %v1343 = vld [vmem:[%s8 + $0x58] sm:$0xff]
    %v1344 = vld [vmem:[%s8 + $0x60] sm:$0xff]
    %v1345 = vld [vmem:[%s8 + $0x68] sm:$0xff]
    %v1346 = vld [vmem:[%s8 + $0x70] sm:$0xff]
    %v1347 = vld [vmem:[%s8 + $0x78] sm:$0xff]
    %v1348 = vpack.c.bf16 %v1312, %v1311
    %v1349 = vld [vmem:[%s8 + $0x80] sm:$0xff]
    %v1350 = vld [vmem:[%s8 + $0x88] sm:$0xff]
    %v1351 = vld [vmem:[%s8 + $0x90] sm:$0xff]
    %v1352 = vld [vmem:[%s8 + $0x98] sm:$0xff]
    %v1353 = vld [vmem:[%s8 + $0xa0] sm:$0xff]
    %v1354 = vld [vmem:[%s8 + $0xa8] sm:$0xff]
    %v1355 = vld [vmem:[%s8 + $0xb0] sm:$0xff]
    %v1356 = vld [vmem:[%s8 + $0xb8] sm:$0xff]
    %v1357 = vld [vmem:[%s8 + $0xc0] sm:$0xff]
    %v1358 = vld [vmem:[%s8 + $0xc8] sm:$0xff]
    %v1359 = vld [vmem:[%s8 + $0xd0] sm:$0xff]
    %v1360 = vld [vmem:[%s8 + $0xd8] sm:$0xff]
    %v1361 = vld [vmem:[%s8 + $0xe0] sm:$0xff]
    %v1362 = vld [vmem:[%s8 + $0xe8] sm:$0xff]
    %v1363 = vld [vmem:[%s8 + $0xf0] sm:$0xff]
    %v1364 = vld [vmem:[%s8 + $0xf8] sm:$0xff]
    %v1365 = vpack.c.bf16 %v1291, %v1290
    %v1382 = vunpack.c.l.b16 %v1349
    %v1383 = vunpack.c.h.b16 %v1349
    %v1384 = vunpack.c.l.b16 %v1350
    %v1385 = vunpack.c.h.b16 %v1350
    %v1386 = vunpack.c.l.b16 %v1351
    %v1387 = vunpack.c.h.b16 %v1351
    %v1388 = vunpack.c.l.b16 %v1352
    %v1389 = vunpack.c.h.b16 %v1352
    %v1390 = vunpack.c.l.b16 %v1353
    %v1391 = vunpack.c.h.b16 %v1353
    %v1392 = vunpack.c.l.b16 %v1354
    %v1393 = vunpack.c.h.b16 %v1354
    %v1394 = vunpack.c.l.b16 %v1355
    %v1395 = vunpack.c.h.b16 %v1355
    %v1396 = vunpack.c.l.b16 %v1356
    %v1397 = vunpack.c.h.b16 %v1356
    %v1398 = vunpack.c.l.b16 %v1357
    %v1399 = vunpack.c.h.b16 %v1357
    %v1400 = vunpack.c.l.b16 %v1358
    %v1401 = vunpack.c.h.b16 %v1358
    %v1402 = vunpack.c.l.b16 %v1359
    %v1403 = vunpack.c.h.b16 %v1359
    %v1404 = vunpack.c.l.b16 %v1360
    %v1405 = vunpack.c.h.b16 %v1360
    %v1406 = vunpack.c.l.b16 %v1361
    %v1407 = vunpack.c.h.b16 %v1361
    %v1408 = vunpack.c.l.b16 %v1362
    %v1409 = vunpack.c.h.b16 %v1362
    %v1410 = vunpack.c.l.b16 %v1363
    %v1411 = vunpack.c.h.b16 %v1363
    %v1412 = vunpack.c.l.b16 %v1364
    %v1413 = vunpack.c.h.b16 %v1364
    %v1414 = vpack.c.b16 %v1384, %v1382
    %v1415 = vpack.c.b16 %v1385, %v1383
    %v1416 = vpack.c.b16 %v1388, %v1386
    %v1417 = vpack.c.b16 %v1389, %v1387
    %v1418 = vpack.c.b16 %v1392, %v1390
    %v1419 = vpack.c.b16 %v1393, %v1391
    %v1420 = vpack.c.b16 %v1396, %v1394
    %v1421 = vpack.c.b16 %v1397, %v1395
    %v1422 = vpack.c.b16 %v1400, %v1398
    %v1423 = vpack.c.b16 %v1401, %v1399
    %v1424 = vpack.c.b16 %v1404, %v1402
    %v1425 = vpack.c.b16 %v1405, %v1403
    %v1426 = vpack.c.b16 %v1408, %v1406
    %v1427 = vpack.c.b16 %v1409, %v1407
    %v1428 = vpack.c.b16 %v1412, %v1410
    %v1429 = vpack.c.b16 %v1413, %v1411
    %1446 = vmatprep.subr.bf16.mxu0 %v1415
    %1447 = vmatpush1.bf16.msra.mxu0 %v1414
    %1448 = vmatprep.subr.bf16.mxu0 %v1417
    %1449 = vmatpush1.bf16.msra.mxu0 %v1416
    %1450 = vmatprep.subr.bf16.mxu0 %v1419
    %1451 = vmatpush1.bf16.msra.mxu0 %v1418
    %1452 = vmatprep.subr.bf16.mxu0 %v1421
    %1453 = vmatpush1.bf16.msra.mxu0 %v1420
    %1454 = vmatprep.subr.bf16.mxu0 %v1423
    %1455 = vmatpush1.bf16.msra.mxu0 %v1422
    %1456 = vmatprep.subr.bf16.mxu0 %v1425
    %1457 = vmatpush1.bf16.msra.mxu0 %v1424
    %1458 = vmatprep.subr.bf16.mxu0 %v1427
    %1459 = vmatpush1.bf16.msra.mxu0 %v1426
    %1460 = vmatprep.subr.bf16.mxu0 %v1429
    %1461 = vmatpush1.bf16.msra.mxu0 %v1428
    %1462 = vmatprep.subr.bf16.mxu0 0
    %1463 = vmatpush1.bf16.msra.mxu0 0
    %1464 = vmatprep.subr.bf16.mxu0 0
    %1465 = vmatpush1.bf16.msra.mxu0 0
    %1466 = vmatprep.subr.bf16.mxu0 0
    %1467 = vmatpush1.bf16.msra.mxu0 0
    %1468 = vmatprep.subr.bf16.mxu0 0
    %1469 = vmatpush1.bf16.msra.mxu0 0
    %1470 = vmatprep.subr.bf16.mxu0 0
    %1471 = vmatpush1.bf16.msra.mxu0 0
    %1472 = vmatprep.subr.bf16.mxu0 0
    %1473 = vmatpush1.bf16.msra.mxu0 0
    %1474 = vmatprep.subr.bf16.mxu0 0
    %1475 = vmatpush1.bf16.msra.mxu0 0
    %1476 = vmatprep.subr.bf16.mxu0 0
    %1477 = vmatpush1.bf16.msra.mxu0 0
    %1478 = vmatprep.mubr.bf16.mxu0 0
    %1479 = vmatmul.mubr.bf16.gmra.mrb[0].mxu0 %v1365
    %v1480 = vpop.f32.mrb[0].mxu0
    %v1481 = vadd.f32 0.0, %v1480
    %v1482 = vpop.f32.mrb[0].mxu0
    %v1483 = vadd.f32 0.0, %v1482
    %v1484 = vpop.f32.mrb[0].mxu0
    %v1485 = vadd.f32 0.0, %v1484
    %v1486 = vpop.f32.mrb[0].mxu0
    %v1487 = vadd.f32 0.0, %v1486
    %1488 = vdwg.mxu0
    %v1505 = vunpack.c.l.b16 %v1332
    %v1506 = vunpack.c.h.b16 %v1332
    %v1507 = vunpack.c.l.b16 %v1333
    %v1508 = vunpack.c.h.b16 %v1333
    %v1509 = vunpack.c.l.b16 %v1334
    %v1510 = vunpack.c.h.b16 %v1334
    %v1511 = vunpack.c.l.b16 %v1335
    %v1512 = vunpack.c.h.b16 %v1335
    %v1513 = vunpack.c.l.b16 %v1336
    %v1514 = vunpack.c.h.b16 %v1336
    %v1515 = vunpack.c.l.b16 %v1337
    %v1516 = vunpack.c.h.b16 %v1337
    %v1517 = vunpack.c.l.b16 %v1338
    %v1518 = vunpack.c.h.b16 %v1338
    %v1519 = vunpack.c.l.b16 %v1339
    %v1520 = vunpack.c.h.b16 %v1339
    %v1521 = vunpack.c.l.b16 %v1340
    %v1522 = vunpack.c.h.b16 %v1340
    %v1523 = vunpack.c.l.b16 %v1341
    %v1524 = vunpack.c.h.b16 %v1341
    %v1525 = vunpack.c.l.b16 %v1342
    %v1526 = vunpack.c.h.b16 %v1342
    %v1527 = vunpack.c.l.b16 %v1343
    %v1528 = vunpack.c.h.b16 %v1343
    %v1529 = vunpack.c.l.b16 %v1344
    %v1530 = vunpack.c.h.b16 %v1344
    %v1531 = vunpack.c.l.b16 %v1345
    %v1532 = vunpack.c.h.b16 %v1345
    %v1533 = vunpack.c.l.b16 %v1346
    %v1534 = vunpack.c.h.b16 %v1346
    %v1535 = vunpack.c.l.b16 %v1347
    %v1536 = vunpack.c.h.b16 %v1347
    %v1537 = vpack.c.b16 %v1507, %v1505
    %v1538 = vpack.c.b16 %v1508, %v1506
    %v1539 = vpack.c.b16 %v1511, %v1509
    %v1540 = vpack.c.b16 %v1512, %v1510
    %v1541 = vpack.c.b16 %v1515, %v1513
    %v1542 = vpack.c.b16 %v1516, %v1514
    %v1543 = vpack.c.b16 %v1519, %v1517
    %v1544 = vpack.c.b16 %v1520, %v1518
    %v1545 = vpack.c.b16 %v1523, %v1521
    %v1546 = vpack.c.b16 %v1524, %v1522
    %v1547 = vpack.c.b16 %v1527, %v1525
    %v1548 = vpack.c.b16 %v1528, %v1526
    %v1549 = vpack.c.b16 %v1531, %v1529
    %v1550 = vpack.c.b16 %v1532, %v1530
    %v1551 = vpack.c.b16 %v1535, %v1533
    %v1552 = vpack.c.b16 %v1536, %v1534
    %1569 = vmatprep.subr.bf16.mxu0 %v1538
    %1570 = vmatpush1.bf16.msra.mxu0 %v1537
    %1571 = vmatprep.subr.bf16.mxu0 %v1540
    %1572 = vmatpush1.bf16.msra.mxu0 %v1539
    %1573 = vmatprep.subr.bf16.mxu0 %v1542
    %1574 = vmatpush1.bf16.msra.mxu0 %v1541
    %1575 = vmatprep.subr.bf16.mxu0 %v1544
    %1576 = vmatpush1.bf16.msra.mxu0 %v1543
    %1577 = vmatprep.subr.bf16.mxu0 %v1546
    %1578 = vmatpush1.bf16.msra.mxu0 %v1545
    %1579 = vmatprep.subr.bf16.mxu0 %v1548
    %1580 = vmatpush1.bf16.msra.mxu0 %v1547
    %1581 = vmatprep.subr.bf16.mxu0 %v1550
    %1582 = vmatpush1.bf16.msra.mxu0 %v1549
    %1583 = vmatprep.subr.bf16.mxu0 %v1552
    %1584 = vmatpush1.bf16.msra.mxu0 %v1551
    %1585 = vmatprep.subr.bf16.mxu0 0
    %1586 = vmatpush1.bf16.msra.mxu0 0
    %1587 = vmatprep.subr.bf16.mxu0 0
    %1588 = vmatpush1.bf16.msra.mxu0 0
    %1589 = vmatprep.subr.bf16.mxu0 0
    %1590 = vmatpush1.bf16.msra.mxu0 0
    %1591 = vmatprep.subr.bf16.mxu0 0
    %1592 = vmatpush1.bf16.msra.mxu0 0
    %1593 = vmatprep.subr.bf16.mxu0 0
    %1594 = vmatpush1.bf16.msra.mxu0 0
    %1595 = vmatprep.subr.bf16.mxu0 0
    %1596 = vmatpush1.bf16.msra.mxu0 0
    %1597 = vmatprep.subr.bf16.mxu0 0
    %1598 = vmatpush1.bf16.msra.mxu0 0
    %1599 = vmatprep.subr.bf16.mxu0 0
    %1600 = vmatpush1.bf16.msra.mxu0 0
    %1601 = vmatprep.mubr.bf16.mxu0 0
    %1602 = vmatmul.mubr.bf16.gmra.mrb[0].mxu0 %v1348
    %v1603 = vpop.f32.mrb[0].mxu0
    %v1604 = vadd.f32 %v1481, %v1603
    %v1605 = vpop.f32.mrb[0].mxu0
    %v1606 = vadd.f32 %v1483, %v1605
    %v1607 = vpop.f32.mrb[0].mxu0
    %v1608 = vadd.f32 %v1485, %v1607
    %v1609 = vpop.f32.mrb[0].mxu0
    %v1610 = vadd.f32 %v1487, %v1609
    %1611 = vdwg.mxu0
    %v1612 = vld [vmem:[%s8 + $0x100] sm:$0xff]
    %v1613 = vld [vmem:[%s8 + $0x108] sm:$0xff]
    %v1614 = vld [vmem:[%s8 + $0x110] sm:$0xff]
    %v1615 = vld [vmem:[%s8 + $0x118] sm:$0xff]
    %v1616 = vld [vmem:[%s8 + $0x120] sm:$0xff]
    %v1617 = vld [vmem:[%s8 + $0x128] sm:$0xff]
    %v1618 = vld [vmem:[%s8 + $0x130] sm:$0xff]
    %v1619 = vld [vmem:[%s8 + $0x138] sm:$0xff]
    %v1620 = vld [vmem:[%s8 + $0x140] sm:$0xff]
    %v1621 = vld [vmem:[%s8 + $0x148] sm:$0xff]
    %v1622 = vld [vmem:[%s8 + $0x150] sm:$0xff]
    %v1623 = vld [vmem:[%s8 + $0x158] sm:$0xff]
    %v1624 = vld [vmem:[%s8 + $0x160] sm:$0xff]
    %v1625 = vld [vmem:[%s8 + $0x168] sm:$0xff]
    %v1626 = vld [vmem:[%s8 + $0x170] sm:$0xff]
    %v1627 = vld [vmem:[%s8 + $0x178] sm:$0xff]
    %v1628 = vpack.c.bf16 %v1331, %v1330
    %v1645 = vunpack.c.l.b16 %v1612
    %v1646 = vunpack.c.h.b16 %v1612
    %v1647 = vunpack.c.l.b16 %v1613
    %v1648 = vunpack.c.h.b16 %v1613
    %v1649 = vunpack.c.l.b16 %v1614
    %v1650 = vunpack.c.h.b16 %v1614
    %v1651 = vunpack.c.l.b16 %v1615
    %v1652 = vunpack.c.h.b16 %v1615
    %v1653 = vunpack.c.l.b16 %v1616
    %v1654 = vunpack.c.h.b16 %v1616
    %v1655 = vunpack.c.l.b16 %v1617
    %v1656 = vunpack.c.h.b16 %v1617
    %v1657 = vunpack.c.l.b16 %v1618
    %v1658 = vunpack.c.h.b16 %v1618
    %v1659 = vunpack.c.l.b16 %v1619
    %v1660 = vunpack.c.h.b16 %v1619
    %v1661 = vunpack.c.l.b16 %v1620
    %v1662 = vunpack.c.h.b16 %v1620
    %v1663 = vunpack.c.l.b16 %v1621
    %v1664 = vunpack.c.h.b16 %v1621
    %v1665 = vunpack.c.l.b16 %v1622
    %v1666 = vunpack.c.h.b16 %v1622
    %v1667 = vunpack.c.l.b16 %v1623
    %v1668 = vunpack.c.h.b16 %v1623
    %v1669 = vunpack.c.l.b16 %v1624
    %v1670 = vunpack.c.h.b16 %v1624
    %v1671 = vunpack.c.l.b16 %v1625
    %v1672 = vunpack.c.h.b16 %v1625
    %v1673 = vunpack.c.l.b16 %v1626
    %v1674 = vunpack.c.h.b16 %v1626
    %v1675 = vunpack.c.l.b16 %v1627
    %v1676 = vunpack.c.h.b16 %v1627
    %v1677 = vpack.c.b16 %v1647, %v1645
    %v1678 = vpack.c.b16 %v1648, %v1646
    %v1679 = vpack.c.b16 %v1651, %v1649
    %v1680 = vpack.c.b16 %v1652, %v1650
    %v1681 = vpack.c.b16 %v1655, %v1653
    %v1682 = vpack.c.b16 %v1656, %v1654
    %v1683 = vpack.c.b16 %v1659, %v1657
    %v1684 = vpack.c.b16 %v1660, %v1658
    %v1685 = vpack.c.b16 %v1663, %v1661
    %v1686 = vpack.c.b16 %v1664, %v1662
    %v1687 = vpack.c.b16 %v1667, %v1665
    %v1688 = vpack.c.b16 %v1668, %v1666
    %v1689 = vpack.c.b16 %v1671, %v1669
    %v1690 = vpack.c.b16 %v1672, %v1670
    %v1691 = vpack.c.b16 %v1675, %v1673
    %v1692 = vpack.c.b16 %v1676, %v1674
    %1709 = vmatprep.subr.bf16.mxu0 %v1678
    %1710 = vmatpush1.bf16.msra.mxu0 %v1677
    %1711 = vmatprep.subr.bf16.mxu0 %v1680
    %1712 = vmatpush1.bf16.msra.mxu0 %v1679
    %1713 = vmatprep.subr.bf16.mxu0 %v1682
    %1714 = vmatpush1.bf16.msra.mxu0 %v1681
    %1715 = vmatprep.subr.bf16.mxu0 %v1684
    %1716 = vmatpush1.bf16.msra.mxu0 %v1683
    %1717 = vmatprep.subr.bf16.mxu0 %v1686
    %1718 = vmatpush1.bf16.msra.mxu0 %v1685
    %1719 = vmatprep.subr.bf16.mxu0 %v1688
    %1720 = vmatpush1.bf16.msra.mxu0 %v1687
    %1721 = vmatprep.subr.bf16.mxu0 %v1690
    %1722 = vmatpush1.bf16.msra.mxu0 %v1689
    %1723 = vmatprep.subr.bf16.mxu0 %v1692
    %1724 = vmatpush1.bf16.msra.mxu0 %v1691
    %1725 = vmatprep.subr.bf16.mxu0 0
    %1726 = vmatpush1.bf16.msra.mxu0 0
    %1727 = vmatprep.subr.bf16.mxu0 0
    %1728 = vmatpush1.bf16.msra.mxu0 0
    %1729 = vmatprep.subr.bf16.mxu0 0
    %1730 = vmatpush1.bf16.msra.mxu0 0
    %1731 = vmatprep.subr.bf16.mxu0 0
    %1732 = vmatpush1.bf16.msra.mxu0 0
    %1733 = vmatprep.subr.bf16.mxu0 0
    %1734 = vmatpush1.bf16.msra.mxu0 0
    %1735 = vmatprep.subr.bf16.mxu0 0
    %1736 = vmatpush1.bf16.msra.mxu0 0
    %1737 = vmatprep.subr.bf16.mxu0 0
    %1738 = vmatpush1.bf16.msra.mxu0 0
    %1739 = vmatprep.subr.bf16.mxu0 0
    %1740 = vmatpush1.bf16.msra.mxu0 0
    %1741 = vmatprep.mubr.bf16.mxu0 0
    %1742 = vmatmul.mubr.bf16.gmra.mrb[0].mxu0 %v1628
    %v1743 = vpop.f32.mrb[0].mxu0
    %v1744 = vadd.f32 0.0, %v1743
    %v1745 = vpop.f32.mrb[0].mxu0
    %v1746 = vadd.f32 0.0, %v1745
    %v1747 = vpop.f32.mrb[0].mxu0
    %v1748 = vadd.f32 0.0, %v1747
    %v1749 = vpop.f32.mrb[0].mxu0
    %v1750 = vadd.f32 0.0, %v1749
    %1751 = vdwg.mxu0
    %v1752 = vadd.f32 %v1604, %v1744
    %v1753 = vadd.f32 %v1606, %v1746
    %v1754 = vadd.f32 %v1608, %v1748
    %v1755 = vadd.f32 %v1610, %v1750
    %v1756 = vld [vmem:[#allocation12] ss:$4 sm:$0x3]
    %v1758 = vlaneseq
    %v1759 = vshrl.u32 %v1758, 7
    %v1760 = vsub.s32 0, %v1759
    %v1761 = vrot.slane %v1756, %v1760
    %v1762 = vlaneseq
    %v1763 = vshrl.u32 %v1762, 7
    %v1764 = vsub.s32 1, %v1763
    %v1765 = vrot.slane %v1756, %v1764
    %v1768 = vadd.f32 %v1752, %v1761
    %v1769 = vadd.f32 %v1753, %v1765
    %v1770 = vadd.f32 %v1754, %v1761
    %v1771 = vadd.f32 %v1755, %v1765
    %v1772 = vmul.f32 %v1768, 0.5
    %v1773 = vmul.f32 %v1769, 0.5
    %v1774 = vmul.f32 %v1770, 0.5
    %v1775 = vmul.f32 %v1771, 0.5
    %v1776 = vmul.f32 %v1768, 0.044715
    %v1777 = vmul.f32 %v1769, 0.044715
    %v1778 = vmul.f32 %v1770, 0.044715
    %v1779 = vmul.f32 %v1771, 0.044715
    %v1780 = vmul.f32 %v1776, %v1768
    %v1781 = vmul.f32 %v1777, %v1769
    %v1782 = vmul.f32 %v1778, %v1770
    %v1783 = vmul.f32 %v1779, %v1771
    %v1784 = vmul.f32 %v1780, %v1768
    %v1785 = vmul.f32 %v1781, %v1769
    %v1786 = vmul.f32 %v1782, %v1770
    %v1787 = vmul.f32 %v1783, %v1771
    %v1788 = vadd.f32 %v1768, %v1784
    %v1789 = vadd.f32 %v1769, %v1785
    %v1790 = vadd.f32 %v1770, %v1786
    %v1791 = vadd.f32 %v1771, %v1787
    %v1792 = vmul.f32 %v1788, 0.7978846
    %v1793 = vmul.f32 %v1789, 0.7978846
    %v1794 = vmul.f32 %v1790, 0.7978846
    %v1795 = vmul.f32 %v1791, 0.7978846
    %v1796 = vtanh.pop %v1792
    %v1797 = vtanh.pop %v1793
    %v1798 = vtanh.pop %v1794
    %v1799 = vtanh.pop %v1795
    %v1800 = vadd.f32 %v1796, 1.0
    %v1801 = vadd.f32 %v1797, 1.0
    %v1802 = vadd.f32 %v1798, 1.0
    %v1803 = vadd.f32 %v1799, 1.0
    %v1804 = vmul.f32 %v1772, %v1800
    %v1805 = vmul.f32 %v1773, %v1801
    %v1806 = vmul.f32 %v1774, %v1802
    %v1807 = vmul.f32 %v1775, %v1803
    %s1808 = scalar_lea.vmem [#allocation12], 1
    %v1809 = vld [vmem:[%s1808] ss:$4 sm:$0x3]
    %s1810 = scalar_lea.vmem [#allocation12], 2
    %v1811 = vld [vmem:[%s1810] ss:$4 sm:$0x3]
    %vm1812 = vcmask 130048
    %v1814 = vsel %vm1812, %v140, 0
    %1816 = vmatprep.subr.mxu0 %v1805
    %1817 = vmatpush1.msra.mxu0 %v1804
    %1818 = vmatprep.subr.mxu0 %v1807
    %1819 = vmatpush1.msra.mxu0 %v1806
    %1820 = vmatprep.subr.mxu0 0.0
    %1821 = vmatpush1.msra.mxu0 0.0
    %1822 = vmatprep.subr.mxu0 0.0
    %1823 = vmatpush1.msra.mxu0 0.0
    %1824 = vmatprep.subr.mxu0 0.0
    %1825 = vmatpush1.msra.mxu0 0.0
    %1826 = vmatprep.subr.mxu0 0.0
    %1827 = vmatpush1.msra.mxu0 0.0
    %1828 = vmatprep.subr.mxu0 0.0
    %1829 = vmatpush1.msra.mxu0 0.0
    %1830 = vmatprep.subr.mxu0 0.0
    %1831 = vmatpush1.msra.mxu0 0.0
    %1832 = vmatprep.subr.mxu0 0.0
    %1833 = vmatpush1.msra.mxu0 0.0
    %1834 = vmatprep.subr.mxu0 0.0
    %1835 = vmatpush1.msra.mxu0 0.0
    %1836 = vmatprep.subr.mxu0 0.0
    %1837 = vmatpush1.msra.mxu0 0.0
    %1838 = vmatprep.subr.mxu0 0.0
    %1839 = vmatpush1.msra.mxu0 0.0
    %1840 = vmatprep.subr.mxu0 0.0
    %1841 = vmatpush1.msra.mxu0 0.0
    %1842 = vmatprep.subr.mxu0 0.0
    %1843 = vmatpush1.msra.mxu0 0.0
    %1844 = vmatprep.subr.mxu0 0.0
    %1845 = vmatpush1.msra.mxu0 0.0
    %1846 = vmatprep.subr.mxu0 0.0
    %1847 = vmatpush1.msra.mxu0 0.0
    %1848 = vmatprep.subr.mxu0 0.0
    %1849 = vmatpush1.msra.mxu0 0.0
    %1850 = vmatprep.subr.mxu0 0.0
    %1851 = vmatpush1.msra.mxu0 0.0
    %1852 = vmatprep.subr.mxu0 0.0
    %1853 = vmatpush1.msra.mxu0 0.0
    %1854 = vmatprep.subr.mxu0 0.0
    %1855 = vmatpush1.msra.mxu0 0.0
    %1856 = vmatprep.subr.mxu0 0.0
    %1857 = vmatpush1.msra.mxu0 0.0
    %1858 = vmatprep.subr.mxu0 0.0
    %1859 = vmatpush1.msra.mxu0 0.0
    %1860 = vmatprep.subr.mxu0 0.0
    %1861 = vmatpush1.msra.mxu0 0.0
    %1862 = vmatprep.subr.mxu0 0.0
    %1863 = vmatpush1.msra.mxu0 0.0
    %1864 = vmatprep.subr.mxu0 0.0
    %1865 = vmatpush1.msra.mxu0 0.0
    %1866 = vmatprep.subr.mxu0 0.0
    %1867 = vmatpush1.msra.mxu0 0.0
    %1868 = vmatprep.subr.mxu0 0.0
    %1869 = vmatpush1.msra.mxu0 0.0
    %1870 = vmatprep.subr.mxu0 0.0
    %1871 = vmatpush1.msra.mxu0 0.0
    %1872 = vmatprep.subr.mxu0 0.0
    %1873 = vmatpush1.msra.mxu0 0.0
    %1874 = vmatprep.subr.mxu0 0.0
    %1875 = vmatpush1.msra.mxu0 0.0
    %1876 = vmatprep.subr.mxu0 0.0
    %1877 = vmatpush1.msra.mxu0 0.0
    %1878 = vmatprep.subr.mxu0 0.0
    %1879 = vmatpush1.msra.mxu0 0.0
    %1880 = vmatprep.mubr.f32.mxu0 0.0
    %1881 = vmatmul.mubr.f32.gmra.mrb[0].mxu0 %v1814
    %v1882 = vpop.f32.mrb[0].mxu0
    %v1883 = vadd.f32 0.0, %v1882
    %v1884 = vpop.f32.mrb[0].mxu0
    %v1885 = vadd.f32 0.0, %v1884
    %1886 = vdwg.mxu0
    %1887 = vmatprep.subr.mxu0 %v164
    %1888 = vmatpush1.msra.mxu0 %v163
    %1889 = vmatprep.subr.mxu0 %v166
    %1890 = vmatpush1.msra.mxu0 %v165
    %1891 = vmatprep.subr.mxu0 %v168
    %1892 = vmatpush1.msra.mxu0 %v167
    %1893 = vmatprep.subr.mxu0 %v170
    %1894 = vmatpush1.msra.mxu0 %v169
    %1895 = vmatprep.subr.mxu0 %v172
    %1896 = vmatpush1.msra.mxu0 %v171
    %1897 = vmatprep.subr.mxu0 %v174
    %1898 = vmatpush1.msra.mxu0 %v173
    %1899 = vmatprep.subr.mxu0 %v176
    %1900 = vmatpush1.msra.mxu0 %v175
    %1901 = vmatprep.subr.mxu0 %v178
    %1902 = vmatpush1.msra.mxu0 %v177
    %1903 = vmatprep.subr.mxu0 %v180
    %1904 = vmatpush1.msra.mxu0 %v179
    %1905 = vmatprep.subr.mxu0 %v182
    %1906 = vmatpush1.msra.mxu0 %v181
    %1907 = vmatprep.subr.mxu0 %v184
    %1908 = vmatpush1.msra.mxu0 %v183
    %1909 = vmatprep.subr.mxu0 %v186
    %1910 = vmatpush1.msra.mxu0 %v185
    %1911 = vmatprep.subr.mxu0 %v188
    %1912 = vmatpush1.msra.mxu0 %v187
    %1913 = vmatprep.subr.mxu0 %v190
    %1914 = vmatpush1.msra.mxu0 %v189
    %1915 = vmatprep.subr.mxu0 %v192
    %1916 = vmatpush1.msra.mxu0 %v191
    %1917 = vmatprep.subr.mxu0 %v194
    %1918 = vmatpush1.msra.mxu0 %v193
    %1919 = vmatprep.subr.mxu0 %v196
    %1920 = vmatpush1.msra.mxu0 %v195
    %1921 = vmatprep.subr.mxu0 %v198
    %1922 = vmatpush1.msra.mxu0 %v197
    %1923 = vmatprep.subr.mxu0 %v200
    %1924 = vmatpush1.msra.mxu0 %v199
    %1925 = vmatprep.subr.mxu0 %v202
    %1926 = vmatpush1.msra.mxu0 %v201
    %1927 = vmatprep.subr.mxu0 %v204
    %1928 = vmatpush1.msra.mxu0 %v203
    %1929 = vmatprep.subr.mxu0 %v206
    %1930 = vmatpush1.msra.mxu0 %v205
    %1931 = vmatprep.subr.mxu0 %v208
    %1932 = vmatpush1.msra.mxu0 %v207
    %1933 = vmatprep.subr.mxu0 %v210
    %1934 = vmatpush1.msra.mxu0 %v209
    %1935 = vmatprep.subr.mxu0 %v212
    %1936 = vmatpush1.msra.mxu0 %v211
    %1937 = vmatprep.subr.mxu0 %v214
    %1938 = vmatpush1.msra.mxu0 %v213
    %1939 = vmatprep.subr.mxu0 %v216
    %1940 = vmatpush1.msra.mxu0 %v215
    %1941 = vmatprep.subr.mxu0 %v218
    %1942 = vmatpush1.msra.mxu0 %v217
    %1943 = vmatprep.subr.mxu0 %v220
    %1944 = vmatpush1.msra.mxu0 %v219
    %1945 = vmatprep.subr.mxu0 %v222
    %1946 = vmatpush1.msra.mxu0 %v221
    %1947 = vmatprep.subr.mxu0 %v224
    %1948 = vmatpush1.msra.mxu0 %v223
    %1949 = vmatprep.subr.mxu0 %v226
    %1950 = vmatpush1.msra.mxu0 %v225
    %1951 = vmatprep.mubr.f32.mxu0 %v1885
    %1952 = vmatmul.mubr.f32.gmra.mrb[0].mxu0 %v1883
    %v1953 = vpop.f32.mrb[0].mxu0
    %v1954 = vadd.f32 0.0, %v1953
    %v1955 = vpop.f32.mrb[0].mxu0
    %v1956 = vadd.f32 0.0, %v1955
    %1957 = vdwg.mxu0
    %v1958 = vmul.f32 %v1954, 0.083333336
    %v1959 = vmul.f32 %v1956, 0.083333336
    %vm1960 = vcmask 7168
    %v1962 = vsel %vm1960, %v141, 0
    %v1965 = vsel %vm1960, %v142, 0
    %v1968 = vsel %vm1294, %v1958, 0
    %v1971 = vsel %vm1294, %v1959, 0
    %1973 = vmatprep.subr.mxu0 %v1971
    %1974 = vmatpush1.msra.mxu0 %v1968
    %1975 = vmatprep.subr.mxu0 0.0
    %1976 = vmatpush1.msra.mxu0 0.0
    %1977 = vmatprep.subr.mxu0 0.0
    %1978 = vmatpush1.msra.mxu0 0.0
    %1979 = vmatprep.subr.mxu0 0.0
    %1980 = vmatpush1.msra.mxu0 0.0
    %1981 = vmatprep.subr.mxu0 0.0
    %1982 = vmatpush1.msra.mxu0 0.0
    %1983 = vmatprep.subr.mxu0 0.0
    %1984 = vmatpush1.msra.mxu0 0.0
    %1985 = vmatprep.subr.mxu0 0.0
    %1986 = vmatpush1.msra.mxu0 0.0
    %1987 = vmatprep.subr.mxu0 0.0
    %1988 = vmatpush1.msra.mxu0 0.0
    %1989 = vmatprep.subr.mxu0 0.0
    %1990 = vmatpush1.msra.mxu0 0.0
    %1991 = vmatprep.subr.mxu0 0.0
    %1992 = vmatpush1.msra.mxu0 0.0
    %1993 = vmatprep.subr.mxu0 0.0
    %1994 = vmatpush1.msra.mxu0 0.0
    %1995 = vmatprep.subr.mxu0 0.0
    %1996 = vmatpush1.msra.mxu0 0.0
    %1997 = vmatprep.subr.mxu0 0.0
    %1998 = vmatpush1.msra.mxu0 0.0
    %1999 = vmatprep.subr.mxu0 0.0
    %2000 = vmatpush1.msra.mxu0 0.0
    %2001 = vmatprep.subr.mxu0 0.0
    %2002 = vmatpush1.msra.mxu0 0.0
    %2003 = vmatprep.subr.mxu0 0.0
    %2004 = vmatpush1.msra.mxu0 0.0
    %2005 = vmatprep.subr.mxu0 0.0
    %2006 = vmatpush1.msra.mxu0 0.0
    %2007 = vmatprep.subr.mxu0 0.0
    %2008 = vmatpush1.msra.mxu0 0.0
    %2009 = vmatprep.subr.mxu0 0.0
    %2010 = vmatpush1.msra.mxu0 0.0
    %2011 = vmatprep.subr.mxu0 0.0
    %2012 = vmatpush1.msra.mxu0 0.0
    %2013 = vmatprep.subr.mxu0 0.0
    %2014 = vmatpush1.msra.mxu0 0.0
    %2015 = vmatprep.subr.mxu0 0.0
    %2016 = vmatpush1.msra.mxu0 0.0
    %2017 = vmatprep.subr.mxu0 0.0
    %2018 = vmatpush1.msra.mxu0 0.0
    %2019 = vmatprep.subr.mxu0 0.0
    %2020 = vmatpush1.msra.mxu0 0.0
    %2021 = vmatprep.subr.mxu0 0.0
    %2022 = vmatpush1.msra.mxu0 0.0
    %2023 = vmatprep.subr.mxu0 0.0
    %2024 = vmatpush1.msra.mxu0 0.0
    %2025 = vmatprep.subr.mxu0 0.0
    %2026 = vmatpush1.msra.mxu0 0.0
    %2027 = vmatprep.subr.mxu0 0.0
    %2028 = vmatpush1.msra.mxu0 0.0
    %2029 = vmatprep.subr.mxu0 0.0
    %2030 = vmatpush1.msra.mxu0 0.0
    %2031 = vmatprep.subr.mxu0 0.0
    %2032 = vmatpush1.msra.mxu0 0.0
    %2033 = vmatprep.subr.mxu0 0.0
    %2034 = vmatpush1.msra.mxu0 0.0
    %2035 = vmatprep.subr.mxu0 0.0
    %2036 = vmatpush1.msra.mxu0 0.0
    %2037 = vmatprep.mubr.f32.mxu0 0.0
    %2038 = vmatmul.mubr.f32.gmra.mrb[0].mxu0 %v1962
    %v2039 = vpop.f32.mrb[0].mxu0
    %v2040 = vadd.f32 0.0, %v2039
    %v2041 = vpop.f32.mrb[0].mxu0
    %v2042 = vadd.f32 0.0, %v2041
    %2043 = vmatprep.mubr.f32.mxu0 0.0
    %2044 = vmatmul.mubr.f32.gmra.mrb[0].mxu0 %v1965
    %v2045 = vpop.f32.mrb[0].mxu0
    %v2046 = vadd.f32 0.0, %v2045
    %v2047 = vpop.f32.mrb[0].mxu0
    %v2048 = vadd.f32 0.0, %v2047
    %2049 = vdwg.mxu0
    %v2050 = vsub.f32 %v1804, %v2040
    %v2051 = vsub.f32 %v1805, %v2042
    %v2052 = vsub.f32 %v1806, %v2046
    %v2053 = vsub.f32 %v1807, %v2048
    %v2054 = vmul.f32 %v2050, %v2050
    %v2055 = vmul.f32 %v2051, %v2051
    %v2056 = vmul.f32 %v2052, %v2052
    %v2057 = vmul.f32 %v2053, %v2053
    %2058 = vmatprep.subr.mxu0 %v2055
    %2059 = vmatpush1.msra.mxu0 %v2054
    %2060 = vmatprep.subr.mxu0 %v2057
    %2061 = vmatpush1.msra.mxu0 %v2056
    %2062 = vmatprep.subr.mxu0 0.0
    %2063 = vmatpush1.msra.mxu0 0.0
    %2064 = vmatprep.subr.mxu0 0.0
    %2065 = vmatpush1.msra.mxu0 0.0
    %2066 = vmatprep.subr.mxu0 0.0
    %2067 = vmatpush1.msra.mxu0 0.0
    %2068 = vmatprep.subr.mxu0 0.0
    %2069 = vmatpush1.msra.mxu0 0.0
    %2070 = vmatprep.subr.mxu0 0.0
    %2071 = vmatpush1.msra.mxu0 0.0
    %2072 = vmatprep.subr.mxu0 0.0
    %2073 = vmatpush1.msra.mxu0 0.0
    %2074 = vmatprep.subr.mxu0 0.0
    %2075 = vmatpush1.msra.mxu0 0.0
    %2076 = vmatprep.subr.mxu0 0.0
    %2077 = vmatpush1.msra.mxu0 0.0
    %2078 = vmatprep.subr.mxu0 0.0
    %2079 = vmatpush1.msra.mxu0 0.0
    %2080 = vmatprep.subr.mxu0 0.0
    %2081 = vmatpush1.msra.mxu0 0.0
    %2082 = vmatprep.subr.mxu0 0.0
    %2083 = vmatpush1.msra.mxu0 0.0
    %2084 = vmatprep.subr.mxu0 0.0
    %2085 = vmatpush1.msra.mxu0 0.0
    %2086 = vmatprep.subr.mxu0 0.0
    %2087 = vmatpush1.msra.mxu0 0.0
    %2088 = vmatprep.subr.mxu0 0.0
    %2089 = vmatpush1.msra.mxu0 0.0
    %2090 = vmatprep.subr.mxu0 0.0
    %2091 = vmatpush1.msra.mxu0 0.0
    %2092 = vmatprep.subr.mxu0 0.0
    %2093 = vmatpush1.msra.mxu0 0.0
    %2094 = vmatprep.subr.mxu0 0.0
    %2095 = vmatpush1.msra.mxu0 0.0
    %2096 = vmatprep.subr.mxu0 0.0
    %2097 = vmatpush1.msra.mxu0 0.0
    %2098 = vmatprep.subr.mxu0 0.0
    %2099 = vmatpush1.msra.mxu0 0.0
    %2100 = vmatprep.subr.mxu0 0.0
    %2101 = vmatpush1.msra.mxu0 0.0
    %2102 = vmatprep.subr.mxu0 0.0
    %2103 = vmatpush1.msra.mxu0 0.0
    %2104 = vmatprep.subr.mxu0 0.0
    %2105 = vmatpush1.msra.mxu0 0.0
    %2106 = vmatprep.subr.mxu0 0.0
    %2107 = vmatpush1.msra.mxu0 0.0
    %2108 = vmatprep.subr.mxu0 0.0
    %2109 = vmatpush1.msra.mxu0 0.0
    %2110 = vmatprep.subr.mxu0 0.0
    %2111 = vmatpush1.msra.mxu0 0.0
    %2112 = vmatprep.subr.mxu0 0.0
    %2113 = vmatpush1.msra.mxu0 0.0
    %2114 = vmatprep.subr.mxu0 0.0
    %2115 = vmatpush1.msra.mxu0 0.0
    %2116 = vmatprep.subr.mxu0 0.0
    %2117 = vmatpush1.msra.mxu0 0.0
    %2118 = vmatprep.subr.mxu0 0.0
    %2119 = vmatpush1.msra.mxu0 0.0
    %2120 = vmatprep.subr.mxu0 0.0
    %2121 = vmatpush1.msra.mxu0 0.0
    %2122 = vmatprep.mubr.f32.mxu0 0.0
    %2123 = vmatmul.mubr.f32.gmra.mrb[0].mxu0 %v1814
    %v2124 = vpop.f32.mrb[0].mxu0
    %v2125 = vadd.f32 0.0, %v2124
    %v2126 = vpop.f32.mrb[0].mxu0
    %v2127 = vadd.f32 0.0, %v2126
    %2128 = vdwg.mxu0
    %2129 = vmatprep.subr.mxu0 %v164
    %2130 = vmatpush1.msra.mxu0 %v163
    %2131 = vmatprep.subr.mxu0 %v166
    %2132 = vmatpush1.msra.mxu0 %v165
    %2133 = vmatprep.subr.mxu0 %v168
    %2134 = vmatpush1.msra.mxu0 %v167
    %2135 = vmatprep.subr.mxu0 %v170
    %2136 = vmatpush1.msra.mxu0 %v169
    %2137 = vmatprep.subr.mxu0 %v172
    %2138 = vmatpush1.msra.mxu0 %v171
    %2139 = vmatprep.subr.mxu0 %v174
    %2140 = vmatpush1.msra.mxu0 %v173
    %2141 = vmatprep.subr.mxu0 %v176
    %2142 = vmatpush1.msra.mxu0 %v175
    %2143 = vmatprep.subr.mxu0 %v178
    %2144 = vmatpush1.msra.mxu0 %v177
    %2145 = vmatprep.subr.mxu0 %v180
    %2146 = vmatpush1.msra.mxu0 %v179
    %2147 = vmatprep.subr.mxu0 %v182
    %2148 = vmatpush1.msra.mxu0 %v181
    %2149 = vmatprep.subr.mxu0 %v184
    %2150 = vmatpush1.msra.mxu0 %v183
    %2151 = vmatprep.subr.mxu0 %v186
    %2152 = vmatpush1.msra.mxu0 %v185
    %2153 = vmatprep.subr.mxu0 %v188
    %2154 = vmatpush1.msra.mxu0 %v187
    %2155 = vmatprep.subr.mxu0 %v190
    %2156 = vmatpush1.msra.mxu0 %v189
    %2157 = vmatprep.subr.mxu0 %v192
    %2158 = vmatpush1.msra.mxu0 %v191
    %2159 = vmatprep.subr.mxu0 %v194
    %2160 = vmatpush1.msra.mxu0 %v193
    %2161 = vmatprep.subr.mxu0 %v196
    %2162 = vmatpush1.msra.mxu0 %v195
    %2163 = vmatprep.subr.mxu0 %v198
    %2164 = vmatpush1.msra.mxu0 %v197
    %2165 = vmatprep.subr.mxu0 %v200
    %2166 = vmatpush1.msra.mxu0 %v199
    %2167 = vmatprep.subr.mxu0 %v202
    %2168 = vmatpush1.msra.mxu0 %v201
    %2169 = vmatprep.subr.mxu0 %v204
    %2170 = vmatpush1.msra.mxu0 %v203
    %2171 = vmatprep.subr.mxu0 %v206
    %2172 = vmatpush1.msra.mxu0 %v205
    %2173 = vmatprep.subr.mxu0 %v208
    %2174 = vmatpush1.msra.mxu0 %v207
    %2175 = vmatprep.subr.mxu0 %v210
    %2176 = vmatpush1.msra.mxu0 %v209
    %2177 = vmatprep.subr.mxu0 %v212
    %2178 = vmatpush1.msra.mxu0 %v211
    %2179 = vmatprep.subr.mxu0 %v214
    %2180 = vmatpush1.msra.mxu0 %v213
    %2181 = vmatprep.subr.mxu0 %v216
    %2182 = vmatpush1.msra.mxu0 %v215
    %2183 = vmatprep.subr.mxu0 %v218
    %2184 = vmatpush1.msra.mxu0 %v217
    %2185 = vmatprep.subr.mxu0 %v220
    %2186 = vmatpush1.msra.mxu0 %v219
    %2187 = vmatprep.subr.mxu0 %v222
    %2188 = vmatpush1.msra.mxu0 %v221
    %2189 = vmatprep.subr.mxu0 %v224
    %2190 = vmatpush1.msra.mxu0 %v223
    %2191 = vmatprep.subr.mxu0 %v226
    %2192 = vmatpush1.msra.mxu0 %v225
    %2193 = vmatprep.mubr.f32.mxu0 %v2127
    %2194 = vmatmul.mubr.f32.gmra.mrb[0].mxu0 %v2125
    %v2195 = vpop.f32.mrb[0].mxu0
    %v2196 = vadd.f32 0.0, %v2195
    %v2197 = vpop.f32.mrb[0].mxu0
    %v2198 = vadd.f32 0.0, %v2197
    %2199 = vdwg.mxu0
    %v2200 = vmul.f32 %v2196, 0.083333336
    %v2201 = vmul.f32 %v2198, 0.083333336
    %v2203 = vsel %vm1294, %v2200, 0
    %v2206 = vsel %vm1294, %v2201, 0
    %2208 = vmatprep.subr.mxu0 %v2206
    %2209 = vmatpush1.msra.mxu0 %v2203
    %2210 = vmatprep.subr.mxu0 0.0
    %2211 = vmatpush1.msra.mxu0 0.0
    %2212 = vmatprep.subr.mxu0 0.0
    %2213 = vmatpush1.msra.mxu0 0.0
    %2214 = vmatprep.subr.mxu0 0.0
    %2215 = vmatpush1.msra.mxu0 0.0
    %2216 = vmatprep.subr.mxu0 0.0
    %2217 = vmatpush1.msra.mxu0 0.0
    %2218 = vmatprep.subr.mxu0 0.0
    %2219 = vmatpush1.msra.mxu0 0.0
    %2220 = vmatprep.subr.mxu0 0.0
    %2221 = vmatpush1.msra.mxu0 0.0
    %2222 = vmatprep.subr.mxu0 0.0
    %2223 = vmatpush1.msra.mxu0 0.0
    %2224 = vmatprep.subr.mxu0 0.0
    %2225 = vmatpush1.msra.mxu0 0.0
    %2226 = vmatprep.subr.mxu0 0.0
    %2227 = vmatpush1.msra.mxu0 0.0
    %2228 = vmatprep.subr.mxu0 0.0
    %2229 = vmatpush1.msra.mxu0 0.0
    %2230 = vmatprep.subr.mxu0 0.0
    %2231 = vmatpush1.msra.mxu0 0.0
    %2232 = vmatprep.subr.mxu0 0.0
    %2233 = vmatpush1.msra.mxu0 0.0
    %2234 = vmatprep.subr.mxu0 0.0
    %2235 = vmatpush1.msra.mxu0 0.0
    %2236 = vmatprep.subr.mxu0 0.0
    %2237 = vmatpush1.msra.mxu0 0.0
    %2238 = vmatprep.subr.mxu0 0.0
    %2239 = vmatpush1.msra.mxu0 0.0
    %2240 = vmatprep.subr.mxu0 0.0
    %2241 = vmatpush1.msra.mxu0 0.0
    %2242 = vmatprep.subr.mxu0 0.0
    %2243 = vmatpush1.msra.mxu0 0.0
    %2244 = vmatprep.subr.mxu0 0.0
    %2245 = vmatpush1.msra.mxu0 0.0
    %2246 = vmatprep.subr.mxu0 0.0
    %2247 = vmatpush1.msra.mxu0 0.0
    %2248 = vmatprep.subr.mxu0 0.0
    %2249 = vmatpush1.msra.mxu0 0.0
    %2250 = vmatprep.subr.mxu0 0.0
    %2251 = vmatpush1.msra.mxu0 0.0
    %2252 = vmatprep.subr.mxu0 0.0
    %2253 = vmatpush1.msra.mxu0 0.0
    %2254 = vmatprep.subr.mxu0 0.0
    %2255 = vmatpush1.msra.mxu0 0.0
    %2256 = vmatprep.subr.mxu0 0.0
    %2257 = vmatpush1.msra.mxu0 0.0
    %2258 = vmatprep.subr.mxu0 0.0
    %2259 = vmatpush1.msra.mxu0 0.0
    %2260 = vmatprep.subr.mxu0 0.0
    %2261 = vmatpush1.msra.mxu0 0.0
    %2262 = vmatprep.subr.mxu0 0.0
    %2263 = vmatpush1.msra.mxu0 0.0
    %2264 = vmatprep.subr.mxu0 0.0
    %2265 = vmatpush1.msra.mxu0 0.0
    %2266 = vmatprep.subr.mxu0 0.0
    %2267 = vmatpush1.msra.mxu0 0.0
    %2268 = vmatprep.subr.mxu0 0.0
    %2269 = vmatpush1.msra.mxu0 0.0
    %2270 = vmatprep.subr.mxu0 0.0
    %2271 = vmatpush1.msra.mxu0 0.0
    %2272 = vmatprep.mubr.f32.mxu0 0.0
    %2273 = vmatmul.mubr.f32.gmra.mrb[0].mxu0 %v1962
    %v2274 = vpop.f32.mrb[0].mxu0
    %v2275 = vadd.f32 1e-05, %v2274
    %v2276 = vpop.f32.mrb[0].mxu0
    %v2277 = vadd.f32 1e-05, %v2276
    %2278 = vmatprep.mubr.f32.mxu0 0.0
    %2279 = vmatmul.mubr.f32.gmra.mrb[0].mxu0 %v1965
    %v2280 = vpop.f32.mrb[0].mxu0
    %v2281 = vadd.f32 1e-05, %v2280
    %v2282 = vpop.f32.mrb[0].mxu0
    %v2283 = vadd.f32 1e-05, %v2282
    %2284 = vdwg.mxu0
    %v2285 = vrsqrt.pop %v2275
    %v2286 = vrsqrt.pop %v2277
    %v2287 = vrsqrt.pop %v2281
    %v2288 = vrsqrt.pop %v2283
    %v2289 = vmul.f32 %v2050, %v2285
    %v2290 = vmul.f32 %v2051, %v2286
    %v2291 = vmul.f32 %v2052, %v2287
    %v2292 = vmul.f32 %v2053, %v2288
    %v2294 = vlaneseq
    %v2295 = vshrl.u32 %v2294, 7
    %v2296 = vsub.s32 0, %v2295
    %v2297 = vrot.slane %v1809, %v2296
    %v2298 = vlaneseq
    %v2299 = vshrl.u32 %v2298, 7
    %v2300 = vsub.s32 1, %v2299
    %v2301 = vrot.slane %v1809, %v2300
    %v2304 = vmul.f32 %v2289, %v2297
    %v2305 = vmul.f32 %v2290, %v2301
    %v2306 = vmul.f32 %v2291, %v2297
    %v2307 = vmul.f32 %v2292, %v2301
    %v2309 = vlaneseq
    %v2310 = vshrl.u32 %v2309, 7
    %v2311 = vsub.s32 0, %v2310
    %v2312 = vrot.slane %v1811, %v2311
    %v2313 = vlaneseq
    %v2314 = vshrl.u32 %v2313, 7
    %v2315 = vsub.s32 1, %v2314
    %v2316 = vrot.slane %v1811, %v2315
    %v2319 = vadd.f32 %v2304, %v2312
    %v2320 = vadd.f32 %v2305, %v2316
    %v2321 = vadd.f32 %v2306, %v2312
    %v2322 = vadd.f32 %v2307, %v2316
    %v2327 = vrot.slane %v2319, 7
    %v2328 = vrot.slane %v2320, 7
    %v2329 = vrot.slane %v2321, 7
    %v2330 = vsel %vm1294, %v2327, %v2329
    %v2331 = vrot.slane %v2322, 7
    %v2332 = vsel %vm1294, %v2328, %v2331
    %v2337 = vsel %vm1294, 0.0, %v2327
    %v2338 = vsel %vm1294, 0.0, %v2328
    %v2339 = vmul.f32 %v2337, %v1304
    %v2340 = vmul.f32 %v2338, %v1304
    %v2341 = vmul.f32 %v2330, %v1309
    %v2342 = vmul.f32 %v2332, %v1309
    %v2343 = vrot.slane %v2319, 1
    %v2344 = vrot.slane %v2321, 1
    %v2345 = vsel %vm1313, %v2343, %v2344
    %v2346 = vrot.slane %v2320, 1
    %v2347 = vrot.slane %v2322, 1
    %v2348 = vsel %vm1313, %v2346, %v2347
    %v2353 = vsel %vm1313, %v2344, 0.0
    %v2354 = vsel %vm1313, %v2347, 0.0
    %v2355 = vmul.f32 %v2345, %v1323
    %v2356 = vmul.f32 %v2348, %v1323
    %v2357 = vmul.f32 %v2353, %v1328
    %v2358 = vmul.f32 %v2354, %v1328
    %v2359 = vld [vmem:[#allocation6 + $0xc0] sm:$0xf]
    %v2360 = vld [vmem:[#allocation6 + $0xc4] sm:$0xf]
    %v2361 = vld [vmem:[#allocation6 + $0xc8] sm:$0xf]
    %v2362 = vld [vmem:[#allocation6 + $0xcc] sm:$0xf]
    %v2363 = vld [vmem:[#allocation6 + $0xd0] sm:$0xf]
    %v2364 = vld [vmem:[#allocation6 + $0xd4] sm:$0xf]
    %v2365 = vld [vmem:[#allocation6 + $0xd8] sm:$0xf]
    %v2366 = vld [vmem:[#allocation6 + $0xdc] sm:$0xf]
    %v2367 = vld [vmem:[#allocation6 + $0xe0] sm:$0xf]
    %v2368 = vld [vmem:[#allocation6 + $0xe4] sm:$0xf]
    %v2369 = vld [vmem:[#allocation6 + $0xe8] sm:$0xf]
    %v2370 = vld [vmem:[#allocation6 + $0xec] sm:$0xf]
    %v2371 = vld [vmem:[#allocation6 + $0xf0] sm:$0xf]
    %v2372 = vld [vmem:[#allocation6 + $0xf4] sm:$0xf]
    %v2373 = vld [vmem:[#allocation6 + $0xf8] sm:$0xf]
    %v2374 = vld [vmem:[#allocation6 + $0xfc] sm:$0xf]
    %v2375 = vld [vmem:[#allocation6 + $0x100] sm:$0xf]
    %v2376 = vld [vmem:[#allocation6 + $0x104] sm:$0xf]
    %v2377 = vld [vmem:[#allocation6 + $0x108] sm:$0xf]
    %v2378 = vld [vmem:[#allocation6 + $0x10c] sm:$0xf]
    %v2379 = vld [vmem:[#allocation6 + $0x110] sm:$0xf]
    %v2380 = vld [vmem:[#allocation6 + $0x114] sm:$0xf]
    %v2381 = vld [vmem:[#allocation6 + $0x118] sm:$0xf]
    %v2382 = vld [vmem:[#allocation6 + $0x11c] sm:$0xf]
    %v2383 = vld [vmem:[#allocation6 + $0x120] sm:$0xf]
    %v2384 = vld [vmem:[#allocation6 + $0x124] sm:$0xf]
    %v2385 = vld [vmem:[#allocation6 + $0x128] sm:$0xf]
    %v2386 = vld [vmem:[#allocation6 + $0x12c] sm:$0xf]
    %v2387 = vld [vmem:[#allocation6 + $0x130] sm:$0xf]
    %v2388 = vld [vmem:[#allocation6 + $0x134] sm:$0xf]
    %v2389 = vld [vmem:[#allocation6 + $0x138] sm:$0xf]
    %v2390 = vld [vmem:[#allocation6 + $0x13c] sm:$0xf]
    %v2391 = vpack.c.bf16 %v2341, %v2339
    %v2392 = vpack.c.bf16 %v2342, %v2340
    %v2393 = vld [vmem:[#allocation6 + $0x140] sm:$0xf]
    %v2394 = vld [vmem:[#allocation6 + $0x144] sm:$0xf]
    %v2395 = vld [vmem:[#allocation6 + $0x148] sm:$0xf]
    %v2396 = vld [vmem:[#allocation6 + $0x14c] sm:$0xf]
    %v2397 = vld [vmem:[#allocation6 + $0x150] sm:$0xf]
    %v2398 = vld [vmem:[#allocation6 + $0x154] sm:$0xf]
    %v2399 = vld [vmem:[#allocation6 + $0x158] sm:$0xf]
    %v2400 = vld [vmem:[#allocation6 + $0x15c] sm:$0xf]
    %v2401 = vld [vmem:[#allocation6 + $0x160] sm:$0xf]
    %v2402 = vld [vmem:[#allocation6 + $0x164] sm:$0xf]
    %v2403 = vld [vmem:[#allocation6 + $0x168] sm:$0xf]
    %v2404 = vld [vmem:[#allocation6 + $0x16c] sm:$0xf]
    %v2405 = vld [vmem:[#allocation6 + $0x170] sm:$0xf]
    %v2406 = vld [vmem:[#allocation6 + $0x174] sm:$0xf]
    %v2407 = vld [vmem:[#allocation6 + $0x178] sm:$0xf]
    %v2408 = vld [vmem:[#allocation6 + $0x17c] sm:$0xf]
    %v2409 = vld [vmem:[#allocation6 + $0x180] sm:$0xf]
    %v2410 = vld [vmem:[#allocation6 + $0x184] sm:$0xf]
    %v2411 = vld [vmem:[#allocation6 + $0x188] sm:$0xf]
    %v2412 = vld [vmem:[#allocation6 + $0x18c] sm:$0xf]
    %v2413 = vld [vmem:[#allocation6 + $0x190] sm:$0xf]
    %v2414 = vld [vmem:[#allocation6 + $0x194] sm:$0xf]
    %v2415 = vld [vmem:[#allocation6 + $0x198] sm:$0xf]
    %v2416 = vld [vmem:[#allocation6 + $0x19c] sm:$0xf]
    %v2417 = vld [vmem:[#allocation6 + $0x1a0] sm:$0xf]
    %v2418 = vld [vmem:[#allocation6 + $0x1a4] sm:$0xf]
    %v2419 = vld [vmem:[#allocation6 + $0x1a8] sm:$0xf]
    %v2420 = vld [vmem:[#allocation6 + $0x1ac] sm:$0xf]
    %v2421 = vld [vmem:[#allocation6 + $0x1b0] sm:$0xf]
    %v2422 = vld [vmem:[#allocation6 + $0x1b4] sm:$0xf]
    %v2423 = vld [vmem:[#allocation6 + $0x1b8] sm:$0xf]
    %v2424 = vld [vmem:[#allocation6 + $0x1bc] sm:$0xf]
    %v2425 = vpack.c.bf16 %v2321, %v2319
    %v2426 = vpack.c.bf16 %v2322, %v2320
    %v2459 = vunpack.c.l.b16 %v2393
    %v2460 = vunpack.c.l.b16 %v2394
    %v2461 = vunpack.c.l.b16 %v2395
    %v2462 = vunpack.c.l.b16 %v2396
    %v2463 = vunpack.c.l.b16 %v2397
    %v2464 = vunpack.c.l.b16 %v2398
    %v2465 = vunpack.c.l.b16 %v2399
    %v2466 = vunpack.c.l.b16 %v2400
    %v2467 = vunpack.c.l.b16 %v2401
    %v2468 = vunpack.c.l.b16 %v2402
    %v2469 = vunpack.c.l.b16 %v2403
    %v2470 = vunpack.c.l.b16 %v2404
    %v2471 = vunpack.c.l.b16 %v2405
    %v2472 = vunpack.c.l.b16 %v2406
    %v2473 = vunpack.c.l.b16 %v2407
    %v2474 = vunpack.c.l.b16 %v2408
    %v2475 = vunpack.c.l.b16 %v2409
    %v2476 = vunpack.c.l.b16 %v2410
    %v2477 = vunpack.c.l.b16 %v2411
    %v2478 = vunpack.c.l.b16 %v2412
    %v2479 = vunpack.c.l.b16 %v2413
    %v2480 = vunpack.c.l.b16 %v2414
    %v2481 = vunpack.c.l.b16 %v2415
    %v2482 = vunpack.c.l.b16 %v2416
    %v2483 = vunpack.c.l.b16 %v2417
    %v2484 = vunpack.c.l.b16 %v2418
    %v2485 = vunpack.c.l.b16 %v2419
    %v2486 = vunpack.c.l.b16 %v2420
    %v2487 = vunpack.c.l.b16 %v2421
    %v2488 = vunpack.c.l.b16 %v2422
    %v2489 = vunpack.c.l.b16 %v2423
    %v2490 = vunpack.c.l.b16 %v2424
    %v2491 = vpack.c.b16 %v2460, %v2459
    %v2492 = vpack.c.b16 %v2462, %v2461
    %v2493 = vpack.c.b16 %v2464, %v2463
    %v2494 = vpack.c.b16 %v2466, %v2465
    %v2495 = vpack.c.b16 %v2468, %v2467
    %v2496 = vpack.c.b16 %v2470, %v2469
    %v2497 = vpack.c.b16 %v2472, %v2471
    %v2498 = vpack.c.b16 %v2474, %v2473
    %v2499 = vpack.c.b16 %v2476, %v2475
    %v2500 = vpack.c.b16 %v2478, %v2477
    %v2501 = vpack.c.b16 %v2480, %v2479
    %v2502 = vpack.c.b16 %v2482, %v2481
    %v2503 = vpack.c.b16 %v2484, %v2483
    %v2504 = vpack.c.b16 %v2486, %v2485
    %v2505 = vpack.c.b16 %v2488, %v2487
    %v2506 = vpack.c.b16 %v2490, %v2489
    %2523 = vmatprep.subr.bf16.mxu0 0
    %2524 = vmatpush1.bf16.msra.mxu0 %v2491
    %2525 = vmatprep.subr.bf16.mxu0 0
    %2526 = vmatpush1.bf16.msra.mxu0 %v2492
    %2527 = vmatprep.subr.bf16.mxu0 0
    %2528 = vmatpush1.bf16.msra.mxu0 %v2493
    %2529 = vmatprep.subr.bf16.mxu0 0
    %2530 = vmatpush1.bf16.msra.mxu0 %v2494
    %2531 = vmatprep.subr.bf16.mxu0 0
    %2532 = vmatpush1.bf16.msra.mxu0 %v2495
    %2533 = vmatprep.subr.bf16.mxu0 0
    %2534 = vmatpush1.bf16.msra.mxu0 %v2496
    %2535 = vmatprep.subr.bf16.mxu0 0
    %2536 = vmatpush1.bf16.msra.mxu0 %v2497
    %2537 = vmatprep.subr.bf16.mxu0 0
    %2538 = vmatpush1.bf16.msra.mxu0 %v2498
    %2539 = vmatprep.subr.bf16.mxu0 0
    %2540 = vmatpush1.bf16.msra.mxu0 %v2499
    %2541 = vmatprep.subr.bf16.mxu0 0
    %2542 = vmatpush1.bf16.msra.mxu0 %v2500
    %2543 = vmatprep.subr.bf16.mxu0 0
    %2544 = vmatpush1.bf16.msra.mxu0 %v2501
    %2545 = vmatprep.subr.bf16.mxu0 0
    %2546 = vmatpush1.bf16.msra.mxu0 %v2502
    %2547 = vmatprep.subr.bf16.mxu0 0
    %2548 = vmatpush1.bf16.msra.mxu0 %v2503
    %2549 = vmatprep.subr.bf16.mxu0 0
    %2550 = vmatpush1.bf16.msra.mxu0 %v2504
    %2551 = vmatprep.subr.bf16.mxu0 0
    %2552 = vmatpush1.bf16.msra.mxu0 %v2505
    %2553 = vmatprep.subr.bf16.mxu0 0
    %2554 = vmatpush1.bf16.msra.mxu0 %v2506
    %2555 = vmatprep.mubr.bf16.mxu0 %v2426
    %2556 = vmatmul.mubr.bf16.gmra.mrb[0].mxu0 %v2425
    %v2557 = vpop.f32.mrb[0].mxu0
    %v2558 = vadd.f32 0.0, %v2557
    %v2559 = vpop.f32.mrb[0].mxu0
    %v2560 = vpop.f32.mrb[0].mxu0
    %v2561 = vadd.f32 0.0, %v2560
    %v2562 = vpop.f32.mrb[0].mxu0
    %2563 = vdwg.mxu0
    %v2596 = vunpack.c.l.b16 %v2359
    %v2597 = vunpack.c.l.b16 %v2360
    %v2598 = vunpack.c.l.b16 %v2361
    %v2599 = vunpack.c.l.b16 %v2362
    %v2600 = vunpack.c.l.b16 %v2363
    %v2601 = vunpack.c.l.b16 %v2364
    %v2602 = vunpack.c.l.b16 %v2365
    %v2603 = vunpack.c.l.b16 %v2366
    %v2604 = vunpack.c.l.b16 %v2367
    %v2605 = vunpack.c.l.b16 %v2368
    %v2606 = vunpack.c.l.b16 %v2369
    %v2607 = vunpack.c.l.b16 %v2370
    %v2608 = vunpack.c.l.b16 %v2371
    %v2609 = vunpack.c.l.b16 %v2372
    %v2610 = vunpack.c.l.b16 %v2373
    %v2611 = vunpack.c.l.b16 %v2374
    %v2612 = vunpack.c.l.b16 %v2375
    %v2613 = vunpack.c.l.b16 %v2376
    %v2614 = vunpack.c.l.b16 %v2377
    %v2615 = vunpack.c.l.b16 %v2378
    %v2616 = vunpack.c.l.b16 %v2379
    %v2617 = vunpack.c.l.b16 %v2380
    %v2618 = vunpack.c.l.b16 %v2381
    %v2619 = vunpack.c.l.b16 %v2382
    %v2620 = vunpack.c.l.b16 %v2383
    %v2621 = vunpack.c.l.b16 %v2384
    %v2622 = vunpack.c.l.b16 %v2385
    %v2623 = vunpack.c.l.b16 %v2386
    %v2624 = vunpack.c.l.b16 %v2387
    %v2625 = vunpack.c.l.b16 %v2388
    %v2626 = vunpack.c.l.b16 %v2389
    %v2627 = vunpack.c.l.b16 %v2390
    %v2628 = vpack.c.b16 %v2597, %v2596
    %v2629 = vpack.c.b16 %v2599, %v2598
    %v2630 = vpack.c.b16 %v2601, %v2600
    %v2631 = vpack.c.b16 %v2603, %v2602
    %v2632 = vpack.c.b16 %v2605, %v2604
    %v2633 = vpack.c.b16 %v2607, %v2606
    %v2634 = vpack.c.b16 %v2609, %v2608
    %v2635 = vpack.c.b16 %v2611, %v2610
    %v2636 = vpack.c.b16 %v2613, %v2612
    %v2637 = vpack.c.b16 %v2615, %v2614
    %v2638 = vpack.c.b16 %v2617, %v2616
    %v2639 = vpack.c.b16 %v2619, %v2618
    %v2640 = vpack.c.b16 %v2621, %v2620
    %v2641 = vpack.c.b16 %v2623, %v2622
    %v2642 = vpack.c.b16 %v2625, %v2624
    %v2643 = vpack.c.b16 %v2627, %v2626
    %2660 = vmatprep.subr.bf16.mxu0 0
    %2661 = vmatpush1.bf16.msra.mxu0 %v2628
    %2662 = vmatprep.subr.bf16.mxu0 0
    %2663 = vmatpush1.bf16.msra.mxu0 %v2629
    %2664 = vmatprep.subr.bf16.mxu0 0
    %2665 = vmatpush1.bf16.msra.mxu0 %v2630
    %2666 = vmatprep.subr.bf16.mxu0 0
    %2667 = vmatpush1.bf16.msra.mxu0 %v2631
    %2668 = vmatprep.subr.bf16.mxu0 0
    %2669 = vmatpush1.bf16.msra.mxu0 %v2632
    %2670 = vmatprep.subr.bf16.mxu0 0
    %2671 = vmatpush1.bf16.msra.mxu0 %v2633
    %2672 = vmatprep.subr.bf16.mxu0 0
    %2673 = vmatpush1.bf16.msra.mxu0 %v2634
    %2674 = vmatprep.subr.bf16.mxu0 0
    %2675 = vmatpush1.bf16.msra.mxu0 %v2635
    %2676 = vmatprep.subr.bf16.mxu0 0
    %2677 = vmatpush1.bf16.msra.mxu0 %v2636
    %2678 = vmatprep.subr.bf16.mxu0 0
    %2679 = vmatpush1.bf16.msra.mxu0 %v2637
    %2680 = vmatprep.subr.bf16.mxu0 0
    %2681 = vmatpush1.bf16.msra.mxu0 %v2638
    %2682 = vmatprep.subr.bf16.mxu0 0
    %2683 = vmatpush1.bf16.msra.mxu0 %v2639
    %2684 = vmatprep.subr.bf16.mxu0 0
    %2685 = vmatpush1.bf16.msra.mxu0 %v2640
    %2686 = vmatprep.subr.bf16.mxu0 0
    %2687 = vmatpush1.bf16.msra.mxu0 %v2641
    %2688 = vmatprep.subr.bf16.mxu0 0
    %2689 = vmatpush1.bf16.msra.mxu0 %v2642
    %2690 = vmatprep.subr.bf16.mxu0 0
    %2691 = vmatpush1.bf16.msra.mxu0 %v2643
    %2692 = vmatprep.mubr.bf16.mxu0 %v2392
    %2693 = vmatmul.mubr.bf16.gmra.mrb[0].mxu0 %v2391
    %v2694 = vpop.f32.mrb[0].mxu0
    %v2695 = vadd.f32 %v2558, %v2694
    %v2696 = vpop.f32.mrb[0].mxu0
    %v2697 = vpop.f32.mrb[0].mxu0
    %v2698 = vadd.f32 %v2561, %v2697
    %v2699 = vpop.f32.mrb[0].mxu0
    %2700 = vdwg.mxu0
    %v2701 = vld [vmem:[#allocation6 + $0x1c0] sm:$0xf]
    %v2702 = vld [vmem:[#allocation6 + $0x1c4] sm:$0xf]
    %v2703 = vld [vmem:[#allocation6 + $0x1c8] sm:$0xf]
    %v2704 = vld [vmem:[#allocation6 + $0x1cc] sm:$0xf]
    %v2705 = vld [vmem:[#allocation6 + $0x1d0] sm:$0xf]
    %v2706 = vld [vmem:[#allocation6 + $0x1d4] sm:$0xf]
    %v2707 = vld [vmem:[#allocation6 + $0x1d8] sm:$0xf]
    %v2708 = vld [vmem:[#allocation6 + $0x1dc] sm:$0xf]
    %v2709 = vld [vmem:[#allocation6 + $0x1e0] sm:$0xf]
    %v2710 = vld [vmem:[#allocation6 + $0x1e4] sm:$0xf]
    %v2711 = vld [vmem:[#allocation6 + $0x1e8] sm:$0xf]
    %v2712 = vld [vmem:[#allocation6 + $0x1ec] sm:$0xf]
    %v2713 = vld [vmem:[#allocation6 + $0x1f0] sm:$0xf]
    %v2714 = vld [vmem:[#allocation6 + $0x1f4] sm:$0xf]
    %v2715 = vld [vmem:[#allocation6 + $0x1f8] sm:$0xf]
    %v2716 = vld [vmem:[#allocation6 + $0x1fc] sm:$0xf]
    %v2717 = vld [vmem:[#allocation6 + $0x200] sm:$0xf]
    %v2718 = vld [vmem:[#allocation6 + $0x204] sm:$0xf]
    %v2719 = vld [vmem:[#allocation6 + $0x208] sm:$0xf]
    %v2720 = vld [vmem:[#allocation6 + $0x20c] sm:$0xf]
    %v2721 = vld [vmem:[#allocation6 + $0x210] sm:$0xf]
    %v2722 = vld [vmem:[#allocation6 + $0x214] sm:$0xf]
    %v2723 = vld [vmem:[#allocation6 + $0x218] sm:$0xf]
    %v2724 = vld [vmem:[#allocation6 + $0x21c] sm:$0xf]
    %v2725 = vld [vmem:[#allocation6 + $0x220] sm:$0xf]
    %v2726 = vld [vmem:[#allocation6 + $0x224] sm:$0xf]
    %v2727 = vld [vmem:[#allocation6 + $0x228] sm:$0xf]
    %v2728 = vld [vmem:[#allocation6 + $0x22c] sm:$0xf]
    %v2729 = vld [vmem:[#allocation6 + $0x230] sm:$0xf]
    %v2730 = vld [vmem:[#allocation6 + $0x234] sm:$0xf]
    %v2731 = vld [vmem:[#allocation6 + $0x238] sm:$0xf]
    %v2732 = vld [vmem:[#allocation6 + $0x23c] sm:$0xf]
    %v2733 = vpack.c.bf16 %v2357, %v2355
    %v2734 = vpack.c.bf16 %v2358, %v2356
    %v2767 = vunpack.c.l.b16 %v2701
    %v2768 = vunpack.c.l.b16 %v2702
    %v2769 = vunpack.c.l.b16 %v2703
    %v2770 = vunpack.c.l.b16 %v2704
    %v2771 = vunpack.c.l.b16 %v2705
    %v2772 = vunpack.c.l.b16 %v2706
    %v2773 = vunpack.c.l.b16 %v2707
    %v2774 = vunpack.c.l.b16 %v2708
    %v2775 = vunpack.c.l.b16 %v2709
    %v2776 = vunpack.c.l.b16 %v2710
    %v2777 = vunpack.c.l.b16 %v2711
    %v2778 = vunpack.c.l.b16 %v2712
    %v2779 = vunpack.c.l.b16 %v2713
    %v2780 = vunpack.c.l.b16 %v2714
    %v2781 = vunpack.c.l.b16 %v2715
    %v2782 = vunpack.c.l.b16 %v2716
    %v2783 = vunpack.c.l.b16 %v2717
    %v2784 = vunpack.c.l.b16 %v2718
    %v2785 = vunpack.c.l.b16 %v2719
    %v2786 = vunpack.c.l.b16 %v2720
    %v2787 = vunpack.c.l.b16 %v2721
    %v2788 = vunpack.c.l.b16 %v2722
    %v2789 = vunpack.c.l.b16 %v2723
    %v2790 = vunpack.c.l.b16 %v2724
    %v2791 = vunpack.c.l.b16 %v2725
    %v2792 = vunpack.c.l.b16 %v2726
    %v2793 = vunpack.c.l.b16 %v2727
    %v2794 = vunpack.c.l.b16 %v2728
    %v2795 = vunpack.c.l.b16 %v2729
    %v2796 = vunpack.c.l.b16 %v2730
    %v2797 = vunpack.c.l.b16 %v2731
    %v2798 = vunpack.c.l.b16 %v2732
    %v2799 = vpack.c.b16 %v2768, %v2767
    %v2800 = vpack.c.b16 %v2770, %v2769
    %v2801 = vpack.c.b16 %v2772, %v2771
    %v2802 = vpack.c.b16 %v2774, %v2773
    %v2803 = vpack.c.b16 %v2776, %v2775
    %v2804 = vpack.c.b16 %v2778, %v2777
    %v2805 = vpack.c.b16 %v2780, %v2779
    %v2806 = vpack.c.b16 %v2782, %v2781
    %v2807 = vpack.c.b16 %v2784, %v2783
    %v2808 = vpack.c.b16 %v2786, %v2785
    %v2809 = vpack.c.b16 %v2788, %v2787
    %v2810 = vpack.c.b16 %v2790, %v2789
    %v2811 = vpack.c.b16 %v2792, %v2791
    %v2812 = vpack.c.b16 %v2794, %v2793
    %v2813 = vpack.c.b16 %v2796, %v2795
    %v2814 = vpack.c.b16 %v2798, %v2797
    %2831 = vmatprep.subr.bf16.mxu0 0
    %2832 = vmatpush1.bf16.msra.mxu0 %v2799
    %2833 = vmatprep.subr.bf16.mxu0 0
    %2834 = vmatpush1.bf16.msra.mxu0 %v2800
    %2835 = vmatprep.subr.bf16.mxu0 0
    %2836 = vmatpush1.bf16.msra.mxu0 %v2801
    %2837 = vmatprep.subr.bf16.mxu0 0
    %2838 = vmatpush1.bf16.msra.mxu0 %v2802
    %2839 = vmatprep.subr.bf16.mxu0 0
    %2840 = vmatpush1.bf16.msra.mxu0 %v2803
    %2841 = vmatprep.subr.bf16.mxu0 0
    %2842 = vmatpush1.bf16.msra.mxu0 %v2804
    %2843 = vmatprep.subr.bf16.mxu0 0
    %2844 = vmatpush1.bf16.msra.mxu0 %v2805
    %2845 = vmatprep.subr.bf16.mxu0 0
    %2846 = vmatpush1.bf16.msra.mxu0 %v2806
    %2847 = vmatprep.subr.bf16.mxu0 0
    %2848 = vmatpush1.bf16.msra.mxu0 %v2807
    %2849 = vmatprep.subr.bf16.mxu0 0
    %2850 = vmatpush1.bf16.msra.mxu0 %v2808
    %2851 = vmatprep.subr.bf16.mxu0 0
    %2852 = vmatpush1.bf16.msra.mxu0 %v2809
    %2853 = vmatprep.subr.bf16.mxu0 0
    %2854 = vmatpush1.bf16.msra.mxu0 %v2810
    %2855 = vmatprep.subr.bf16.mxu0 0
    %2856 = vmatpush1.bf16.msra.mxu0 %v2811
    %2857 = vmatprep.subr.bf16.mxu0 0
    %2858 = vmatpush1.bf16.msra.mxu0 %v2812
    %2859 = vmatprep.subr.bf16.mxu0 0
    %2860 = vmatpush1.bf16.msra.mxu0 %v2813
    %2861 = vmatprep.subr.bf16.mxu0 0
    %2862 = vmatpush1.bf16.msra.mxu0 %v2814
    %2863 = vmatprep.mubr.bf16.mxu0 %v2734
    %2864 = vmatmul.mubr.bf16.gmra.mrb[0].mxu0 %v2733
    %v2865 = vpop.f32.mrb[0].mxu0
    %v2866 = vadd.f32 0.0, %v2865
    %v2867 = vpop.f32.mrb[0].mxu0
    %v2868 = vpop.f32.mrb[0].mxu0
    %v2869 = vadd.f32 0.0, %v2868
    %v2870 = vpop.f32.mrb[0].mxu0
    %2871 = vdwg.mxu0
    %v2872 = vadd.f32 %v2695, %v2866
    %v2873 = vadd.f32 %v2698, %v2869
    %v2874 = vld [vmem:[#allocation10 + $0x8] sm:$0x1]
    %v2875 = vlaneseq
    %v2876 = vshrl.u32 %v2875, 7
    %v2877 = vsub.s32 0, %v2876
    %v2878 = vrot.slane %v2874, %v2877
    %v2879 = vadd.f32 %v2872, %v2878
    %v2880 = vadd.f32 %v2873, %v2878
    %v2881 = vmul.f32 %v2879, 0.5
    %v2882 = vmul.f32 %v2880, 0.5
    %v2883 = vmul.f32 %v2879, 0.044715
    %v2884 = vmul.f32 %v2880, 0.044715
    %v2885 = vmul.f32 %v2883, %v2879
    %v2886 = vmul.f32 %v2884, %v2880
    %v2887 = vmul.f32 %v2885, %v2879
    %v2888 = vmul.f32 %v2886, %v2880
    %v2889 = vadd.f32 %v2879, %v2887
    %v2890 = vadd.f32 %v2880, %v2888
    %v2891 = vmul.f32 %v2889, 0.7978846
    %v2892 = vmul.f32 %v2890, 0.7978846
    %v2893 = vtanh.pop %v2891
    %v2894 = vtanh.pop %v2892
    %v2895 = vadd.f32 %v2893, 1.0
    %v2896 = vadd.f32 %v2894, 1.0
    %v2897 = vmul.f32 %v2881, %v2895
    %v2898 = vmul.f32 %v2882, %v2896
    %v2899 = vld [vmem:[#allocation10 + $0x9] sm:$0x1]
    %v2900 = vld [vmem:[#allocation10 + $0xa] sm:$0x1]
    %2901 = vmatprep.subr.mxu0 0.0
    %2902 = vmatpush1.msra.mxu0 %v2897
    %2903 = vmatprep.subr.mxu0 0.0
    %2904 = vmatpush1.msra.mxu0 %v2898
    %2905 = vmatprep.subr.mxu0 0.0
    %2906 = vmatpush1.msra.mxu0 0.0
    %2907 = vmatprep.subr.mxu0 0.0
    %2908 = vmatpush1.msra.mxu0 0.0
    %2909 = vmatprep.subr.mxu0 0.0
    %2910 = vmatpush1.msra.mxu0 0.0
    %2911 = vmatprep.subr.mxu0 0.0
    %2912 = vmatpush1.msra.mxu0 0.0
    %2913 = vmatprep.subr.mxu0 0.0
    %2914 = vmatpush1.msra.mxu0 0.0
    %2915 = vmatprep.subr.mxu0 0.0
    %2916 = vmatpush1.msra.mxu0 0.0
    %2917 = vmatprep.subr.mxu0 0.0
    %2918 = vmatpush1.msra.mxu0 0.0
    %2919 = vmatprep.subr.mxu0 0.0
    %2920 = vmatpush1.msra.mxu0 0.0
    %2921 = vmatprep.subr.mxu0 0.0
    %2922 = vmatpush1.msra.mxu0 0.0
    %2923 = vmatprep.subr.mxu0 0.0
    %2924 = vmatpush1.msra.mxu0 0.0
    %2925 = vmatprep.subr.mxu0 0.0
    %2926 = vmatpush1.msra.mxu0 0.0
    %2927 = vmatprep.subr.mxu0 0.0
    %2928 = vmatpush1.msra.mxu0 0.0
    %2929 = vmatprep.subr.mxu0 0.0
    %2930 = vmatpush1.msra.mxu0 0.0
    %2931 = vmatprep.subr.mxu0 0.0
    %2932 = vmatpush1.msra.mxu0 0.0
    %2933 = vmatprep.subr.mxu0 0.0
    %2934 = vmatpush1.msra.mxu0 0.0
    %2935 = vmatprep.subr.mxu0 0.0
    %2936 = vmatpush1.msra.mxu0 0.0
    %2937 = vmatprep.subr.mxu0 0.0
    %2938 = vmatpush1.msra.mxu0 0.0
    %2939 = vmatprep.subr.mxu0 0.0
    %2940 = vmatpush1.msra.mxu0 0.0
    %2941 = vmatprep.subr.mxu0 0.0
    %2942 = vmatpush1.msra.mxu0 0.0
    %2943 = vmatprep.subr.mxu0 0.0
    %2944 = vmatpush1.msra.mxu0 0.0
    %2945 = vmatprep.subr.mxu0 0.0
    %2946 = vmatpush1.msra.mxu0 0.0
    %2947 = vmatprep.subr.mxu0 0.0
    %2948 = vmatpush1.msra.mxu0 0.0
    %2949 = vmatprep.subr.mxu0 0.0
    %2950 = vmatpush1.msra.mxu0 0.0
    %2951 = vmatprep.subr.mxu0 0.0
    %2952 = vmatpush1.msra.mxu0 0.0
    %2953 = vmatprep.subr.mxu0 0.0
    %2954 = vmatpush1.msra.mxu0 0.0
    %2955 = vmatprep.subr.mxu0 0.0
    %2956 = vmatpush1.msra.mxu0 0.0
    %2957 = vmatprep.subr.mxu0 0.0
    %2958 = vmatpush1.msra.mxu0 0.0
    %2959 = vmatprep.subr.mxu0 0.0
    %2960 = vmatpush1.msra.mxu0 0.0
    %2961 = vmatprep.subr.mxu0 0.0
    %2962 = vmatpush1.msra.mxu0 0.0
    %2963 = vmatprep.subr.mxu0 0.0
    %2964 = vmatpush1.msra.mxu0 0.0
    %2965 = vmatprep.mubr.f32.mxu0 0.0
    %2966 = vmatmul.mubr.f32.gmra.mrb[0].mxu0 %v1814
    %v2967 = vpop.f32.mrb[0].mxu0
    %v2968 = vadd.f32 0.0, %v2967
    %v2969 = vpop.f32.mrb[0].mxu0
    %2970 = vdwg.mxu0
    %2971 = vmatprep.subr.mxu0 0.0
    %2972 = vmatpush1.msra.mxu0 %v147
    %2973 = vmatprep.subr.mxu0 0.0
    %2974 = vmatpush1.msra.mxu0 %v148
    %2975 = vmatprep.subr.mxu0 0.0
    %2976 = vmatpush1.msra.mxu0 %v149
    %2977 = vmatprep.subr.mxu0 0.0
    %2978 = vmatpush1.msra.mxu0 %v150
    %2979 = vmatprep.subr.mxu0 0.0
    %2980 = vmatpush1.msra.mxu0 %v151
    %2981 = vmatprep.subr.mxu0 0.0
    %2982 = vmatpush1.msra.mxu0 %v152
    %2983 = vmatprep.subr.mxu0 0.0
    %2984 = vmatpush1.msra.mxu0 %v153
    %2985 = vmatprep.subr.mxu0 0.0
    %2986 = vmatpush1.msra.mxu0 %v154
    %2987 = vmatprep.subr.mxu0 0.0
    %2988 = vmatpush1.msra.mxu0 %v155
    %2989 = vmatprep.subr.mxu0 0.0
    %2990 = vmatpush1.msra.mxu0 %v156
    %2991 = vmatprep.subr.mxu0 0.0
    %2992 = vmatpush1.msra.mxu0 %v157
    %2993 = vmatprep.subr.mxu0 0.0
    %2994 = vmatpush1.msra.mxu0 %v158
    %2995 = vmatprep.subr.mxu0 0.0
    %2996 = vmatpush1.msra.mxu0 %v159
    %2997 = vmatprep.subr.mxu0 0.0
    %2998 = vmatpush1.msra.mxu0 %v160
    %2999 = vmatprep.subr.mxu0 0.0
    %3000 = vmatpush1.msra.mxu0 %v161
    %3001 = vmatprep.subr.mxu0 0.0
    %3002 = vmatpush1.msra.mxu0 %v162
    %3003 = vmatprep.subr.mxu0 0.0
    %3004 = vmatpush1.msra.mxu0 0.0
    %3005 = vmatprep.subr.mxu0 0.0
    %3006 = vmatpush1.msra.mxu0 0.0
    %3007 = vmatprep.subr.mxu0 0.0
    %3008 = vmatpush1.msra.mxu0 0.0
    %3009 = vmatprep.subr.mxu0 0.0
    %3010 = vmatpush1.msra.mxu0 0.0
    %3011 = vmatprep.subr.mxu0 0.0
    %3012 = vmatpush1.msra.mxu0 0.0
    %3013 = vmatprep.subr.mxu0 0.0
    %3014 = vmatpush1.msra.mxu0 0.0
    %3015 = vmatprep.subr.mxu0 0.0
    %3016 = vmatpush1.msra.mxu0 0.0
    %3017 = vmatprep.subr.mxu0 0.0
    %3018 = vmatpush1.msra.mxu0 0.0
    %3019 = vmatprep.subr.mxu0 0.0
    %3020 = vmatpush1.msra.mxu0 0.0
    %3021 = vmatprep.subr.mxu0 0.0
    %3022 = vmatpush1.msra.mxu0 0.0
    %3023 = vmatprep.subr.mxu0 0.0
    %3024 = vmatpush1.msra.mxu0 0.0
    %3025 = vmatprep.subr.mxu0 0.0
    %3026 = vmatpush1.msra.mxu0 0.0
    %3027 = vmatprep.subr.mxu0 0.0
    %3028 = vmatpush1.msra.mxu0 0.0
    %3029 = vmatprep.subr.mxu0 0.0
    %3030 = vmatpush1.msra.mxu0 0.0
    %3031 = vmatprep.subr.mxu0 0.0
    %3032 = vmatpush1.msra.mxu0 0.0
    %3033 = vmatprep.subr.mxu0 0.0
    %3034 = vmatpush1.msra.mxu0 0.0
    %3035 = vmatprep.mubr.f32.mxu0 0.0
    %3036 = vmatmul.mubr.f32.gmra.mrb[0].mxu0 %v2968
    %v3037 = vpop.f32.mrb[0].mxu0
    %v3038 = vadd.f32 0.0, %v3037
    %v3039 = vpop.f32.mrb[0].mxu0
    %3040 = vdwg.mxu0
    %v3041 = vmul.f32 %v3038, 0.083333336
    %v3043 = vsel %vm1294, %v3041, 0
    %3045 = vmatprep.subr.mxu0 0.0
    %3046 = vmatpush1.msra.mxu0 %v3043
    %3047 = vmatprep.subr.mxu0 0.0
    %3048 = vmatpush1.msra.mxu0 0.0
    %3049 = vmatprep.subr.mxu0 0.0
    %3050 = vmatpush1.msra.mxu0 0.0
    %3051 = vmatprep.subr.mxu0 0.0
    %3052 = vmatpush1.msra.mxu0 0.0
    %3053 = vmatprep.subr.mxu0 0.0
    %3054 = vmatpush1.msra.mxu0 0.0
    %3055 = vmatprep.subr.mxu0 0.0
    %3056 = vmatpush1.msra.mxu0 0.0
    %3057 = vmatprep.subr.mxu0 0.0
    %3058 = vmatpush1.msra.mxu0 0.0
    %3059 = vmatprep.subr.mxu0 0.0
    %3060 = vmatpush1.msra.mxu0 0.0
    %3061 = vmatprep.subr.mxu0 0.0
    %3062 = vmatpush1.msra.mxu0 0.0
    %3063 = vmatprep.subr.mxu0 0.0
    %3064 = vmatpush1.msra.mxu0 0.0
    %3065 = vmatprep.subr.mxu0 0.0
    %3066 = vmatpush1.msra.mxu0 0.0
    %3067 = vmatprep.subr.mxu0 0.0
    %3068 = vmatpush1.msra.mxu0 0.0
    %3069 = vmatprep.subr.mxu0 0.0
    %3070 = vmatpush1.msra.mxu0 0.0
    %3071 = vmatprep.subr.mxu0 0.0
    %3072 = vmatpush1.msra.mxu0 0.0
    %3073 = vmatprep.subr.mxu0 0.0
    %3074 = vmatpush1.msra.mxu0 0.0
    %3075 = vmatprep.subr.mxu0 0.0
    %3076 = vmatpush1.msra.mxu0 0.0
    %3077 = vmatprep.subr.mxu0 0.0
    %3078 = vmatpush1.msra.mxu0 0.0
    %3079 = vmatprep.subr.mxu0 0.0
    %3080 = vmatpush1.msra.mxu0 0.0
    %3081 = vmatprep.subr.mxu0 0.0
    %3082 = vmatpush1.msra.mxu0 0.0
    %3083 = vmatprep.subr.mxu0 0.0
    %3084 = vmatpush1.msra.mxu0 0.0
    %3085 = vmatprep.subr.mxu0 0.0
    %3086 = vmatpush1.msra.mxu0 0.0
    %3087 = vmatprep.subr.mxu0 0.0
    %3088 = vmatpush1.msra.mxu0 0.0
    %3089 = vmatprep.subr.mxu0 0.0
    %3090 = vmatpush1.msra.mxu0 0.0
    %3091 = vmatprep.subr.mxu0 0.0
    %3092 = vmatpush1.msra.mxu0 0.0
    %3093 = vmatprep.subr.mxu0 0.0
    %3094 = vmatpush1.msra.mxu0 0.0
    %3095 = vmatprep.subr.mxu0 0.0
    %3096 = vmatpush1.msra.mxu0 0.0
    %3097 = vmatprep.subr.mxu0 0.0
    %3098 = vmatpush1.msra.mxu0 0.0
    %3099 = vmatprep.subr.mxu0 0.0
    %3100 = vmatpush1.msra.mxu0 0.0
    %3101 = vmatprep.subr.mxu0 0.0
    %3102 = vmatpush1.msra.mxu0 0.0
    %3103 = vmatprep.subr.mxu0 0.0
    %3104 = vmatpush1.msra.mxu0 0.0
    %3105 = vmatprep.subr.mxu0 0.0
    %3106 = vmatpush1.msra.mxu0 0.0
    %3107 = vmatprep.subr.mxu0 0.0
    %3108 = vmatpush1.msra.mxu0 0.0
    %3109 = vmatprep.mubr.f32.mxu0 0.0
    %3110 = vmatmul.mubr.f32.gmra.mrb[0].mxu0 %v1962
    %v3111 = vpop.f32.mrb[0].mxu0
    %v3112 = vadd.f32 0.0, %v3111
    %v3113 = vpop.f32.mrb[0].mxu0
    %3114 = vmatprep.mubr.f32.mxu0 0.0
    %3115 = vmatmul.mubr.f32.gmra.mrb[0].mxu0 %v1965
    %v3116 = vpop.f32.mrb[0].mxu0
    %v3117 = vadd.f32 0.0, %v3116
    %v3118 = vpop.f32.mrb[0].mxu0
    %3119 = vdwg.mxu0
    %v3120 = vsub.f32 %v2897, %v3112
    %v3121 = vsub.f32 %v2898, %v3117
    %v3122 = vmul.f32 %v3120, %v3120
    %v3123 = vmul.f32 %v3121, %v3121
    %3124 = vmatprep.subr.mxu0 0.0
    %3125 = vmatpush1.msra.mxu0 %v3122
    %3126 = vmatprep.subr.mxu0 0.0
    %3127 = vmatpush1.msra.mxu0 %v3123
    %3128 = vmatprep.subr.mxu0 0.0
    %3129 = vmatpush1.msra.mxu0 0.0
    %3130 = vmatprep.subr.mxu0 0.0
    %3131 = vmatpush1.msra.mxu0 0.0
    %3132 = vmatprep.subr.mxu0 0.0
    %3133 = vmatpush1.msra.mxu0 0.0
    %3134 = vmatprep.subr.mxu0 0.0
    %3135 = vmatpush1.msra.mxu0 0.0
    %3136 = vmatprep.subr.mxu0 0.0
    %3137 = vmatpush1.msra.mxu0 0.0
    %3138 = vmatprep.subr.mxu0 0.0
    %3139 = vmatpush1.msra.mxu0 0.0
    %3140 = vmatprep.subr.mxu0 0.0
    %3141 = vmatpush1.msra.mxu0 0.0
    %3142 = vmatprep.subr.mxu0 0.0
    %3143 = vmatpush1.msra.mxu0 0.0
    %3144 = vmatprep.subr.mxu0 0.0
    %3145 = vmatpush1.msra.mxu0 0.0
    %3146 = vmatprep.subr.mxu0 0.0
    %3147 = vmatpush1.msra.mxu0 0.0
    %3148 = vmatprep.subr.mxu0 0.0
    %3149 = vmatpush1.msra.mxu0 0.0
    %3150 = vmatprep.subr.mxu0 0.0
    %3151 = vmatpush1.msra.mxu0 0.0
    %3152 = vmatprep.subr.mxu0 0.0
    %3153 = vmatpush1.msra.mxu0 0.0
    %3154 = vmatprep.subr.mxu0 0.0
    %3155 = vmatpush1.msra.mxu0 0.0
    %3156 = vmatprep.subr.mxu0 0.0
    %3157 = vmatpush1.msra.mxu0 0.0
    %3158 = vmatprep.subr.mxu0 0.0
    %3159 = vmatpush1.msra.mxu0 0.0
    %3160 = vmatprep.subr.mxu0 0.0
    %3161 = vmatpush1.msra.mxu0 0.0
    %3162 = vmatprep.subr.mxu0 0.0
    %3163 = vmatpush1.msra.mxu0 0.0
    %3164 = vmatprep.subr.mxu0 0.0
    %3165 = vmatpush1.msra.mxu0 0.0
    %3166 = vmatprep.subr.mxu0 0.0
    %3167 = vmatpush1.msra.mxu0 0.0
    %3168 = vmatprep.subr.mxu0 0.0
    %3169 = vmatpush1.msra.mxu0 0.0
    %3170 = vmatprep.subr.mxu0 0.0
    %3171 = vmatpush1.msra.mxu0 0.0
    %3172 = vmatprep.subr.mxu0 0.0
    %3173 = vmatpush1.msra.mxu0 0.0
    %3174 = vmatprep.subr.mxu0 0.0
    %3175 = vmatpush1.msra.mxu0 0.0
    %3176 = vmatprep.subr.mxu0 0.0
    %3177 = vmatpush1.msra.mxu0 0.0
    %3178 = vmatprep.subr.mxu0 0.0
    %3179 = vmatpush1.msra.mxu0 0.0
    %3180 = vmatprep.subr.mxu0 0.0
    %3181 = vmatpush1.msra.mxu0 0.0
    %3182 = vmatprep.subr.mxu0 0.0
    %3183 = vmatpush1.msra.mxu0 0.0
    %3184 = vmatprep.subr.mxu0 0.0
    %3185 = vmatpush1.msra.mxu0 0.0
    %3186 = vmatprep.subr.mxu0 0.0
    %3187 = vmatpush1.msra.mxu0 0.0
    %3188 = vmatprep.mubr.f32.mxu0 0.0
    %3189 = vmatmul.mubr.f32.gmra.mrb[0].mxu0 %v1814
    %v3190 = vpop.f32.mrb[0].mxu0
    %v3191 = vadd.f32 0.0, %v3190
    %v3192 = vpop.f32.mrb[0].mxu0
    %3193 = vdwg.mxu0
    %3194 = vmatprep.subr.mxu0 0.0
    %3195 = vmatpush1.msra.mxu0 %v147
    %3196 = vmatprep.subr.mxu0 0.0
    %3197 = vmatpush1.msra.mxu0 %v148
    %3198 = vmatprep.subr.mxu0 0.0
    %3199 = vmatpush1.msra.mxu0 %v149
    %3200 = vmatprep.subr.mxu0 0.0
    %3201 = vmatpush1.msra.mxu0 %v150
    %3202 = vmatprep.subr.mxu0 0.0
    %3203 = vmatpush1.msra.mxu0 %v151
    %3204 = vmatprep.subr.mxu0 0.0
    %3205 = vmatpush1.msra.mxu0 %v152
    %3206 = vmatprep.subr.mxu0 0.0
    %3207 = vmatpush1.msra.mxu0 %v153
    %3208 = vmatprep.subr.mxu0 0.0
    %3209 = vmatpush1.msra.mxu0 %v154
    %3210 = vmatprep.subr.mxu0 0.0
    %3211 = vmatpush1.msra.mxu0 %v155
    %3212 = vmatprep.subr.mxu0 0.0
    %3213 = vmatpush1.msra.mxu0 %v156
    %3214 = vmatprep.subr.mxu0 0.0
    %3215 = vmatpush1.msra.mxu0 %v157
    %3216 = vmatprep.subr.mxu0 0.0
    %3217 = vmatpush1.msra.mxu0 %v158
    %3218 = vmatprep.subr.mxu0 0.0
    %3219 = vmatpush1.msra.mxu0 %v159
    %3220 = vmatprep.subr.mxu0 0.0
    %3221 = vmatpush1.msra.mxu0 %v160
    %3222 = vmatprep.subr.mxu0 0.0
    %3223 = vmatpush1.msra.mxu0 %v161
    %3224 = vmatprep.subr.mxu0 0.0
    %3225 = vmatpush1.msra.mxu0 %v162
    %3226 = vmatprep.subr.mxu0 0.0
    %3227 = vmatpush1.msra.mxu0 0.0
    %3228 = vmatprep.subr.mxu0 0.0
    %3229 = vmatpush1.msra.mxu0 0.0
    %3230 = vmatprep.subr.mxu0 0.0
    %3231 = vmatpush1.msra.mxu0 0.0
    %3232 = vmatprep.subr.mxu0 0.0
    %3233 = vmatpush1.msra.mxu0 0.0
    %3234 = vmatprep.subr.mxu0 0.0
    %3235 = vmatpush1.msra.mxu0 0.0
    %3236 = vmatprep.subr.mxu0 0.0
    %3237 = vmatpush1.msra.mxu0 0.0
    %3238 = vmatprep.subr.mxu0 0.0
    %3239 = vmatpush1.msra.mxu0 0.0
    %3240 = vmatprep.subr.mxu0 0.0
    %3241 = vmatpush1.msra.mxu0 0.0
    %3242 = vmatprep.subr.mxu0 0.0
    %3243 = vmatpush1.msra.mxu0 0.0
    %3244 = vmatprep.subr.mxu0 0.0
    %3245 = vmatpush1.msra.mxu0 0.0
    %3246 = vmatprep.subr.mxu0 0.0
    %3247 = vmatpush1.msra.mxu0 0.0
    %3248 = vmatprep.subr.mxu0 0.0
    %3249 = vmatpush1.msra.mxu0 0.0
    %3250 = vmatprep.subr.mxu0 0.0
    %3251 = vmatpush1.msra.mxu0 0.0
    %3252 = vmatprep.subr.mxu0 0.0
    %3253 = vmatpush1.msra.mxu0 0.0
    %3254 = vmatprep.subr.mxu0 0.0
    %3255 = vmatpush1.msra.mxu0 0.0
    %3256 = vmatprep.subr.mxu0 0.0
    %3257 = vmatpush1.msra.mxu0 0.0
    %3258 = vmatprep.mubr.f32.mxu0 0.0
    %3259 = vmatmul.mubr.f32.gmra.mrb[0].mxu0 %v3191
    %v3260 = vpop.f32.mrb[0].mxu0
    %v3261 = vadd.f32 0.0, %v3260
    %v3262 = vpop.f32.mrb[0].mxu0
    %3263 = vdwg.mxu0
    %v3264 = vmul.f32 %v3261, 0.083333336
    %v3266 = vsel %vm1294, %v3264, 0
    %3268 = vmatprep.subr.mxu0 0.0
    %3269 = vmatpush1.msra.mxu0 %v3266
    %3270 = vmatprep.subr.mxu0 0.0
    %3271 = vmatpush1.msra.mxu0 0.0
    %3272 = vmatprep.subr.mxu0 0.0
    %3273 = vmatpush1.msra.mxu0 0.0
    %3274 = vmatprep.subr.mxu0 0.0
    %3275 = vmatpush1.msra.mxu0 0.0
    %3276 = vmatprep.subr.mxu0 0.0
    %3277 = vmatpush1.msra.mxu0 0.0
    %3278 = vmatprep.subr.mxu0 0.0
    %3279 = vmatpush1.msra.mxu0 0.0
    %3280 = vmatprep.subr.mxu0 0.0
    %3281 = vmatpush1.msra.mxu0 0.0
    %3282 = vmatprep.subr.mxu0 0.0
    %3283 = vmatpush1.msra.mxu0 0.0
    %3284 = vmatprep.subr.mxu0 0.0
    %3285 = vmatpush1.msra.mxu0 0.0
    %3286 = vmatprep.subr.mxu0 0.0
    %3287 = vmatpush1.msra.mxu0 0.0
    %3288 = vmatprep.subr.mxu0 0.0
    %3289 = vmatpush1.msra.mxu0 0.0
    %3290 = vmatprep.subr.mxu0 0.0
    %3291 = vmatpush1.msra.mxu0 0.0
    %3292 = vmatprep.subr.mxu0 0.0
    %3293 = vmatpush1.msra.mxu0 0.0
    %3294 = vmatprep.subr.mxu0 0.0
    %3295 = vmatpush1.msra.mxu0 0.0
    %3296 = vmatprep.subr.mxu0 0.0
    %3297 = vmatpush1.msra.mxu0 0.0
    %3298 = vmatprep.subr.mxu0 0.0
    %3299 = vmatpush1.msra.mxu0 0.0
    %3300 = vmatprep.subr.mxu0 0.0
    %3301 = vmatpush1.msra.mxu0 0.0
    %3302 = vmatprep.subr.mxu0 0.0
    %3303 = vmatpush1.msra.mxu0 0.0
    %3304 = vmatprep.subr.mxu0 0.0
    %3305 = vmatpush1.msra.mxu0 0.0
    %3306 = vmatprep.subr.mxu0 0.0
    %3307 = vmatpush1.msra.mxu0 0.0
    %3308 = vmatprep.subr.mxu0 0.0
    %3309 = vmatpush1.msra.mxu0 0.0
    %3310 = vmatprep.subr.mxu0 0.0
    %3311 = vmatpush1.msra.mxu0 0.0
    %3312 = vmatprep.subr.mxu0 0.0
    %3313 = vmatpush1.msra.mxu0 0.0
    %3314 = vmatprep.subr.mxu0 0.0
    %3315 = vmatpush1.msra.mxu0 0.0
    %3316 = vmatprep.subr.mxu0 0.0
    %3317 = vmatpush1.msra.mxu0 0.0
    %3318 = vmatprep.subr.mxu0 0.0
    %3319 = vmatpush1.msra.mxu0 0.0
    %3320 = vmatprep.subr.mxu0 0.0
    %3321 = vmatpush1.msra.mxu0 0.0
    %3322 = vmatprep.subr.mxu0 0.0
    %3323 = vmatpush1.msra.mxu0 0.0
    %3324 = vmatprep.subr.mxu0 0.0
    %3325 = vmatpush1.msra.mxu0 0.0
    %3326 = vmatprep.subr.mxu0 0.0
    %3327 = vmatpush1.msra.mxu0 0.0
    %3328 = vmatprep.subr.mxu0 0.0
    %3329 = vmatpush1.msra.mxu0 0.0
    %3330 = vmatprep.subr.mxu0 0.0
    %3331 = vmatpush1.msra.mxu0 0.0
    %3332 = vmatprep.mubr.f32.mxu0 0.0
    %3333 = vmatmul.mubr.f32.gmra.mrb[0].mxu0 %v1962
    %v3334 = vpop.f32.mrb[0].mxu0
    %v3335 = vadd.f32 1e-05, %v3334
    %v3336 = vpop.f32.mrb[0].mxu0
    %3337 = vmatprep.mubr.f32.mxu0 0.0
    %3338 = vmatmul.mubr.f32.gmra.mrb[0].mxu0 %v1965
    %v3339 = vpop.f32.mrb[0].mxu0
    %v3340 = vadd.f32 1e-05, %v3339
    %v3341 = vpop.f32.mrb[0].mxu0
    %3342 = vdwg.mxu0
    %v3343 = vrsqrt.pop %v3335
    %v3344 = vrsqrt.pop %v3340
    %v3345 = vmul.f32 %v3120, %v3343
    %v3346 = vmul.f32 %v3121, %v3344
    %v3347 = vlaneseq
    %v3348 = vshrl.u32 %v3347, 7
    %v3349 = vsub.s32 0, %v3348
    %v3350 = vrot.slane %v2899, %v3349
    %v3351 = vmul.f32 %v3345, %v3350
    %v3352 = vmul.f32 %v3346, %v3350
    %v3353 = vlaneseq
    %v3354 = vshrl.u32 %v3353, 7
    %v3355 = vsub.s32 0, %v3354
    %v3356 = vrot.slane %v2900, %v3355
    %v3357 = vadd.f32 %v3351, %v3356
    %v3358 = vadd.f32 %v3352, %v3356
    %3359 = vmatprep.subr.mxu0 0.0
    %3360 = vmatpush1.msra.mxu0 %v3357
    %3361 = vmatprep.subr.mxu0 0.0
    %3362 = vmatpush1.msra.mxu0 %v3358
    %3363 = vmatprep.subr.mxu0 0.0
    %3364 = vmatpush1.msra.mxu0 0.0
    %3365 = vmatprep.subr.mxu0 0.0
    %3366 = vmatpush1.msra.mxu0 0.0
    %3367 = vmatprep.subr.mxu0 0.0
    %3368 = vmatpush1.msra.mxu0 0.0
    %3369 = vmatprep.subr.mxu0 0.0
    %3370 = vmatpush1.msra.mxu0 0.0
    %3371 = vmatprep.subr.mxu0 0.0
    %3372 = vmatpush1.msra.mxu0 0.0
    %3373 = vmatprep.subr.mxu0 0.0
    %3374 = vmatpush1.msra.mxu0 0.0
    %3375 = vmatprep.subr.mxu0 0.0
    %3376 = vmatpush1.msra.mxu0 0.0
    %3377 = vmatprep.subr.mxu0 0.0
    %3378 = vmatpush1.msra.mxu0 0.0
    %3379 = vmatprep.subr.mxu0 0.0
    %3380 = vmatpush1.msra.mxu0 0.0
    %3381 = vmatprep.subr.mxu0 0.0
    %3382 = vmatpush1.msra.mxu0 0.0
    %3383 = vmatprep.subr.mxu0 0.0
    %3384 = vmatpush1.msra.mxu0 0.0
    %3385 = vmatprep.subr.mxu0 0.0
    %3386 = vmatpush1.msra.mxu0 0.0
    %3387 = vmatprep.subr.mxu0 0.0
    %3388 = vmatpush1.msra.mxu0 0.0
    %3389 = vmatprep.subr.mxu0 0.0
    %3390 = vmatpush1.msra.mxu0 0.0
    %3391 = vmatprep.subr.mxu0 0.0
    %3392 = vmatpush1.msra.mxu0 0.0
    %3393 = vmatprep.subr.mxu0 0.0
    %3394 = vmatpush1.msra.mxu0 0.0
    %3395 = vmatprep.subr.mxu0 0.0
    %3396 = vmatpush1.msra.mxu0 0.0
    %3397 = vmatprep.subr.mxu0 0.0
    %3398 = vmatpush1.msra.mxu0 0.0
    %3399 = vmatprep.subr.mxu0 0.0
    %3400 = vmatpush1.msra.mxu0 0.0
    %3401 = vmatprep.subr.mxu0 0.0
    %3402 = vmatpush1.msra.mxu0 0.0
    %3403 = vmatprep.subr.mxu0 0.0
    %3404 = vmatpush1.msra.mxu0 0.0
    %3405 = vmatprep.subr.mxu0 0.0
    %3406 = vmatpush1.msra.mxu0 0.0
    %3407 = vmatprep.subr.mxu0 0.0
    %3408 = vmatpush1.msra.mxu0 0.0
    %3409 = vmatprep.subr.mxu0 0.0
    %3410 = vmatpush1.msra.mxu0 0.0
    %3411 = vmatprep.subr.mxu0 0.0
    %3412 = vmatpush1.msra.mxu0 0.0
    %3413 = vmatprep.subr.mxu0 0.0
    %3414 = vmatpush1.msra.mxu0 0.0
    %3415 = vmatprep.subr.mxu0 0.0
    %3416 = vmatpush1.msra.mxu0 0.0
    %3417 = vmatprep.subr.mxu0 0.0
    %3418 = vmatpush1.msra.mxu0 0.0
    %3419 = vmatprep.subr.mxu0 0.0
    %3420 = vmatpush1.msra.mxu0 0.0
    %3421 = vmatprep.subr.mxu0 0.0
    %3422 = vmatpush1.msra.mxu0 0.0
    %3423 = vmatprep.mubr.f32.mxu0 0.0
    %3424 = vmatmul.mubr.f32.gmra.mrb[0].mxu0 %v1814
    %v3425 = vpop.f32.mrb[0].mxu0
    %v3426 = vadd.f32 0.0, %v3425
    %v3427 = vpop.f32.mrb[0].mxu0
    %3428 = vdwg.mxu0
    %v3429 = vmul.f32 %v3426, 0.083333336
    %v3430 = vld [vmem:[#allocation6 + $0x240] sm:$0xf]
    %v3431 = vld [vmem:[#allocation6 + $0x244] sm:$0xf]
    %v3432 = vld [vmem:[#allocation6 + $0x248] sm:$0xf]
    %v3433 = vld [vmem:[#allocation6 + $0x24c] sm:$0xf]
    %v3434 = vld [vmem:[#allocation6 + $0x250] sm:$0xf]
    %v3435 = vld [vmem:[#allocation6 + $0x254] sm:$0xf]
    %v3436 = vld [vmem:[#allocation6 + $0x258] sm:$0xf]
    %v3437 = vld [vmem:[#allocation6 + $0x25c] sm:$0xf]
    %v3438 = vld [vmem:[#allocation6 + $0x260] sm:$0xf]
    %v3439 = vld [vmem:[#allocation6 + $0x264] sm:$0xf]
    %v3440 = vld [vmem:[#allocation6 + $0x268] sm:$0xf]
    %v3441 = vld [vmem:[#allocation6 + $0x26c] sm:$0xf]
    %v3442 = vld [vmem:[#allocation6 + $0x270] sm:$0xf]
    %v3443 = vld [vmem:[#allocation6 + $0x274] sm:$0xf]
    %v3444 = vld [vmem:[#allocation6 + $0x278] sm:$0xf]
    %v3445 = vld [vmem:[#allocation6 + $0x27c] sm:$0xf]
    %v3446 = vpack.c.bf16 %v3429, %v3429
    %v3447 = vld [vmem:[#allocation10 + $0xb] sm:$0x1]
    %v3464 = vunpack.c.l.b16 %v3430
    %v3465 = vunpack.c.l.b16 %v3431
    %v3466 = vunpack.c.l.b16 %v3432
    %v3467 = vunpack.c.l.b16 %v3433
    %v3468 = vunpack.c.l.b16 %v3434
    %v3469 = vunpack.c.l.b16 %v3435
    %v3470 = vunpack.c.l.b16 %v3436
    %v3471 = vunpack.c.l.b16 %v3437
    %v3472 = vunpack.c.l.b16 %v3438
    %v3473 = vunpack.c.l.b16 %v3439
    %v3474 = vunpack.c.l.b16 %v3440
    %v3475 = vunpack.c.l.b16 %v3441
    %v3476 = vunpack.c.l.b16 %v3442
    %v3477 = vunpack.c.l.b16 %v3443
    %v3478 = vunpack.c.l.b16 %v3444
    %v3479 = vunpack.c.l.b16 %v3445
    %v3480 = vpack.c.b16 %v3465, %v3464
    %v3481 = vpack.c.b16 %v3467, %v3466
    %v3482 = vpack.c.b16 %v3469, %v3468
    %v3483 = vpack.c.b16 %v3471, %v3470
    %v3484 = vpack.c.b16 %v3473, %v3472
    %v3485 = vpack.c.b16 %v3475, %v3474
    %v3486 = vpack.c.b16 %v3477, %v3476
    %v3487 = vpack.c.b16 %v3479, %v3478
    %3496 = vmatprep.subr.bf16.mxu0 0
    %3497 = vmatpush1.bf16.msra.mxu0 %v3480
    %3498 = vmatprep.subr.bf16.mxu0 0
    %3499 = vmatpush1.bf16.msra.mxu0 %v3481
    %3500 = vmatprep.subr.bf16.mxu0 0
    %3501 = vmatpush1.bf16.msra.mxu0 %v3482
    %3502 = vmatprep.subr.bf16.mxu0 0
    %3503 = vmatpush1.bf16.msra.mxu0 %v3483
    %3504 = vmatprep.subr.bf16.mxu0 0
    %3505 = vmatpush1.bf16.msra.mxu0 %v3484
    %3506 = vmatprep.subr.bf16.mxu0 0
    %3507 = vmatpush1.bf16.msra.mxu0 %v3485
    %3508 = vmatprep.subr.bf16.mxu0 0
    %3509 = vmatpush1.bf16.msra.mxu0 %v3486
    %3510 = vmatprep.subr.bf16.mxu0 0
    %3511 = vmatpush1.bf16.msra.mxu0 %v3487
    %3512 = vmatprep.subr.bf16.mxu0 0
    %3513 = vmatpush1.bf16.msra.mxu0 0
    %3514 = vmatprep.subr.bf16.mxu0 0
    %3515 = vmatpush1.bf16.msra.mxu0 0
    %3516 = vmatprep.subr.bf16.mxu0 0
    %3517 = vmatpush1.bf16.msra.mxu0 0
    %3518 = vmatprep.subr.bf16.mxu0 0
    %3519 = vmatpush1.bf16.msra.mxu0 0
    %3520 = vmatprep.subr.bf16.mxu0 0
    %3521 = vmatpush1.bf16.msra.mxu0 0
    %3522 = vmatprep.subr.bf16.mxu0 0
    %3523 = vmatpush1.bf16.msra.mxu0 0
    %3524 = vmatprep.subr.bf16.mxu0 0
    %3525 = vmatpush1.bf16.msra.mxu0 0
    %3526 = vmatprep.subr.bf16.mxu0 0
    %3527 = vmatpush1.bf16.msra.mxu0 0
    %3528 = vmatprep.mubr.bf16.mxu0 0
    %3529 = vmatmul.mubr.bf16.gmra.mrb[0].mxu0 %v3446
    %v3530 = vpop.f32.mrb[0].mxu0
    %v3531 = vadd.f32 %v3447, %v3530
    %v3532 = vpop.f32.mrb[0].mxu0
    %v3533 = vpop.f32.mrb[0].mxu0
    %v3534 = vpop.f32.mrb[0].mxu0
    %3535 = vdwg.mxu0
    %v3536 = vmul.f32 %v3531, 0.5
    %v3537 = vmul.f32 %v3531, 0.044715
    %v3538 = vmul.f32 %v3537, %v3531
    %v3539 = vmul.f32 %v3538, %v3531
    %v3540 = vadd.f32 %v3531, %v3539
    %v3541 = vmul.f32 %v3540, 0.7978846
    %v3542 = vtanh.pop %v3541
    %v3543 = vadd.f32 %v3542, 1.0
    %v3544 = vmul.f32 %v3536, %v3543
    %v3545 = vld [vmem:[#allocation6 + $0x280] sm:$0xf]
    %v3546 = vld [vmem:[#allocation6 + $0x284] sm:$0xf]
    %v3547 = vld [vmem:[#allocation6 + $0x288] sm:$0xf]
    %v3548 = vld [vmem:[#allocation6 + $0x28c] sm:$0xf]
    %v3549 = vld [vmem:[#allocation6 + $0x290] sm:$0xf]
    %v3550 = vld [vmem:[#allocation6 + $0x294] sm:$0xf]
    %v3551 = vld [vmem:[#allocation6 + $0x298] sm:$0xf]
    %v3552 = vld [vmem:[#allocation6 + $0x29c] sm:$0xf]
    %v3553 = vld [vmem:[#allocation6 + $0x2a0] sm:$0xf]
    %v3554 = vld [vmem:[#allocation6 + $0x2a4] sm:$0xf]
    %v3555 = vld [vmem:[#allocation6 + $0x2a8] sm:$0xf]
    %v3556 = vld [vmem:[#allocation6 + $0x2ac] sm:$0xf]
    %v3557 = vld [vmem:[#allocation6 + $0x2b0] sm:$0xf]
    %v3558 = vld [vmem:[#allocation6 + $0x2b4] sm:$0xf]
    %v3559 = vld [vmem:[#allocation6 + $0x2b8] sm:$0xf]
    %v3560 = vld [vmem:[#allocation6 + $0x2bc] sm:$0xf]
    %v3561 = vpack.c.bf16 %v3544, %v3544
    %v3562 = vld [vmem:[#allocation10 + $0xc] sm:$0x1]
    %v3579 = vunpack.c.l.b16 %v3545
    %v3580 = vunpack.c.l.b16 %v3546
    %v3581 = vunpack.c.l.b16 %v3547
    %v3582 = vunpack.c.l.b16 %v3548
    %v3583 = vunpack.c.l.b16 %v3549
    %v3584 = vunpack.c.l.b16 %v3550
    %v3585 = vunpack.c.l.b16 %v3551
    %v3586 = vunpack.c.l.b16 %v3552
    %v3587 = vunpack.c.l.b16 %v3553
    %v3588 = vunpack.c.l.b16 %v3554
    %v3589 = vunpack.c.l.b16 %v3555
    %v3590 = vunpack.c.l.b16 %v3556
    %v3591 = vunpack.c.l.b16 %v3557
    %v3592 = vunpack.c.l.b16 %v3558
    %v3593 = vunpack.c.l.b16 %v3559
    %v3594 = vunpack.c.l.b16 %v3560
    %v3595 = vpack.c.b16 %v3580, %v3579
    %v3596 = vpack.c.b16 %v3582, %v3581
    %v3597 = vpack.c.b16 %v3584, %v3583
    %v3598 = vpack.c.b16 %v3586, %v3585
    %v3599 = vpack.c.b16 %v3588, %v3587
    %v3600 = vpack.c.b16 %v3590, %v3589
    %v3601 = vpack.c.b16 %v3592, %v3591
    %v3602 = vpack.c.b16 %v3594, %v3593
    %3611 = vmatprep.subr.bf16.mxu0 0
    %3612 = vmatpush1.bf16.msra.mxu0 %v3595
    %3613 = vmatprep.subr.bf16.mxu0 0
    %3614 = vmatpush1.bf16.msra.mxu0 %v3596
    %3615 = vmatprep.subr.bf16.mxu0 0
    %3616 = vmatpush1.bf16.msra.mxu0 %v3597
    %3617 = vmatprep.subr.bf16.mxu0 0
    %3618 = vmatpush1.bf16.msra.mxu0 %v3598
    %3619 = vmatprep.subr.bf16.mxu0 0
    %3620 = vmatpush1.bf16.msra.mxu0 %v3599
    %3621 = vmatprep.subr.bf16.mxu0 0
    %3622 = vmatpush1.bf16.msra.mxu0 %v3600
    %3623 = vmatprep.subr.bf16.mxu0 0
    %3624 = vmatpush1.bf16.msra.mxu0 %v3601
    %3625 = vmatprep.subr.bf16.mxu0 0
    %3626 = vmatpush1.bf16.msra.mxu0 %v3602
    %3627 = vmatprep.subr.bf16.mxu0 0
    %3628 = vmatpush1.bf16.msra.mxu0 0
    %3629 = vmatprep.subr.bf16.mxu0 0
    %3630 = vmatpush1.bf16.msra.mxu0 0
    %3631 = vmatprep.subr.bf16.mxu0 0
    %3632 = vmatpush1.bf16.msra.mxu0 0
    %3633 = vmatprep.subr.bf16.mxu0 0
    %3634 = vmatpush1.bf16.msra.mxu0 0
    %3635 = vmatprep.subr.bf16.mxu0 0
    %3636 = vmatpush1.bf16.msra.mxu0 0
    %3637 = vmatprep.subr.bf16.mxu0 0
    %3638 = vmatpush1.bf16.msra.mxu0 0
    %3639 = vmatprep.subr.bf16.mxu0 0
    %3640 = vmatpush1.bf16.msra.mxu0 0
    %3641 = vmatprep.subr.bf16.mxu0 0
    %3642 = vmatpush1.bf16.msra.mxu0 0
    %3643 = vmatprep.mubr.bf16.mxu0 0
    %3644 = vmatmul.mubr.bf16.gmra.mrb[0].mxu0 %v3561
    %v3645 = vpop.f32.mrb[0].mxu0
    %v3646 = vadd.f32 %v3562, %v3645
    %v3647 = vpop.f32.mrb[0].mxu0
    %v3648 = vpop.f32.mrb[0].mxu0
    %v3649 = vpop.f32.mrb[0].mxu0
    %3650 = vdwg.mxu0
    %v3651 = vsub.f32 0.0, %v3646
    %v3652 = vmul.f32 %v3651, 1.442695
    %v3653 = vpow.pop %v3652
    %v3654 = vadd.f32 %v3653, 1.0
    %v3655 = vrcp.pop %v3654
    %v3657 = vsel %vm1294, %v3655, 0
    %3659 = vmatprep.subr.mxu0 0.0
    %3660 = vmatpush1.msra.mxu0 %v3657
    %3661 = vmatprep.subr.mxu0 0.0
    %3662 = vmatpush1.msra.mxu0 0.0
    %3663 = vmatprep.subr.mxu0 0.0
    %3664 = vmatpush1.msra.mxu0 0.0
    %3665 = vmatprep.subr.mxu0 0.0
    %3666 = vmatpush1.msra.mxu0 0.0
    %3667 = vmatprep.subr.mxu0 0.0
    %3668 = vmatpush1.msra.mxu0 0.0
    %3669 = vmatprep.subr.mxu0 0.0
    %3670 = vmatpush1.msra.mxu0 0.0
    %3671 = vmatprep.subr.mxu0 0.0
    %3672 = vmatpush1.msra.mxu0 0.0
    %3673 = vmatprep.subr.mxu0 0.0
    %3674 = vmatpush1.msra.mxu0 0.0
    %3675 = vmatprep.subr.mxu0 0.0
    %3676 = vmatpush1.msra.mxu0 0.0
    %3677 = vmatprep.subr.mxu0 0.0
    %3678 = vmatpush1.msra.mxu0 0.0
    %3679 = vmatprep.subr.mxu0 0.0
    %3680 = vmatpush1.msra.mxu0 0.0
    %3681 = vmatprep.subr.mxu0 0.0
    %3682 = vmatpush1.msra.mxu0 0.0
    %3683 = vmatprep.subr.mxu0 0.0
    %3684 = vmatpush1.msra.mxu0 0.0
    %3685 = vmatprep.subr.mxu0 0.0
    %3686 = vmatpush1.msra.mxu0 0.0
    %3687 = vmatprep.subr.mxu0 0.0
    %3688 = vmatpush1.msra.mxu0 0.0
    %3689 = vmatprep.subr.mxu0 0.0
    %3690 = vmatpush1.msra.mxu0 0.0
    %3691 = vmatprep.subr.mxu0 0.0
    %3692 = vmatpush1.msra.mxu0 0.0
    %3693 = vmatprep.subr.mxu0 0.0
    %3694 = vmatpush1.msra.mxu0 0.0
    %3695 = vmatprep.subr.mxu0 0.0
    %3696 = vmatpush1.msra.mxu0 0.0
    %3697 = vmatprep.subr.mxu0 0.0
    %3698 = vmatpush1.msra.mxu0 0.0
    %3699 = vmatprep.subr.mxu0 0.0
    %3700 = vmatpush1.msra.mxu0 0.0
    %3701 = vmatprep.subr.mxu0 0.0
    %3702 = vmatpush1.msra.mxu0 0.0
    %3703 = vmatprep.subr.mxu0 0.0
    %3704 = vmatpush1.msra.mxu0 0.0
    %3705 = vmatprep.subr.mxu0 0.0
    %3706 = vmatpush1.msra.mxu0 0.0
    %3707 = vmatprep.subr.mxu0 0.0
    %3708 = vmatpush1.msra.mxu0 0.0
    %3709 = vmatprep.subr.mxu0 0.0
    %3710 = vmatpush1.msra.mxu0 0.0
    %3711 = vmatprep.subr.mxu0 0.0
    %3712 = vmatpush1.msra.mxu0 0.0
    %3713 = vmatprep.subr.mxu0 0.0
    %3714 = vmatpush1.msra.mxu0 0.0
    %3715 = vmatprep.subr.mxu0 0.0
    %3716 = vmatpush1.msra.mxu0 0.0
    %3717 = vmatprep.subr.mxu0 0.0
    %3718 = vmatpush1.msra.mxu0 0.0
    %3719 = vmatprep.subr.mxu0 0.0
    %3720 = vmatpush1.msra.mxu0 0.0
    %3721 = vmatprep.subr.mxu0 0.0
    %3722 = vmatpush1.msra.mxu0 0.0
    %3723 = vmatprep.mubr.f32.mxu0 0.0
    %3724 = vmatmul.mubr.f32.gmra.mrb[0].mxu0 %v1962
    %v3725 = vpop.f32.mrb[0].mxu0
    %v3726 = vadd.f32 0.0, %v3725
    %v3727 = vpop.f32.mrb[0].mxu0
    %3728 = vmatprep.mubr.f32.mxu0 0.0
    %3729 = vmatmul.mubr.f32.gmra.mrb[0].mxu0 %v1965
    %v3730 = vpop.f32.mrb[0].mxu0
    %v3731 = vadd.f32 0.0, %v3730
    %v3732 = vpop.f32.mrb[0].mxu0
    %3733 = vdwg.mxu0
    %v3734 = vmul.f32 %v3357, %v3726
    %v3735 = vmul.f32 %v3358, %v3731
    %v3736 = vld [vmem:[%s1] sm:$0x3]
    %v3738 = vsel %vm1294, %v3736, 0
    %3740 = vmatprep.subr.mxu0 0.0
    %3741 = vmatpush1.msra.mxu0 %v3738
    %3742 = vmatprep.subr.mxu0 0.0
    %3743 = vmatpush1.msra.mxu0 0.0
    %3744 = vmatprep.subr.mxu0 0.0
    %3745 = vmatpush1.msra.mxu0 0.0
    %3746 = vmatprep.subr.mxu0 0.0
    %3747 = vmatpush1.msra.mxu0 0.0
    %3748 = vmatprep.subr.mxu0 0.0
    %3749 = vmatpush1.msra.mxu0 0.0
    %3750 = vmatprep.subr.mxu0 0.0
    %3751 = vmatpush1.msra.mxu0 0.0
    %3752 = vmatprep.subr.mxu0 0.0
    %3753 = vmatpush1.msra.mxu0 0.0
    %3754 = vmatprep.subr.mxu0 0.0
    %3755 = vmatpush1.msra.mxu0 0.0
    %3756 = vmatprep.subr.mxu0 0.0
    %3757 = vmatpush1.msra.mxu0 0.0
    %3758 = vmatprep.subr.mxu0 0.0
    %3759 = vmatpush1.msra.mxu0 0.0
    %3760 = vmatprep.subr.mxu0 0.0
    %3761 = vmatpush1.msra.mxu0 0.0
    %3762 = vmatprep.subr.mxu0 0.0
    %3763 = vmatpush1.msra.mxu0 0.0
    %3764 = vmatprep.subr.mxu0 0.0
    %3765 = vmatpush1.msra.mxu0 0.0
    %3766 = vmatprep.subr.mxu0 0.0
    %3767 = vmatpush1.msra.mxu0 0.0
    %3768 = vmatprep.subr.mxu0 0.0
    %3769 = vmatpush1.msra.mxu0 0.0
    %3770 = vmatprep.subr.mxu0 0.0
    %3771 = vmatpush1.msra.mxu0 0.0
    %3772 = vmatprep.subr.mxu0 0.0
    %3773 = vmatpush1.msra.mxu0 0.0
    %3774 = vmatprep.subr.mxu0 0.0
    %3775 = vmatpush1.msra.mxu0 0.0
    %3776 = vmatprep.subr.mxu0 0.0
    %3777 = vmatpush1.msra.mxu0 0.0
    %3778 = vmatprep.subr.mxu0 0.0
    %3779 = vmatpush1.msra.mxu0 0.0
    %3780 = vmatprep.subr.mxu0 0.0
    %3781 = vmatpush1.msra.mxu0 0.0
    %3782 = vmatprep.subr.mxu0 0.0
    %3783 = vmatpush1.msra.mxu0 0.0
    %3784 = vmatprep.subr.mxu0 0.0
    %3785 = vmatpush1.msra.mxu0 0.0
    %3786 = vmatprep.subr.mxu0 0.0
    %3787 = vmatpush1.msra.mxu0 0.0
    %3788 = vmatprep.subr.mxu0 0.0
    %3789 = vmatpush1.msra.mxu0 0.0
    %3790 = vmatprep.subr.mxu0 0.0
    %3791 = vmatpush1.msra.mxu0 0.0
    %3792 = vmatprep.subr.mxu0 0.0
    %3793 = vmatpush1.msra.mxu0 0.0
    %3794 = vmatprep.subr.mxu0 0.0
    %3795 = vmatpush1.msra.mxu0 0.0
    %3796 = vmatprep.subr.mxu0 0.0
    %3797 = vmatpush1.msra.mxu0 0.0
    %3798 = vmatprep.subr.mxu0 0.0
    %3799 = vmatpush1.msra.mxu0 0.0
    %3800 = vmatprep.subr.mxu0 0.0
    %3801 = vmatpush1.msra.mxu0 0.0
    %3802 = vmatprep.subr.mxu0 0.0
    %3803 = vmatpush1.msra.mxu0 0.0
    %3804 = vmatprep.mubr.f32.mxu0 0.0
    %3805 = vmatmul.mubr.f32.gmra.mrb[0].mxu0 %v1962
    %v3806 = vpop.f32.mrb[0].mxu0
    %v3807 = vadd.f32 0.0, %v3806
    %v3808 = vpop.f32.mrb[0].mxu0
    %3809 = vmatprep.mubr.f32.mxu0 0.0
    %3810 = vmatmul.mubr.f32.gmra.mrb[0].mxu0 %v1965
    %v3811 = vpop.f32.mrb[0].mxu0
    %v3812 = vadd.f32 0.0, %v3811
    %v3813 = vpop.f32.mrb[0].mxu0
    %3814 = vdwg.mxu0
    %v3815 = vmul.f32 %v3734, %v3807
    %v3816 = vmul.f32 %v3735, %v3812
    %v3817 = vrot.slane %v3736, 1
    %v3818 = vsel %vm1294, %v3817, 0
    %3820 = vmatprep.subr.mxu0 0.0
    %3821 = vmatpush1.msra.mxu0 %v3818
    %3822 = vmatprep.subr.mxu0 0.0
    %3823 = vmatpush1.msra.mxu0 0.0
    %3824 = vmatprep.subr.mxu0 0.0
    %3825 = vmatpush1.msra.mxu0 0.0
    %3826 = vmatprep.subr.mxu0 0.0
    %3827 = vmatpush1.msra.mxu0 0.0
    %3828 = vmatprep.subr.mxu0 0.0
    %3829 = vmatpush1.msra.mxu0 0.0
    %3830 = vmatprep.subr.mxu0 0.0
    %3831 = vmatpush1.msra.mxu0 0.0
    %3832 = vmatprep.subr.mxu0 0.0
    %3833 = vmatpush1.msra.mxu0 0.0
    %3834 = vmatprep.subr.mxu0 0.0
    %3835 = vmatpush1.msra.mxu0 0.0
    %3836 = vmatprep.subr.mxu0 0.0
    %3837 = vmatpush1.msra.mxu0 0.0
    %3838 = vmatprep.subr.mxu0 0.0
    %3839 = vmatpush1.msra.mxu0 0.0
    %3840 = vmatprep.subr.mxu0 0.0
    %3841 = vmatpush1.msra.mxu0 0.0
    %3842 = vmatprep.subr.mxu0 0.0
    %3843 = vmatpush1.msra.mxu0 0.0
    %3844 = vmatprep.subr.mxu0 0.0
    %3845 = vmatpush1.msra.mxu0 0.0
    %3846 = vmatprep.subr.mxu0 0.0
    %3847 = vmatpush1.msra.mxu0 0.0
    %3848 = vmatprep.subr.mxu0 0.0
    %3849 = vmatpush1.msra.mxu0 0.0
    %3850 = vmatprep.subr.mxu0 0.0
    %3851 = vmatpush1.msra.mxu0 0.0
    %3852 = vmatprep.subr.mxu0 0.0
    %3853 = vmatpush1.msra.mxu0 0.0
    %3854 = vmatprep.subr.mxu0 0.0
    %3855 = vmatpush1.msra.mxu0 0.0
    %3856 = vmatprep.subr.mxu0 0.0
    %3857 = vmatpush1.msra.mxu0 0.0
    %3858 = vmatprep.subr.mxu0 0.0
    %3859 = vmatpush1.msra.mxu0 0.0
    %3860 = vmatprep.subr.mxu0 0.0
    %3861 = vmatpush1.msra.mxu0 0.0
    %3862 = vmatprep.subr.mxu0 0.0
    %3863 = vmatpush1.msra.mxu0 0.0
    %3864 = vmatprep.subr.mxu0 0.0
    %3865 = vmatpush1.msra.mxu0 0.0
    %3866 = vmatprep.subr.mxu0 0.0
    %3867 = vmatpush1.msra.mxu0 0.0
    %3868 = vmatprep.subr.mxu0 0.0
    %3869 = vmatpush1.msra.mxu0 0.0
    %3870 = vmatprep.subr.mxu0 0.0
    %3871 = vmatpush1.msra.mxu0 0.0
    %3872 = vmatprep.subr.mxu0 0.0
    %3873 = vmatpush1.msra.mxu0 0.0
    %3874 = vmatprep.subr.mxu0 0.0
    %3875 = vmatpush1.msra.mxu0 0.0
    %3876 = vmatprep.subr.mxu0 0.0
    %3877 = vmatpush1.msra.mxu0 0.0
    %3878 = vmatprep.subr.mxu0 0.0
    %3879 = vmatpush1.msra.mxu0 0.0
    %3880 = vmatprep.subr.mxu0 0.0
    %3881 = vmatpush1.msra.mxu0 0.0
    %3882 = vmatprep.subr.mxu0 0.0
    %3883 = vmatpush1.msra.mxu0 0.0
    %3884 = vmatprep.mubr.f32.mxu0 0.0
    %3885 = vmatmul.mubr.f32.gmra.mrb[0].mxu0 %v1962
    %v3886 = vpop.f32.mrb[0].mxu0
    %v3887 = vadd.f32 0.0, %v3886
    %v3888 = vpop.f32.mrb[0].mxu0
    %3889 = vmatprep.mubr.f32.mxu0 0.0
    %3890 = vmatmul.mubr.f32.gmra.mrb[0].mxu0 %v1965
    %v3891 = vpop.f32.mrb[0].mxu0
    %v3892 = vadd.f32 0.0, %v3891
    %v3893 = vpop.f32.mrb[0].mxu0
    %3894 = vdwg.mxu0
    %v3895 = vadd.f32 %v3815, %v3887
    %v3896 = vadd.f32 %v3816, %v3892
    %v3897 = vld [vmem:[#allocation10 + $0xd] sm:$0x1]
    %v3898 = vld [vmem:[#allocation10 + $0xe] sm:$0x1]
    %3899 = vmatprep.subr.mxu0 0.0
    %3900 = vmatpush1.msra.mxu0 %v147
    %3901 = vmatprep.subr.mxu0 0.0
    %3902 = vmatpush1.msra.mxu0 %v148
    %3903 = vmatprep.subr.mxu0 0.0
    %3904 = vmatpush1.msra.mxu0 %v149
    %3905 = vmatprep.subr.mxu0 0.0
    %3906 = vmatpush1.msra.mxu0 %v150
    %3907 = vmatprep.subr.mxu0 0.0
    %3908 = vmatpush1.msra.mxu0 %v151
    %3909 = vmatprep.subr.mxu0 0.0
    %3910 = vmatpush1.msra.mxu0 %v152
    %3911 = vmatprep.subr.mxu0 0.0
    %3912 = vmatpush1.msra.mxu0 %v153
    %3913 = vmatprep.subr.mxu0 0.0
    %3914 = vmatpush1.msra.mxu0 %v154
    %3915 = vmatprep.subr.mxu0 0.0
    %3916 = vmatpush1.msra.mxu0 %v155
    %3917 = vmatprep.subr.mxu0 0.0
    %3918 = vmatpush1.msra.mxu0 %v156
    %3919 = vmatprep.subr.mxu0 0.0
    %3920 = vmatpush1.msra.mxu0 %v157
    %3921 = vmatprep.subr.mxu0 0.0
    %3922 = vmatpush1.msra.mxu0 %v158
    %3923 = vmatprep.subr.mxu0 0.0
    %3924 = vmatpush1.msra.mxu0 %v159
    %3925 = vmatprep.subr.mxu0 0.0
    %3926 = vmatpush1.msra.mxu0 %v160
    %3927 = vmatprep.subr.mxu0 0.0
    %3928 = vmatpush1.msra.mxu0 %v161
    %3929 = vmatprep.subr.mxu0 0.0
    %3930 = vmatpush1.msra.mxu0 %v162
    %3931 = vmatprep.subr.mxu0 0.0
    %3932 = vmatpush1.msra.mxu0 0.0
    %3933 = vmatprep.subr.mxu0 0.0
    %3934 = vmatpush1.msra.mxu0 0.0
    %3935 = vmatprep.subr.mxu0 0.0
    %3936 = vmatpush1.msra.mxu0 0.0
    %3937 = vmatprep.subr.mxu0 0.0
    %3938 = vmatpush1.msra.mxu0 0.0
    %3939 = vmatprep.subr.mxu0 0.0
    %3940 = vmatpush1.msra.mxu0 0.0
    %3941 = vmatprep.subr.mxu0 0.0
    %3942 = vmatpush1.msra.mxu0 0.0
    %3943 = vmatprep.subr.mxu0 0.0
    %3944 = vmatpush1.msra.mxu0 0.0
    %3945 = vmatprep.subr.mxu0 0.0
    %3946 = vmatpush1.msra.mxu0 0.0
    %3947 = vmatprep.subr.mxu0 0.0
    %3948 = vmatpush1.msra.mxu0 0.0
    %3949 = vmatprep.subr.mxu0 0.0
    %3950 = vmatpush1.msra.mxu0 0.0
    %3951 = vmatprep.subr.mxu0 0.0
    %3952 = vmatpush1.msra.mxu0 0.0
    %3953 = vmatprep.subr.mxu0 0.0
    %3954 = vmatpush1.msra.mxu0 0.0
    %3955 = vmatprep.subr.mxu0 0.0
    %3956 = vmatpush1.msra.mxu0 0.0
    %3957 = vmatprep.subr.mxu0 0.0
    %3958 = vmatpush1.msra.mxu0 0.0
    %3959 = vmatprep.subr.mxu0 0.0
    %3960 = vmatpush1.msra.mxu0 0.0
    %3961 = vmatprep.subr.mxu0 0.0
    %3962 = vmatpush1.msra.mxu0 0.0
    %3963 = vmatprep.mubr.f32.mxu0 0.0
    %3964 = vmatmul.mubr.f32.gmra.mrb[0].mxu0 %v3895
    %v3965 = vpop.f32.mrb[0].mxu0
    %v3966 = vadd.f32 0.0, %v3965
    %v3967 = vpop.f32.mrb[0].mxu0
    %3968 = vmatprep.mubr.f32.mxu0 0.0
    %3969 = vmatmul.mubr.f32.gmra.mrb[0].mxu0 %v3896
    %v3970 = vpop.f32.mrb[0].mxu0
    %v3971 = vadd.f32 0.0, %v3970
    %v3972 = vpop.f32.mrb[0].mxu0
    %3973 = vdwg.mxu0
    %v3974 = vsub.f32 %v3895, %v3966
    %v3975 = vsub.f32 %v3896, %v3971
    %v3976 = vmul.f32 %v3974, %v3974
    %v3977 = vmul.f32 %v3975, %v3975
    %3978 = vmatprep.subr.mxu0 0.0
    %3979 = vmatpush1.msra.mxu0 %v147
    %3980 = vmatprep.subr.mxu0 0.0
    %3981 = vmatpush1.msra.mxu0 %v148
    %3982 = vmatprep.subr.mxu0 0.0
    %3983 = vmatpush1.msra.mxu0 %v149
    %3984 = vmatprep.subr.mxu0 0.0
    %3985 = vmatpush1.msra.mxu0 %v150
    %3986 = vmatprep.subr.mxu0 0.0
    %3987 = vmatpush1.msra.mxu0 %v151
    %3988 = vmatprep.subr.mxu0 0.0
    %3989 = vmatpush1.msra.mxu0 %v152
    %3990 = vmatprep.subr.mxu0 0.0
    %3991 = vmatpush1.msra.mxu0 %v153
    %3992 = vmatprep.subr.mxu0 0.0
    %3993 = vmatpush1.msra.mxu0 %v154
    %3994 = vmatprep.subr.mxu0 0.0
    %3995 = vmatpush1.msra.mxu0 %v155
    %3996 = vmatprep.subr.mxu0 0.0
    %3997 = vmatpush1.msra.mxu0 %v156
    %3998 = vmatprep.subr.mxu0 0.0
    %3999 = vmatpush1.msra.mxu0 %v157
    %4000 = vmatprep.subr.mxu0 0.0
    %4001 = vmatpush1.msra.mxu0 %v158
    %4002 = vmatprep.subr.mxu0 0.0
    %4003 = vmatpush1.msra.mxu0 %v159
    %4004 = vmatprep.subr.mxu0 0.0
    %4005 = vmatpush1.msra.mxu0 %v160
    %4006 = vmatprep.subr.mxu0 0.0
    %4007 = vmatpush1.msra.mxu0 %v161
    %4008 = vmatprep.subr.mxu0 0.0
    %4009 = vmatpush1.msra.mxu0 %v162
    %4010 = vmatprep.subr.mxu0 0.0
    %4011 = vmatpush1.msra.mxu0 0.0
    %4012 = vmatprep.subr.mxu0 0.0
    %4013 = vmatpush1.msra.mxu0 0.0
    %4014 = vmatprep.subr.mxu0 0.0
    %4015 = vmatpush1.msra.mxu0 0.0
    %4016 = vmatprep.subr.mxu0 0.0
    %4017 = vmatpush1.msra.mxu0 0.0
    %4018 = vmatprep.subr.mxu0 0.0
    %4019 = vmatpush1.msra.mxu0 0.0
    %4020 = vmatprep.subr.mxu0 0.0
    %4021 = vmatpush1.msra.mxu0 0.0
    %4022 = vmatprep.subr.mxu0 0.0
    %4023 = vmatpush1.msra.mxu0 0.0
    %4024 = vmatprep.subr.mxu0 0.0
    %4025 = vmatpush1.msra.mxu0 0.0
    %4026 = vmatprep.subr.mxu0 0.0
    %4027 = vmatpush1.msra.mxu0 0.0
    %4028 = vmatprep.subr.mxu0 0.0
    %4029 = vmatpush1.msra.mxu0 0.0
    %4030 = vmatprep.subr.mxu0 0.0
    %4031 = vmatpush1.msra.mxu0 0.0
    %4032 = vmatprep.subr.mxu0 0.0
    %4033 = vmatpush1.msra.mxu0 0.0
    %4034 = vmatprep.subr.mxu0 0.0
    %4035 = vmatpush1.msra.mxu0 0.0
    %4036 = vmatprep.subr.mxu0 0.0
    %4037 = vmatpush1.msra.mxu0 0.0
    %4038 = vmatprep.subr.mxu0 0.0
    %4039 = vmatpush1.msra.mxu0 0.0
    %4040 = vmatprep.subr.mxu0 0.0
    %4041 = vmatpush1.msra.mxu0 0.0
    %4042 = vmatprep.mubr.f32.mxu0 0.0
    %4043 = vmatmul.mubr.f32.gmra.mrb[0].mxu0 %v3976
    %v4044 = vpop.f32.mrb[0].mxu0
    %v4045 = vadd.f32 1e-05, %v4044
    %v4046 = vpop.f32.mrb[0].mxu0
    %4047 = vmatprep.mubr.f32.mxu0 0.0
    %4048 = vmatmul.mubr.f32.gmra.mrb[0].mxu0 %v3977
    %v4049 = vpop.f32.mrb[0].mxu0
    %v4050 = vadd.f32 1e-05, %v4049
    %v4051 = vpop.f32.mrb[0].mxu0
    %4052 = vdwg.mxu0
    %v4053 = vrsqrt.pop %v4045
    %v4054 = vrsqrt.pop %v4050
    %v4055 = vmul.f32 %v3974, %v4053
    %v4056 = vmul.f32 %v3975, %v4054
    %v4057 = vlaneseq
    %v4058 = vshrl.u32 %v4057, 7
    %v4059 = vsub.s32 0, %v4058
    %v4060 = vrot.slane %v3897, %v4059
    %v4061 = vmul.f32 %v4055, %v4060
    %v4062 = vmul.f32 %v4056, %v4060
    %v4063 = vlaneseq
    %v4064 = vshrl.u32 %v4063, 7
    %v4065 = vsub.s32 0, %v4064
    %v4066 = vrot.slane %v3898, %v4065
    %v4067 = vadd.f32 %v4061, %v4066
    %v4068 = vadd.f32 %v4062, %v4066
    %v4069 = vadd.f32 %v4067, %v138
    %v4070 = vadd.f32 %v4068, %v139
    %4071 = vst [vmem:[%s13] sm:$0xff] %v4069
    %4072 = vst [vmem:[%s13 + $0x8] sm:$0xff] %v4070
    // Predicated region
    $region82: #{optimized_bottleneck_processor.1} parent=1 // pred_check
      _
    $region83: #{optimized_bottleneck_processor.1} parent=1 // pred_check_branch
      %4074 = sbr.rel (0) target = $region85
    $region84: #{optimized_bottleneck_processor.1} parent=1 // pred_region
      _
    $region85: #{optimized_bottleneck_processor.1} parent=1 // pred_fallthru
      _
    // Predicated region
    $region86: #{optimized_bottleneck_processor.1} parent=1 // pred_check
      _
    $region87: #{optimized_bottleneck_processor.1} parent=1 // pred_check_branch
      %4076 = sbr.rel (0) target = $region89
    $region88: #{optimized_bottleneck_processor.1} parent=1 // pred_region
      _
    $region89: #{optimized_bottleneck_processor.1} parent=1 // pred_fallthru
      _
    %4077 = vsyncpa [#allocation3], 1
    %4078 = vsyncpa [#allocation5], 1
    %4079 = vsyncpa [#allocation8], 1
    %4080 = vsyncpa [#allocation11], 1

</llo_original>
